<compile_context>
chip_gen: v6e
topology: v6e:2x2x1
jax: 0.10.0
libtpu: 0.0.40
codegen_flags: <defaults>
</compile_context>

<pallas_src>
import functools

import jax
import jax.numpy as jnp
from jax.experimental import pallas as pl
from jax.experimental.pallas import tpu as pltpu

EPS = 1e-6
GELU_C = 0.7978845608028654  # sqrt(2/pi)

# Small, TPU-friendly stand-ins for T5-XXL (d_model=4096, H=64, d_kv=64, d_ff=10240)
SEQ = 256
D_MODEL = 256
N_HEADS = 4
D_KV = 64            # N_HEADS * D_KV == D_MODEL (real T5-XXL: inner_dim == d_model)
D_FF = 512

# ---- Tiling knobs (demo values; re-derive per generation at real shapes) ------------
# v6e/v7x: TS=256; v5e: TS=128.  TN ~ 512-1024 at d_model=4096.  TF=512 on v6e,
# keep 256 (or sweep 256/384) on v7x's 64 MiB VMEM.  HEADS_PER_STEP=4 on v6e/v7x once
# the per-step score tiles have been verified against the VMEM budget.
TS = 128             # sequence rows per grid step for K1/K3/K4 (multiple of 8)
TN = 256             # fused-QKV output-column tile for K1 (multiple of 128)
TF = 256             # d_ff reduction tile for K4 (multiple of 128)
TQ = 128             # query-row tile for flash attention (multiple of 8)
TK = 128             # key/value tile for flash attention (multiple of 128)
HEADS_PER_STEP = 2   # 2 heads * 64 lanes = 128-lane (lane-dense) attention output block

# Scoped VMEM limit: fits every generation (v7x: 64 MiB physical per TC).
VMEM_LIMIT = 56 * 1024 * 1024


# ---------------------------------------------------------------------------
# K1: RMSNorm + fused QKV projection, weight tiled over output columns
# ---------------------------------------------------------------------------
def _rmsnorm_qkv_kernel(x_ref, ln_ref, w_ref, o_ref):
    # RMSNorm recomputed per column tile: O(TS*D) vs the O(TS*D*TN) matmul — cheap.
    x = x_ref[...].astype(jnp.float32)
    var = jnp.mean(x * x, axis=-1, keepdims=True)
    normed = (x * jax.lax.rsqrt(var + EPS) * ln_ref[...]).astype(jnp.bfloat16)
    o_ref[...] = jnp.dot(normed, w_ref[...],
                         preferred_element_type=jnp.float32).astype(o_ref.dtype)


def fused_rmsnorm_qkv(x, ln_w_row, w_qkv):
    S, D = x.shape
    NQKV = w_qkv.shape[1]
    return pl.pallas_call(
        _rmsnorm_qkv_kernel,
        out_shape=jax.ShapeDtypeStruct((S, NQKV), jnp.bfloat16),
        grid=(S // TS, NQKV // TN),
        in_specs=[pl.BlockSpec((TS, D), lambda i, n: (i, 0)),
                  pl.BlockSpec((1, D), lambda i, n: (0, 0)),
                  pl.BlockSpec((D, TN), lambda i, n: (0, n))],
        out_specs=pl.BlockSpec((TS, TN), lambda i, n: (i, n)),
        compiler_params=pltpu.CompilerParams(
            dimension_semantics=("parallel", "parallel"),
            vmem_limit_bytes=VMEM_LIMIT),
    )(x, ln_w_row, w_qkv)


# ---------------------------------------------------------------------------
# K2: flash (online-softmax) self-attention, HEADS_PER_STEP heads per grid step
# ---------------------------------------------------------------------------
def _flash_attn_kernel(q_ref, k_ref, v_ref, b_ref, m_ref, o_ref,
                       m_sc, l_sc, acc_sc, *, hc, d_kv):
    kv = pl.program_id(2)

    @pl.when(kv == 0)
    def _init():
        m_sc[...] = jnp.full(m_sc.shape, -jnp.inf, jnp.float32)
        l_sc[...] = jnp.zeros(l_sc.shape, jnp.float32)
        acc_sc[...] = jnp.zeros(acc_sc.shape, jnp.float32)

    mask = m_ref[...]                                  # (1, TK) additive key-mask row
    for h in range(hc):                                # static unroll over heads
        sl = slice(h * d_kv, (h + 1) * d_kv)
        q = q_ref[:, sl]                               # (TQ, Dk) bf16
        k = k_ref[:, sl]                               # (TK, Dk) bf16
        v = v_ref[:, sl]                               # (TK, Dk) bf16
        # T5 does not scale scores by 1/sqrt(d_kv). Softmax stats kept in f32.
        s = jax.lax.dot_general(q, k, (((1,), (1,)), ((), ())),
                                preferred_element_type=jnp.float32)
        s = s + b_ref[h].astype(jnp.float32) + mask    # bias streamed as bf16 tiles
        m_prev = m_sc[h]
        m_new = jnp.maximum(m_prev, jnp.max(s, axis=-1, keepdims=True))
        alpha = jnp.exp(m_prev - m_new)
        p = jnp.exp(s - m_new)
        l_sc[h] = alpha * l_sc[h] + jnp.sum(p, axis=-1, keepdims=True)
        acc_sc[h] = alpha * acc_sc[h] + jnp.dot(p.astype(v.dtype), v,
                                                preferred_element_type=jnp.float32)
        m_sc[h] = m_new

    @pl.when(kv == pl.num_programs(2) - 1)
    def _finalize():
        parts = []
        for h in range(hc):
            inv = pl.reciprocal(l_sc[h], approx=True)   # EUP slot, nearly free
            parts.append((acc_sc[h] * inv).astype(o_ref.dtype))  # cast per head
        o_ref[...] = jnp.concatenate(parts, axis=-1)    # >=128-lane unmasked store


def attention(qkv, bias_bf16, mask_row, *, heads, d_kv, hc):
    S = qkv.shape[0]
    assert heads % hc == 0 and S % TQ == 0 and S % TK == 0
    G = heads // hc
    bw = hc * d_kv                                      # 128 lanes per block
    return pl.pallas_call(
        functools.partial(_flash_attn_kernel, hc=hc, d_kv=d_kv),
        out_shape=jax.ShapeDtypeStruct((S, heads * d_kv), jnp.bfloat16),
        grid=(G, S // TQ, S // TK),
        in_specs=[pl.BlockSpec((TQ, bw), lambda g, qi, ki: (qi, g)),
                  pl.BlockSpec((TK, bw), lambda g, qi, ki: (ki, g + G)),
                  pl.BlockSpec((TK, bw), lambda g, qi, ki: (ki, g + 2 * G)),
                  pl.BlockSpec((hc, TQ, TK), lambda g, qi, ki: (g, qi, ki)),
                  pl.BlockSpec((1, TK), lambda g, qi, ki: (0, ki))],
        out_specs=pl.BlockSpec((TQ, bw), lambda g, qi, ki: (qi, g)),
        scratch_shapes=[pltpu.VMEM((hc, TQ, 1), jnp.float32),     # running max
                        pltpu.VMEM((hc, TQ, 1), jnp.float32),     # running denom
                        pltpu.VMEM((hc, TQ, d_kv), jnp.float32)], # f32 accumulator
        compiler_params=pltpu.CompilerParams(
            dimension_semantics=("parallel", "parallel", "arbitrary"),
            vmem_limit_bytes=VMEM_LIMIT),
    )(qkv, qkv, qkv, bias_bf16, mask_row)


# ---------------------------------------------------------------------------
# K3: attention output projection + residual + second RMSNorm (two outputs)
# ---------------------------------------------------------------------------
def _out_proj_ln_kernel(attn_ref, wo_ref, x_ref, ln2_ref, xo_ref, n2_ref):
    y = x_ref[...] + jnp.dot(attn_ref[...], wo_ref[...],
                             preferred_element_type=jnp.float32)
    xo_ref[...] = y
    var = jnp.mean(y * y, axis=-1, keepdims=True)
    n2_ref[...] = (y * jax.lax.rsqrt(var + EPS) * ln2_ref[...]).astype(n2_ref.dtype)


def out_proj_rmsnorm(attn, wo, x, ln2_row):
    S, D = x.shape
    K = attn.shape[1]
    # TODO(synk): at real T5-XXL on v7x, single-buffer wo (its index_map is constant)
    # or tile it over output columns + a tiny variance pass so double-buffering a
    # 32 MiB weight does not blow the 64 MiB VMEM.
    return pl.pallas_call(
        _out_proj_ln_kernel,
        out_shape=(jax.ShapeDtypeStruct((S, D), jnp.float32),
                   jax.ShapeDtypeStruct((S, D), jnp.bfloat16)),
        grid=(S // TS,),
        in_specs=[pl.BlockSpec((TS, K), lambda i: (i, 0)),
                  pl.BlockSpec((K, D), lambda i: (0, 0)),
                  pl.BlockSpec((TS, D), lambda i: (i, 0)),
                  pl.BlockSpec((1, D), lambda i: (0, 0))],
        out_specs=(pl.BlockSpec((TS, D), lambda i: (i, 0)),
                   pl.BlockSpec((TS, D), lambda i: (i, 0))),
        compiler_params=pltpu.CompilerParams(
            dimension_semantics=("parallel",),
            vmem_limit_bytes=VMEM_LIMIT),
    )(attn, wo, x, ln2_row)


# ---------------------------------------------------------------------------
# K4: gated-gelu FF + down projection + residual, D_FF tiled as reduction axis,
#     accumulating directly into the resident output block (no scratch).
# ---------------------------------------------------------------------------
def _ff_fused_kernel(n2_ref, wi0_ref, wi1_ref, wo_ref, res_ref, o_ref):
    # The output BlockSpec ignores j, so the (TS, D) f32 output block stays VMEM
    # resident across the whole d_ff reduction: init with the residual, then +=.
    @pl.when(pl.program_id(1) == 0)
    def _init():
        o_ref[...] = res_ref[...]

    n = n2_ref[...]
    h0 = jnp.dot(n, wi0_ref[...], preferred_element_type=jnp.float32)
    h1 = jnp.dot(n, wi1_ref[...], preferred_element_type=jnp.float32)
    # NewGELU (gelu_new) used by T5 v1.1 gated-gelu FF
    g = 0.5 * h0 * (1.0 + jnp.tanh(GELU_C * (h0 + 0.044715 * (h0 * h0 * h0))))
    o_ref[...] += jnp.dot((g * h1).astype(jnp.bfloat16), wo_ref[...],
                          preferred_element_type=jnp.float32)


def ff_fused(n2, wi0, wi1, wo_ff, res):
    S, D = res.shape
    F = wi0.shape[1]
    return pl.pallas_call(
        _ff_fused_kernel,
        out_shape=jax.ShapeDtypeStruct((S, D), jnp.float32),
        grid=(S // TS, F // TF),
        in_specs=[pl.BlockSpec((TS, D), lambda i, j: (i, 0)),
                  pl.BlockSpec((D, TF), lambda i, j: (0, j)),
                  pl.BlockSpec((D, TF), lambda i, j: (0, j)),
                  pl.BlockSpec((TF, D), lambda i, j: (j, 0)),
                  pl.BlockSpec((TS, D), lambda i, j: (i, 0))],
        out_specs=pl.BlockSpec((TS, D), lambda i, j: (i, 0)),
        compiler_params=pltpu.CompilerParams(
            dimension_semantics=("parallel", "arbitrary"),
            vmem_limit_bytes=VMEM_LIMIT),
    )(n2, wi0, wi1, wo_ff, res)


# ---------------------------------------------------------------------------
# One-time setup (OUTSIDE jit) + module forward (thin glue; hot paths in Pallas)
# ---------------------------------------------------------------------------
def prepare_params(p):
    """One-time weight prep: fuse QKV + cast to bf16.  Run OUTSIDE the jitted call —
    params are traced jit arguments, so doing this inside the forward would re-read /
    re-write the whole weight set in HBM on every call."""
    d = p["wq"].shape[0]
    return {
        "attn_ln": p["attn_ln"].reshape(1, d).astype(jnp.float32),
        "ff_ln": p["ff_ln"].reshape(1, d).astype(jnp.float32),
        "w_qkv": jnp.concatenate([p["wq"], p["wk"], p["wv"]], axis=1).astype(jnp.bfloat16),
        "wo": p["wo"].astype(jnp.bfloat16),
        "wi0": p["wi0"].astype(jnp.bfloat16),
        "wi1": p["wi1"].astype(jnp.bfloat16),
        "wo_ff": p["wo_ff"].astype(jnp.bfloat16),
    }


def t5_block_next(hidden_states, attention_mask, position_bias_bf16, params):
    # hidden_states: (1, S, D) f32
    # attention_mask: (1, 1, 1, S) additive extended mask (key-only, B == 1 assumed)
    # position_bias_bf16: (H, S, S) bf16 (cast once at setup, reused across calls)
    # params: output of prepare_params()
    B, S, D = hidden_states.shape
    assert B == 1
    x = hidden_states[0]
    mask_row = attention_mask.reshape(1, S).astype(jnp.float32)

    # --- layer[0]: T5LayerSelfAttention ---
    qkv = fused_rmsnorm_qkv(x, params["attn_ln"], params["w_qkv"])     # (S, 3*H*Dk) bf16
    attn = attention(qkv, position_bias_bf16, mask_row,
                     heads=N_HEADS, d_kv=D_KV, hc=HEADS_PER_STEP)      # (S, H*Dk) bf16
    x, normed2 = out_proj_rmsnorm(attn, params["wo"], x, params["ff_ln"])

    # --- layer[1]: T5LayerFF (DenseGatedActDense), fully fused ---
    x = ff_fused(normed2, params["wi0"], params["wi1"], params["wo_ff"], x)

    return x[None]                                                     # (1, S, D)


# ---------------------------------------------------------------------------
# Pure-JAX reference (same math, all f32) for a sanity check
# ---------------------------------------------------------------------------
def reference(hidden_states, attention_mask, position_bias, p):
    x = hidden_states[0].astype(jnp.float32)

    def rms(y, w):
        var = jnp.mean(y * y, axis=-1, keepdims=True)
        return y * jax.lax.rsqrt(var + EPS) * w

    S = x.shape[0]
    n = rms(x, p["attn_ln"])
    q = (n @ p["wq"]).reshape(S, N_HEADS, D_KV).transpose(1, 0, 2)
    k = (n @ p["wk"]).reshape(S, N_HEADS, D_KV).transpose(1, 0, 2)
    v = (n @ p["wv"]).reshape(S, N_HEADS, D_KV).transpose(1, 0, 2)
    s = jnp.einsum("hqd,hkd->hqk", q, k) + (position_bias + attention_mask)[0]
    m = s.max(-1, keepdims=True)
    e = jnp.exp(s - m)
    pw = e / e.sum(-1, keepdims=True)
    attn = jnp.einsum("hqk,hkd->hqd", pw, v).transpose(1, 0, 2).reshape(S, N_HEADS * D_KV)
    x = x + attn @ p["wo"]
    n2 = rms(x, p["ff_ln"])
    h0 = n2 @ p["wi0"]
    h1 = n2 @ p["wi1"]
    g = 0.5 * h0 * (1.0 + jnp.tanh(GELU_C * (h0 + 0.044715 * h0 ** 3)))
    x = x + (g * h1) @ p["wo_ff"]
    return x[None]


# ---------------------------------------------------------------------------
if __name__ == "__main__":
    key = jax.random.PRNGKey(0)
    ks = jax.random.split(key, 12)

    # Deterministic synthetic parameters (real T5-XXL weights come from a checkpoint).
    params = {
        "attn_ln": 1.0 + 0.05 * jax.random.normal(ks[0], (D_MODEL,), jnp.float32),
        "wq": 0.03 * jax.random.normal(ks[1], (D_MODEL, N_HEADS * D_KV), jnp.float32),
        "wk": 0.03 * jax.random.normal(ks[2], (D_MODEL, N_HEADS * D_KV), jnp.float32),
        "wv": 0.05 * jax.random.normal(ks[3], (D_MODEL, N_HEADS * D_KV), jnp.float32),
        "wo": 0.05 * jax.random.normal(ks[4], (N_HEADS * D_KV, D_MODEL), jnp.float32),
        "ff_ln": 1.0 + 0.05 * jax.random.normal(ks[5], (D_MODEL,), jnp.float32),
        "wi0": 0.05 * jax.random.normal(ks[6], (D_MODEL, D_FF), jnp.float32),
        "wi1": 0.05 * jax.random.normal(ks[7], (D_MODEL, D_FF), jnp.float32),
        "wo_ff": 0.05 * jax.random.normal(ks[8], (D_FF, D_MODEL), jnp.float32),
    }

    # Inputs mirroring the PyTorch script (at small shapes):
    hidden_states = jax.random.normal(ks[9], (1, SEQ, D_MODEL), jnp.float32)
    attention_mask = jnp.zeros((1, 1, 1, SEQ), jnp.float32)             # `t`
    # `temp_value` (position_bias from block[0]) is computed once and reused; stand in
    # with a deterministic random tensor of the correct shape.
    position_bias = jax.random.normal(ks[10], (1, N_HEADS, SEQ, SEQ), jnp.float32)

    # One-time prep OUTSIDE the jitted forward (weight fusion/casts + bias bf16 cast).
    prepared = prepare_params(params)
    bias_bf16 = position_bias[0].astype(jnp.bfloat16)                   # (H, S, S) bf16

    fwd = jax.jit(t5_block_next)
    out = fwd(hidden_states, attention_mask, bias_bf16, prepared)
    out = jax.block_until_ready(out)

    ref = reference(hidden_states, attention_mask, position_bias, params)
    assert out.shape == (1, SEQ, D_MODEL)
    # bf16 MXU inputs, bf16-streamed position bias, and approx softmax reciprocal
    # => looser tolerance than pure f32 (documented; re-verify at T5-XXL magnitudes).
    max_err = jnp.max(jnp.abs(out - ref))
    assert jnp.allclose(out, ref, rtol=3e-2, atol=3e-2), f"mismatch vs reference, max|err|={max_err}"

    print("KERNEL_OK")
</pallas_src>

<mosaic_0001>
module attributes {stable_mosaic.version = 11 : i64} {
  func.func @_out_proj_ln_kernel(%arg0: i32, %arg1: memref<128x256xbf16, #tpu.memory_space<vmem>>, %arg2: memref<256x256xbf16, #tpu.memory_space<vmem>>, %arg3: memref<128x256xf32, #tpu.memory_space<vmem>>, %arg4: memref<1x256xf32, #tpu.memory_space<vmem>>, %arg5: memref<128x256xf32, #tpu.memory_space<vmem>>, %arg6: memref<128x256xbf16, #tpu.memory_space<vmem>>) attributes {dimension_semantics = [#tpu.dimension_semantics<parallel>], iteration_bounds = array<i64: 2>, scalar_prefetch = 0 : i64, scratch_operands = 0 : i64, tpu.core_type = #tpu.core_type<tc>, window_params = [{transform_indices = @transform_0, window_bounds = array<i64: 128, 256>}, {pipeline_mode = #tpu.pipeline_mode<synchronous>, transform_indices = @transform_1, window_bounds = array<i64: 256, 256>}, {transform_indices = @transform_2, window_bounds = array<i64: 128, 256>}, {pipeline_mode = #tpu.pipeline_mode<synchronous>, transform_indices = @transform_3, window_bounds = array<i64: 1, 256>}, {transform_indices = @transform_4, window_bounds = array<i64: 128, 256>}, {transform_indices = @transform_5, window_bounds = array<i64: 128, 256>}]} {
    %c0 = arith.constant 0 : index
    %c0_0 = arith.constant 0 : index
    %0 = vector.load %arg3[%c0, %c0_0] : memref<128x256xf32, #tpu.memory_space<vmem>>, vector<128x256xf32>
    %c0_1 = arith.constant 0 : index
    %c0_2 = arith.constant 0 : index
    %1 = vector.load %arg1[%c0_1, %c0_2] : memref<128x256xbf16, #tpu.memory_space<vmem>>, vector<128x256xbf16>
    %c0_3 = arith.constant 0 : index
    %c0_4 = arith.constant 0 : index
    %2 = vector.load %arg2[%c0_3, %c0_4] : memref<256x256xbf16, #tpu.memory_space<vmem>>, vector<256x256xbf16>
    %cst = arith.constant dense<0.000000e+00> : vector<128x256xf32>
    %3 = tpu.matmul %1, %2, %cst {dimension_numbers = #tpu.dot_dimension_numbers<[1], [0], [0], [1], [0, 0, 1, 1], [], []>} : vector<128x256xbf16>, vector<256x256xbf16>, vector<128x256xf32> -> vector<128x256xf32>
    %4 = arith.addf %0, %3 : vector<128x256xf32>
    %c0_5 = arith.constant 0 : index
    %c0_6 = arith.constant 0 : index
    %5 = vector.load %arg5[%c0_5, %c0_6] : memref<128x256xf32, #tpu.memory_space<vmem>>, vector<128x256xf32>
    tpu.vector_store %arg5[%c0_5, %c0_6], %4 {strides = array<i32>} : memref<128x256xf32, #tpu.memory_space<vmem>>, vector<128x256xf32>,
    %6 = arith.mulf %4, %4 : vector<128x256xf32>
    %cst_7 = arith.constant dense<0.000000e+00> : vector<128xf32>
    %7 = vector.multi_reduction <add>, %6, %cst_7 [1] : vector<128x256xf32> to vector<128xf32>
    %8 = vector.shape_cast %7 : vector<128xf32> to vector<128x1xf32>
    %cst_8 = arith.constant 2.560000e+02 : f32
    %9 = vector.broadcast %cst_8 : f32 to vector<128x1xf32>
    %10 = arith.divf %8, %9 : vector<128x1xf32>
    %cst_9 = arith.constant 9.99999997E-7 : f32
    %11 = vector.broadcast %cst_9 : f32 to vector<128x1xf32>
    %12 = arith.addf %10, %11 : vector<128x1xf32>
    %13 = math.rsqrt %12 : vector<128x1xf32>
    %14 = vector.broadcast %13 : vector<128x1xf32> to vector<128x256xf32>
    %15 = arith.mulf %4, %14 : vector<128x256xf32>
    %c0_10 = arith.constant 0 : index
    %c0_11 = arith.constant 0 : index
    %16 = vector.load %arg4[%c0_10, %c0_11] : memref<1x256xf32, #tpu.memory_space<vmem>>, vector<1x256xf32>
    %17 = vector.broadcast %16 : vector<1x256xf32> to vector<128x256xf32>
    %18 = arith.mulf %15, %17 : vector<128x256xf32>
    %19 = arith.truncf %18 : vector<128x256xf32> to vector<128x256xbf16>
    %c0_12 = arith.constant 0 : index
    %c0_13 = arith.constant 0 : index
    %20 = vector.load %arg6[%c0_12, %c0_13] : memref<128x256xbf16, #tpu.memory_space<vmem>>, vector<128x256xbf16>
    tpu.vector_store %arg6[%c0_12, %c0_13], %19 {strides = array<i32>} : memref<128x256xbf16, #tpu.memory_space<vmem>>, vector<128x256xbf16>,
    return
  }
  func.func @transform_0(%arg0: i32) -> (i32, i32) {
    %c0_i32 = arith.constant 0 : i32
    %c0_i32_0 = arith.constant 0 : i32
    return %arg0, %c0_i32 : i32, i32
  }
  func.func @transform_1(%arg0: i32) -> (i32, i32) {
    %c0_i32 = arith.constant 0 : i32
    %c0_i32_0 = arith.constant 0 : i32
    %c0_i32_1 = arith.constant 0 : i32
    return %c0_i32, %c0_i32_0 : i32, i32
  }
  func.func @transform_2(%arg0: i32) -> (i32, i32) {
    %c0_i32 = arith.constant 0 : i32
    %c0_i32_0 = arith.constant 0 : i32
    return %arg0, %c0_i32 : i32, i32
  }
  func.func @transform_3(%arg0: i32) -> (i32, i32) {
    %c0_i32 = arith.constant 0 : i32
    %c0_i32_0 = arith.constant 0 : i32
    %c0_i32_1 = arith.constant 0 : i32
    return %c0_i32, %c0_i32_0 : i32, i32
  }
  func.func @transform_4(%arg0: i32) -> (i32, i32) {
    %c0_i32 = arith.constant 0 : i32
    %c0_i32_0 = arith.constant 0 : i32
    return %arg0, %c0_i32 : i32, i32
  }
  func.func @transform_5(%arg0: i32) -> (i32, i32) {
    %c0_i32 = arith.constant 0 : i32
    %c0_i32_0 = arith.constant 0 : i32
    return %arg0, %c0_i32 : i32, i32
  }
}

module attributes {stable_mosaic.version = 11 : i64} {
  func.func @_ff_fused_kernel(%arg0: i32, %arg1: i32, %arg2: memref<128x256xbf16, #tpu.memory_space<vmem>>, %arg3: memref<256x256xbf16, #tpu.memory_space<vmem>>, %arg4: memref<256x256xbf16, #tpu.memory_space<vmem>>, %arg5: memref<256x256xbf16, #tpu.memory_space<vmem>>, %arg6: memref<128x256xf32, #tpu.memory_space<vmem>>, %arg7: memref<128x256xf32, #tpu.memory_space<vmem>>) attributes {dimension_semantics = [#tpu.dimension_semantics<parallel>, #tpu.dimension_semantics<arbitrary>], iteration_bounds = array<i64: 2, 2>, scalar_prefetch = 0 : i64, scratch_operands = 0 : i64, tpu.core_type = #tpu.core_type<tc>, window_params = [{transform_indices = @transform_0, window_bounds = array<i64: 128, 256>}, {transform_indices = @transform_1, window_bounds = array<i64: 256, 256>}, {transform_indices = @transform_2, window_bounds = array<i64: 256, 256>}, {transform_indices = @transform_3, window_bounds = array<i64: 256, 256>}, {transform_indices = @transform_4, window_bounds = array<i64: 128, 256>}, {transform_indices = @transform_5, window_bounds = array<i64: 128, 256>}]} {
    %c0_i32 = arith.constant 0 : i32
    %0 = arith.cmpi eq, %arg1, %c0_i32 : i32
    %1 = arith.extui %0 : i1 to i32
    %c0_i32_0 = arith.constant 0 : i32
    %2 = arith.cmpi ne, %1, %c0_i32_0 : i32
    scf.if %2 {
      %c0_18 = arith.constant 0 : index
      %c0_19 = arith.constant 0 : index
      %28 = vector.load %arg6[%c0_18, %c0_19] : memref<128x256xf32, #tpu.memory_space<vmem>>, vector<128x256xf32>
      %c0_20 = arith.constant 0 : index
      %c0_21 = arith.constant 0 : index
      %29 = vector.load %arg7[%c0_20, %c0_21] : memref<128x256xf32, #tpu.memory_space<vmem>>, vector<128x256xf32>
      tpu.vector_store %arg7[%c0_20, %c0_21], %28 {strides = array<i32>} : memref<128x256xf32, #tpu.memory_space<vmem>>, vector<128x256xf32>,
    } else {
    }
    %c0 = arith.constant 0 : index
    %c0_1 = arith.constant 0 : index
    %3 = vector.load %arg2[%c0, %c0_1] : memref<128x256xbf16, #tpu.memory_space<vmem>>, vector<128x256xbf16>
    %c0_2 = arith.constant 0 : index
    %c0_3 = arith.constant 0 : index
    %4 = vector.load %arg3[%c0_2, %c0_3] : memref<256x256xbf16, #tpu.memory_space<vmem>>, vector<256x256xbf16>
    %cst = arith.constant dense<0.000000e+00> : vector<128x256xf32>
    %5 = tpu.matmul %3, %4, %cst {dimension_numbers = #tpu.dot_dimension_numbers<[1], [0], [0], [1], [0, 0, 1, 1], [], []>} : vector<128x256xbf16>, vector<256x256xbf16>, vector<128x256xf32> -> vector<128x256xf32>
    %c0_4 = arith.constant 0 : index
    %c0_5 = arith.constant 0 : index
    %6 = vector.load %arg4[%c0_4, %c0_5] : memref<256x256xbf16, #tpu.memory_space<vmem>>, vector<256x256xbf16>
    %cst_6 = arith.constant dense<0.000000e+00> : vector<128x256xf32>
    %7 = tpu.matmul %3, %6, %cst_6 {dimension_numbers = #tpu.dot_dimension_numbers<[1], [0], [0], [1], [0, 0, 1, 1], [], []>} : vector<128x256xbf16>, vector<256x256xbf16>, vector<128x256xf32> -> vector<128x256xf32>
    %cst_7 = arith.constant 5.000000e-01 : f32
    %8 = vector.broadcast %cst_7 : f32 to vector<128x256xf32>
    %9 = arith.mulf %8, %5 : vector<128x256xf32>
    %10 = arith.mulf %5, %5 : vector<128x256xf32>
    %11 = arith.mulf %10, %5 : vector<128x256xf32>
    %cst_8 = arith.constant 4.471500e-02 : f32
    %12 = vector.broadcast %cst_8 : f32 to vector<128x256xf32>
    %13 = arith.mulf %12, %11 : vector<128x256xf32>
    %14 = arith.addf %5, %13 : vector<128x256xf32>
    %cst_9 = arith.constant 0.797884583 : f32
    %15 = vector.broadcast %cst_9 : f32 to vector<128x256xf32>
    %16 = arith.mulf %15, %14 : vector<128x256xf32>
    %17 = math.tanh %16 : vector<128x256xf32>
    %cst_10 = arith.constant 1.000000e+00 : f32
    %18 = vector.broadcast %cst_10 : f32 to vector<128x256xf32>
    %19 = arith.addf %18, %17 : vector<128x256xf32>
    %20 = arith.mulf %9, %19 : vector<128x256xf32>
    %c0_11 = arith.constant 0 : index
    %c0_12 = arith.constant 0 : index
    %21 = vector.load %arg7[%c0_11, %c0_12] : memref<128x256xf32, #tpu.memory_space<vmem>>, vector<128x256xf32>
    %22 = arith.mulf %20, %7 : vector<128x256xf32>
    %23 = arith.truncf %22 : vector<128x256xf32> to vector<128x256xbf16>
    %c0_13 = arith.constant 0 : index
    %c0_14 = arith.constant 0 : index
    %24 = vector.load %arg5[%c0_13, %c0_14] : memref<256x256xbf16, #tpu.memory_space<vmem>>, vector<256x256xbf16>
    %cst_15 = arith.constant dense<0.000000e+00> : vector<128x256xf32>
    %25 = tpu.matmul %23, %24, %cst_15 {dimension_numbers = #tpu.dot_dimension_numbers<[1], [0], [0], [1], [0, 0, 1, 1], [], []>} : vector<128x256xbf16>, vector<256x256xbf16>, vector<128x256xf32> -> vector<128x256xf32>
    %26 = arith.addf %21, %25 : vector<128x256xf32>
    %c0_16 = arith.constant 0 : index
    %c0_17 = arith.constant 0 : index
    %27 = vector.load %arg7[%c0_16, %c0_17] : memref<128x256xf32, #tpu.memory_space<vmem>>, vector<128x256xf32>
    tpu.vector_store %arg7[%c0_16, %c0_17], %26 {strides = array<i32>} : memref<128x256xf32, #tpu.memory_space<vmem>>, vector<128x256xf32>,
    return
  }
  func.func @transform_0(%arg0: i32, %arg1: i32) -> (i32, i32) {
    %c0_i32 = arith.constant 0 : i32
    %c0_i32_0 = arith.constant 0 : i32
    return %arg0, %c0_i32 : i32, i32
  }
  func.func @transform_1(%arg0: i32, %arg1: i32) -> (i32, i32) {
    %c0_i32 = arith.constant 0 : i32
    %c0_i32_0 = arith.constant 0 : i32
    return %c0_i32, %arg1 : i32, i32
  }
  func.func @transform_2(%arg0: i32, %arg1: i32) -> (i32, i32) {
    %c0_i32 = arith.constant 0 : i32
    %c0_i32_0 = arith.constant 0 : i32
    return %c0_i32, %arg1 : i32, i32
  }
  func.func @transform_3(%arg0: i32, %arg1: i32) -> (i32, i32) {
    %c0_i32 = arith.constant 0 : i32
    %c0_i32_0 = arith.constant 0 : i32
    return %arg1, %c0_i32 : i32, i32
  }
  func.func @transform_4(%arg0: i32, %arg1: i32) -> (i32, i32) {
    %c0_i32 = arith.constant 0 : i32
    %c0_i32_0 = arith.constant 0 : i32
    return %arg0, %c0_i32 : i32, i32
  }
  func.func @transform_5(%arg0: i32, %arg1: i32) -> (i32, i32) {
    %c0_i32 = arith.constant 0 : i32
    %c0_i32_0 = arith.constant 0 : i32
    return %arg0, %c0_i32 : i32, i32
  }
}

module attributes {stable_mosaic.version = 11 : i64} {
  func.func @_flash_attn_kernel(%arg0: i32, %arg1: i32, %arg2: i32, %arg3: memref<128x128xbf16, #tpu.memory_space<vmem>>, %arg4: memref<128x128xbf16, #tpu.memory_space<vmem>>, %arg5: memref<128x128xbf16, #tpu.memory_space<vmem>>, %arg6: memref<2x128x128xbf16, #tpu.memory_space<vmem>>, %arg7: memref<1x128xf32, #tpu.memory_space<vmem>>, %arg8: memref<128x128xbf16, #tpu.memory_space<vmem>>, %arg9: memref<2x128x1xf32, #tpu.memory_space<vmem>>, %arg10: memref<2x128x1xf32, #tpu.memory_space<vmem>>, %arg11: memref<2x128x64xf32, #tpu.memory_space<vmem>>) attributes {dimension_semantics = [#tpu.dimension_semantics<parallel>, #tpu.dimension_semantics<parallel>, #tpu.dimension_semantics<arbitrary>], iteration_bounds = array<i64: 2, 2, 2>, scalar_prefetch = 0 : i64, scratch_operands = 3 : i64, tpu.core_type = #tpu.core_type<tc>, window_params = [{transform_indices = @transform_0, window_bounds = array<i64: 128, 128>}, {transform_indices = @transform_1, window_bounds = array<i64: 128, 128>}, {transform_indices = @transform_2, window_bounds = array<i64: 128, 128>}, {transform_indices = @transform_3, window_bounds = array<i64: 2, 128, 128>}, {transform_indices = @transform_4, window_bounds = array<i64: 1, 128>}, {transform_indices = @transform_5, window_bounds = array<i64: 128, 128>}]} {
    %c0_i32 = arith.constant 0 : i32
    %0 = arith.cmpi eq, %arg2, %c0_i32 : i32
    %1 = arith.extui %0 : i1 to i32
    %c0_i32_0 = arith.constant 0 : i32
    %2 = arith.cmpi ne, %1, %c0_i32_0 : i32
    scf.if %2 {
      %cst_62 = arith.constant 0xFF800000 : f32
      %91 = vector.broadcast %cst_62 : f32 to vector<2x128x1xf32>
      %c0_63 = arith.constant 0 : index
      %c0_64 = arith.constant 0 : index
      %c0_65 = arith.constant 0 : index
      %92 = vector.load %arg9[%c0_63, %c0_64, %c0_65] : memref<2x128x1xf32, #tpu.memory_space<vmem>>, vector<2x128x1xf32>
      tpu.vector_store %arg9[%c0_63, %c0_64, %c0_65], %91 {strides = array<i32>} : memref<2x128x1xf32, #tpu.memory_space<vmem>>, vector<2x128x1xf32>,
      %cst_66 = arith.constant 0.000000e+00 : f32
      %93 = vector.broadcast %cst_66 : f32 to vector<2x128x1xf32>
      %c0_67 = arith.constant 0 : index
      %c0_68 = arith.constant 0 : index
      %c0_69 = arith.constant 0 : index
      %94 = vector.load %arg10[%c0_67, %c0_68, %c0_69] : memref<2x128x1xf32, #tpu.memory_space<vmem>>, vector<2x128x1xf32>
      tpu.vector_store %arg10[%c0_67, %c0_68, %c0_69], %93 {strides = array<i32>} : memref<2x128x1xf32, #tpu.memory_space<vmem>>, vector<2x128x1xf32>,
      %cst_70 = arith.constant 0.000000e+00 : f32
      %95 = vector.broadcast %cst_70 : f32 to vector<2x128x64xf32>
      %c0_71 = arith.constant 0 : index
      %c0_72 = arith.constant 0 : index
      %c0_73 = arith.constant 0 : index
      %96 = vector.load %arg11[%c0_71, %c0_72, %c0_73] : memref<2x128x64xf32, #tpu.memory_space<vmem>>, vector<2x128x64xf32>
      tpu.vector_store %arg11[%c0_71, %c0_72, %c0_73], %95 {strides = array<i32>} : memref<2x128x64xf32, #tpu.memory_space<vmem>>, vector<2x128x64xf32>,
    } else {
    }
    %c0 = arith.constant 0 : index
    %c0_1 = arith.constant 0 : index
    %3 = vector.load %arg7[%c0, %c0_1] : memref<1x128xf32, #tpu.memory_space<vmem>>, vector<1x128xf32>
    %c0_2 = arith.constant 0 : index
    %c0_3 = arith.constant 0 : index
    %4 = vector.load %arg3[%c0_2, %c0_3] : memref<128x128xbf16, #tpu.memory_space<vmem>>, vector<128x64xbf16>
    %c0_4 = arith.constant 0 : index
    %c0_5 = arith.constant 0 : index
    %5 = vector.load %arg4[%c0_4, %c0_5] : memref<128x128xbf16, #tpu.memory_space<vmem>>, vector<128x64xbf16>
    %c0_6 = arith.constant 0 : index
    %c0_7 = arith.constant 0 : index
    %6 = vector.load %arg5[%c0_6, %c0_7] : memref<128x128xbf16, #tpu.memory_space<vmem>>, vector<128x64xbf16>
    %cst = arith.constant dense<0.000000e+00> : vector<128x128xf32>
    %7 = tpu.matmul %4, %5, %cst {dimension_numbers = #tpu.dot_dimension_numbers<[1], [1], [0], [0], [0, 0, 1, 0], [], []>} : vector<128x64xbf16>, vector<128x64xbf16>, vector<128x128xf32> -> vector<128x128xf32>
    %c0_8 = arith.constant 0 : index
    %c0_9 = arith.constant 0 : index
    %c0_10 = arith.constant 0 : index
    %8 = vector.load %arg6[%c0_8, %c0_9, %c0_10] : memref<2x128x128xbf16, #tpu.memory_space<vmem>>, vector<1x128x128xbf16>
    %9 = vector.shape_cast %8 : vector<1x128x128xbf16> to vector<128x128xbf16>
    %10 = arith.extf %9 : vector<128x128xbf16> to vector<128x128xf32>
    %11 = arith.addf %7, %10 : vector<128x128xf32>
    %12 = vector.broadcast %3 : vector<1x128xf32> to vector<128x128xf32>
    %13 = arith.addf %11, %12 : vector<128x128xf32>
    %c0_11 = arith.constant 0 : index
    %c0_12 = arith.constant 0 : index
    %c0_13 = arith.constant 0 : index
    %14 = vector.load %arg9[%c0_11, %c0_12, %c0_13] : memref<2x128x1xf32, #tpu.memory_space<vmem>>, vector<1x128x1xf32>
    %15 = vector.shape_cast %14 : vector<1x128x1xf32> to vector<128x1xf32>
    %cst_14 = arith.constant dense<0xFF800000> : vector<128xf32>
    %16 = vector.multi_reduction <maximumf>, %13, %cst_14 [1] : vector<128x128xf32> to vector<128xf32>
    %17 = vector.shape_cast %16 : vector<128xf32> to vector<128x1xf32>
    %18 = arith.maximumf %15, %17 : vector<128x1xf32>
    %19 = arith.subf %15, %18 : vector<128x1xf32>
    %20 = math.exp %19 : vector<128x1xf32>
    %21 = vector.broadcast %18 : vector<128x1xf32> to vector<128x128xf32>
    %22 = arith.subf %13, %21 : vector<128x128xf32>
    %23 = math.exp %22 : vector<128x128xf32>
    %c0_15 = arith.constant 0 : index
    %c0_16 = arith.constant 0 : index
    %c0_17 = arith.constant 0 : index
    %24 = vector.load %arg10[%c0_15, %c0_16, %c0_17] : memref<2x128x1xf32, #tpu.memory_space<vmem>>, vector<1x128x1xf32>
    %25 = vector.shape_cast %24 : vector<1x128x1xf32> to vector<128x1xf32>
    %26 = arith.mulf %20, %25 : vector<128x1xf32>
    %cst_18 = arith.constant dense<0.000000e+00> : vector<128xf32>
    %27 = vector.multi_reduction <add>, %23, %cst_18 [1] : vector<128x128xf32> to vector<128xf32>
    %28 = vector.shape_cast %27 : vector<128xf32> to vector<128x1xf32>
    %29 = arith.addf %26, %28 : vector<128x1xf32>
    %c0_19 = arith.constant 0 : index
    %c0_20 = arith.constant 0 : index
    %c0_21 = arith.constant 0 : index
    %30 = vector.load %arg10[%c0_19, %c0_20, %c0_21] : memref<2x128x1xf32, #tpu.memory_space<vmem>>, vector<1x128x1xf32>
    %31 = vector.shape_cast %30 : vector<1x128x1xf32> to vector<128x1xf32>
    %32 = vector.shape_cast %29 : vector<128x1xf32> to vector<1x128x1xf32>
    tpu.vector_store %arg10[%c0_19, %c0_20, %c0_21], %32 {strides = array<i32>} : memref<2x128x1xf32, #tpu.memory_space<vmem>>, vector<1x128x1xf32>,
    %c0_22 = arith.constant 0 : index
    %c0_23 = arith.constant 0 : index
    %c0_24 = arith.constant 0 : index
    %33 = vector.load %arg11[%c0_22, %c0_23, %c0_24] : memref<2x128x64xf32, #tpu.memory_space<vmem>>, vector<1x128x64xf32>
    %34 = vector.shape_cast %33 : vector<1x128x64xf32> to vector<128x64xf32>
    %35 = vector.broadcast %20 : vector<128x1xf32> to vector<128x64xf32>
    %36 = arith.mulf %35, %34 : vector<128x64xf32>
    %37 = arith.truncf %23 : vector<128x128xf32> to vector<128x128xbf16>
    %cst_25 = arith.constant dense<0.000000e+00> : vector<128x64xf32>
    %38 = tpu.matmul %37, %6, %cst_25 {dimension_numbers = #tpu.dot_dimension_numbers<[1], [0], [0], [1], [0, 0, 1, 1], [], []>} : vector<128x128xbf16>, vector<128x64xbf16>, vector<128x64xf32> -> vector<128x64xf32>
    %39 = arith.addf %36, %38 : vector<128x64xf32>
    %c0_26 = arith.constant 0 : index
    %c0_27 = arith.constant 0 : index
    %c0_28 = arith.constant 0 : index
    %40 = vector.load %arg11[%c0_26, %c0_27, %c0_28] : memref<2x128x64xf32, #tpu.memory_space<vmem>>, vector<1x128x64xf32>
    %41 = vector.shape_cast %40 : vector<1x128x64xf32> to vector<128x64xf32>
    %42 = vector.shape_cast %39 : vector<128x64xf32> to vector<1x128x64xf32>
    tpu.vector_store %arg11[%c0_26, %c0_27, %c0_28], %42 {strides = array<i32>} : memref<2x128x64xf32, #tpu.memory_space<vmem>>, vector<1x128x64xf32>,
    %c0_29 = arith.constant 0 : index
    %c0_30 = arith.constant 0 : index
    %c0_31 = arith.constant 0 : index
    %43 = vector.load %arg9[%c0_29, %c0_30, %c0_31] : memref<2x128x1xf32, #tpu.memory_space<vmem>>, vector<1x128x1xf32>
    %44 = vector.shape_cast %43 : vector<1x128x1xf32> to vector<128x1xf32>
    %45 = vector.shape_cast %18 : vector<128x1xf32> to vector<1x128x1xf32>
    tpu.vector_store %arg9[%c0_29, %c0_30, %c0_31], %45 {strides = array<i32>} : memref<2x128x1xf32, #tpu.memory_space<vmem>>, vector<1x128x1xf32>,
    %c0_32 = arith.constant 0 : index
    %c64 = arith.constant 64 : index
    %46 = vector.load %arg3[%c0_32, %c64] : memref<128x128xbf16, #tpu.memory_space<vmem>>, vector<128x64xbf16>
    %c0_33 = arith.constant 0 : index
    %c64_34 = arith.constant 64 : index
    %47 = vector.load %arg4[%c0_33, %c64_34] : memref<128x128xbf16, #tpu.memory_space<vmem>>, vector<128x64xbf16>
    %c0_35 = arith.constant 0 : index
    %c64_36 = arith.constant 64 : index
    %48 = vector.load %arg5[%c0_35, %c64_36] : memref<128x128xbf16, #tpu.memory_space<vmem>>, vector<128x64xbf16>
    %cst_37 = arith.constant dense<0.000000e+00> : vector<128x128xf32>
    %49 = tpu.matmul %46, %47, %cst_37 {dimension_numbers = #tpu.dot_dimension_numbers<[1], [1], [0], [0], [0, 0, 1, 0], [], []>} : vector<128x64xbf16>, vector<128x64xbf16>, vector<128x128xf32> -> vector<128x128xf32>
    %c1 = arith.constant 1 : index
    %c0_38 = arith.constant 0 : index
    %c0_39 = arith.constant 0 : index
    %50 = vector.load %arg6[%c1, %c0_38, %c0_39] : memref<2x128x128xbf16, #tpu.memory_space<vmem>>, vector<1x128x128xbf16>
    %51 = vector.shape_cast %50 : vector<1x128x128xbf16> to vector<128x128xbf16>
    %52 = arith.extf %51 : vector<128x128xbf16> to vector<128x128xf32>
    %53 = arith.addf %49, %52 : vector<128x128xf32>
    %54 = vector.broadcast %3 : vector<1x128xf32> to vector<128x128xf32>
    %55 = arith.addf %53, %54 : vector<128x128xf32>
    %c1_40 = arith.constant 1 : index
    %c0_41 = arith.constant 0 : index
    %c0_42 = arith.constant 0 : index
    %56 = vector.load %arg9[%c1_40, %c0_41, %c0_42] : memref<2x128x1xf32, #tpu.memory_space<vmem>>, vector<1x128x1xf32>
    %57 = vector.shape_cast %56 : vector<1x128x1xf32> to vector<128x1xf32>
    %cst_43 = arith.constant dense<0xFF800000> : vector<128xf32>
    %58 = vector.multi_reduction <maximumf>, %55, %cst_43 [1] : vector<128x128xf32> to vector<128xf32>
    %59 = vector.shape_cast %58 : vector<128xf32> to vector<128x1xf32>
    %60 = arith.maximumf %57, %59 : vector<128x1xf32>
    %61 = arith.subf %57, %60 : vector<128x1xf32>
    %62 = math.exp %61 : vector<128x1xf32>
    %63 = vector.broadcast %60 : vector<128x1xf32> to vector<128x128xf32>
    %64 = arith.subf %55, %63 : vector<128x128xf32>
    %65 = math.exp %64 : vector<128x128xf32>
    %c1_44 = arith.constant 1 : index
    %c0_45 = arith.constant 0 : index
    %c0_46 = arith.constant 0 : index
    %66 = vector.load %arg10[%c1_44, %c0_45, %c0_46] : memref<2x128x1xf32, #tpu.memory_space<vmem>>, vector<1x128x1xf32>
    %67 = vector.shape_cast %66 : vector<1x128x1xf32> to vector<128x1xf32>
    %68 = arith.mulf %62, %67 : vector<128x1xf32>
    %cst_47 = arith.constant dense<0.000000e+00> : vector<128xf32>
    %69 = vector.multi_reduction <add>, %65, %cst_47 [1] : vector<128x128xf32> to vector<128xf32>
    %70 = vector.shape_cast %69 : vector<128xf32> to vector<128x1xf32>
    %71 = arith.addf %68, %70 : vector<128x1xf32>
    %c1_48 = arith.constant 1 : index
    %c0_49 = arith.constant 0 : index
    %c0_50 = arith.constant 0 : index
    %72 = vector.load %arg10[%c1_48, %c0_49, %c0_50] : memref<2x128x1xf32, #tpu.memory_space<vmem>>, vector<1x128x1xf32>
    %73 = vector.shape_cast %72 : vector<1x128x1xf32> to vector<128x1xf32>
    %74 = vector.shape_cast %71 : vector<128x1xf32> to vector<1x128x1xf32>
    tpu.vector_store %arg10[%c1_48, %c0_49, %c0_50], %74 {strides = array<i32>} : memref<2x128x1xf32, #tpu.memory_space<vmem>>, vector<1x128x1xf32>,
    %c1_51 = arith.constant 1 : index
    %c0_52 = arith.constant 0 : index
    %c0_53 = arith.constant 0 : index
    %75 = vector.load %arg11[%c1_51, %c0_52, %c0_53] : memref<2x128x64xf32, #tpu.memory_space<vmem>>, vector<1x128x64xf32>
    %76 = vector.shape_cast %75 : vector<1x128x64xf32> to vector<128x64xf32>
    %77 = vector.broadcast %62 : vector<128x1xf32> to vector<128x64xf32>
    %78 = arith.mulf %77, %76 : vector<128x64xf32>
    %79 = arith.truncf %65 : vector<128x128xf32> to vector<128x128xbf16>
    %cst_54 = arith.constant dense<0.000000e+00> : vector<128x64xf32>
    %80 = tpu.matmul %79, %48, %cst_54 {dimension_numbers = #tpu.dot_dimension_numbers<[1], [0], [0], [1], [0, 0, 1, 1], [], []>} : vector<128x128xbf16>, vector<128x64xbf16>, vector<128x64xf32> -> vector<128x64xf32>
    %81 = arith.addf %78, %80 : vector<128x64xf32>
    %c1_55 = arith.constant 1 : index
    %c0_56 = arith.constant 0 : index
    %c0_57 = arith.constant 0 : index
    %82 = vector.load %arg11[%c1_55, %c0_56, %c0_57] : memref<2x128x64xf32, #tpu.memory_space<vmem>>, vector<1x128x64xf32>
    %83 = vector.shape_cast %82 : vector<1x128x64xf32> to vector<128x64xf32>
    %84 = vector.shape_cast %81 : vector<128x64xf32> to vector<1x128x64xf32>
    tpu.vector_store %arg11[%c1_55, %c0_56, %c0_57], %84 {strides = array<i32>} : memref<2x128x64xf32, #tpu.memory_space<vmem>>, vector<1x128x64xf32>,
    %c1_58 = arith.constant 1 : index
    %c0_59 = arith.constant 0 : index
    %c0_60 = arith.constant 0 : index
    %85 = vector.load %arg9[%c1_58, %c0_59, %c0_60] : memref<2x128x1xf32, #tpu.memory_space<vmem>>, vector<1x128x1xf32>
    %86 = vector.shape_cast %85 : vector<1x128x1xf32> to vector<128x1xf32>
    %87 = vector.shape_cast %60 : vector<128x1xf32> to vector<1x128x1xf32>
    tpu.vector_store %arg9[%c1_58, %c0_59, %c0_60], %87 {strides = array<i32>} : memref<2x128x1xf32, #tpu.memory_space<vmem>>, vector<1x128x1xf32>,
    %c1_i32 = arith.constant 1 : i32
    %88 = arith.cmpi eq, %arg2, %c1_i32 : i32
    %89 = arith.extui %88 : i1 to i32
    %c0_i32_61 = arith.constant 0 : i32
    %90 = arith.cmpi ne, %89, %c0_i32_61 : i32
    scf.if %90 {
      %c0_62 = arith.constant 0 : index
      %c0_63 = arith.constant 0 : index
      %c0_64 = arith.constant 0 : index
      %91 = vector.load %arg10[%c0_62, %c0_63, %c0_64] : memref<2x128x1xf32, #tpu.memory_space<vmem>>, vector<1x128x1xf32>
      %92 = vector.shape_cast %91 : vector<1x128x1xf32> to vector<128x1xf32>
      %93 = tpu.reciprocal %92 {approx = true} : vector<128x1xf32> -> vector<128x1xf32>
      %c0_65 = arith.constant 0 : index
      %c0_66 = arith.constant 0 : index
      %c0_67 = arith.constant 0 : index
      %94 = vector.load %arg11[%c0_65, %c0_66, %c0_67] : memref<2x128x64xf32, #tpu.memory_space<vmem>>, vector<1x128x64xf32>
      %95 = vector.shape_cast %94 : vector<1x128x64xf32> to vector<128x64xf32>
      %96 = vector.broadcast %93 : vector<128x1xf32> to vector<128x64xf32>
      %97 = arith.mulf %95, %96 : vector<128x64xf32>
      %98 = arith.truncf %97 : vector<128x64xf32> to vector<128x64xbf16>
      %c1_68 = arith.constant 1 : index
      %c0_69 = arith.constant 0 : index
      %c0_70 = arith.constant 0 : index
      %99 = vector.load %arg10[%c1_68, %c0_69, %c0_70] : memref<2x128x1xf32, #tpu.memory_space<vmem>>, vector<1x128x1xf32>
      %100 = vector.shape_cast %99 : vector<1x128x1xf32> to vector<128x1xf32>
      %101 = tpu.reciprocal %100 {approx = true} : vector<128x1xf32> -> vector<128x1xf32>
      %c1_71 = arith.constant 1 : index
      %c0_72 = arith.constant 0 : index
      %c0_73 = arith.constant 0 : index
      %102 = vector.load %arg11[%c1_71, %c0_72, %c0_73] : memref<2x128x64xf32, #tpu.memory_space<vmem>>, vector<1x128x64xf32>
      %103 = vector.shape_cast %102 : vector<1x128x64xf32> to vector<128x64xf32>
      %104 = vector.broadcast %101 : vector<128x1xf32> to vector<128x64xf32>
      %105 = arith.mulf %103, %104 : vector<128x64xf32>
      %106 = arith.truncf %105 : vector<128x64xf32> to vector<128x64xbf16>
      %107 = tpu.concatenate %98, %106 in 1 : vector<128x64xbf16>, vector<128x64xbf16> -> vector<128x128xbf16>
      %c0_74 = arith.constant 0 : index
      %c0_75 = arith.constant 0 : index
      %108 = vector.load %arg8[%c0_74, %c0_75] : memref<128x128xbf16, #tpu.memory_space<vmem>>, vector<128x128xbf16>
      tpu.vector_store %arg8[%c0_74, %c0_75], %107 {strides = array<i32>} : memref<128x128xbf16, #tpu.memory_space<vmem>>, vector<128x128xbf16>,
    } else {
    }
    return
  }
  func.func @transform_0(%arg0: i32, %arg1: i32, %arg2: i32) -> (i32, i32) {
    %c0_i32 = arith.constant 0 : i32
    return %arg1, %arg0 : i32, i32
  }
  func.func @transform_1(%arg0: i32, %arg1: i32, %arg2: i32) -> (i32, i32) {
    %c2_i32 = arith.constant 2 : i32
    %0 = arith.addi %arg0, %c2_i32 : i32
    %c0_i32 = arith.constant 0 : i32
    return %arg2, %0 : i32, i32
  }
  func.func @transform_2(%arg0: i32, %arg1: i32, %arg2: i32) -> (i32, i32) {
    %c4_i32 = arith.constant 4 : i32
    %0 = arith.addi %arg0, %c4_i32 : i32
    %c0_i32 = arith.constant 0 : i32
    return %arg2, %0 : i32, i32
  }
  func.func @transform_3(%arg0: i32, %arg1: i32, %arg2: i32) -> (i32, i32, i32) {
    %c0_i32 = arith.constant 0 : i32
    return %arg0, %arg1, %arg2 : i32, i32, i32
  }
  func.func @transform_4(%arg0: i32, %arg1: i32, %arg2: i32) -> (i32, i32) {
    %c0_i32 = arith.constant 0 : i32
    %c0_i32_0 = arith.constant 0 : i32
    return %c0_i32, %arg2 : i32, i32
  }
  func.func @transform_5(%arg0: i32, %arg1: i32, %arg2: i32) -> (i32, i32) {
    %c0_i32 = arith.constant 0 : i32
    return %arg1, %arg0 : i32, i32
  }
}

module attributes {stable_mosaic.version = 11 : i64} {
  func.func @_rmsnorm_qkv_kernel(%arg0: i32, %arg1: i32, %arg2: memref<128x256xf32, #tpu.memory_space<vmem>>, %arg3: memref<1x256xf32, #tpu.memory_space<vmem>>, %arg4: memref<256x256xbf16, #tpu.memory_space<vmem>>, %arg5: memref<128x256xbf16, #tpu.memory_space<vmem>>) attributes {dimension_semantics = [#tpu.dimension_semantics<parallel>, #tpu.dimension_semantics<parallel>], iteration_bounds = array<i64: 2, 3>, scalar_prefetch = 0 : i64, scratch_operands = 0 : i64, tpu.core_type = #tpu.core_type<tc>, window_params = [{transform_indices = @transform_0, window_bounds = array<i64: 128, 256>}, {pipeline_mode = #tpu.pipeline_mode<synchronous>, transform_indices = @transform_1, window_bounds = array<i64: 1, 256>}, {transform_indices = @transform_2, window_bounds = array<i64: 256, 256>}, {transform_indices = @transform_3, window_bounds = array<i64: 128, 256>}]} {
    %c0 = arith.constant 0 : index
    %c0_0 = arith.constant 0 : index
    %0 = vector.load %arg2[%c0, %c0_0] : memref<128x256xf32, #tpu.memory_space<vmem>>, vector<128x256xf32>
    %1 = arith.mulf %0, %0 : vector<128x256xf32>
    %cst = arith.constant dense<0.000000e+00> : vector<128xf32>
    %2 = vector.multi_reduction <add>, %1, %cst [1] : vector<128x256xf32> to vector<128xf32>
    %3 = vector.shape_cast %2 : vector<128xf32> to vector<128x1xf32>
    %cst_1 = arith.constant 2.560000e+02 : f32
    %4 = vector.broadcast %cst_1 : f32 to vector<128x1xf32>
    %5 = arith.divf %3, %4 : vector<128x1xf32>
    %cst_2 = arith.constant 9.99999997E-7 : f32
    %6 = vector.broadcast %cst_2 : f32 to vector<128x1xf32>
    %7 = arith.addf %5, %6 : vector<128x1xf32>
    %8 = math.rsqrt %7 : vector<128x1xf32>
    %9 = vector.broadcast %8 : vector<128x1xf32> to vector<128x256xf32>
    %10 = arith.mulf %0, %9 : vector<128x256xf32>
    %c0_3 = arith.constant 0 : index
    %c0_4 = arith.constant 0 : index
    %11 = vector.load %arg3[%c0_3, %c0_4] : memref<1x256xf32, #tpu.memory_space<vmem>>, vector<1x256xf32>
    %12 = vector.broadcast %11 : vector<1x256xf32> to vector<128x256xf32>
    %13 = arith.mulf %10, %12 : vector<128x256xf32>
    %14 = arith.truncf %13 : vector<128x256xf32> to vector<128x256xbf16>
    %c0_5 = arith.constant 0 : index
    %c0_6 = arith.constant 0 : index
    %15 = vector.load %arg4[%c0_5, %c0_6] : memref<256x256xbf16, #tpu.memory_space<vmem>>, vector<256x256xbf16>
    %cst_7 = arith.constant dense<0.000000e+00> : vector<128x256xf32>
    %16 = tpu.matmul %14, %15, %cst_7 {dimension_numbers = #tpu.dot_dimension_numbers<[1], [0], [0], [1], [0, 0, 1, 1], [], []>} : vector<128x256xbf16>, vector<256x256xbf16>, vector<128x256xf32> -> vector<128x256xf32>
    %17 = arith.truncf %16 : vector<128x256xf32> to vector<128x256xbf16>
    %c0_8 = arith.constant 0 : index
    %c0_9 = arith.constant 0 : index
    %18 = vector.load %arg5[%c0_8, %c0_9] : memref<128x256xbf16, #tpu.memory_space<vmem>>, vector<128x256xbf16>
    tpu.vector_store %arg5[%c0_8, %c0_9], %17 {strides = array<i32>} : memref<128x256xbf16, #tpu.memory_space<vmem>>, vector<128x256xbf16>,
    return
  }
  func.func @transform_0(%arg0: i32, %arg1: i32) -> (i32, i32) {
    %c0_i32 = arith.constant 0 : i32
    %c0_i32_0 = arith.constant 0 : i32
    return %arg0, %c0_i32 : i32, i32
  }
  func.func @transform_1(%arg0: i32, %arg1: i32) -> (i32, i32) {
    %c0_i32 = arith.constant 0 : i32
    %c0_i32_0 = arith.constant 0 : i32
    %c0_i32_1 = arith.constant 0 : i32
    return %c0_i32, %c0_i32_0 : i32, i32
  }
  func.func @transform_2(%arg0: i32, %arg1: i32) -> (i32, i32) {
    %c0_i32 = arith.constant 0 : i32
    %c0_i32_0 = arith.constant 0 : i32
    return %c0_i32, %arg1 : i32, i32
  }
  func.func @transform_3(%arg0: i32, %arg1: i32) -> (i32, i32) {
    %c0_i32 = arith.constant 0 : i32
    return %arg0, %arg1 : i32, i32
  }
}

</mosaic_0001>

<llo_original>
// kernel: t5_block_next.6
$region0: #{t5_block_next.6}
  #allocation0 [shape = 'u32[]', space=smem, size = 0x4, offset = 0x4, fixed_abs, tag = 'smem constant byte address 0x4 - core index']
  #allocation1 [shape = 'u32[144,128]{1,0:T(1,128)}', space=vmem, size = 0x12000, scoped, tag = 'internal scratch']
  %s0 = inlined_call_operand.vmem [shape: bf16[256,256], index: 0, kind: input, shape index: {}]
  %s1 = inlined_call_operand.vmem [shape: bf16[256,256], index: 1, kind: input, shape index: {}]
  %s2 = inlined_call_operand.vmem [shape: f32[256,256], index: 2, kind: input, shape index: {}]
  %s3 = inlined_call_operand.vmem [shape: f32[1,256], index: 3, kind: input, shape index: {}]
  %s4 = inlined_call_operand.vmem [shape: f32[256,256], index: 4, kind: output, shape index: {0}]
  %s5 = inlined_call_operand.vmem [shape: bf16[256,256], index: 5, kind: output, shape index: {1}]
  %6 = xla_tuple %s4, %s5
  %s7 = sld [smem:[#allocation0]]
  $region57: #{t5_block_next.6} parent=0
    _
  %s9 = ssub.s32 1, %s7
  %s10 = scalar_select 0, %s9, %s7
  loop: start=0, step=1, limit=4
  $region2: #{t5_block_next.6} parent=0 // loop_pre_header
    _
  $region3: #{t5_block_next.6} parent=0 // loop_header
    %s12 = sphi 0, %s16
    %p13 = scmp.ge.s32.totalorder %s12, 4
    %s22 = sphi 0, %s24
    %s25 = sphi 0, %s22
    %s26 = sphi 0, %s25
    %s42 = sphi 0, %s26
    %s46 = sphi 0, %s46
    %s48 = sphi 0, %s46
    %s49 = sphi 0, %s48
    %s63 = sphi 0, %s49
    %s69 = sphi 0, %s71
    %s72 = sphi 0, %s69
    %s73 = sphi 0, %s72
    %s89 = sphi 0, %s73
    %s93 = sphi 0, %s93
    %s95 = sphi 0, %s93
    %s96 = sphi 0, %s95
    %s110 = sphi 0, %s96
    %s116 = sphi 0, %s118
    %s119 = sphi 0, %s116
    %s120 = sphi 0, %s119
    %s136 = sphi 0, %s120
    %s142 = sphi 0, %s144
    %s145 = sphi 0, %s142
    %s146 = sphi 0, %s145
    %s162 = sphi 0, %s146
  $region4: #{t5_block_next.6} parent=0 // loop_header_branch
    %15 = sbr.rel (%p13) target = $region8
  $region5: #{t5_block_next.6} parent=0 // loop_body
    %s17 = ssub.s32 %s12, 1
    %s18 = ssub.s32 %s12, 2
    %s19 = sadd.s32 %s12, 1
    %s20 = ssub.s32 %s12, %s19
    %p21 = scmp.eq.s32.totalorder %s20, 0
    %s23 = sadd.s32 %s22, 1
    %s24 = scalar_select %p21, %s22, %s23
    %p27 = pneg %p21
    %p28 = scmp.eq.s32.totalorder %s12, 1
    %p29 = por %p27, %p28
    %p30 = scmp.ne.s32.totalorder %s22, %s25
    %p31 = scmp.eq.s32.totalorder %s12, 0
    %p32 = por %p30, %p31
    %p33 = scmp.ne.s32.totalorder %s22, %s25
    %p34 = scmp.eq.s32.totalorder %s17, 1
    %p35 = por %p33, %p34
    %p36 = scmp.ne.s32.totalorder %s25, %s26
    %p37 = scmp.eq.s32.totalorder %s17, 0
    %p38 = por %p36, %p37
    %p39 = scmp.ne.s32.totalorder %s25, %s26
    %p40 = scmp.eq.s32.totalorder %s18, 1
    %p41 = por %p39, %p40
    %p43 = scmp.ne.s32.totalorder %s26, %s42
    %p44 = scmp.eq.s32.totalorder %s18, 0
    %p45 = por %p43, %p44
    %s47 = sadd.s32 %s46, 1
    %p50 = scmp.eq.s32.totalorder %s12, 1
    %p51 = scmp.ne.s32.totalorder %s46, %s48
    %p52 = scmp.eq.s32.totalorder %s12, 0
    %p53 = por %p51, %p52
    %p54 = scmp.ne.s32.totalorder %s46, %s48
    %p55 = scmp.eq.s32.totalorder %s17, 1
    %p56 = por %p54, %p55
    %p57 = scmp.ne.s32.totalorder %s48, %s49
    %p58 = scmp.eq.s32.totalorder %s17, 0
    %p59 = por %p57, %p58
    %p60 = scmp.ne.s32.totalorder %s48, %s49
    %p61 = scmp.eq.s32.totalorder %s18, 1
    %p62 = por %p60, %p61
    %p64 = scmp.ne.s32.totalorder %s49, %s63
    %p65 = scmp.eq.s32.totalorder %s18, 0
    %p66 = por %p64, %p65
    %s67 = ssub.s32 %s12, %s19
    %p68 = scmp.eq.s32.totalorder %s67, 0
    %s70 = sadd.s32 %s69, 1
    %s71 = scalar_select %p68, %s69, %s70
    %p74 = pneg %p68
    %p75 = scmp.eq.s32.totalorder %s12, 1
    %p76 = por %p74, %p75
    %p77 = scmp.ne.s32.totalorder %s69, %s72
    %p78 = scmp.eq.s32.totalorder %s12, 0
    %p79 = por %p77, %p78
    %p80 = scmp.ne.s32.totalorder %s69, %s72
    %p81 = scmp.eq.s32.totalorder %s17, 1
    %p82 = por %p80, %p81
    %p83 = scmp.ne.s32.totalorder %s72, %s73
    %p84 = scmp.eq.s32.totalorder %s17, 0
    %p85 = por %p83, %p84
    %p86 = scmp.ne.s32.totalorder %s72, %s73
    %p87 = scmp.eq.s32.totalorder %s18, 1
    %p88 = por %p86, %p87
    %p90 = scmp.ne.s32.totalorder %s73, %s89
    %p91 = scmp.eq.s32.totalorder %s18, 0
    %p92 = por %p90, %p91
    %s94 = sadd.s32 %s93, 1
    %p97 = scmp.eq.s32.totalorder %s12, 1
    %p98 = scmp.ne.s32.totalorder %s93, %s95
    %p99 = scmp.eq.s32.totalorder %s12, 0
    %p100 = por %p98, %p99
    %p101 = scmp.ne.s32.totalorder %s93, %s95
    %p102 = scmp.eq.s32.totalorder %s17, 1
    %p103 = por %p101, %p102
    %p104 = scmp.ne.s32.totalorder %s95, %s96
    %p105 = scmp.eq.s32.totalorder %s17, 0
    %p106 = por %p104, %p105
    %p107 = scmp.ne.s32.totalorder %s95, %s96
    %p108 = scmp.eq.s32.totalorder %s18, 1
    %p109 = por %p107, %p108
    %p111 = scmp.ne.s32.totalorder %s96, %s110
    %p112 = scmp.eq.s32.totalorder %s18, 0
    %p113 = por %p111, %p112
    %s114 = ssub.s32 %s12, %s19
    %p115 = scmp.eq.s32.totalorder %s114, 0
    %s117 = sadd.s32 %s116, 1
    %s118 = scalar_select %p115, %s116, %s117
    %p121 = pneg %p115
    %p122 = scmp.eq.s32.totalorder %s12, 1
    %p123 = por %p121, %p122
    %p124 = scmp.ne.s32.totalorder %s116, %s119
    %p125 = scmp.eq.s32.totalorder %s12, 0
    %p126 = por %p124, %p125
    %p127 = scmp.ne.s32.totalorder %s116, %s119
    %p128 = scmp.eq.s32.totalorder %s17, 1
    %p129 = por %p127, %p128
    %p130 = scmp.ne.s32.totalorder %s119, %s120
    %p131 = scmp.eq.s32.totalorder %s17, 0
    %p132 = por %p130, %p131
    %p133 = scmp.ne.s32.totalorder %s119, %s120
    %p134 = scmp.eq.s32.totalorder %s18, 1
    %p135 = por %p133, %p134
    %p137 = scmp.ne.s32.totalorder %s120, %s136
    %p138 = scmp.eq.s32.totalorder %s18, 0
    %p139 = por %p137, %p138
    %s140 = ssub.s32 %s12, %s19
    %p141 = scmp.eq.s32.totalorder %s140, 0
    %s143 = sadd.s32 %s142, 1
    %s144 = scalar_select %p141, %s142, %s143
    %p147 = pneg %p141
    %p148 = scmp.eq.s32.totalorder %s12, 1
    %p149 = por %p147, %p148
    %p150 = scmp.ne.s32.totalorder %s142, %s145
    %p151 = scmp.eq.s32.totalorder %s12, 0
    %p152 = por %p150, %p151
    %p153 = scmp.ne.s32.totalorder %s142, %s145
    %p154 = scmp.eq.s32.totalorder %s17, 1
    %p155 = por %p153, %p154
    %p156 = scmp.ne.s32.totalorder %s145, %s146
    %p157 = scmp.eq.s32.totalorder %s17, 0
    %p158 = por %p156, %p157
    %p159 = scmp.ne.s32.totalorder %s145, %s146
    %p160 = scmp.eq.s32.totalorder %s18, 1
    %p161 = por %p159, %p160
    %p163 = scmp.ne.s32.totalorder %s146, %s162
    %p164 = scmp.eq.s32.totalorder %s18, 0
    %p165 = por %p163, %p164
    %p166 = scmp.le.s32.totalorder 1, %s12
    %p167 = scmp.lt.s32.totalorder %s12, 3
    %p168 = pnand %p166, %p167
    %p169 = pneg %p168
    // Predicated region
    $region9: #{t5_block_next.6} parent=5 // pred_check
      _
    $region10: #{t5_block_next.6} parent=5 // pred_check_branch
      %171 = sbr.rel (%p168) target = $region12
    $region11: #{t5_block_next.6} parent=5 // pred_region
      %s172 = ssub.s32 %s12, 1
      // Predicated region
      $region13: #{t5_block_next.6} parent=11 // pred_check
        %p173 = pneg %p59
      $region14: #{t5_block_next.6} parent=11 // pred_check_branch
        %175 = sbr.rel (%p173) target = $region16
      $region15: #{t5_block_next.6} parent=11 // pred_region
        _
      $region16: #{t5_block_next.6} parent=11 // pred_fallthru
        _
      // Predicated region
      $region17: #{t5_block_next.6} parent=11 // pred_check
        %p176 = pneg %p106
      $region18: #{t5_block_next.6} parent=11 // pred_check_branch
        %178 = sbr.rel (%p176) target = $region20
      $region19: #{t5_block_next.6} parent=11 // pred_region
        _
      $region20: #{t5_block_next.6} parent=11 // pred_fallthru
        _
    $region12: #{t5_block_next.6} parent=5 // pred_fallthru
      _
    %p179 = scmp.lt.s32.totalorder %s12, 2
    // Predicated region
    $region21: #{t5_block_next.6} parent=5 // pred_check
      %p180 = pneg %p179
    $region22: #{t5_block_next.6} parent=5 // pred_check_branch
      %182 = sbr.rel (%p180) target = $region24
    $region23: #{t5_block_next.6} parent=5 // pred_region
      // Predicated region
      $region25: #{t5_block_next.6} parent=23 // pred_check
        %p183 = pneg %p32
      $region26: #{t5_block_next.6} parent=23 // pred_check_branch
        %185 = sbr.rel (%p183) target = $region28
      $region27: #{t5_block_next.6} parent=23 // pred_region
        %s186 = smul.u32 16, %s12
        %p187 = scmp.lt.s32.totalorder %s186, 31
        %s188 = scalar_select %p187, %s186, 31
        %s189 = smul.addr %s188, 2
        %s190 = smul.addr %s189, 4
        %s191 = scalar_lea.vmem %s0, %s190
        %s192 = smul.u32 16, %s12
      $region28: #{t5_block_next.6} parent=23 // pred_fallthru
        _
      // Predicated region
      $region29: #{t5_block_next.6} parent=23 // pred_check
        %p193 = pneg %p79
      $region30: #{t5_block_next.6} parent=23 // pred_check_branch
        %195 = sbr.rel (%p193) target = $region32
      $region31: #{t5_block_next.6} parent=23 // pred_region
        %s196 = smul.u32 16, %s12
        %p197 = scmp.lt.s32.totalorder %s196, 31
        %s198 = scalar_select %p197, %s196, 31
        %s199 = smul.addr %s198, 2
        %s200 = smul.addr %s199, 8
        %s201 = scalar_lea.vmem %s2, %s200
        %s202 = smul.u32 16, %s12
      $region32: #{t5_block_next.6} parent=23 // pred_fallthru
        _
    $region24: #{t5_block_next.6} parent=5 // pred_fallthru
      _
    %p203 = scmp.le.s32.totalorder 1, %s12
    %p204 = scmp.lt.s32.totalorder %s12, 3
    %p205 = pnand %p203, %p204
    %p206 = pneg %p205
    // Predicated region
    $region33: #{t5_block_next.6} parent=5 // pred_check
      _
    $region34: #{t5_block_next.6} parent=5 // pred_check_branch
      %208 = sbr.rel (%p205) target = $region36
    $region35: #{t5_block_next.6} parent=5 // pred_region
      %s209 = ssub.s32 %s12, 1
      %s210 = smul.u32 16, %s17
      %p211 = scmp.lt.s32.totalorder %s210, 31
      %s212 = scalar_select %p211, %s210, 31
      %s213 = smul.addr %s212, 2
      %s214 = smul.addr %s213, 4
      %s215 = scalar_lea.vmem %s0, %s214
      %p216 = pneg %p38
      %p217 = pneg %p35
      %p218 = pneg %p59
      %p219 = pneg %p56
      %s220 = smul.u32 16, %s17
      %p221 = scmp.lt.s32.totalorder %s220, 31
      %s222 = scalar_select %p221, %s220, 31
      %s223 = smul.addr %s222, 2
      %s224 = smul.addr %s223, 8
      %s225 = scalar_lea.vmem %s2, %s224
      %p226 = pneg %p85
      %p227 = pneg %p82
      %p228 = pneg %p106
      %p229 = pneg %p103
      %p230 = pneg %p132
      %p231 = pneg %p129
      %s232 = smul.u32 16, %s17
      %p233 = scmp.lt.s32.totalorder %s232, 31
      %s234 = scalar_select %p233, %s232, 31
      %s235 = smul.addr %s234, 2
      %s236 = smul.addr %s235, 8
      %s237 = scalar_lea.vmem %s4, %s236
      %p238 = pneg %p158
      %p239 = pneg %p155
      %s240 = smul.u32 16, %s17
      %p241 = scmp.lt.s32.totalorder %s240, 31
      %s242 = scalar_select %p241, %s240, 31
      %s243 = smul.addr %s242, 2
      %s244 = smul.addr %s243, 4
      %s245 = scalar_lea.vmem %s5, %s244
      %s246 = smul.u32 16, %s17
      %p247 = scmp.lt.s32.totalorder %s246, 31
      %s248 = scalar_select %p247, %s246, 31
      %s249 = smul.addr %s248, 2
      %s250 = smul.addr %s249, 4
      %s251 = scalar_lea.vmem %s0, %s250
      %s252 = smul.u32 16, %s17
      %s253 = smul.u32 16, %s17
      %p254 = scmp.lt.s32.totalorder %s253, 31
      %s255 = scalar_select %p254, %s253, 31
      %s256 = smul.addr %s255, 2
      %s257 = smul.addr %s256, 8
      %s258 = scalar_lea.vmem %s2, %s257
      %s259 = smul.u32 16, %s17
      %s260 = smul.u32 16, %s17
      %p261 = scmp.lt.s32.totalorder %s260, 31
      %s262 = scalar_select %p261, %s260, 31
      %s263 = smul.addr %s262, 2
      %s264 = smul.addr %s263, 8
      %s265 = scalar_lea.vmem %s4, %s264
      %s266 = smul.u32 16, %s17
      %s267 = smul.u32 16, %s17
      %p268 = scmp.lt.s32.totalorder %s267, 31
      %s269 = scalar_select %p268, %s267, 31
      %s270 = smul.addr %s269, 2
      %s271 = smul.addr %s270, 4
      %s272 = scalar_lea.vmem %s5, %s271
      %s273 = smul.u32 16, %s17
      %v274 = vld [vmem:[%s258] sm:$0xff]
      %v275 = vld [vmem:[%s258 + $0x8] sm:$0xff]
      %v276 = vld [vmem:[%s258 + $0x10] sm:$0xff]
      %v277 = vld [vmem:[%s258 + $0x18] sm:$0xff]
      %v278 = vld [vmem:[%s258 + $0x20] sm:$0xff]
      %v279 = vld [vmem:[%s258 + $0x28] sm:$0xff]
      %v280 = vld [vmem:[%s258 + $0x30] sm:$0xff]
      %v281 = vld [vmem:[%s258 + $0x38] sm:$0xff]
      %v282 = vld [vmem:[%s258 + $0x40] sm:$0xff]
      %v283 = vld [vmem:[%s258 + $0x48] sm:$0xff]
      %v284 = vld [vmem:[%s258 + $0x50] sm:$0xff]
      %v285 = vld [vmem:[%s258 + $0x58] sm:$0xff]
      %v286 = vld [vmem:[%s258 + $0x60] sm:$0xff]
      %v287 = vld [vmem:[%s258 + $0x68] sm:$0xff]
      %v288 = vld [vmem:[%s258 + $0x70] sm:$0xff]
      %v289 = vld [vmem:[%s258 + $0x78] sm:$0xff]
      %v290 = vld [vmem:[%s258 + $0x80] sm:$0xff]
      %v291 = vld [vmem:[%s258 + $0x88] sm:$0xff]
      %v292 = vld [vmem:[%s258 + $0x90] sm:$0xff]
      %v293 = vld [vmem:[%s258 + $0x98] sm:$0xff]
      %v294 = vld [vmem:[%s258 + $0xa0] sm:$0xff]
      %v295 = vld [vmem:[%s258 + $0xa8] sm:$0xff]
      %v296 = vld [vmem:[%s258 + $0xb0] sm:$0xff]
      %v297 = vld [vmem:[%s258 + $0xb8] sm:$0xff]
      %v298 = vld [vmem:[%s258 + $0xc0] sm:$0xff]
      %v299 = vld [vmem:[%s258 + $0xc8] sm:$0xff]
      %v300 = vld [vmem:[%s258 + $0xd0] sm:$0xff]
      %v301 = vld [vmem:[%s258 + $0xd8] sm:$0xff]
      %v302 = vld [vmem:[%s258 + $0xe0] sm:$0xff]
      %v303 = vld [vmem:[%s258 + $0xe8] sm:$0xff]
      %v304 = vld [vmem:[%s258 + $0xf0] sm:$0xff]
      %v305 = vld [vmem:[%s258 + $0xf8] sm:$0xff]
      %v306 = vld [vmem:[%s251] sm:$0xff]
      %v307 = vld [vmem:[%s251 + $0x8] sm:$0xff]
      %v308 = vld [vmem:[%s251 + $0x10] sm:$0xff]
      %v309 = vld [vmem:[%s251 + $0x18] sm:$0xff]
      %v310 = vld [vmem:[%s251 + $0x20] sm:$0xff]
      %v311 = vld [vmem:[%s251 + $0x28] sm:$0xff]
      %v312 = vld [vmem:[%s251 + $0x30] sm:$0xff]
      %v313 = vld [vmem:[%s251 + $0x38] sm:$0xff]
      %v314 = vld [vmem:[%s251 + $0x40] sm:$0xff]
      %v315 = vld [vmem:[%s251 + $0x48] sm:$0xff]
      %v316 = vld [vmem:[%s251 + $0x50] sm:$0xff]
      %v317 = vld [vmem:[%s251 + $0x58] sm:$0xff]
      %v318 = vld [vmem:[%s251 + $0x60] sm:$0xff]
      %v319 = vld [vmem:[%s251 + $0x68] sm:$0xff]
      %v320 = vld [vmem:[%s251 + $0x70] sm:$0xff]
      %v321 = vld [vmem:[%s251 + $0x78] sm:$0xff]
      %v322 = vld [vmem:[%s1] sm:$0xff]
      %v323 = vld [vmem:[%s1 + $0x8] sm:$0xff]
      %v324 = vld [vmem:[%s1 + $0x10] sm:$0xff]
      %v325 = vld [vmem:[%s1 + $0x18] sm:$0xff]
      %v326 = vld [vmem:[%s1 + $0x20] sm:$0xff]
      %v327 = vld [vmem:[%s1 + $0x28] sm:$0xff]
      %v328 = vld [vmem:[%s1 + $0x30] sm:$0xff]
      %v329 = vld [vmem:[%s1 + $0x38] sm:$0xff]
      %v330 = vld [vmem:[%s1 + $0x40] sm:$0xff]
      %v331 = vld [vmem:[%s1 + $0x48] sm:$0xff]
      %v332 = vld [vmem:[%s1 + $0x50] sm:$0xff]
      %v333 = vld [vmem:[%s1 + $0x58] sm:$0xff]
      %v334 = vld [vmem:[%s1 + $0x60] sm:$0xff]
      %v335 = vld [vmem:[%s1 + $0x68] sm:$0xff]
      %v336 = vld [vmem:[%s1 + $0x70] sm:$0xff]
      %v337 = vld [vmem:[%s1 + $0x78] sm:$0xff]
      %v338 = vld [vmem:[%s1 + $0x80] sm:$0xff]
      %v339 = vld [vmem:[%s1 + $0x88] sm:$0xff]
      %v340 = vld [vmem:[%s1 + $0x90] sm:$0xff]
      %v341 = vld [vmem:[%s1 + $0x98] sm:$0xff]
      %v342 = vld [vmem:[%s1 + $0xa0] sm:$0xff]
      %v343 = vld [vmem:[%s1 + $0xa8] sm:$0xff]
      %v344 = vld [vmem:[%s1 + $0xb0] sm:$0xff]
      %v345 = vld [vmem:[%s1 + $0xb8] sm:$0xff]
      %v346 = vld [vmem:[%s1 + $0xc0] sm:$0xff]
      %v347 = vld [vmem:[%s1 + $0xc8] sm:$0xff]
      %v348 = vld [vmem:[%s1 + $0xd0] sm:$0xff]
      %v349 = vld [vmem:[%s1 + $0xd8] sm:$0xff]
      %v350 = vld [vmem:[%s1 + $0xe0] sm:$0xff]
      %v351 = vld [vmem:[%s1 + $0xe8] sm:$0xff]
      %v352 = vld [vmem:[%s1 + $0xf0] sm:$0xff]
      %v353 = vld [vmem:[%s1 + $0xf8] sm:$0xff]
      %v370 = vunpack.c.l.b16 %v306
      %v371 = vunpack.c.h.b16 %v306
      %v372 = vunpack.c.l.b16 %v307
      %v373 = vunpack.c.h.b16 %v307
      %v374 = vunpack.c.l.b16 %v308
      %v375 = vunpack.c.h.b16 %v308
      %v376 = vunpack.c.l.b16 %v309
      %v377 = vunpack.c.h.b16 %v309
      %v378 = vunpack.c.l.b16 %v310
      %v379 = vunpack.c.h.b16 %v310
      %v380 = vunpack.c.l.b16 %v311
      %v381 = vunpack.c.h.b16 %v311
      %v382 = vunpack.c.l.b16 %v312
      %v383 = vunpack.c.h.b16 %v312
      %v384 = vunpack.c.l.b16 %v313
      %v385 = vunpack.c.h.b16 %v313
      %v386 = vunpack.c.l.b16 %v314
      %v387 = vunpack.c.h.b16 %v314
      %v388 = vunpack.c.l.b16 %v315
      %v389 = vunpack.c.h.b16 %v315
      %v390 = vunpack.c.l.b16 %v316
      %v391 = vunpack.c.h.b16 %v316
      %v392 = vunpack.c.l.b16 %v317
      %v393 = vunpack.c.h.b16 %v317
      %v394 = vunpack.c.l.b16 %v318
      %v395 = vunpack.c.h.b16 %v318
      %v396 = vunpack.c.l.b16 %v319
      %v397 = vunpack.c.h.b16 %v319
      %v398 = vunpack.c.l.b16 %v320
      %v399 = vunpack.c.h.b16 %v320
      %v400 = vunpack.c.l.b16 %v321
      %v401 = vunpack.c.h.b16 %v321
      %v402 = vpack.c.b16 %v372, %v370
      %v403 = vpack.c.b16 %v373, %v371
      %v404 = vpack.c.b16 %v376, %v374
      %v405 = vpack.c.b16 %v377, %v375
      %v406 = vpack.c.b16 %v380, %v378
      %v407 = vpack.c.b16 %v381, %v379
      %v408 = vpack.c.b16 %v384, %v382
      %v409 = vpack.c.b16 %v385, %v383
      %v410 = vpack.c.b16 %v388, %v386
      %v411 = vpack.c.b16 %v389, %v387
      %v412 = vpack.c.b16 %v392, %v390
      %v413 = vpack.c.b16 %v393, %v391
      %v414 = vpack.c.b16 %v396, %v394
      %v415 = vpack.c.b16 %v397, %v395
      %v416 = vpack.c.b16 %v400, %v398
      %v417 = vpack.c.b16 %v401, %v399
      %v466 = vunpack.c.l.b16 %v322
      %v467 = vunpack.c.h.b16 %v322
      %v468 = vunpack.c.l.b16 %v323
      %v469 = vunpack.c.h.b16 %v323
      %v470 = vunpack.c.l.b16 %v324
      %v471 = vunpack.c.h.b16 %v324
      %v472 = vunpack.c.l.b16 %v325
      %v473 = vunpack.c.h.b16 %v325
      %v474 = vunpack.c.l.b16 %v326
      %v475 = vunpack.c.h.b16 %v326
      %v476 = vunpack.c.l.b16 %v327
      %v477 = vunpack.c.h.b16 %v327
      %v478 = vunpack.c.l.b16 %v328
      %v479 = vunpack.c.h.b16 %v328
      %v480 = vunpack.c.l.b16 %v329
      %v481 = vunpack.c.h.b16 %v329
      %v482 = vunpack.c.l.b16 %v330
      %v483 = vunpack.c.h.b16 %v330
      %v484 = vunpack.c.l.b16 %v331
      %v485 = vunpack.c.h.b16 %v331
      %v486 = vunpack.c.l.b16 %v332
      %v487 = vunpack.c.h.b16 %v332
      %v488 = vunpack.c.l.b16 %v333
      %v489 = vunpack.c.h.b16 %v333
      %v490 = vunpack.c.l.b16 %v334
      %v491 = vunpack.c.h.b16 %v334
      %v492 = vunpack.c.l.b16 %v335
      %v493 = vunpack.c.h.b16 %v335
      %v494 = vunpack.c.l.b16 %v336
      %v495 = vunpack.c.h.b16 %v336
      %v496 = vunpack.c.l.b16 %v337
      %v497 = vunpack.c.h.b16 %v337
      %v498 = vunpack.c.l.b16 %v338
      %v499 = vunpack.c.h.b16 %v338
      %v500 = vunpack.c.l.b16 %v339
      %v501 = vunpack.c.h.b16 %v339
      %v502 = vunpack.c.l.b16 %v340
      %v503 = vunpack.c.h.b16 %v340
      %v504 = vunpack.c.l.b16 %v341
      %v505 = vunpack.c.h.b16 %v341
      %v506 = vunpack.c.l.b16 %v342
      %v507 = vunpack.c.h.b16 %v342
      %v508 = vunpack.c.l.b16 %v343
      %v509 = vunpack.c.h.b16 %v343
      %v510 = vunpack.c.l.b16 %v344
      %v511 = vunpack.c.h.b16 %v344
      %v512 = vunpack.c.l.b16 %v345
      %v513 = vunpack.c.h.b16 %v345
      %v514 = vunpack.c.l.b16 %v346
      %v515 = vunpack.c.h.b16 %v346
      %v516 = vunpack.c.l.b16 %v347
      %v517 = vunpack.c.h.b16 %v347
      %v518 = vunpack.c.l.b16 %v348
      %v519 = vunpack.c.h.b16 %v348
      %v520 = vunpack.c.l.b16 %v349
      %v521 = vunpack.c.h.b16 %v349
      %v522 = vunpack.c.l.b16 %v350
      %v523 = vunpack.c.h.b16 %v350
      %v524 = vunpack.c.l.b16 %v351
      %v525 = vunpack.c.h.b16 %v351
      %v526 = vunpack.c.l.b16 %v352
      %v527 = vunpack.c.h.b16 %v352
      %v528 = vunpack.c.l.b16 %v353
      %v529 = vunpack.c.h.b16 %v353
      %v530 = vpack.c.b16 %v468, %v466
      %v531 = vpack.c.b16 %v469, %v467
      %v532 = vpack.c.b16 %v472, %v470
      %v533 = vpack.c.b16 %v473, %v471
      %v534 = vpack.c.b16 %v476, %v474
      %v535 = vpack.c.b16 %v477, %v475
      %v536 = vpack.c.b16 %v480, %v478
      %v537 = vpack.c.b16 %v481, %v479
      %v538 = vpack.c.b16 %v484, %v482
      %v539 = vpack.c.b16 %v485, %v483
      %v540 = vpack.c.b16 %v488, %v486
      %v541 = vpack.c.b16 %v489, %v487
      %v542 = vpack.c.b16 %v492, %v490
      %v543 = vpack.c.b16 %v493, %v491
      %v544 = vpack.c.b16 %v496, %v494
      %v545 = vpack.c.b16 %v497, %v495
      %v546 = vpack.c.b16 %v500, %v498
      %v547 = vpack.c.b16 %v501, %v499
      %v548 = vpack.c.b16 %v504, %v502
      %v549 = vpack.c.b16 %v505, %v503
      %v550 = vpack.c.b16 %v508, %v506
      %v551 = vpack.c.b16 %v509, %v507
      %v552 = vpack.c.b16 %v512, %v510
      %v553 = vpack.c.b16 %v513, %v511
      %v554 = vpack.c.b16 %v516, %v514
      %v555 = vpack.c.b16 %v517, %v515
      %v556 = vpack.c.b16 %v520, %v518
      %v557 = vpack.c.b16 %v521, %v519
      %v558 = vpack.c.b16 %v524, %v522
      %v559 = vpack.c.b16 %v525, %v523
      %v560 = vpack.c.b16 %v528, %v526
      %v561 = vpack.c.b16 %v529, %v527
      %594 = vmatprep.subr.bf16.mxu0 %v545
      %595 = vmatpush1.bf16.msra.mxu0 %v544
      %596 = vmatprep.subr.bf16.mxu0 %v543
      %597 = vmatpush1.bf16.msra.mxu0 %v542
      %598 = vmatprep.subr.bf16.mxu0 %v541
      %599 = vmatpush1.bf16.msra.mxu0 %v540
      %600 = vmatprep.subr.bf16.mxu0 %v539
      %601 = vmatpush1.bf16.msra.mxu0 %v538
      %602 = vmatprep.subr.bf16.mxu0 %v537
      %603 = vmatpush1.bf16.msra.mxu0 %v536
      %604 = vmatprep.subr.bf16.mxu0 %v535
      %605 = vmatpush1.bf16.msra.mxu0 %v534
      %606 = vmatprep.subr.bf16.mxu0 %v533
      %607 = vmatpush1.bf16.msra.mxu0 %v532
      %608 = vmatprep.subr.bf16.mxu0 %v531
      %609 = vmatpush1.bf16.msra.mxu0 %v530
      %610 = vmatprep.subr.bf16.mxu0 %v561
      %611 = vmatpush2.bf16.msra.mxu0 %v560
      %612 = vmatprep.subr.bf16.mxu0 %v559
      %613 = vmatpush2.bf16.msra.mxu0 %v558
      %614 = vmatprep.subr.bf16.mxu0 %v557
      %615 = vmatpush2.bf16.msra.mxu0 %v556
      %616 = vmatprep.subr.bf16.mxu0 %v555
      %617 = vmatpush2.bf16.msra.mxu0 %v554
      %618 = vmatprep.subr.bf16.mxu0 %v553
      %619 = vmatpush2.bf16.msra.mxu0 %v552
      %620 = vmatprep.subr.bf16.mxu0 %v551
      %621 = vmatpush2.bf16.msra.mxu0 %v550
      %622 = vmatprep.subr.bf16.mxu0 %v549
      %623 = vmatpush2.bf16.msra.mxu0 %v548
      %624 = vmatprep.subr.bf16.mxu0 %v547
      %625 = vmatpush2.bf16.msra.mxu0 %v546
      %626 = vmatprep.mubr.bf16.mxu0 %v403
      %627 = vmatmul.mubr.bf16.gmra.mxu0 %v402
      %v628 = vpop.f32.mrf.mxu0
      %v629 = vadd.f32 0.0, %v628
      %v630 = vpop.f32.mrf.mxu0
      %v631 = vadd.f32 0.0, %v630
      %v632 = vpop.f32.mrf.mxu0
      %v633 = vadd.f32 0.0, %v632
      %v634 = vpop.f32.mrf.mxu0
      %v635 = vadd.f32 0.0, %v634
      %636 = vmatprep.mubr.bf16.mxu0 %v405
      %637 = vmatmul.mubr.bf16.gmra.mxu0 %v404
      %v638 = vpop.f32.mrf.mxu0
      %v639 = vadd.f32 0.0, %v638
      %v640 = vpop.f32.mrf.mxu0
      %v641 = vadd.f32 0.0, %v640
      %v642 = vpop.f32.mrf.mxu0
      %v643 = vadd.f32 0.0, %v642
      %v644 = vpop.f32.mrf.mxu0
      %v645 = vadd.f32 0.0, %v644
      %646 = vmatprep.mubr.bf16.mxu0 %v407
      %647 = vmatmul.mubr.bf16.gmra.mxu0 %v406
      %v648 = vpop.f32.mrf.mxu0
      %v649 = vadd.f32 0.0, %v648
      %v650 = vpop.f32.mrf.mxu0
      %v651 = vadd.f32 0.0, %v650
      %v652 = vpop.f32.mrf.mxu0
      %v653 = vadd.f32 0.0, %v652
      %v654 = vpop.f32.mrf.mxu0
      %v655 = vadd.f32 0.0, %v654
      %656 = vmatprep.mubr.bf16.mxu0 %v409
      %657 = vmatmul.mubr.bf16.gmra.mxu0 %v408
      %v658 = vpop.f32.mrf.mxu0
      %v659 = vadd.f32 0.0, %v658
      %v660 = vpop.f32.mrf.mxu0
      %v661 = vadd.f32 0.0, %v660
      %v662 = vpop.f32.mrf.mxu0
      %v663 = vadd.f32 0.0, %v662
      %v664 = vpop.f32.mrf.mxu0
      %v665 = vadd.f32 0.0, %v664
      %666 = vmatprep.mubr.bf16.mxu0 %v411
      %667 = vmatmul.mubr.bf16.gmra.mxu0 %v410
      %v668 = vpop.f32.mrf.mxu0
      %v669 = vadd.f32 0.0, %v668
      %v670 = vpop.f32.mrf.mxu0
      %v671 = vadd.f32 0.0, %v670
      %v672 = vpop.f32.mrf.mxu0
      %v673 = vadd.f32 0.0, %v672
      %v674 = vpop.f32.mrf.mxu0
      %v675 = vadd.f32 0.0, %v674
      %676 = vmatprep.mubr.bf16.mxu0 %v413
      %677 = vmatmul.mubr.bf16.gmra.mxu0 %v412
      %v678 = vpop.f32.mrf.mxu0
      %v679 = vadd.f32 0.0, %v678
      %v680 = vpop.f32.mrf.mxu0
      %v681 = vadd.f32 0.0, %v680
      %v682 = vpop.f32.mrf.mxu0
      %v683 = vadd.f32 0.0, %v682
      %v684 = vpop.f32.mrf.mxu0
      %v685 = vadd.f32 0.0, %v684
      %686 = vmatprep.mubr.bf16.mxu0 %v415
      %687 = vmatmul.mubr.bf16.gmra.mxu0 %v414
      %v688 = vpop.f32.mrf.mxu0
      %v689 = vadd.f32 0.0, %v688
      %v690 = vpop.f32.mrf.mxu0
      %v691 = vadd.f32 0.0, %v690
      %v692 = vpop.f32.mrf.mxu0
      %v693 = vadd.f32 0.0, %v692
      %v694 = vpop.f32.mrf.mxu0
      %v695 = vadd.f32 0.0, %v694
      %696 = vmatprep.mubr.bf16.mxu0 %v417
      %697 = vmatmul.mubr.bf16.gmra.mxu0 %v416
      %v698 = vpop.f32.mrf.mxu0
      %v699 = vadd.f32 0.0, %v698
      %v700 = vpop.f32.mrf.mxu0
      %v701 = vadd.f32 0.0, %v700
      %v702 = vpop.f32.mrf.mxu0
      %v703 = vadd.f32 0.0, %v702
      %v704 = vpop.f32.mrf.mxu0
      %v705 = vadd.f32 0.0, %v704
      %706 = vdwg.mxu0
      %v707 = vadd.f32 %v274, %v629
      %v708 = vadd.f32 %v275, %v631
      %v709 = vadd.f32 %v276, %v633
      %v710 = vadd.f32 %v277, %v635
      %v711 = vadd.f32 %v278, %v639
      %v712 = vadd.f32 %v279, %v641
      %v713 = vadd.f32 %v280, %v643
      %v714 = vadd.f32 %v281, %v645
      %v715 = vadd.f32 %v282, %v649
      %v716 = vadd.f32 %v283, %v651
      %v717 = vadd.f32 %v284, %v653
      %v718 = vadd.f32 %v285, %v655
      %v719 = vadd.f32 %v286, %v659
      %v720 = vadd.f32 %v287, %v661
      %v721 = vadd.f32 %v288, %v663
      %v722 = vadd.f32 %v289, %v665
      %v723 = vadd.f32 %v290, %v669
      %v724 = vadd.f32 %v291, %v671
      %v725 = vadd.f32 %v292, %v673
      %v726 = vadd.f32 %v293, %v675
      %v727 = vadd.f32 %v294, %v679
      %v728 = vadd.f32 %v295, %v681
      %v729 = vadd.f32 %v296, %v683
      %v730 = vadd.f32 %v297, %v685
      %v731 = vadd.f32 %v298, %v689
      %v732 = vadd.f32 %v299, %v691
      %v733 = vadd.f32 %v300, %v693
      %v734 = vadd.f32 %v301, %v695
      %v735 = vadd.f32 %v302, %v699
      %v736 = vadd.f32 %v303, %v701
      %v737 = vadd.f32 %v304, %v703
      %v738 = vadd.f32 %v305, %v705
      %739 = vst [vmem:[%s265] sm:$0xff] %v707
      %740 = vst [vmem:[%s265 + $0x8] sm:$0xff] %v708
      %741 = vst [vmem:[%s265 + $0x10] sm:$0xff] %v709
      %742 = vst [vmem:[%s265 + $0x18] sm:$0xff] %v710
      %743 = vst [vmem:[%s265 + $0x20] sm:$0xff] %v711
      %744 = vst [vmem:[%s265 + $0x28] sm:$0xff] %v712
      %745 = vst [vmem:[%s265 + $0x30] sm:$0xff] %v713
      %746 = vst [vmem:[%s265 + $0x38] sm:$0xff] %v714
      %747 = vst [vmem:[%s265 + $0x40] sm:$0xff] %v715
      %748 = vst [vmem:[%s265 + $0x48] sm:$0xff] %v716
      %749 = vst [vmem:[%s265 + $0x50] sm:$0xff] %v717
      %750 = vst [vmem:[%s265 + $0x58] sm:$0xff] %v718
      %751 = vst [vmem:[%s265 + $0x60] sm:$0xff] %v719
      %752 = vst [vmem:[%s265 + $0x68] sm:$0xff] %v720
      %753 = vst [vmem:[%s265 + $0x70] sm:$0xff] %v721
      %754 = vst [vmem:[%s265 + $0x78] sm:$0xff] %v722
      %755 = vst [vmem:[%s265 + $0x80] sm:$0xff] %v723
      %756 = vst [vmem:[%s265 + $0x88] sm:$0xff] %v724
      %757 = vst [vmem:[%s265 + $0x90] sm:$0xff] %v725
      %758 = vst [vmem:[%s265 + $0x98] sm:$0xff] %v726
      %759 = vst [vmem:[%s265 + $0xa0] sm:$0xff] %v727
      %760 = vst [vmem:[%s265 + $0xa8] sm:$0xff] %v728
      %761 = vst [vmem:[%s265 + $0xb0] sm:$0xff] %v729
      %762 = vst [vmem:[%s265 + $0xb8] sm:$0xff] %v730
      %763 = vst [vmem:[%s265 + $0xc0] sm:$0xff] %v731
      %764 = vst [vmem:[%s265 + $0xc8] sm:$0xff] %v732
      %765 = vst [vmem:[%s265 + $0xd0] sm:$0xff] %v733
      %766 = vst [vmem:[%s265 + $0xd8] sm:$0xff] %v734
      %767 = vst [vmem:[%s265 + $0xe0] sm:$0xff] %v735
      %768 = vst [vmem:[%s265 + $0xe8] sm:$0xff] %v736
      %769 = vst [vmem:[%s265 + $0xf0] sm:$0xff] %v737
      %770 = vst [vmem:[%s265 + $0xf8] sm:$0xff] %v738
      %v771 = vmul.f32 %v707, %v707
      %v772 = vmul.f32 %v708, %v708
      %v773 = vmul.f32 %v709, %v709
      %v774 = vmul.f32 %v710, %v710
      %v775 = vmul.f32 %v711, %v711
      %v776 = vmul.f32 %v712, %v712
      %v777 = vmul.f32 %v713, %v713
      %v778 = vmul.f32 %v714, %v714
      %v779 = vmul.f32 %v715, %v715
      %v780 = vmul.f32 %v716, %v716
      %v781 = vmul.f32 %v717, %v717
      %v782 = vmul.f32 %v718, %v718
      %v783 = vmul.f32 %v719, %v719
      %v784 = vmul.f32 %v720, %v720
      %v785 = vmul.f32 %v721, %v721
      %v786 = vmul.f32 %v722, %v722
      %v787 = vmul.f32 %v723, %v723
      %v788 = vmul.f32 %v724, %v724
      %v789 = vmul.f32 %v725, %v725
      %v790 = vmul.f32 %v726, %v726
      %v791 = vmul.f32 %v727, %v727
      %v792 = vmul.f32 %v728, %v728
      %v793 = vmul.f32 %v729, %v729
      %v794 = vmul.f32 %v730, %v730
      %v795 = vmul.f32 %v731, %v731
      %v796 = vmul.f32 %v732, %v732
      %v797 = vmul.f32 %v733, %v733
      %v798 = vmul.f32 %v734, %v734
      %v799 = vmul.f32 %v735, %v735
      %v800 = vmul.f32 %v736, %v736
      %v801 = vmul.f32 %v737, %v737
      %v802 = vmul.f32 %v738, %v738
      %v803 = vadd.f32 %v771, %v772
      %804 = vadd.xlane.f32.xlu0 %v803
      %v805 = vpop.xlane.xlu0 %804
      %v806 = vadd.f32 %v773, %v774
      %807 = vadd.xlane.f32.xlu0 %v806
      %v808 = vpop.xlane.xlu0 %807
      %v809 = vadd.f32 %v775, %v776
      %810 = vadd.xlane.f32.xlu0 %v809
      %v811 = vpop.xlane.xlu0 %810
      %v812 = vadd.f32 %v777, %v778
      %813 = vadd.xlane.f32.xlu0 %v812
      %v814 = vpop.xlane.xlu0 %813
      %v815 = vadd.f32 %v779, %v780
      %816 = vadd.xlane.f32.xlu0 %v815
      %v817 = vpop.xlane.xlu0 %816
      %v818 = vadd.f32 %v781, %v782
      %819 = vadd.xlane.f32.xlu0 %v818
      %v820 = vpop.xlane.xlu0 %819
      %v821 = vadd.f32 %v783, %v784
      %822 = vadd.xlane.f32.xlu0 %v821
      %v823 = vpop.xlane.xlu0 %822
      %v824 = vadd.f32 %v785, %v786
      %825 = vadd.xlane.f32.xlu0 %v824
      %v826 = vpop.xlane.xlu0 %825
      %v827 = vadd.f32 %v787, %v788
      %828 = vadd.xlane.f32.xlu0 %v827
      %v829 = vpop.xlane.xlu0 %828
      %v830 = vadd.f32 %v789, %v790
      %831 = vadd.xlane.f32.xlu0 %v830
      %v832 = vpop.xlane.xlu0 %831
      %v833 = vadd.f32 %v791, %v792
      %834 = vadd.xlane.f32.xlu0 %v833
      %v835 = vpop.xlane.xlu0 %834
      %v836 = vadd.f32 %v793, %v794
      %837 = vadd.xlane.f32.xlu0 %v836
      %v838 = vpop.xlane.xlu0 %837
      %v839 = vadd.f32 %v795, %v796
      %840 = vadd.xlane.f32.xlu0 %v839
      %v841 = vpop.xlane.xlu0 %840
      %v842 = vadd.f32 %v797, %v798
      %843 = vadd.xlane.f32.xlu0 %v842
      %v844 = vpop.xlane.xlu0 %843
      %v845 = vadd.f32 %v799, %v800
      %846 = vadd.xlane.f32.xlu0 %v845
      %v847 = vpop.xlane.xlu0 %846
      %v848 = vadd.f32 %v801, %v802
      %849 = vadd.xlane.f32.xlu0 %v848
      %v850 = vpop.xlane.xlu0 %849
      %v851 = vrcp.pop 256.0
      %v852 = vmul.f32 %v805, %v851
      %v853 = vmul.f32 %v808, %v851
      %v854 = vmul.f32 %v811, %v851
      %v855 = vmul.f32 %v814, %v851
      %v856 = vmul.f32 %v817, %v851
      %v857 = vmul.f32 %v820, %v851
      %v858 = vmul.f32 %v823, %v851
      %v859 = vmul.f32 %v826, %v851
      %v860 = vmul.f32 %v829, %v851
      %v861 = vmul.f32 %v832, %v851
      %v862 = vmul.f32 %v835, %v851
      %v863 = vmul.f32 %v838, %v851
      %v864 = vmul.f32 %v841, %v851
      %v865 = vmul.f32 %v844, %v851
      %v866 = vmul.f32 %v847, %v851
      %v867 = vmul.f32 %v850, %v851
      %v868 = vadd.f32 %v852, 1e-06
      %v869 = vadd.f32 %v853, 1e-06
      %v870 = vadd.f32 %v854, 1e-06
      %v871 = vadd.f32 %v855, 1e-06
      %v872 = vadd.f32 %v856, 1e-06
      %v873 = vadd.f32 %v857, 1e-06
      %v874 = vadd.f32 %v858, 1e-06
      %v875 = vadd.f32 %v859, 1e-06
      %v876 = vadd.f32 %v860, 1e-06
      %v877 = vadd.f32 %v861, 1e-06
      %v878 = vadd.f32 %v862, 1e-06
      %v879 = vadd.f32 %v863, 1e-06
      %v880 = vadd.f32 %v864, 1e-06
      %v881 = vadd.f32 %v865, 1e-06
      %v882 = vadd.f32 %v866, 1e-06
      %v883 = vadd.f32 %v867, 1e-06
      %v884 = vrsqrt.pop %v868
      %v885 = vrsqrt.pop %v869
      %v886 = vrsqrt.pop %v870
      %v887 = vrsqrt.pop %v871
      %v888 = vrsqrt.pop %v872
      %v889 = vrsqrt.pop %v873
      %v890 = vrsqrt.pop %v874
      %v891 = vrsqrt.pop %v875
      %v892 = vrsqrt.pop %v876
      %v893 = vrsqrt.pop %v877
      %v894 = vrsqrt.pop %v878
      %v895 = vrsqrt.pop %v879
      %v896 = vrsqrt.pop %v880
      %v897 = vrsqrt.pop %v881
      %v898 = vrsqrt.pop %v882
      %v899 = vrsqrt.pop %v883
      %v900 = vmul.f32 %v707, %v884
      %v901 = vmul.f32 %v708, %v884
      %v902 = vmul.f32 %v709, %v885
      %v903 = vmul.f32 %v710, %v885
      %v904 = vmul.f32 %v711, %v886
      %v905 = vmul.f32 %v712, %v886
      %v906 = vmul.f32 %v713, %v887
      %v907 = vmul.f32 %v714, %v887
      %v908 = vmul.f32 %v715, %v888
      %v909 = vmul.f32 %v716, %v888
      %v910 = vmul.f32 %v717, %v889
      %v911 = vmul.f32 %v718, %v889
      %v912 = vmul.f32 %v719, %v890
      %v913 = vmul.f32 %v720, %v890
      %v914 = vmul.f32 %v721, %v891
      %v915 = vmul.f32 %v722, %v891
      %v916 = vmul.f32 %v723, %v892
      %v917 = vmul.f32 %v724, %v892
      %v918 = vmul.f32 %v725, %v893
      %v919 = vmul.f32 %v726, %v893
      %v920 = vmul.f32 %v727, %v894
      %v921 = vmul.f32 %v728, %v894
      %v922 = vmul.f32 %v729, %v895
      %v923 = vmul.f32 %v730, %v895
      %v924 = vmul.f32 %v731, %v896
      %v925 = vmul.f32 %v732, %v896
      %v926 = vmul.f32 %v733, %v897
      %v927 = vmul.f32 %v734, %v897
      %v928 = vmul.f32 %v735, %v898
      %v929 = vmul.f32 %v736, %v898
      %v930 = vmul.f32 %v737, %v899
      %v931 = vmul.f32 %v738, %v899
      %v932 = vld [vmem:[%s3] sm:$0x3]
      %v934 = vlaneseq
      %v935 = vshrl.u32 %v934, 7
      %v936 = vsub.s32 0, %v935
      %v937 = vrot.slane %v932, %v936
      %v938 = vlaneseq
      %v939 = vshrl.u32 %v938, 7
      %v940 = vsub.s32 1, %v939
      %v941 = vrot.slane %v932, %v940
      %v944 = vmul.f32 %v900, %v937
      %v945 = vmul.f32 %v901, %v941
      %v946 = vmul.f32 %v902, %v937
      %v947 = vmul.f32 %v903, %v941
      %v948 = vmul.f32 %v904, %v937
      %v949 = vmul.f32 %v905, %v941
      %v950 = vmul.f32 %v906, %v937
      %v951 = vmul.f32 %v907, %v941
      %v952 = vmul.f32 %v908, %v937
      %v953 = vmul.f32 %v909, %v941
      %v954 = vmul.f32 %v910, %v937
      %v955 = vmul.f32 %v911, %v941
      %v956 = vmul.f32 %v912, %v937
      %v957 = vmul.f32 %v913, %v941
      %v958 = vmul.f32 %v914, %v937
      %v959 = vmul.f32 %v915, %v941
      %v960 = vmul.f32 %v916, %v937
      %v961 = vmul.f32 %v917, %v941
      %v962 = vmul.f32 %v918, %v937
      %v963 = vmul.f32 %v919, %v941
      %v964 = vmul.f32 %v920, %v937
      %v965 = vmul.f32 %v921, %v941
      %v966 = vmul.f32 %v922, %v937
      %v967 = vmul.f32 %v923, %v941
      %v968 = vmul.f32 %v924, %v937
      %v969 = vmul.f32 %v925, %v941
      %v970 = vmul.f32 %v926, %v937
      %v971 = vmul.f32 %v927, %v941
      %v972 = vmul.f32 %v928, %v937
      %v973 = vmul.f32 %v929, %v941
      %v974 = vmul.f32 %v930, %v937
      %v975 = vmul.f32 %v931, %v941
      %v976 = vpack.c.bf16 %v946, %v944
      %v977 = vpack.c.bf16 %v947, %v945
      %v978 = vpack.c.bf16 %v950, %v948
      %v979 = vpack.c.bf16 %v951, %v949
      %v980 = vpack.c.bf16 %v954, %v952
      %v981 = vpack.c.bf16 %v955, %v953
      %v982 = vpack.c.bf16 %v958, %v956
      %v983 = vpack.c.bf16 %v959, %v957
      %v984 = vpack.c.bf16 %v962, %v960
      %v985 = vpack.c.bf16 %v963, %v961
      %v986 = vpack.c.bf16 %v966, %v964
      %v987 = vpack.c.bf16 %v967, %v965
      %v988 = vpack.c.bf16 %v970, %v968
      %v989 = vpack.c.bf16 %v971, %v969
      %v990 = vpack.c.bf16 %v974, %v972
      %v991 = vpack.c.bf16 %v975, %v973
      %v1008 = vunpack.c.l.b16 %v976
      %v1009 = vunpack.c.l.b16 %v977
      %v1010 = vunpack.c.h.b16 %v976
      %v1011 = vunpack.c.h.b16 %v977
      %v1012 = vunpack.c.l.b16 %v978
      %v1013 = vunpack.c.l.b16 %v979
      %v1014 = vunpack.c.h.b16 %v978
      %v1015 = vunpack.c.h.b16 %v979
      %v1016 = vunpack.c.l.b16 %v980
      %v1017 = vunpack.c.l.b16 %v981
      %v1018 = vunpack.c.h.b16 %v980
      %v1019 = vunpack.c.h.b16 %v981
      %v1020 = vunpack.c.l.b16 %v982
      %v1021 = vunpack.c.l.b16 %v983
      %v1022 = vunpack.c.h.b16 %v982
      %v1023 = vunpack.c.h.b16 %v983
      %v1024 = vunpack.c.l.b16 %v984
      %v1025 = vunpack.c.l.b16 %v985
      %v1026 = vunpack.c.h.b16 %v984
      %v1027 = vunpack.c.h.b16 %v985
      %v1028 = vunpack.c.l.b16 %v986
      %v1029 = vunpack.c.l.b16 %v987
      %v1030 = vunpack.c.h.b16 %v986
      %v1031 = vunpack.c.h.b16 %v987
      %v1032 = vunpack.c.l.b16 %v988
      %v1033 = vunpack.c.l.b16 %v989
      %v1034 = vunpack.c.h.b16 %v988
      %v1035 = vunpack.c.h.b16 %v989
      %v1036 = vunpack.c.l.b16 %v990
      %v1037 = vunpack.c.l.b16 %v991
      %v1038 = vunpack.c.h.b16 %v990
      %v1039 = vunpack.c.h.b16 %v991
      %v1040 = vpack.c.b16 %v1009, %v1008
      %v1041 = vpack.c.b16 %v1011, %v1010
      %v1042 = vpack.c.b16 %v1013, %v1012
      %v1043 = vpack.c.b16 %v1015, %v1014
      %v1044 = vpack.c.b16 %v1017, %v1016
      %v1045 = vpack.c.b16 %v1019, %v1018
      %v1046 = vpack.c.b16 %v1021, %v1020
      %v1047 = vpack.c.b16 %v1023, %v1022
      %v1048 = vpack.c.b16 %v1025, %v1024
      %v1049 = vpack.c.b16 %v1027, %v1026
      %v1050 = vpack.c.b16 %v1029, %v1028
      %v1051 = vpack.c.b16 %v1031, %v1030
      %v1052 = vpack.c.b16 %v1033, %v1032
      %v1053 = vpack.c.b16 %v1035, %v1034
      %v1054 = vpack.c.b16 %v1037, %v1036
      %v1055 = vpack.c.b16 %v1039, %v1038
      %1072 = vst [vmem:[%s272] sm:$0xff] %v1040
      %1073 = vst [vmem:[%s272 + $0x8] sm:$0xff] %v1041
      %1074 = vst [vmem:[%s272 + $0x10] sm:$0xff] %v1042
      %1075 = vst [vmem:[%s272 + $0x18] sm:$0xff] %v1043
      %1076 = vst [vmem:[%s272 + $0x20] sm:$0xff] %v1044
      %1077 = vst [vmem:[%s272 + $0x28] sm:$0xff] %v1045
      %1078 = vst [vmem:[%s272 + $0x30] sm:$0xff] %v1046
      %1079 = vst [vmem:[%s272 + $0x38] sm:$0xff] %v1047
      %1080 = vst [vmem:[%s272 + $0x40] sm:$0xff] %v1048
      %1081 = vst [vmem:[%s272 + $0x48] sm:$0xff] %v1049
      %1082 = vst [vmem:[%s272 + $0x50] sm:$0xff] %v1050
      %1083 = vst [vmem:[%s272 + $0x58] sm:$0xff] %v1051
      %1084 = vst [vmem:[%s272 + $0x60] sm:$0xff] %v1052
      %1085 = vst [vmem:[%s272 + $0x68] sm:$0xff] %v1053
      %1086 = vst [vmem:[%s272 + $0x70] sm:$0xff] %v1054
      %1087 = vst [vmem:[%s272 + $0x78] sm:$0xff] %v1055
      %s1088 = smul.u32 16, %s17
      %p1089 = scmp.lt.s32.totalorder %s1088, 31
      %s1090 = scalar_select %p1089, %s1088, 31
      %s1091 = smul.addr %s1090, 2
      %s1092 = smul.addr %s1091, 8
      %s1093 = scalar_lea.vmem %s4, %s1092
      %s1094 = smul.u32 16, %s17
      %p1095 = scmp.lt.s32.totalorder %s1094, 31
      %s1096 = scalar_select %p1095, %s1094, 31
      %s1097 = smul.addr %s1096, 2
      %s1098 = smul.addr %s1097, 4
      %s1099 = scalar_lea.vmem %s5, %s1098
      // Predicated region
      $region37: #{t5_block_next.6} parent=35 // pred_check
        %p1100 = pneg %p129
      $region38: #{t5_block_next.6} parent=35 // pred_check_branch
        %1102 = sbr.rel (%p1100) target = $region40
      $region39: #{t5_block_next.6} parent=35 // pred_region
        %s1103 = smul.u32 16, %s17
      $region40: #{t5_block_next.6} parent=35 // pred_fallthru
        _
      // Predicated region
      $region41: #{t5_block_next.6} parent=35 // pred_check
        %p1104 = pneg %p155
      $region42: #{t5_block_next.6} parent=35 // pred_check_branch
        %1106 = sbr.rel (%p1104) target = $region44
      $region43: #{t5_block_next.6} parent=35 // pred_region
        %s1107 = smul.u32 16, %s17
      $region44: #{t5_block_next.6} parent=35 // pred_fallthru
        _
    $region36: #{t5_block_next.6} parent=5 // pred_fallthru
      _
    %p1108 = scmp.le.s32.totalorder 2, %s12
    // Predicated region
    $region45: #{t5_block_next.6} parent=5 // pred_check
      %p1109 = pneg %p1108
    $region46: #{t5_block_next.6} parent=5 // pred_check_branch
      %1111 = sbr.rel (%p1109) target = $region48
    $region47: #{t5_block_next.6} parent=5 // pred_region
      %s1112 = ssub.s32 %s12, 2
      // Predicated region
      $region49: #{t5_block_next.6} parent=47 // pred_check
        %p1113 = pneg %p135
      $region50: #{t5_block_next.6} parent=47 // pred_check_branch
        %1115 = sbr.rel (%p1113) target = $region52
      $region51: #{t5_block_next.6} parent=47 // pred_region
        %s1116 = smul.u32 16, %s18
        %p1117 = scmp.lt.s32.totalorder %s1116, 31
        %s1118 = scalar_select %p1117, %s1116, 31
        %s1119 = smul.addr %s1118, 2
        %s1120 = smul.addr %s1119, 8
        %s1121 = scalar_lea.vmem %s4, %s1120
      $region52: #{t5_block_next.6} parent=47 // pred_fallthru
        _
      // Predicated region
      $region53: #{t5_block_next.6} parent=47 // pred_check
        %p1122 = pneg %p161
      $region54: #{t5_block_next.6} parent=47 // pred_check_branch
        %1124 = sbr.rel (%p1122) target = $region56
      $region55: #{t5_block_next.6} parent=47 // pred_region
        %s1125 = smul.u32 16, %s18
        %p1126 = scmp.lt.s32.totalorder %s1125, 31
        %s1127 = scalar_select %p1126, %s1125, 31
        %s1128 = smul.addr %s1127, 2
        %s1129 = smul.addr %s1128, 4
        %s1130 = scalar_lea.vmem %s5, %s1129
      $region56: #{t5_block_next.6} parent=47 // pred_fallthru
        _
    $region48: #{t5_block_next.6} parent=5 // pred_fallthru
      _
  $region6: #{t5_block_next.6} parent=0 // loop_footer
    %s16 = sadd.s32 1, %s12
  $region7: #{t5_block_next.6} parent=0 // loop_footer_branch
    %11 = sbr.rel target = $region3
  $region8: #{t5_block_next.6} parent=0 // loop_exit
    _

// kernel: t5_block_next.4
$region0: #{t5_block_next.4}
  #allocation0 [shape = 'u32[]', space=smem, size = 0x4, offset = 0x4, fixed_abs, tag = 'smem constant byte address 0x4 - core index']
  #allocation1 [shape = 'u32[144,128]{1,0:T(1,128)}', space=vmem, size = 0x12000, scoped, tag = 'internal scratch']
  %s0 = inlined_call_operand.hbm [shape: f32[256,256], index: 0, kind: input, shape index: {}]
  %s1 = inlined_call_operand.vmem [shape: f32[1,256], index: 1, kind: input, shape index: {}]
  %s2 = inlined_call_operand.hbm [shape: bf16[256,768], index: 2, kind: input, shape index: {}]
  %s3 = inlined_call_operand.vmem [shape: bf16[256,768], index: 3, kind: output, shape index: {}]
  %s4 = sld [smem:[#allocation0]]
  $region87: #{t5_block_next.4} parent=0
    _
  %s6 = ssub.s32 1, %s4
  %s7 = scalar_select 0, %s6, %s4
  $region1: #{t5_block_next.4} parent=0
    #allocation2 [shape = 'u8[262144]{0}', space=vmem, size = 0x40000, scoped, tag = 'input window, operand 0']
    #allocation3 [shape = 's32[2]{0}', space=sflag, size = 0x8, scoped, tag = 'scoped memory for t5_block_next.4']
    #allocation4 [shape = 'u8[262144]{0}', space=vmem, size = 0x40000, scoped, tag = 'input window, operand 2']
    #allocation5 [shape = 's32[2]{0}', space=sflag, size = 0x8, scoped, tag = 'scoped memory for t5_block_next.4']
    #allocation6 [shape = 'u8[131072]{0}', space=vmem, size = 0x20000, scoped, tag = 'output window, operand 0']
    %8 = vsyncpa [#allocation3], 0
    %s9 = scalar_lea.sflag [#allocation3], 1
    %10 = vsyncpa %s9, 0
    %11 = vsyncpa [#allocation5], 0
    %s12 = scalar_lea.sflag [#allocation5], 1
    %13 = vsyncpa %s12, 0
    loop: start=0, step=1, limit=8
    $region2: #{t5_block_next.4} parent=1 // loop_pre_header
      _
    $region3: #{t5_block_next.4} parent=1 // loop_header
      %s15 = sphi 0, %s19
      %p16 = scmp.ge.s32.totalorder %s15, 8
      %s22 = sphi 0, %s34
      %s23 = sphi 0, %s30
      %s24 = sphi 0, %s22
      %s25 = sphi 0, %s23
      %s26 = sphi 0, %s24
      %s27 = sphi 0, %s25
      %s37 = sphi 0, %s39
      %s40 = sphi 0, %s37
      %s41 = sphi 0, %s40
      %s57 = sphi 0, %s41
      %s61 = sphi 0, %s61
      %s63 = sphi 0, %s61
      %s64 = sphi 0, %s63
      %s78 = sphi 0, %s64
      %s84 = sphi 0, %s86
      %s87 = sphi 0, %s84
      %s88 = sphi 0, %s87
      %s104 = sphi 0, %s88
      %s112 = sphi 0, %s114
      %s115 = sphi 0, %s112
      %s116 = sphi 0, %s115
      %s132 = sphi 0, %s116
    $region4: #{t5_block_next.4} parent=1 // loop_header_branch
      %18 = sbr.rel (%p16) target = $region8
    $region5: #{t5_block_next.4} parent=1 // loop_body
      %s20 = ssub.s32 %s15, 1
      %s21 = ssub.s32 %s15, 2
      %s28 = sadd.s32 1, %s23
      %p29 = scmp.ge.s32.totalorder %s28, 3
      %s30 = scalar_select %p29, 0, %s28
      %s31 = sadd.s32 1, %s22
      %s32 = scalar_select %p29, %s31, %s22
      %p33 = scmp.ge.s32.totalorder %s32, 2
      %s34 = scalar_select %p33, 0, %s32
      %s35 = ssub.s32 %s22, %s34
      %p36 = scmp.eq.s32.totalorder %s35, 0
      %s38 = sadd.s32 %s37, 1
      %s39 = scalar_select %p36, %s37, %s38
      %p42 = pneg %p36
      %p43 = scmp.eq.s32.totalorder %s15, 5
      %p44 = por %p42, %p43
      %p45 = scmp.ne.s32.totalorder %s37, %s40
      %p46 = scmp.eq.s32.totalorder %s15, 0
      %p47 = por %p45, %p46
      %p48 = scmp.ne.s32.totalorder %s37, %s40
      %p49 = scmp.eq.s32.totalorder %s20, 5
      %p50 = por %p48, %p49
      %p51 = scmp.ne.s32.totalorder %s40, %s41
      %p52 = scmp.eq.s32.totalorder %s20, 0
      %p53 = por %p51, %p52
      %p54 = scmp.ne.s32.totalorder %s40, %s41
      %p55 = scmp.eq.s32.totalorder %s21, 5
      %p56 = por %p54, %p55
      %p58 = scmp.ne.s32.totalorder %s41, %s57
      %p59 = scmp.eq.s32.totalorder %s21, 0
      %p60 = por %p58, %p59
      %s62 = sadd.s32 %s61, 1
      %p65 = scmp.eq.s32.totalorder %s15, 5
      %p66 = scmp.ne.s32.totalorder %s61, %s63
      %p67 = scmp.eq.s32.totalorder %s15, 0
      %p68 = por %p66, %p67
      %p69 = scmp.ne.s32.totalorder %s61, %s63
      %p70 = scmp.eq.s32.totalorder %s20, 5
      %p71 = por %p69, %p70
      %p72 = scmp.ne.s32.totalorder %s63, %s64
      %p73 = scmp.eq.s32.totalorder %s20, 0
      %p74 = por %p72, %p73
      %p75 = scmp.ne.s32.totalorder %s63, %s64
      %p76 = scmp.eq.s32.totalorder %s21, 5
      %p77 = por %p75, %p76
      %p79 = scmp.ne.s32.totalorder %s64, %s78
      %p80 = scmp.eq.s32.totalorder %s21, 0
      %p81 = por %p79, %p80
      %s82 = ssub.s32 %s23, %s30
      %p83 = scmp.eq.s32.totalorder %s82, 0
      %s85 = sadd.s32 %s84, 1
      %s86 = scalar_select %p83, %s84, %s85
      %p89 = pneg %p83
      %p90 = scmp.eq.s32.totalorder %s15, 5
      %p91 = por %p89, %p90
      %p92 = scmp.ne.s32.totalorder %s84, %s87
      %p93 = scmp.eq.s32.totalorder %s15, 0
      %p94 = por %p92, %p93
      %p95 = scmp.ne.s32.totalorder %s84, %s87
      %p96 = scmp.eq.s32.totalorder %s20, 5
      %p97 = por %p95, %p96
      %p98 = scmp.ne.s32.totalorder %s87, %s88
      %p99 = scmp.eq.s32.totalorder %s20, 0
      %p100 = por %p98, %p99
      %p101 = scmp.ne.s32.totalorder %s87, %s88
      %p102 = scmp.eq.s32.totalorder %s21, 5
      %p103 = por %p101, %p102
      %p105 = scmp.ne.s32.totalorder %s88, %s104
      %p106 = scmp.eq.s32.totalorder %s21, 0
      %p107 = por %p105, %p106
      %s108 = ssub.s32 %s22, %s34
      %s109 = ssub.s32 %s23, %s30
      %s110 = sor.u32 %s108, %s109
      %p111 = scmp.eq.s32.totalorder %s110, 0
      %s113 = sadd.s32 %s112, 1
      %s114 = scalar_select %p111, %s112, %s113
      %p117 = pneg %p111
      %p118 = scmp.eq.s32.totalorder %s15, 5
      %p119 = por %p117, %p118
      %p120 = scmp.ne.s32.totalorder %s112, %s115
      %p121 = scmp.eq.s32.totalorder %s15, 0
      %p122 = por %p120, %p121
      %p123 = scmp.ne.s32.totalorder %s112, %s115
      %p124 = scmp.eq.s32.totalorder %s20, 5
      %p125 = por %p123, %p124
      %p126 = scmp.ne.s32.totalorder %s115, %s116
      %p127 = scmp.eq.s32.totalorder %s20, 0
      %p128 = por %p126, %p127
      %p129 = scmp.ne.s32.totalorder %s115, %s116
      %p130 = scmp.eq.s32.totalorder %s21, 5
      %p131 = por %p129, %p130
      %p133 = scmp.ne.s32.totalorder %s116, %s132
      %p134 = scmp.eq.s32.totalorder %s21, 0
      %p135 = por %p133, %p134
      %p136 = scmp.le.s32.totalorder 1, %s15
      %p137 = scmp.lt.s32.totalorder %s15, 7
      %p138 = pnand %p136, %p137
      %p139 = pneg %p138
      // Predicated region
      $region9: #{t5_block_next.4} parent=5 // pred_check
        _
      $region10: #{t5_block_next.4} parent=5 // pred_check_branch
        %141 = sbr.rel (%p138) target = $region12
      $region11: #{t5_block_next.4} parent=5 // pred_region
        %s142 = ssub.s32 %s15, 1
        // Predicated region
        $region13: #{t5_block_next.4} parent=11 // pred_check
          %p143 = pneg %p74
        $region14: #{t5_block_next.4} parent=11 // pred_check_branch
          %145 = sbr.rel (%p143) target = $region16
        $region15: #{t5_block_next.4} parent=11 // pred_region
          _
        $region16: #{t5_block_next.4} parent=11 // pred_fallthru
          _
      $region12: #{t5_block_next.4} parent=5 // pred_fallthru
        _
      %p146 = scmp.lt.s32.totalorder %s15, 6
      // Predicated region
      $region17: #{t5_block_next.4} parent=5 // pred_check
        %p147 = pneg %p146
      $region18: #{t5_block_next.4} parent=5 // pred_check_branch
        %149 = sbr.rel (%p147) target = $region20
      $region19: #{t5_block_next.4} parent=5 // pred_region
        // Predicated region
        $region21: #{t5_block_next.4} parent=19 // pred_check
          %p150 = pneg %p47
        $region22: #{t5_block_next.4} parent=19 // pred_check_branch
          %152 = sbr.rel (%p150) target = $region24
        $region23: #{t5_block_next.4} parent=19 // pred_region
          %s153 = sand.u32 %s37, 1
          %s154 = scalar_lea.sflag [#allocation3], %s153
          %s155 = sand.u32 %s37, 1
          %s156 = smul.addr %s155, 256
          %s157 = scalar_lea.vmem [#allocation2], %s156
          %s158 = smul.u32 16, %s22
          %s160 = ssub.s32 4096, 4096
          %161 = vsyncadd %s154, %s160
          %s162 = smul.addr %s158, 2
          %s163 = smul.addr %s162, 128
          %s164 = scalar_lea.hbm %s0, %s163
          %s165 = sshll.u32 %s157, 4
          %s166 = int_to_ptr.vmem [resolvable:$true] %s165
          %171 = dma.hbm_to_vmem [thread:$0]  %s164, 4096, %s166, %s154, 256, 256, 16
        $region24: #{t5_block_next.4} parent=19 // pred_fallthru
          _
        // Predicated region
        $region25: #{t5_block_next.4} parent=19 // pred_check
          %p172 = pneg %p94
        $region26: #{t5_block_next.4} parent=19 // pred_check_branch
          %174 = sbr.rel (%p172) target = $region28
        $region27: #{t5_block_next.4} parent=19 // pred_region
          %s175 = sand.u32 %s84, 1
          %s176 = scalar_lea.sflag [#allocation5], %s175
          %s177 = sand.u32 %s84, 1
          %s178 = smul.addr %s177, 256
          %s179 = scalar_lea.vmem [#allocation4], %s178
          %s180 = smul.u32 2, %s23
          %s182 = ssub.s32 4096, 4096
          %183 = vsyncadd %s176, %s182
          %s184 = smul.addr %s180, 64
          %s185 = scalar_lea.hbm %s2, %s184
          %s186 = sshll.u32 %s179, 4
          %s187 = int_to_ptr.vmem [resolvable:$true] %s186
          %192 = dma.hbm_to_vmem [thread:$0]  %s185, 4096, %s187, %s176, 384, 128, 8
        $region28: #{t5_block_next.4} parent=19 // pred_fallthru
          _
      $region20: #{t5_block_next.4} parent=5 // pred_fallthru
        _
      %p193 = scmp.le.s32.totalorder 1, %s15
      %p194 = scmp.lt.s32.totalorder %s15, 7
      %p195 = pnand %p193, %p194
      %p196 = pneg %p195
      // Predicated region
      $region29: #{t5_block_next.4} parent=5 // pred_check
        _
      $region30: #{t5_block_next.4} parent=5 // pred_check_branch
        %198 = sbr.rel (%p195) target = $region32
      $region31: #{t5_block_next.4} parent=5 // pred_region
        %s199 = ssub.s32 %s15, 1
        %s200 = sand.u32 %s40, 1
        %s201 = scalar_lea.sflag [#allocation3], %s200
        %s202 = sand.u32 %s40, 1
        %s203 = smul.addr %s202, 256
        %s204 = scalar_lea.vmem [#allocation2], %s203
        // Predicated region
        $region33: #{t5_block_next.4} parent=31 // pred_check
          %p205 = pneg %p53
        $region34: #{t5_block_next.4} parent=31 // pred_check_branch
          %207 = sbr.rel (%p205) target = $region36
        $region35: #{t5_block_next.4} parent=31 // pred_region
          %208 = dma.done %s201, 4096
        $region36: #{t5_block_next.4} parent=31 // pred_fallthru
          _
        %s209 = sand.u32 %s87, 1
        %s210 = scalar_lea.sflag [#allocation5], %s209
        %s211 = sand.u32 %s87, 1
        %s212 = smul.addr %s211, 256
        %s213 = scalar_lea.vmem [#allocation4], %s212
        // Predicated region
        $region37: #{t5_block_next.4} parent=31 // pred_check
          %p214 = pneg %p100
        $region38: #{t5_block_next.4} parent=31 // pred_check_branch
          %216 = sbr.rel (%p214) target = $region40
        $region39: #{t5_block_next.4} parent=31 // pred_region
          %217 = dma.done %s210, 4096
        $region40: #{t5_block_next.4} parent=31 // pred_fallthru
          _
        %s218 = sand.u32 %s40, 1
        %s219 = scalar_lea.sflag [#allocation3], %s218
        %s220 = sand.u32 %s40, 1
        %s221 = smul.addr %s220, 256
        %s222 = scalar_lea.vmem [#allocation2], %s221
        %p223 = pneg %p53
        %p224 = pneg %p50
        %p225 = pneg %p74
        %p226 = pneg %p71
        %s227 = sand.u32 %s87, 1
        %s228 = scalar_lea.sflag [#allocation5], %s227
        %s229 = sand.u32 %s87, 1
        %s230 = smul.addr %s229, 256
        %s231 = scalar_lea.vmem [#allocation4], %s230
        %p232 = pneg %p100
        %p233 = pneg %p97
        %p234 = pneg %p128
        %p235 = pneg %p125
        %s236 = sand.u32 %s115, 1
        %s237 = sand.u32 %s115, 1
        %s238 = smul.addr %s237, 128
        %s239 = scalar_lea.vmem [#allocation6], %s238
        %s240 = smul.u32 16, %s24
        %s241 = smul.u32 2, %s25
        %s242 = smul.u32 16, %s24
        %s243 = smul.u32 2, %s25
        %v244 = vld [vmem:[%s204] sm:$0xff]
        %v245 = vld [vmem:[%s204 + $0x8] sm:$0xff]
        %v246 = vld [vmem:[%s204 + $0x10] sm:$0xff]
        %v247 = vld [vmem:[%s204 + $0x18] sm:$0xff]
        %v248 = vld [vmem:[%s204 + $0x20] sm:$0xff]
        %v249 = vld [vmem:[%s204 + $0x28] sm:$0xff]
        %v250 = vld [vmem:[%s204 + $0x30] sm:$0xff]
        %v251 = vld [vmem:[%s204 + $0x38] sm:$0xff]
        %v252 = vld [vmem:[%s204 + $0x40] sm:$0xff]
        %v253 = vld [vmem:[%s204 + $0x48] sm:$0xff]
        %v254 = vld [vmem:[%s204 + $0x50] sm:$0xff]
        %v255 = vld [vmem:[%s204 + $0x58] sm:$0xff]
        %v256 = vld [vmem:[%s204 + $0x60] sm:$0xff]
        %v257 = vld [vmem:[%s204 + $0x68] sm:$0xff]
        %v258 = vld [vmem:[%s204 + $0x70] sm:$0xff]
        %v259 = vld [vmem:[%s204 + $0x78] sm:$0xff]
        %v260 = vld [vmem:[%s204 + $0x80] sm:$0xff]
        %v261 = vld [vmem:[%s204 + $0x88] sm:$0xff]
        %v262 = vld [vmem:[%s204 + $0x90] sm:$0xff]
        %v263 = vld [vmem:[%s204 + $0x98] sm:$0xff]
        %v264 = vld [vmem:[%s204 + $0xa0] sm:$0xff]
        %v265 = vld [vmem:[%s204 + $0xa8] sm:$0xff]
        %v266 = vld [vmem:[%s204 + $0xb0] sm:$0xff]
        %v267 = vld [vmem:[%s204 + $0xb8] sm:$0xff]
        %v268 = vld [vmem:[%s204 + $0xc0] sm:$0xff]
        %v269 = vld [vmem:[%s204 + $0xc8] sm:$0xff]
        %v270 = vld [vmem:[%s204 + $0xd0] sm:$0xff]
        %v271 = vld [vmem:[%s204 + $0xd8] sm:$0xff]
        %v272 = vld [vmem:[%s204 + $0xe0] sm:$0xff]
        %v273 = vld [vmem:[%s204 + $0xe8] sm:$0xff]
        %v274 = vld [vmem:[%s204 + $0xf0] sm:$0xff]
        %v275 = vld [vmem:[%s204 + $0xf8] sm:$0xff]
        %v276 = vmul.f32 %v244, %v244
        %v277 = vmul.f32 %v245, %v245
        %v278 = vmul.f32 %v246, %v246
        %v279 = vmul.f32 %v247, %v247
        %v280 = vmul.f32 %v248, %v248
        %v281 = vmul.f32 %v249, %v249
        %v282 = vmul.f32 %v250, %v250
        %v283 = vmul.f32 %v251, %v251
        %v284 = vmul.f32 %v252, %v252
        %v285 = vmul.f32 %v253, %v253
        %v286 = vmul.f32 %v254, %v254
        %v287 = vmul.f32 %v255, %v255
        %v288 = vmul.f32 %v256, %v256
        %v289 = vmul.f32 %v257, %v257
        %v290 = vmul.f32 %v258, %v258
        %v291 = vmul.f32 %v259, %v259
        %v292 = vmul.f32 %v260, %v260
        %v293 = vmul.f32 %v261, %v261
        %v294 = vmul.f32 %v262, %v262
        %v295 = vmul.f32 %v263, %v263
        %v296 = vmul.f32 %v264, %v264
        %v297 = vmul.f32 %v265, %v265
        %v298 = vmul.f32 %v266, %v266
        %v299 = vmul.f32 %v267, %v267
        %v300 = vmul.f32 %v268, %v268
        %v301 = vmul.f32 %v269, %v269
        %v302 = vmul.f32 %v270, %v270
        %v303 = vmul.f32 %v271, %v271
        %v304 = vmul.f32 %v272, %v272
        %v305 = vmul.f32 %v273, %v273
        %v306 = vmul.f32 %v274, %v274
        %v307 = vmul.f32 %v275, %v275
        %v308 = vadd.f32 %v276, %v277
        %309 = vadd.xlane.f32.xlu0 %v308
        %v310 = vpop.xlane.xlu0 %309
        %v311 = vadd.f32 %v278, %v279
        %312 = vadd.xlane.f32.xlu0 %v311
        %v313 = vpop.xlane.xlu0 %312
        %v314 = vadd.f32 %v280, %v281
        %315 = vadd.xlane.f32.xlu0 %v314
        %v316 = vpop.xlane.xlu0 %315
        %v317 = vadd.f32 %v282, %v283
        %318 = vadd.xlane.f32.xlu0 %v317
        %v319 = vpop.xlane.xlu0 %318
        %v320 = vadd.f32 %v284, %v285
        %321 = vadd.xlane.f32.xlu0 %v320
        %v322 = vpop.xlane.xlu0 %321
        %v323 = vadd.f32 %v286, %v287
        %324 = vadd.xlane.f32.xlu0 %v323
        %v325 = vpop.xlane.xlu0 %324
        %v326 = vadd.f32 %v288, %v289
        %327 = vadd.xlane.f32.xlu0 %v326
        %v328 = vpop.xlane.xlu0 %327
        %v329 = vadd.f32 %v290, %v291
        %330 = vadd.xlane.f32.xlu0 %v329
        %v331 = vpop.xlane.xlu0 %330
        %v332 = vadd.f32 %v292, %v293
        %333 = vadd.xlane.f32.xlu0 %v332
        %v334 = vpop.xlane.xlu0 %333
        %v335 = vadd.f32 %v294, %v295
        %336 = vadd.xlane.f32.xlu0 %v335
        %v337 = vpop.xlane.xlu0 %336
        %v338 = vadd.f32 %v296, %v297
        %339 = vadd.xlane.f32.xlu0 %v338
        %v340 = vpop.xlane.xlu0 %339
        %v341 = vadd.f32 %v298, %v299
        %342 = vadd.xlane.f32.xlu0 %v341
        %v343 = vpop.xlane.xlu0 %342
        %v344 = vadd.f32 %v300, %v301
        %345 = vadd.xlane.f32.xlu0 %v344
        %v346 = vpop.xlane.xlu0 %345
        %v347 = vadd.f32 %v302, %v303
        %348 = vadd.xlane.f32.xlu0 %v347
        %v349 = vpop.xlane.xlu0 %348
        %v350 = vadd.f32 %v304, %v305
        %351 = vadd.xlane.f32.xlu0 %v350
        %v352 = vpop.xlane.xlu0 %351
        %v353 = vadd.f32 %v306, %v307
        %354 = vadd.xlane.f32.xlu0 %v353
        %v355 = vpop.xlane.xlu0 %354
        %v356 = vrcp.pop 256.0
        %v357 = vmul.f32 %v310, %v356
        %v358 = vmul.f32 %v313, %v356
        %v359 = vmul.f32 %v316, %v356
        %v360 = vmul.f32 %v319, %v356
        %v361 = vmul.f32 %v322, %v356
        %v362 = vmul.f32 %v325, %v356
        %v363 = vmul.f32 %v328, %v356
        %v364 = vmul.f32 %v331, %v356
        %v365 = vmul.f32 %v334, %v356
        %v366 = vmul.f32 %v337, %v356
        %v367 = vmul.f32 %v340, %v356
        %v368 = vmul.f32 %v343, %v356
        %v369 = vmul.f32 %v346, %v356
        %v370 = vmul.f32 %v349, %v356
        %v371 = vmul.f32 %v352, %v356
        %v372 = vmul.f32 %v355, %v356
        %v373 = vadd.f32 %v357, 1e-06
        %v374 = vadd.f32 %v358, 1e-06
        %v375 = vadd.f32 %v359, 1e-06
        %v376 = vadd.f32 %v360, 1e-06
        %v377 = vadd.f32 %v361, 1e-06
        %v378 = vadd.f32 %v362, 1e-06
        %v379 = vadd.f32 %v363, 1e-06
        %v380 = vadd.f32 %v364, 1e-06
        %v381 = vadd.f32 %v365, 1e-06
        %v382 = vadd.f32 %v366, 1e-06
        %v383 = vadd.f32 %v367, 1e-06
        %v384 = vadd.f32 %v368, 1e-06
        %v385 = vadd.f32 %v369, 1e-06
        %v386 = vadd.f32 %v370, 1e-06
        %v387 = vadd.f32 %v371, 1e-06
        %v388 = vadd.f32 %v372, 1e-06
        %v389 = vrsqrt.pop %v373
        %v390 = vrsqrt.pop %v374
        %v391 = vrsqrt.pop %v375
        %v392 = vrsqrt.pop %v376
        %v393 = vrsqrt.pop %v377
        %v394 = vrsqrt.pop %v378
        %v395 = vrsqrt.pop %v379
        %v396 = vrsqrt.pop %v380
        %v397 = vrsqrt.pop %v381
        %v398 = vrsqrt.pop %v382
        %v399 = vrsqrt.pop %v383
        %v400 = vrsqrt.pop %v384
        %v401 = vrsqrt.pop %v385
        %v402 = vrsqrt.pop %v386
        %v403 = vrsqrt.pop %v387
        %v404 = vrsqrt.pop %v388
        %v405 = vmul.f32 %v244, %v389
        %v406 = vmul.f32 %v245, %v389
        %v407 = vmul.f32 %v246, %v390
        %v408 = vmul.f32 %v247, %v390
        %v409 = vmul.f32 %v248, %v391
        %v410 = vmul.f32 %v249, %v391
        %v411 = vmul.f32 %v250, %v392
        %v412 = vmul.f32 %v251, %v392
        %v413 = vmul.f32 %v252, %v393
        %v414 = vmul.f32 %v253, %v393
        %v415 = vmul.f32 %v254, %v394
        %v416 = vmul.f32 %v255, %v394
        %v417 = vmul.f32 %v256, %v395
        %v418 = vmul.f32 %v257, %v395
        %v419 = vmul.f32 %v258, %v396
        %v420 = vmul.f32 %v259, %v396
        %v421 = vmul.f32 %v260, %v397
        %v422 = vmul.f32 %v261, %v397
        %v423 = vmul.f32 %v262, %v398
        %v424 = vmul.f32 %v263, %v398
        %v425 = vmul.f32 %v264, %v399
        %v426 = vmul.f32 %v265, %v399
        %v427 = vmul.f32 %v266, %v400
        %v428 = vmul.f32 %v267, %v400
        %v429 = vmul.f32 %v268, %v401
        %v430 = vmul.f32 %v269, %v401
        %v431 = vmul.f32 %v270, %v402
        %v432 = vmul.f32 %v271, %v402
        %v433 = vmul.f32 %v272, %v403
        %v434 = vmul.f32 %v273, %v403
        %v435 = vmul.f32 %v274, %v404
        %v436 = vmul.f32 %v275, %v404
        %v437 = vld [vmem:[%s1] sm:$0x3]
        %v439 = vlaneseq
        %v440 = vshrl.u32 %v439, 7
        %v441 = vsub.s32 0, %v440
        %v442 = vrot.slane %v437, %v441
        %v443 = vlaneseq
        %v444 = vshrl.u32 %v443, 7
        %v445 = vsub.s32 1, %v444
        %v446 = vrot.slane %v437, %v445
        %v449 = vmul.f32 %v405, %v442
        %v450 = vmul.f32 %v406, %v446
        %v451 = vmul.f32 %v407, %v442
        %v452 = vmul.f32 %v408, %v446
        %v453 = vmul.f32 %v409, %v442
        %v454 = vmul.f32 %v410, %v446
        %v455 = vmul.f32 %v411, %v442
        %v456 = vmul.f32 %v412, %v446
        %v457 = vmul.f32 %v413, %v442
        %v458 = vmul.f32 %v414, %v446
        %v459 = vmul.f32 %v415, %v442
        %v460 = vmul.f32 %v416, %v446
        %v461 = vmul.f32 %v417, %v442
        %v462 = vmul.f32 %v418, %v446
        %v463 = vmul.f32 %v419, %v442
        %v464 = vmul.f32 %v420, %v446
        %v465 = vmul.f32 %v421, %v442
        %v466 = vmul.f32 %v422, %v446
        %v467 = vmul.f32 %v423, %v442
        %v468 = vmul.f32 %v424, %v446
        %v469 = vmul.f32 %v425, %v442
        %v470 = vmul.f32 %v426, %v446
        %v471 = vmul.f32 %v427, %v442
        %v472 = vmul.f32 %v428, %v446
        %v473 = vmul.f32 %v429, %v442
        %v474 = vmul.f32 %v430, %v446
        %v475 = vmul.f32 %v431, %v442
        %v476 = vmul.f32 %v432, %v446
        %v477 = vmul.f32 %v433, %v442
        %v478 = vmul.f32 %v434, %v446
        %v479 = vmul.f32 %v435, %v442
        %v480 = vmul.f32 %v436, %v446
        %v481 = vpack.c.bf16 %v451, %v449
        %v482 = vpack.c.bf16 %v452, %v450
        %v483 = vpack.c.bf16 %v455, %v453
        %v484 = vpack.c.bf16 %v456, %v454
        %v485 = vpack.c.bf16 %v459, %v457
        %v486 = vpack.c.bf16 %v460, %v458
        %v487 = vpack.c.bf16 %v463, %v461
        %v488 = vpack.c.bf16 %v464, %v462
        %v489 = vpack.c.bf16 %v467, %v465
        %v490 = vpack.c.bf16 %v468, %v466
        %v491 = vpack.c.bf16 %v471, %v469
        %v492 = vpack.c.bf16 %v472, %v470
        %v493 = vpack.c.bf16 %v475, %v473
        %v494 = vpack.c.bf16 %v476, %v474
        %v495 = vpack.c.bf16 %v479, %v477
        %v496 = vpack.c.bf16 %v480, %v478
        %v497 = vld [vmem:[%s213] sm:$0xff]
        %v498 = vld [vmem:[%s213 + $0x8] sm:$0xff]
        %v499 = vld [vmem:[%s213 + $0x10] sm:$0xff]
        %v500 = vld [vmem:[%s213 + $0x18] sm:$0xff]
        %v501 = vld [vmem:[%s213 + $0x20] sm:$0xff]
        %v502 = vld [vmem:[%s213 + $0x28] sm:$0xff]
        %v503 = vld [vmem:[%s213 + $0x30] sm:$0xff]
        %v504 = vld [vmem:[%s213 + $0x38] sm:$0xff]
        %v505 = vld [vmem:[%s213 + $0x40] sm:$0xff]
        %v506 = vld [vmem:[%s213 + $0x48] sm:$0xff]
        %v507 = vld [vmem:[%s213 + $0x50] sm:$0xff]
        %v508 = vld [vmem:[%s213 + $0x58] sm:$0xff]
        %v509 = vld [vmem:[%s213 + $0x60] sm:$0xff]
        %v510 = vld [vmem:[%s213 + $0x68] sm:$0xff]
        %v511 = vld [vmem:[%s213 + $0x70] sm:$0xff]
        %v512 = vld [vmem:[%s213 + $0x78] sm:$0xff]
        %v513 = vld [vmem:[%s213 + $0x80] sm:$0xff]
        %v514 = vld [vmem:[%s213 + $0x88] sm:$0xff]
        %v515 = vld [vmem:[%s213 + $0x90] sm:$0xff]
        %v516 = vld [vmem:[%s213 + $0x98] sm:$0xff]
        %v517 = vld [vmem:[%s213 + $0xa0] sm:$0xff]
        %v518 = vld [vmem:[%s213 + $0xa8] sm:$0xff]
        %v519 = vld [vmem:[%s213 + $0xb0] sm:$0xff]
        %v520 = vld [vmem:[%s213 + $0xb8] sm:$0xff]
        %v521 = vld [vmem:[%s213 + $0xc0] sm:$0xff]
        %v522 = vld [vmem:[%s213 + $0xc8] sm:$0xff]
        %v523 = vld [vmem:[%s213 + $0xd0] sm:$0xff]
        %v524 = vld [vmem:[%s213 + $0xd8] sm:$0xff]
        %v525 = vld [vmem:[%s213 + $0xe0] sm:$0xff]
        %v526 = vld [vmem:[%s213 + $0xe8] sm:$0xff]
        %v527 = vld [vmem:[%s213 + $0xf0] sm:$0xff]
        %v528 = vld [vmem:[%s213 + $0xf8] sm:$0xff]
        %v561 = vunpack.c.l.b16 %v497
        %v562 = vunpack.c.h.b16 %v497
        %v563 = vunpack.c.l.b16 %v498
        %v564 = vunpack.c.h.b16 %v498
        %v565 = vunpack.c.l.b16 %v499
        %v566 = vunpack.c.h.b16 %v499
        %v567 = vunpack.c.l.b16 %v500
        %v568 = vunpack.c.h.b16 %v500
        %v569 = vunpack.c.l.b16 %v501
        %v570 = vunpack.c.h.b16 %v501
        %v571 = vunpack.c.l.b16 %v502
        %v572 = vunpack.c.h.b16 %v502
        %v573 = vunpack.c.l.b16 %v503
        %v574 = vunpack.c.h.b16 %v503
        %v575 = vunpack.c.l.b16 %v504
        %v576 = vunpack.c.h.b16 %v504
        %v577 = vunpack.c.l.b16 %v505
        %v578 = vunpack.c.h.b16 %v505
        %v579 = vunpack.c.l.b16 %v506
        %v580 = vunpack.c.h.b16 %v506
        %v581 = vunpack.c.l.b16 %v507
        %v582 = vunpack.c.h.b16 %v507
        %v583 = vunpack.c.l.b16 %v508
        %v584 = vunpack.c.h.b16 %v508
        %v585 = vunpack.c.l.b16 %v509
        %v586 = vunpack.c.h.b16 %v509
        %v587 = vunpack.c.l.b16 %v510
        %v588 = vunpack.c.h.b16 %v510
        %v589 = vunpack.c.l.b16 %v511
        %v590 = vunpack.c.h.b16 %v511
        %v591 = vunpack.c.l.b16 %v512
        %v592 = vunpack.c.h.b16 %v512
        %v593 = vunpack.c.l.b16 %v513
        %v594 = vunpack.c.h.b16 %v513
        %v595 = vunpack.c.l.b16 %v514
        %v596 = vunpack.c.h.b16 %v514
        %v597 = vunpack.c.l.b16 %v515
        %v598 = vunpack.c.h.b16 %v515
        %v599 = vunpack.c.l.b16 %v516
        %v600 = vunpack.c.h.b16 %v516
        %v601 = vunpack.c.l.b16 %v517
        %v602 = vunpack.c.h.b16 %v517
        %v603 = vunpack.c.l.b16 %v518
        %v604 = vunpack.c.h.b16 %v518
        %v605 = vunpack.c.l.b16 %v519
        %v606 = vunpack.c.h.b16 %v519
        %v607 = vunpack.c.l.b16 %v520
        %v608 = vunpack.c.h.b16 %v520
        %v609 = vunpack.c.l.b16 %v521
        %v610 = vunpack.c.h.b16 %v521
        %v611 = vunpack.c.l.b16 %v522
        %v612 = vunpack.c.h.b16 %v522
        %v613 = vunpack.c.l.b16 %v523
        %v614 = vunpack.c.h.b16 %v523
        %v615 = vunpack.c.l.b16 %v524
        %v616 = vunpack.c.h.b16 %v524
        %v617 = vunpack.c.l.b16 %v525
        %v618 = vunpack.c.h.b16 %v525
        %v619 = vunpack.c.l.b16 %v526
        %v620 = vunpack.c.h.b16 %v526
        %v621 = vunpack.c.l.b16 %v527
        %v622 = vunpack.c.h.b16 %v527
        %v623 = vunpack.c.l.b16 %v528
        %v624 = vunpack.c.h.b16 %v528
        %v625 = vpack.c.b16 %v563, %v561
        %v626 = vpack.c.b16 %v564, %v562
        %v627 = vpack.c.b16 %v567, %v565
        %v628 = vpack.c.b16 %v568, %v566
        %v629 = vpack.c.b16 %v571, %v569
        %v630 = vpack.c.b16 %v572, %v570
        %v631 = vpack.c.b16 %v575, %v573
        %v632 = vpack.c.b16 %v576, %v574
        %v633 = vpack.c.b16 %v579, %v577
        %v634 = vpack.c.b16 %v580, %v578
        %v635 = vpack.c.b16 %v583, %v581
        %v636 = vpack.c.b16 %v584, %v582
        %v637 = vpack.c.b16 %v587, %v585
        %v638 = vpack.c.b16 %v588, %v586
        %v639 = vpack.c.b16 %v591, %v589
        %v640 = vpack.c.b16 %v592, %v590
        %v641 = vpack.c.b16 %v595, %v593
        %v642 = vpack.c.b16 %v596, %v594
        %v643 = vpack.c.b16 %v599, %v597
        %v644 = vpack.c.b16 %v600, %v598
        %v645 = vpack.c.b16 %v603, %v601
        %v646 = vpack.c.b16 %v604, %v602
        %v647 = vpack.c.b16 %v607, %v605
        %v648 = vpack.c.b16 %v608, %v606
        %v649 = vpack.c.b16 %v611, %v609
        %v650 = vpack.c.b16 %v612, %v610
        %v651 = vpack.c.b16 %v615, %v613
        %v652 = vpack.c.b16 %v616, %v614
        %v653 = vpack.c.b16 %v619, %v617
        %v654 = vpack.c.b16 %v620, %v618
        %v655 = vpack.c.b16 %v623, %v621
        %v656 = vpack.c.b16 %v624, %v622
        %689 = vmatprep.subr.bf16.mxu0 %v640
        %690 = vmatpush1.bf16.msra.mxu0 %v639
        %691 = vmatprep.subr.bf16.mxu0 %v638
        %692 = vmatpush1.bf16.msra.mxu0 %v637
        %693 = vmatprep.subr.bf16.mxu0 %v636
        %694 = vmatpush1.bf16.msra.mxu0 %v635
        %695 = vmatprep.subr.bf16.mxu0 %v634
        %696 = vmatpush1.bf16.msra.mxu0 %v633
        %697 = vmatprep.subr.bf16.mxu0 %v632
        %698 = vmatpush1.bf16.msra.mxu0 %v631
        %699 = vmatprep.subr.bf16.mxu0 %v630
        %700 = vmatpush1.bf16.msra.mxu0 %v629
        %701 = vmatprep.subr.bf16.mxu0 %v628
        %702 = vmatpush1.bf16.msra.mxu0 %v627
        %703 = vmatprep.subr.bf16.mxu0 %v626
        %704 = vmatpush1.bf16.msra.mxu0 %v625
        %705 = vmatprep.subr.bf16.mxu0 %v656
        %706 = vmatpush2.bf16.msra.mxu0 %v655
        %707 = vmatprep.subr.bf16.mxu0 %v654
        %708 = vmatpush2.bf16.msra.mxu0 %v653
        %709 = vmatprep.subr.bf16.mxu0 %v652
        %710 = vmatpush2.bf16.msra.mxu0 %v651
        %711 = vmatprep.subr.bf16.mxu0 %v650
        %712 = vmatpush2.bf16.msra.mxu0 %v649
        %713 = vmatprep.subr.bf16.mxu0 %v648
        %714 = vmatpush2.bf16.msra.mxu0 %v647
        %715 = vmatprep.subr.bf16.mxu0 %v646
        %716 = vmatpush2.bf16.msra.mxu0 %v645
        %717 = vmatprep.subr.bf16.mxu0 %v644
        %718 = vmatpush2.bf16.msra.mxu0 %v643
        %719 = vmatprep.subr.bf16.mxu0 %v642
        %720 = vmatpush2.bf16.msra.mxu0 %v641
        %721 = vmatprep.mubr.bf16.mxu0 %v482
        %722 = vmatmul.mubr.bf16.gmra.mxu0 %v481
        %v723 = vpop.f32.mrf.mxu0
        %v724 = vadd.f32 0.0, %v723
        %v725 = vpop.f32.mrf.mxu0
        %v726 = vadd.f32 0.0, %v725
        %v727 = vpop.f32.mrf.mxu0
        %v728 = vadd.f32 0.0, %v727
        %v729 = vpop.f32.mrf.mxu0
        %v730 = vadd.f32 0.0, %v729
        %731 = vmatprep.mubr.bf16.mxu0 %v484
        %732 = vmatmul.mubr.bf16.gmra.mxu0 %v483
        %v733 = vpop.f32.mrf.mxu0
        %v734 = vadd.f32 0.0, %v733
        %v735 = vpop.f32.mrf.mxu0
        %v736 = vadd.f32 0.0, %v735
        %v737 = vpop.f32.mrf.mxu0
        %v738 = vadd.f32 0.0, %v737
        %v739 = vpop.f32.mrf.mxu0
        %v740 = vadd.f32 0.0, %v739
        %741 = vmatprep.mubr.bf16.mxu0 %v486
        %742 = vmatmul.mubr.bf16.gmra.mxu0 %v485
        %v743 = vpop.f32.mrf.mxu0
        %v744 = vadd.f32 0.0, %v743
        %v745 = vpop.f32.mrf.mxu0
        %v746 = vadd.f32 0.0, %v745
        %v747 = vpop.f32.mrf.mxu0
        %v748 = vadd.f32 0.0, %v747
        %v749 = vpop.f32.mrf.mxu0
        %v750 = vadd.f32 0.0, %v749
        %751 = vmatprep.mubr.bf16.mxu0 %v488
        %752 = vmatmul.mubr.bf16.gmra.mxu0 %v487
        %v753 = vpop.f32.mrf.mxu0
        %v754 = vadd.f32 0.0, %v753
        %v755 = vpop.f32.mrf.mxu0
        %v756 = vadd.f32 0.0, %v755
        %v757 = vpop.f32.mrf.mxu0
        %v758 = vadd.f32 0.0, %v757
        %v759 = vpop.f32.mrf.mxu0
        %v760 = vadd.f32 0.0, %v759
        %761 = vmatprep.mubr.bf16.mxu0 %v490
        %762 = vmatmul.mubr.bf16.gmra.mxu0 %v489
        %v763 = vpop.f32.mrf.mxu0
        %v764 = vadd.f32 0.0, %v763
        %v765 = vpop.f32.mrf.mxu0
        %v766 = vadd.f32 0.0, %v765
        %v767 = vpop.f32.mrf.mxu0
        %v768 = vadd.f32 0.0, %v767
        %v769 = vpop.f32.mrf.mxu0
        %v770 = vadd.f32 0.0, %v769
        %771 = vmatprep.mubr.bf16.mxu0 %v492
        %772 = vmatmul.mubr.bf16.gmra.mxu0 %v491
        %v773 = vpop.f32.mrf.mxu0
        %v774 = vadd.f32 0.0, %v773
        %v775 = vpop.f32.mrf.mxu0
        %v776 = vadd.f32 0.0, %v775
        %v777 = vpop.f32.mrf.mxu0
        %v778 = vadd.f32 0.0, %v777
        %v779 = vpop.f32.mrf.mxu0
        %v780 = vadd.f32 0.0, %v779
        %781 = vmatprep.mubr.bf16.mxu0 %v494
        %782 = vmatmul.mubr.bf16.gmra.mxu0 %v493
        %v783 = vpop.f32.mrf.mxu0
        %v784 = vadd.f32 0.0, %v783
        %v785 = vpop.f32.mrf.mxu0
        %v786 = vadd.f32 0.0, %v785
        %v787 = vpop.f32.mrf.mxu0
        %v788 = vadd.f32 0.0, %v787
        %v789 = vpop.f32.mrf.mxu0
        %v790 = vadd.f32 0.0, %v789
        %791 = vmatprep.mubr.bf16.mxu0 %v496
        %792 = vmatmul.mubr.bf16.gmra.mxu0 %v495
        %v793 = vpop.f32.mrf.mxu0
        %v794 = vadd.f32 0.0, %v793
        %v795 = vpop.f32.mrf.mxu0
        %v796 = vadd.f32 0.0, %v795
        %v797 = vpop.f32.mrf.mxu0
        %v798 = vadd.f32 0.0, %v797
        %v799 = vpop.f32.mrf.mxu0
        %v800 = vadd.f32 0.0, %v799
        %801 = vdwg.mxu0
        %v802 = vpack.c.bf16 %v728, %v724
        %v803 = vpack.c.bf16 %v730, %v726
        %v804 = vpack.c.bf16 %v738, %v734
        %v805 = vpack.c.bf16 %v740, %v736
        %v806 = vpack.c.bf16 %v748, %v744
        %v807 = vpack.c.bf16 %v750, %v746
        %v808 = vpack.c.bf16 %v758, %v754
        %v809 = vpack.c.bf16 %v760, %v756
        %v810 = vpack.c.bf16 %v768, %v764
        %v811 = vpack.c.bf16 %v770, %v766
        %v812 = vpack.c.bf16 %v778, %v774
        %v813 = vpack.c.bf16 %v780, %v776
        %v814 = vpack.c.bf16 %v788, %v784
        %v815 = vpack.c.bf16 %v790, %v786
        %v816 = vpack.c.bf16 %v798, %v794
        %v817 = vpack.c.bf16 %v800, %v796
        %v834 = vunpack.c.l.b16 %v802
        %v835 = vunpack.c.l.b16 %v803
        %v836 = vunpack.c.h.b16 %v802
        %v837 = vunpack.c.h.b16 %v803
        %v838 = vunpack.c.l.b16 %v804
        %v839 = vunpack.c.l.b16 %v805
        %v840 = vunpack.c.h.b16 %v804
        %v841 = vunpack.c.h.b16 %v805
        %v842 = vunpack.c.l.b16 %v806
        %v843 = vunpack.c.l.b16 %v807
        %v844 = vunpack.c.h.b16 %v806
        %v845 = vunpack.c.h.b16 %v807
        %v846 = vunpack.c.l.b16 %v808
        %v847 = vunpack.c.l.b16 %v809
        %v848 = vunpack.c.h.b16 %v808
        %v849 = vunpack.c.h.b16 %v809
        %v850 = vunpack.c.l.b16 %v810
        %v851 = vunpack.c.l.b16 %v811
        %v852 = vunpack.c.h.b16 %v810
        %v853 = vunpack.c.h.b16 %v811
        %v854 = vunpack.c.l.b16 %v812
        %v855 = vunpack.c.l.b16 %v813
        %v856 = vunpack.c.h.b16 %v812
        %v857 = vunpack.c.h.b16 %v813
        %v858 = vunpack.c.l.b16 %v814
        %v859 = vunpack.c.l.b16 %v815
        %v860 = vunpack.c.h.b16 %v814
        %v861 = vunpack.c.h.b16 %v815
        %v862 = vunpack.c.l.b16 %v816
        %v863 = vunpack.c.l.b16 %v817
        %v864 = vunpack.c.h.b16 %v816
        %v865 = vunpack.c.h.b16 %v817
        %v866 = vpack.c.b16 %v835, %v834
        %v867 = vpack.c.b16 %v837, %v836
        %v868 = vpack.c.b16 %v839, %v838
        %v869 = vpack.c.b16 %v841, %v840
        %v870 = vpack.c.b16 %v843, %v842
        %v871 = vpack.c.b16 %v845, %v844
        %v872 = vpack.c.b16 %v847, %v846
        %v873 = vpack.c.b16 %v849, %v848
        %v874 = vpack.c.b16 %v851, %v850
        %v875 = vpack.c.b16 %v853, %v852
        %v876 = vpack.c.b16 %v855, %v854
        %v877 = vpack.c.b16 %v857, %v856
        %v878 = vpack.c.b16 %v859, %v858
        %v879 = vpack.c.b16 %v861, %v860
        %v880 = vpack.c.b16 %v863, %v862
        %v881 = vpack.c.b16 %v865, %v864
        %898 = vst [vmem:[%s239] sm:$0xff] %v866
        %899 = vst [vmem:[%s239 + $0x8] sm:$0xff] %v867
        %900 = vst [vmem:[%s239 + $0x10] sm:$0xff] %v868
        %901 = vst [vmem:[%s239 + $0x18] sm:$0xff] %v869
        %902 = vst [vmem:[%s239 + $0x20] sm:$0xff] %v870
        %903 = vst [vmem:[%s239 + $0x28] sm:$0xff] %v871
        %904 = vst [vmem:[%s239 + $0x30] sm:$0xff] %v872
        %905 = vst [vmem:[%s239 + $0x38] sm:$0xff] %v873
        %906 = vst [vmem:[%s239 + $0x40] sm:$0xff] %v874
        %907 = vst [vmem:[%s239 + $0x48] sm:$0xff] %v875
        %908 = vst [vmem:[%s239 + $0x50] sm:$0xff] %v876
        %909 = vst [vmem:[%s239 + $0x58] sm:$0xff] %v877
        %910 = vst [vmem:[%s239 + $0x60] sm:$0xff] %v878
        %911 = vst [vmem:[%s239 + $0x68] sm:$0xff] %v879
        %912 = vst [vmem:[%s239 + $0x70] sm:$0xff] %v880
        %913 = vst [vmem:[%s239 + $0x78] sm:$0xff] %v881
        %s914 = sand.u32 %s115, 1
        %s915 = sand.u32 %s115, 1
        %s916 = smul.addr %s915, 128
        %s917 = scalar_lea.vmem [#allocation6], %s916
        // Predicated region
        $region41: #{t5_block_next.4} parent=31 // pred_check
          %p918 = pneg %p125
        $region42: #{t5_block_next.4} parent=31 // pred_check_branch
          %920 = sbr.rel (%p918) target = $region44
        $region43: #{t5_block_next.4} parent=31 // pred_region
          %s921 = smul.u32 16, %s24
          %s922 = smul.u32 2, %s25
          %s923 = smul.addr %s921, 6
          %s924 = sadd.s32 %s922, %s923
          %s925 = smul.addr %s924, 4
          %s926 = scalar_lea.vmem %s3, %s925
          // Predicated region
          $region45: #{t5_block_next.4} parent=43 // pred_check
            _
          $region46: #{t5_block_next.4} parent=43 // pred_check_branch
            %928 = sbr.rel (0) target = $region48
          $region47: #{t5_block_next.4} parent=43 // pred_region
            // Predicated region
            $region49: #{t5_block_next.4} parent=47 // pred_check
              _
            $region50: #{t5_block_next.4} parent=47 // pred_check_branch
              %930 = sbr.rel (0) target = $region52
            $region51: #{t5_block_next.4} parent=47 // pred_region
              // Predicated region
              $region64: #{t5_block_next.4} parent=51 // pred_check
                _
              $region65: #{t5_block_next.4} parent=51 // pred_check_branch
                %976 = sbr.rel (0) target = $region67
              $region66: #{t5_block_next.4} parent=51 // pred_region
                loop: start=0, step=1, limit=1
                $region68: #{t5_block_next.4} parent=66 // loop_pre_header
                  _
                $region69: #{t5_block_next.4} parent=66 // loop_header
                  %s978 = sphi 0, %s982
                  %p979 = scmp.ge.s32.totalorder %s978, 1
                  %s983 = sphi %s917, %s917
                  %s984 = sphi %s926, %s926
                $region70: #{t5_block_next.4} parent=66 // loop_header_branch
                  %981 = sbr.rel (%p979) target = $region74
                $region71: #{t5_block_next.4} parent=66 // loop_body
                  %v985 = vld [vmem:[%s983] sm:$0xff]
                  %986 = vst [vmem:[%s984] sm:$0xff] %v985
                  %v987 = vld [vmem:[%s983 + $0x8] sm:$0xff]
                  %988 = vst [vmem:[%s984 + $0x18] sm:$0xff] %v987
                  %v989 = vld [vmem:[%s983 + $0x10] sm:$0xff]
                  %990 = vst [vmem:[%s984 + $0x30] sm:$0xff] %v989
                  %v991 = vld [vmem:[%s983 + $0x18] sm:$0xff]
                  %992 = vst [vmem:[%s984 + $0x48] sm:$0xff] %v991
                  %v993 = vld [vmem:[%s983 + $0x20] sm:$0xff]
                  %994 = vst [vmem:[%s984 + $0x60] sm:$0xff] %v993
                  %v995 = vld [vmem:[%s983 + $0x28] sm:$0xff]
                  %996 = vst [vmem:[%s984 + $0x78] sm:$0xff] %v995
                  %v997 = vld [vmem:[%s983 + $0x30] sm:$0xff]
                  %998 = vst [vmem:[%s984 + $0x90] sm:$0xff] %v997
                  %v999 = vld [vmem:[%s983 + $0x38] sm:$0xff]
                  %1000 = vst [vmem:[%s984 + $0xa8] sm:$0xff] %v999
                  %v1001 = vld [vmem:[%s983 + $0x40] sm:$0xff]
                  %1002 = vst [vmem:[%s984 + $0xc0] sm:$0xff] %v1001
                  %v1003 = vld [vmem:[%s983 + $0x48] sm:$0xff]
                  %1004 = vst [vmem:[%s984 + $0xd8] sm:$0xff] %v1003
                  %v1005 = vld [vmem:[%s983 + $0x50] sm:$0xff]
                  %1006 = vst [vmem:[%s984 + $0xf0] sm:$0xff] %v1005
                  %v1007 = vld [vmem:[%s983 + $0x58] sm:$0xff]
                  %1008 = vst [vmem:[%s984 + $0x108] sm:$0xff] %v1007
                  %v1009 = vld [vmem:[%s983 + $0x60] sm:$0xff]
                  %1010 = vst [vmem:[%s984 + $0x120] sm:$0xff] %v1009
                  %v1011 = vld [vmem:[%s983 + $0x68] sm:$0xff]
                  %1012 = vst [vmem:[%s984 + $0x138] sm:$0xff] %v1011
                  %v1013 = vld [vmem:[%s983 + $0x70] sm:$0xff]
                  %1014 = vst [vmem:[%s984 + $0x150] sm:$0xff] %v1013
                  %v1015 = vld [vmem:[%s983 + $0x78] sm:$0xff]
                  %1016 = vst [vmem:[%s984 + $0x168] sm:$0xff] %v1015
                $region72: #{t5_block_next.4} parent=66 // loop_footer
                  %s982 = sadd.s32 1, %s978
                $region73: #{t5_block_next.4} parent=66 // loop_footer_branch
                  %977 = sbr.rel target = $region69
                $region74: #{t5_block_next.4} parent=66 // loop_exit
                  _
              $region67: #{t5_block_next.4} parent=51 // pred_fallthru
                _
              // Predicated region
              $region75: #{t5_block_next.4} parent=51 // pred_check
                _
              $region76: #{t5_block_next.4} parent=51 // pred_check_branch
                %1018 = sbr.rel target = $region78
              $region77: #{t5_block_next.4} parent=51 // pred_region
                _
              $region78: #{t5_block_next.4} parent=51 // pred_fallthru
                _
            $region52: #{t5_block_next.4} parent=47 // pred_fallthru
              _
            // Predicated region
            $region53: #{t5_block_next.4} parent=47 // pred_check
              _
            $region54: #{t5_block_next.4} parent=47 // pred_check_branch
              %932 = sbr.rel target = $region56
            $region55: #{t5_block_next.4} parent=47 // pred_region
              %s934 = ssub.s32 256, 1
              loop: start=0, step=1, limit=1
              $region57: #{t5_block_next.4} parent=55 // loop_pre_header
                _
              $region58: #{t5_block_next.4} parent=55 // loop_header
                %s936 = sphi 0, %s940
                %p937 = scmp.ge.s32.totalorder %s936, 1
                %s941 = sphi %s917, %s917
                %s942 = sphi %s926, %s926
              $region59: #{t5_block_next.4} parent=55 // loop_header_branch
                %939 = sbr.rel (%p937) target = $region63
              $region60: #{t5_block_next.4} parent=55 // loop_body
                %v943 = vld [vmem:[%s941] sm:%s934]
                %944 = vst [vmem:[%s942] sm:%s934] %v943
                %v945 = vld [vmem:[%s941 + $0x8] sm:%s934]
                %946 = vst [vmem:[%s942 + $0x18] sm:%s934] %v945
                %v947 = vld [vmem:[%s941 + $0x10] sm:%s934]
                %948 = vst [vmem:[%s942 + $0x30] sm:%s934] %v947
                %v949 = vld [vmem:[%s941 + $0x18] sm:%s934]
                %950 = vst [vmem:[%s942 + $0x48] sm:%s934] %v949
                %v951 = vld [vmem:[%s941 + $0x20] sm:%s934]
                %952 = vst [vmem:[%s942 + $0x60] sm:%s934] %v951
                %v953 = vld [vmem:[%s941 + $0x28] sm:%s934]
                %954 = vst [vmem:[%s942 + $0x78] sm:%s934] %v953
                %v955 = vld [vmem:[%s941 + $0x30] sm:%s934]
                %956 = vst [vmem:[%s942 + $0x90] sm:%s934] %v955
                %v957 = vld [vmem:[%s941 + $0x38] sm:%s934]
                %958 = vst [vmem:[%s942 + $0xa8] sm:%s934] %v957
                %v959 = vld [vmem:[%s941 + $0x40] sm:%s934]
                %960 = vst [vmem:[%s942 + $0xc0] sm:%s934] %v959
                %v961 = vld [vmem:[%s941 + $0x48] sm:%s934]
                %962 = vst [vmem:[%s942 + $0xd8] sm:%s934] %v961
                %v963 = vld [vmem:[%s941 + $0x50] sm:%s934]
                %964 = vst [vmem:[%s942 + $0xf0] sm:%s934] %v963
                %v965 = vld [vmem:[%s941 + $0x58] sm:%s934]
                %966 = vst [vmem:[%s942 + $0x108] sm:%s934] %v965
                %v967 = vld [vmem:[%s941 + $0x60] sm:%s934]
                %968 = vst [vmem:[%s942 + $0x120] sm:%s934] %v967
                %v969 = vld [vmem:[%s941 + $0x68] sm:%s934]
                %970 = vst [vmem:[%s942 + $0x138] sm:%s934] %v969
                %v971 = vld [vmem:[%s941 + $0x70] sm:%s934]
                %972 = vst [vmem:[%s942 + $0x150] sm:%s934] %v971
                %v973 = vld [vmem:[%s941 + $0x78] sm:%s934]
                %974 = vst [vmem:[%s942 + $0x168] sm:%s934] %v973
              $region61: #{t5_block_next.4} parent=55 // loop_footer
                %s940 = sadd.s32 1, %s936
              $region62: #{t5_block_next.4} parent=55 // loop_footer_branch
                %935 = sbr.rel target = $region58
              $region63: #{t5_block_next.4} parent=55 // loop_exit
                _
            $region56: #{t5_block_next.4} parent=47 // pred_fallthru
              _
          $region48: #{t5_block_next.4} parent=43 // pred_fallthru
            _
          %1019 = vnop
        $region44: #{t5_block_next.4} parent=31 // pred_fallthru
          _
      $region32: #{t5_block_next.4} parent=5 // pred_fallthru
        _
      %p1020 = scmp.le.s32.totalorder 2, %s15
      // Predicated region
      $region79: #{t5_block_next.4} parent=5 // pred_check
        %p1021 = pneg %p1020
      $region80: #{t5_block_next.4} parent=5 // pred_check_branch
        %1023 = sbr.rel (%p1021) target = $region82
      $region81: #{t5_block_next.4} parent=5 // pred_region
        %s1024 = ssub.s32 %s15, 2
        // Predicated region
        $region83: #{t5_block_next.4} parent=81 // pred_check
          %p1025 = pneg %p131
        $region84: #{t5_block_next.4} parent=81 // pred_check_branch
          %1027 = sbr.rel (%p1025) target = $region86
        $region85: #{t5_block_next.4} parent=81 // pred_region
          %s1028 = sand.u32 %s116, 1
          %s1029 = sand.u32 %s116, 1
          %s1030 = smul.addr %s1029, 128
          %s1031 = scalar_lea.vmem [#allocation6], %s1030
        $region86: #{t5_block_next.4} parent=81 // pred_fallthru
          _
      $region82: #{t5_block_next.4} parent=5 // pred_fallthru
        _
    $region6: #{t5_block_next.4} parent=1 // loop_footer
      %s19 = sadd.s32 1, %s15
    $region7: #{t5_block_next.4} parent=1 // loop_footer_branch
      %14 = sbr.rel target = $region3
    $region8: #{t5_block_next.4} parent=1 // loop_exit
      _
    %1032 = vsyncpa [#allocation3], 1
    %s1033 = scalar_lea.sflag [#allocation3], 1
    %1034 = vsyncpa %s1033, 1
    %1035 = vsyncpa [#allocation5], 1
    %s1036 = scalar_lea.sflag [#allocation5], 1
    %1037 = vsyncpa %s1036, 1

// kernel: t5_block_next.7
$region0: #{t5_block_next.7}
  #allocation0 [shape = 'u32[]', space=smem, size = 0x4, offset = 0x4, fixed_abs, tag = 'smem constant byte address 0x4 - core index']
  #allocation1 [shape = 'u32[144,128]{1,0:T(1,128)}', space=vmem, size = 0x12000, scoped, tag = 'internal scratch']
  %s0 = inlined_call_operand.vmem [shape: bf16[256,256], index: 0, kind: input, shape index: {}]
  %s1 = inlined_call_operand.vmem [shape: bf16[256,512], index: 1, kind: input, shape index: {}]
  %s2 = inlined_call_operand.vmem [shape: bf16[256,512], index: 2, kind: input, shape index: {}]
  %s3 = inlined_call_operand.vmem [shape: bf16[512,256], index: 3, kind: input, shape index: {}]
  %s4 = inlined_call_operand.vmem [shape: f32[256,256], index: 4, kind: input, shape index: {}]
  %s5 = inlined_call_operand.hbm [shape: f32[256,256], index: 5, kind: output, shape index: {}]
  %s6 = sld [smem:[#allocation0]]
  $region133: #{t5_block_next.7} parent=0
    _
  %s8 = ssub.s32 1, %s6
  %s9 = scalar_select 0, %s8, %s6
  $region1: #{t5_block_next.7} parent=0
    #allocation2 [shape = 'u8[262144]{0}', space=vmem, size = 0x40000, scoped, tag = 'input window, operand 1']
    #allocation3 [shape = 'u8[262144]{0}', space=vmem, size = 0x40000, scoped, tag = 'input window, operand 2']
    #allocation4 [shape = 'u8[262144]{0}', space=vmem, size = 0x40000, scoped, tag = 'output window, operand 0']
    #allocation5 [shape = 's32[2]{0}', space=sflag, size = 0x8, scoped, tag = 'scoped memory for t5_block_next.7']
    %10 = vsyncpa [#allocation5], 0
    %s11 = scalar_lea.sflag [#allocation5], 1
    %12 = vsyncpa %s11, 0
    loop: start=0, step=1, limit=6
    $region2: #{t5_block_next.7} parent=1 // loop_pre_header
      _
    $region3: #{t5_block_next.7} parent=1 // loop_header
      %s14 = sphi 0, %s18
      %p15 = scmp.ge.s32.totalorder %s14, 6
      %s21 = sphi 0, %s33
      %s22 = sphi 0, %s29
      %s23 = sphi 0, %s21
      %s24 = sphi 0, %s22
      %s25 = sphi 0, %s23
      %s26 = sphi 0, %s24
      %s36 = sphi 0, %s38
      %s39 = sphi 0, %s36
      %s40 = sphi 0, %s39
      %s56 = sphi 0, %s40
      %s62 = sphi 0, %s64
      %s65 = sphi 0, %s62
      %s66 = sphi 0, %s65
      %s82 = sphi 0, %s66
      %s88 = sphi 0, %s90
      %s91 = sphi 0, %s88
      %s92 = sphi 0, %s91
      %s108 = sphi 0, %s92
      %s114 = sphi 0, %s116
      %s117 = sphi 0, %s114
      %s118 = sphi 0, %s117
      %s134 = sphi 0, %s118
      %s140 = sphi 0, %s142
      %s143 = sphi 0, %s140
      %s144 = sphi 0, %s143
      %s160 = sphi 0, %s144
      %s166 = sphi 0, %s168
      %s169 = sphi 0, %s166
      %s170 = sphi 0, %s169
      %s186 = sphi 0, %s170
    $region4: #{t5_block_next.7} parent=1 // loop_header_branch
      %17 = sbr.rel (%p15) target = $region8
    $region5: #{t5_block_next.7} parent=1 // loop_body
      %s19 = ssub.s32 %s14, 1
      %s20 = ssub.s32 %s14, 2
      %s27 = sadd.s32 1, %s22
      %p28 = scmp.ge.s32.totalorder %s27, 2
      %s29 = scalar_select %p28, 0, %s27
      %s30 = sadd.s32 1, %s21
      %s31 = scalar_select %p28, %s30, %s21
      %p32 = scmp.ge.s32.totalorder %s31, 2
      %s33 = scalar_select %p32, 0, %s31
      %s34 = ssub.s32 %s21, %s33
      %p35 = scmp.eq.s32.totalorder %s34, 0
      %s37 = sadd.s32 %s36, 1
      %s38 = scalar_select %p35, %s36, %s37
      %p41 = pneg %p35
      %p42 = scmp.eq.s32.totalorder %s14, 3
      %p43 = por %p41, %p42
      %p44 = scmp.ne.s32.totalorder %s36, %s39
      %p45 = scmp.eq.s32.totalorder %s14, 0
      %p46 = por %p44, %p45
      %p47 = scmp.ne.s32.totalorder %s36, %s39
      %p48 = scmp.eq.s32.totalorder %s19, 3
      %p49 = por %p47, %p48
      %p50 = scmp.ne.s32.totalorder %s39, %s40
      %p51 = scmp.eq.s32.totalorder %s19, 0
      %p52 = por %p50, %p51
      %p53 = scmp.ne.s32.totalorder %s39, %s40
      %p54 = scmp.eq.s32.totalorder %s20, 3
      %p55 = por %p53, %p54
      %p57 = scmp.ne.s32.totalorder %s40, %s56
      %p58 = scmp.eq.s32.totalorder %s20, 0
      %p59 = por %p57, %p58
      %s60 = ssub.s32 %s22, %s29
      %p61 = scmp.eq.s32.totalorder %s60, 0
      %s63 = sadd.s32 %s62, 1
      %s64 = scalar_select %p61, %s62, %s63
      %p67 = pneg %p61
      %p68 = scmp.eq.s32.totalorder %s14, 3
      %p69 = por %p67, %p68
      %p70 = scmp.ne.s32.totalorder %s62, %s65
      %p71 = scmp.eq.s32.totalorder %s14, 0
      %p72 = por %p70, %p71
      %p73 = scmp.ne.s32.totalorder %s62, %s65
      %p74 = scmp.eq.s32.totalorder %s19, 3
      %p75 = por %p73, %p74
      %p76 = scmp.ne.s32.totalorder %s65, %s66
      %p77 = scmp.eq.s32.totalorder %s19, 0
      %p78 = por %p76, %p77
      %p79 = scmp.ne.s32.totalorder %s65, %s66
      %p80 = scmp.eq.s32.totalorder %s20, 3
      %p81 = por %p79, %p80
      %p83 = scmp.ne.s32.totalorder %s66, %s82
      %p84 = scmp.eq.s32.totalorder %s20, 0
      %p85 = por %p83, %p84
      %s86 = ssub.s32 %s22, %s29
      %p87 = scmp.eq.s32.totalorder %s86, 0
      %s89 = sadd.s32 %s88, 1
      %s90 = scalar_select %p87, %s88, %s89
      %p93 = pneg %p87
      %p94 = scmp.eq.s32.totalorder %s14, 3
      %p95 = por %p93, %p94
      %p96 = scmp.ne.s32.totalorder %s88, %s91
      %p97 = scmp.eq.s32.totalorder %s14, 0
      %p98 = por %p96, %p97
      %p99 = scmp.ne.s32.totalorder %s88, %s91
      %p100 = scmp.eq.s32.totalorder %s19, 3
      %p101 = por %p99, %p100
      %p102 = scmp.ne.s32.totalorder %s91, %s92
      %p103 = scmp.eq.s32.totalorder %s19, 0
      %p104 = por %p102, %p103
      %p105 = scmp.ne.s32.totalorder %s91, %s92
      %p106 = scmp.eq.s32.totalorder %s20, 3
      %p107 = por %p105, %p106
      %p109 = scmp.ne.s32.totalorder %s92, %s108
      %p110 = scmp.eq.s32.totalorder %s20, 0
      %p111 = por %p109, %p110
      %s112 = ssub.s32 %s22, %s29
      %p113 = scmp.eq.s32.totalorder %s112, 0
      %s115 = sadd.s32 %s114, 1
      %s116 = scalar_select %p113, %s114, %s115
      %p119 = pneg %p113
      %p120 = scmp.eq.s32.totalorder %s14, 3
      %p121 = por %p119, %p120
      %p122 = scmp.ne.s32.totalorder %s114, %s117
      %p123 = scmp.eq.s32.totalorder %s14, 0
      %p124 = por %p122, %p123
      %p125 = scmp.ne.s32.totalorder %s114, %s117
      %p126 = scmp.eq.s32.totalorder %s19, 3
      %p127 = por %p125, %p126
      %p128 = scmp.ne.s32.totalorder %s117, %s118
      %p129 = scmp.eq.s32.totalorder %s19, 0
      %p130 = por %p128, %p129
      %p131 = scmp.ne.s32.totalorder %s117, %s118
      %p132 = scmp.eq.s32.totalorder %s20, 3
      %p133 = por %p131, %p132
      %p135 = scmp.ne.s32.totalorder %s118, %s134
      %p136 = scmp.eq.s32.totalorder %s20, 0
      %p137 = por %p135, %p136
      %s138 = ssub.s32 %s21, %s33
      %p139 = scmp.eq.s32.totalorder %s138, 0
      %s141 = sadd.s32 %s140, 1
      %s142 = scalar_select %p139, %s140, %s141
      %p145 = pneg %p139
      %p146 = scmp.eq.s32.totalorder %s14, 3
      %p147 = por %p145, %p146
      %p148 = scmp.ne.s32.totalorder %s140, %s143
      %p149 = scmp.eq.s32.totalorder %s14, 0
      %p150 = por %p148, %p149
      %p151 = scmp.ne.s32.totalorder %s140, %s143
      %p152 = scmp.eq.s32.totalorder %s19, 3
      %p153 = por %p151, %p152
      %p154 = scmp.ne.s32.totalorder %s143, %s144
      %p155 = scmp.eq.s32.totalorder %s19, 0
      %p156 = por %p154, %p155
      %p157 = scmp.ne.s32.totalorder %s143, %s144
      %p158 = scmp.eq.s32.totalorder %s20, 3
      %p159 = por %p157, %p158
      %p161 = scmp.ne.s32.totalorder %s144, %s160
      %p162 = scmp.eq.s32.totalorder %s20, 0
      %p163 = por %p161, %p162
      %s164 = ssub.s32 %s21, %s33
      %p165 = scmp.eq.s32.totalorder %s164, 0
      %s167 = sadd.s32 %s166, 1
      %s168 = scalar_select %p165, %s166, %s167
      %p171 = pneg %p165
      %p172 = scmp.eq.s32.totalorder %s14, 3
      %p173 = por %p171, %p172
      %p174 = scmp.ne.s32.totalorder %s166, %s169
      %p175 = scmp.eq.s32.totalorder %s14, 0
      %p176 = por %p174, %p175
      %p177 = scmp.ne.s32.totalorder %s166, %s169
      %p178 = scmp.eq.s32.totalorder %s19, 3
      %p179 = por %p177, %p178
      %p180 = scmp.ne.s32.totalorder %s169, %s170
      %p181 = scmp.eq.s32.totalorder %s19, 0
      %p182 = por %p180, %p181
      %p183 = scmp.ne.s32.totalorder %s169, %s170
      %p184 = scmp.eq.s32.totalorder %s20, 3
      %p185 = por %p183, %p184
      %p187 = scmp.ne.s32.totalorder %s170, %s186
      %p188 = scmp.eq.s32.totalorder %s20, 0
      %p189 = por %p187, %p188
      %p190 = scmp.le.s32.totalorder 1, %s14
      %p191 = scmp.lt.s32.totalorder %s14, 5
      %p192 = pnand %p190, %p191
      %p193 = pneg %p192
      // Predicated region
      $region9: #{t5_block_next.7} parent=5 // pred_check
        _
      $region10: #{t5_block_next.7} parent=5 // pred_check_branch
        %195 = sbr.rel (%p192) target = $region12
      $region11: #{t5_block_next.7} parent=5 // pred_region
        %s196 = ssub.s32 %s14, 1
      $region12: #{t5_block_next.7} parent=5 // pred_fallthru
        _
      %p197 = scmp.lt.s32.totalorder %s14, 4
      // Predicated region
      $region13: #{t5_block_next.7} parent=5 // pred_check
        %p198 = pneg %p197
      $region14: #{t5_block_next.7} parent=5 // pred_check_branch
        %200 = sbr.rel (%p198) target = $region16
      $region15: #{t5_block_next.7} parent=5 // pred_region
        // Predicated region
        $region17: #{t5_block_next.7} parent=15 // pred_check
          %p201 = pneg %p46
        $region18: #{t5_block_next.7} parent=15 // pred_check_branch
          %203 = sbr.rel (%p201) target = $region20
        $region19: #{t5_block_next.7} parent=15 // pred_region
          %s204 = smul.u32 16, %s21
          %p205 = scmp.lt.s32.totalorder %s204, 31
          %s206 = scalar_select %p205, %s204, 31
          %s207 = smul.addr %s206, 2
          %s208 = smul.addr %s207, 4
          %s209 = scalar_lea.vmem %s0, %s208
          %s210 = smul.u32 16, %s21
        $region20: #{t5_block_next.7} parent=15 // pred_fallthru
          _
        // Predicated region
        $region21: #{t5_block_next.7} parent=15 // pred_check
          %p211 = pneg %p72
        $region22: #{t5_block_next.7} parent=15 // pred_check_branch
          %213 = sbr.rel (%p211) target = $region24
        $region23: #{t5_block_next.7} parent=15 // pred_region
          %s214 = sand.u32 %s62, 1
          %s215 = sand.u32 %s62, 1
          %s216 = smul.addr %s215, 256
          %s217 = scalar_lea.vmem [#allocation2], %s216
          %s218 = smul.u32 2, %s22
          %s219 = smul.addr %s218, 4
          %s220 = scalar_lea.vmem %s1, %s219
          // Predicated region
          $region25: #{t5_block_next.7} parent=23 // pred_check
            _
          $region26: #{t5_block_next.7} parent=23 // pred_check_branch
            %222 = sbr.rel (0) target = $region28
          $region27: #{t5_block_next.7} parent=23 // pred_region
            // Predicated region
            $region29: #{t5_block_next.7} parent=27 // pred_check
              _
            $region30: #{t5_block_next.7} parent=27 // pred_check_branch
              %224 = sbr.rel (0) target = $region32
            $region31: #{t5_block_next.7} parent=27 // pred_region
              // Predicated region
              $region44: #{t5_block_next.7} parent=31 // pred_check
                _
              $region45: #{t5_block_next.7} parent=31 // pred_check_branch
                %302 = sbr.rel (0) target = $region47
              $region46: #{t5_block_next.7} parent=31 // pred_region
                loop: start=0, step=1, limit=1
                $region48: #{t5_block_next.7} parent=46 // loop_pre_header
                  _
                $region49: #{t5_block_next.7} parent=46 // loop_header
                  %s304 = sphi 0, %s308
                  %p305 = scmp.ge.s32.totalorder %s304, 1
                  %s309 = sphi %s220, %s220
                  %s310 = sphi %s217, %s217
                $region50: #{t5_block_next.7} parent=46 // loop_header_branch
                  %307 = sbr.rel (%p305) target = $region54
                $region51: #{t5_block_next.7} parent=46 // loop_body
                  %v311 = vld [vmem:[%s309] sm:$0xff]
                  %312 = vst [vmem:[%s310] sm:$0xff] %v311
                  %v313 = vld [vmem:[%s309 + $0x10] sm:$0xff]
                  %314 = vst [vmem:[%s310 + $0x8] sm:$0xff] %v313
                  %v315 = vld [vmem:[%s309 + $0x20] sm:$0xff]
                  %316 = vst [vmem:[%s310 + $0x10] sm:$0xff] %v315
                  %v317 = vld [vmem:[%s309 + $0x30] sm:$0xff]
                  %318 = vst [vmem:[%s310 + $0x18] sm:$0xff] %v317
                  %v319 = vld [vmem:[%s309 + $0x40] sm:$0xff]
                  %320 = vst [vmem:[%s310 + $0x20] sm:$0xff] %v319
                  %v321 = vld [vmem:[%s309 + $0x50] sm:$0xff]
                  %322 = vst [vmem:[%s310 + $0x28] sm:$0xff] %v321
                  %v323 = vld [vmem:[%s309 + $0x60] sm:$0xff]
                  %324 = vst [vmem:[%s310 + $0x30] sm:$0xff] %v323
                  %v325 = vld [vmem:[%s309 + $0x70] sm:$0xff]
                  %326 = vst [vmem:[%s310 + $0x38] sm:$0xff] %v325
                  %v327 = vld [vmem:[%s309 + $0x80] sm:$0xff]
                  %328 = vst [vmem:[%s310 + $0x40] sm:$0xff] %v327
                  %v329 = vld [vmem:[%s309 + $0x90] sm:$0xff]
                  %330 = vst [vmem:[%s310 + $0x48] sm:$0xff] %v329
                  %v331 = vld [vmem:[%s309 + $0xa0] sm:$0xff]
                  %332 = vst [vmem:[%s310 + $0x50] sm:$0xff] %v331
                  %v333 = vld [vmem:[%s309 + $0xb0] sm:$0xff]
                  %334 = vst [vmem:[%s310 + $0x58] sm:$0xff] %v333
                  %v335 = vld [vmem:[%s309 + $0xc0] sm:$0xff]
                  %336 = vst [vmem:[%s310 + $0x60] sm:$0xff] %v335
                  %v337 = vld [vmem:[%s309 + $0xd0] sm:$0xff]
                  %338 = vst [vmem:[%s310 + $0x68] sm:$0xff] %v337
                  %v339 = vld [vmem:[%s309 + $0xe0] sm:$0xff]
                  %340 = vst [vmem:[%s310 + $0x70] sm:$0xff] %v339
                  %v341 = vld [vmem:[%s309 + $0xf0] sm:$0xff]
                  %342 = vst [vmem:[%s310 + $0x78] sm:$0xff] %v341
                  %v343 = vld [vmem:[%s309 + $0x100] sm:$0xff]
                  %344 = vst [vmem:[%s310 + $0x80] sm:$0xff] %v343
                  %v345 = vld [vmem:[%s309 + $0x110] sm:$0xff]
                  %346 = vst [vmem:[%s310 + $0x88] sm:$0xff] %v345
                  %v347 = vld [vmem:[%s309 + $0x120] sm:$0xff]
                  %348 = vst [vmem:[%s310 + $0x90] sm:$0xff] %v347
                  %v349 = vld [vmem:[%s309 + $0x130] sm:$0xff]
                  %350 = vst [vmem:[%s310 + $0x98] sm:$0xff] %v349
                  %v351 = vld [vmem:[%s309 + $0x140] sm:$0xff]
                  %352 = vst [vmem:[%s310 + $0xa0] sm:$0xff] %v351
                  %v353 = vld [vmem:[%s309 + $0x150] sm:$0xff]
                  %354 = vst [vmem:[%s310 + $0xa8] sm:$0xff] %v353
                  %v355 = vld [vmem:[%s309 + $0x160] sm:$0xff]
                  %356 = vst [vmem:[%s310 + $0xb0] sm:$0xff] %v355
                  %v357 = vld [vmem:[%s309 + $0x170] sm:$0xff]
                  %358 = vst [vmem:[%s310 + $0xb8] sm:$0xff] %v357
                  %v359 = vld [vmem:[%s309 + $0x180] sm:$0xff]
                  %360 = vst [vmem:[%s310 + $0xc0] sm:$0xff] %v359
                  %v361 = vld [vmem:[%s309 + $0x190] sm:$0xff]
                  %362 = vst [vmem:[%s310 + $0xc8] sm:$0xff] %v361
                  %v363 = vld [vmem:[%s309 + $0x1a0] sm:$0xff]
                  %364 = vst [vmem:[%s310 + $0xd0] sm:$0xff] %v363
                  %v365 = vld [vmem:[%s309 + $0x1b0] sm:$0xff]
                  %366 = vst [vmem:[%s310 + $0xd8] sm:$0xff] %v365
                  %v367 = vld [vmem:[%s309 + $0x1c0] sm:$0xff]
                  %368 = vst [vmem:[%s310 + $0xe0] sm:$0xff] %v367
                  %v369 = vld [vmem:[%s309 + $0x1d0] sm:$0xff]
                  %370 = vst [vmem:[%s310 + $0xe8] sm:$0xff] %v369
                  %v371 = vld [vmem:[%s309 + $0x1e0] sm:$0xff]
                  %372 = vst [vmem:[%s310 + $0xf0] sm:$0xff] %v371
                  %v373 = vld [vmem:[%s309 + $0x1f0] sm:$0xff]
                  %374 = vst [vmem:[%s310 + $0xf8] sm:$0xff] %v373
                $region52: #{t5_block_next.7} parent=46 // loop_footer
                  %s308 = sadd.s32 1, %s304
                $region53: #{t5_block_next.7} parent=46 // loop_footer_branch
                  %303 = sbr.rel target = $region49
                $region54: #{t5_block_next.7} parent=46 // loop_exit
                  _
              $region47: #{t5_block_next.7} parent=31 // pred_fallthru
                _
              // Predicated region
              $region55: #{t5_block_next.7} parent=31 // pred_check
                _
              $region56: #{t5_block_next.7} parent=31 // pred_check_branch
                %376 = sbr.rel target = $region58
              $region57: #{t5_block_next.7} parent=31 // pred_region
                _
              $region58: #{t5_block_next.7} parent=31 // pred_fallthru
                _
            $region32: #{t5_block_next.7} parent=27 // pred_fallthru
              _
            // Predicated region
            $region33: #{t5_block_next.7} parent=27 // pred_check
              _
            $region34: #{t5_block_next.7} parent=27 // pred_check_branch
              %226 = sbr.rel target = $region36
            $region35: #{t5_block_next.7} parent=27 // pred_region
              %s228 = ssub.s32 256, 1
              loop: start=0, step=1, limit=1
              $region37: #{t5_block_next.7} parent=35 // loop_pre_header
                _
              $region38: #{t5_block_next.7} parent=35 // loop_header
                %s230 = sphi 0, %s234
                %p231 = scmp.ge.s32.totalorder %s230, 1
                %s235 = sphi %s220, %s220
                %s236 = sphi %s217, %s217
              $region39: #{t5_block_next.7} parent=35 // loop_header_branch
                %233 = sbr.rel (%p231) target = $region43
              $region40: #{t5_block_next.7} parent=35 // loop_body
                %v237 = vld [vmem:[%s235] sm:%s228]
                %238 = vst [vmem:[%s236] sm:%s228] %v237
                %v239 = vld [vmem:[%s235 + $0x10] sm:%s228]
                %240 = vst [vmem:[%s236 + $0x8] sm:%s228] %v239
                %v241 = vld [vmem:[%s235 + $0x20] sm:%s228]
                %242 = vst [vmem:[%s236 + $0x10] sm:%s228] %v241
                %v243 = vld [vmem:[%s235 + $0x30] sm:%s228]
                %244 = vst [vmem:[%s236 + $0x18] sm:%s228] %v243
                %v245 = vld [vmem:[%s235 + $0x40] sm:%s228]
                %246 = vst [vmem:[%s236 + $0x20] sm:%s228] %v245
                %v247 = vld [vmem:[%s235 + $0x50] sm:%s228]
                %248 = vst [vmem:[%s236 + $0x28] sm:%s228] %v247
                %v249 = vld [vmem:[%s235 + $0x60] sm:%s228]
                %250 = vst [vmem:[%s236 + $0x30] sm:%s228] %v249
                %v251 = vld [vmem:[%s235 + $0x70] sm:%s228]
                %252 = vst [vmem:[%s236 + $0x38] sm:%s228] %v251
                %v253 = vld [vmem:[%s235 + $0x80] sm:%s228]
                %254 = vst [vmem:[%s236 + $0x40] sm:%s228] %v253
                %v255 = vld [vmem:[%s235 + $0x90] sm:%s228]
                %256 = vst [vmem:[%s236 + $0x48] sm:%s228] %v255
                %v257 = vld [vmem:[%s235 + $0xa0] sm:%s228]
                %258 = vst [vmem:[%s236 + $0x50] sm:%s228] %v257
                %v259 = vld [vmem:[%s235 + $0xb0] sm:%s228]
                %260 = vst [vmem:[%s236 + $0x58] sm:%s228] %v259
                %v261 = vld [vmem:[%s235 + $0xc0] sm:%s228]
                %262 = vst [vmem:[%s236 + $0x60] sm:%s228] %v261
                %v263 = vld [vmem:[%s235 + $0xd0] sm:%s228]
                %264 = vst [vmem:[%s236 + $0x68] sm:%s228] %v263
                %v265 = vld [vmem:[%s235 + $0xe0] sm:%s228]
                %266 = vst [vmem:[%s236 + $0x70] sm:%s228] %v265
                %v267 = vld [vmem:[%s235 + $0xf0] sm:%s228]
                %268 = vst [vmem:[%s236 + $0x78] sm:%s228] %v267
                %v269 = vld [vmem:[%s235 + $0x100] sm:%s228]
                %270 = vst [vmem:[%s236 + $0x80] sm:%s228] %v269
                %v271 = vld [vmem:[%s235 + $0x110] sm:%s228]
                %272 = vst [vmem:[%s236 + $0x88] sm:%s228] %v271
                %v273 = vld [vmem:[%s235 + $0x120] sm:%s228]
                %274 = vst [vmem:[%s236 + $0x90] sm:%s228] %v273
                %v275 = vld [vmem:[%s235 + $0x130] sm:%s228]
                %276 = vst [vmem:[%s236 + $0x98] sm:%s228] %v275
                %v277 = vld [vmem:[%s235 + $0x140] sm:%s228]
                %278 = vst [vmem:[%s236 + $0xa0] sm:%s228] %v277
                %v279 = vld [vmem:[%s235 + $0x150] sm:%s228]
                %280 = vst [vmem:[%s236 + $0xa8] sm:%s228] %v279
                %v281 = vld [vmem:[%s235 + $0x160] sm:%s228]
                %282 = vst [vmem:[%s236 + $0xb0] sm:%s228] %v281
                %v283 = vld [vmem:[%s235 + $0x170] sm:%s228]
                %284 = vst [vmem:[%s236 + $0xb8] sm:%s228] %v283
                %v285 = vld [vmem:[%s235 + $0x180] sm:%s228]
                %286 = vst [vmem:[%s236 + $0xc0] sm:%s228] %v285
                %v287 = vld [vmem:[%s235 + $0x190] sm:%s228]
                %288 = vst [vmem:[%s236 + $0xc8] sm:%s228] %v287
                %v289 = vld [vmem:[%s235 + $0x1a0] sm:%s228]
                %290 = vst [vmem:[%s236 + $0xd0] sm:%s228] %v289
                %v291 = vld [vmem:[%s235 + $0x1b0] sm:%s228]
                %292 = vst [vmem:[%s236 + $0xd8] sm:%s228] %v291
                %v293 = vld [vmem:[%s235 + $0x1c0] sm:%s228]
                %294 = vst [vmem:[%s236 + $0xe0] sm:%s228] %v293
                %v295 = vld [vmem:[%s235 + $0x1d0] sm:%s228]
                %296 = vst [vmem:[%s236 + $0xe8] sm:%s228] %v295
                %v297 = vld [vmem:[%s235 + $0x1e0] sm:%s228]
                %298 = vst [vmem:[%s236 + $0xf0] sm:%s228] %v297
                %v299 = vld [vmem:[%s235 + $0x1f0] sm:%s228]
                %300 = vst [vmem:[%s236 + $0xf8] sm:%s228] %v299
              $region41: #{t5_block_next.7} parent=35 // loop_footer
                %s234 = sadd.s32 1, %s230
              $region42: #{t5_block_next.7} parent=35 // loop_footer_branch
                %229 = sbr.rel target = $region38
              $region43: #{t5_block_next.7} parent=35 // loop_exit
                _
            $region36: #{t5_block_next.7} parent=27 // pred_fallthru
              _
          $region28: #{t5_block_next.7} parent=23 // pred_fallthru
            _
          %377 = vnop
        $region24: #{t5_block_next.7} parent=15 // pred_fallthru
          _
        // Predicated region
        $region59: #{t5_block_next.7} parent=15 // pred_check
          %p378 = pneg %p98
        $region60: #{t5_block_next.7} parent=15 // pred_check_branch
          %380 = sbr.rel (%p378) target = $region62
        $region61: #{t5_block_next.7} parent=15 // pred_region
          %s381 = sand.u32 %s88, 1
          %s382 = sand.u32 %s88, 1
          %s383 = smul.addr %s382, 256
          %s384 = scalar_lea.vmem [#allocation3], %s383
          %s385 = smul.u32 2, %s22
          %s386 = smul.addr %s385, 4
          %s387 = scalar_lea.vmem %s2, %s386
          // Predicated region
          $region63: #{t5_block_next.7} parent=61 // pred_check
            _
          $region64: #{t5_block_next.7} parent=61 // pred_check_branch
            %389 = sbr.rel (0) target = $region66
          $region65: #{t5_block_next.7} parent=61 // pred_region
            // Predicated region
            $region67: #{t5_block_next.7} parent=65 // pred_check
              _
            $region68: #{t5_block_next.7} parent=65 // pred_check_branch
              %391 = sbr.rel (0) target = $region70
            $region69: #{t5_block_next.7} parent=65 // pred_region
              // Predicated region
              $region82: #{t5_block_next.7} parent=69 // pred_check
                _
              $region83: #{t5_block_next.7} parent=69 // pred_check_branch
                %469 = sbr.rel (0) target = $region85
              $region84: #{t5_block_next.7} parent=69 // pred_region
                loop: start=0, step=1, limit=1
                $region86: #{t5_block_next.7} parent=84 // loop_pre_header
                  _
                $region87: #{t5_block_next.7} parent=84 // loop_header
                  %s471 = sphi 0, %s475
                  %p472 = scmp.ge.s32.totalorder %s471, 1
                  %s476 = sphi %s387, %s387
                  %s477 = sphi %s384, %s384
                $region88: #{t5_block_next.7} parent=84 // loop_header_branch
                  %474 = sbr.rel (%p472) target = $region92
                $region89: #{t5_block_next.7} parent=84 // loop_body
                  %v478 = vld [vmem:[%s476] sm:$0xff]
                  %479 = vst [vmem:[%s477] sm:$0xff] %v478
                  %v480 = vld [vmem:[%s476 + $0x10] sm:$0xff]
                  %481 = vst [vmem:[%s477 + $0x8] sm:$0xff] %v480
                  %v482 = vld [vmem:[%s476 + $0x20] sm:$0xff]
                  %483 = vst [vmem:[%s477 + $0x10] sm:$0xff] %v482
                  %v484 = vld [vmem:[%s476 + $0x30] sm:$0xff]
                  %485 = vst [vmem:[%s477 + $0x18] sm:$0xff] %v484
                  %v486 = vld [vmem:[%s476 + $0x40] sm:$0xff]
                  %487 = vst [vmem:[%s477 + $0x20] sm:$0xff] %v486
                  %v488 = vld [vmem:[%s476 + $0x50] sm:$0xff]
                  %489 = vst [vmem:[%s477 + $0x28] sm:$0xff] %v488
                  %v490 = vld [vmem:[%s476 + $0x60] sm:$0xff]
                  %491 = vst [vmem:[%s477 + $0x30] sm:$0xff] %v490
                  %v492 = vld [vmem:[%s476 + $0x70] sm:$0xff]
                  %493 = vst [vmem:[%s477 + $0x38] sm:$0xff] %v492
                  %v494 = vld [vmem:[%s476 + $0x80] sm:$0xff]
                  %495 = vst [vmem:[%s477 + $0x40] sm:$0xff] %v494
                  %v496 = vld [vmem:[%s476 + $0x90] sm:$0xff]
                  %497 = vst [vmem:[%s477 + $0x48] sm:$0xff] %v496
                  %v498 = vld [vmem:[%s476 + $0xa0] sm:$0xff]
                  %499 = vst [vmem:[%s477 + $0x50] sm:$0xff] %v498
                  %v500 = vld [vmem:[%s476 + $0xb0] sm:$0xff]
                  %501 = vst [vmem:[%s477 + $0x58] sm:$0xff] %v500
                  %v502 = vld [vmem:[%s476 + $0xc0] sm:$0xff]
                  %503 = vst [vmem:[%s477 + $0x60] sm:$0xff] %v502
                  %v504 = vld [vmem:[%s476 + $0xd0] sm:$0xff]
                  %505 = vst [vmem:[%s477 + $0x68] sm:$0xff] %v504
                  %v506 = vld [vmem:[%s476 + $0xe0] sm:$0xff]
                  %507 = vst [vmem:[%s477 + $0x70] sm:$0xff] %v506
                  %v508 = vld [vmem:[%s476 + $0xf0] sm:$0xff]
                  %509 = vst [vmem:[%s477 + $0x78] sm:$0xff] %v508
                  %v510 = vld [vmem:[%s476 + $0x100] sm:$0xff]
                  %511 = vst [vmem:[%s477 + $0x80] sm:$0xff] %v510
                  %v512 = vld [vmem:[%s476 + $0x110] sm:$0xff]
                  %513 = vst [vmem:[%s477 + $0x88] sm:$0xff] %v512
                  %v514 = vld [vmem:[%s476 + $0x120] sm:$0xff]
                  %515 = vst [vmem:[%s477 + $0x90] sm:$0xff] %v514
                  %v516 = vld [vmem:[%s476 + $0x130] sm:$0xff]
                  %517 = vst [vmem:[%s477 + $0x98] sm:$0xff] %v516
                  %v518 = vld [vmem:[%s476 + $0x140] sm:$0xff]
                  %519 = vst [vmem:[%s477 + $0xa0] sm:$0xff] %v518
                  %v520 = vld [vmem:[%s476 + $0x150] sm:$0xff]
                  %521 = vst [vmem:[%s477 + $0xa8] sm:$0xff] %v520
                  %v522 = vld [vmem:[%s476 + $0x160] sm:$0xff]
                  %523 = vst [vmem:[%s477 + $0xb0] sm:$0xff] %v522
                  %v524 = vld [vmem:[%s476 + $0x170] sm:$0xff]
                  %525 = vst [vmem:[%s477 + $0xb8] sm:$0xff] %v524
                  %v526 = vld [vmem:[%s476 + $0x180] sm:$0xff]
                  %527 = vst [vmem:[%s477 + $0xc0] sm:$0xff] %v526
                  %v528 = vld [vmem:[%s476 + $0x190] sm:$0xff]
                  %529 = vst [vmem:[%s477 + $0xc8] sm:$0xff] %v528
                  %v530 = vld [vmem:[%s476 + $0x1a0] sm:$0xff]
                  %531 = vst [vmem:[%s477 + $0xd0] sm:$0xff] %v530
                  %v532 = vld [vmem:[%s476 + $0x1b0] sm:$0xff]
                  %533 = vst [vmem:[%s477 + $0xd8] sm:$0xff] %v532
                  %v534 = vld [vmem:[%s476 + $0x1c0] sm:$0xff]
                  %535 = vst [vmem:[%s477 + $0xe0] sm:$0xff] %v534
                  %v536 = vld [vmem:[%s476 + $0x1d0] sm:$0xff]
                  %537 = vst [vmem:[%s477 + $0xe8] sm:$0xff] %v536
                  %v538 = vld [vmem:[%s476 + $0x1e0] sm:$0xff]
                  %539 = vst [vmem:[%s477 + $0xf0] sm:$0xff] %v538
                  %v540 = vld [vmem:[%s476 + $0x1f0] sm:$0xff]
                  %541 = vst [vmem:[%s477 + $0xf8] sm:$0xff] %v540
                $region90: #{t5_block_next.7} parent=84 // loop_footer
                  %s475 = sadd.s32 1, %s471
                $region91: #{t5_block_next.7} parent=84 // loop_footer_branch
                  %470 = sbr.rel target = $region87
                $region92: #{t5_block_next.7} parent=84 // loop_exit
                  _
              $region85: #{t5_block_next.7} parent=69 // pred_fallthru
                _
              // Predicated region
              $region93: #{t5_block_next.7} parent=69 // pred_check
                _
              $region94: #{t5_block_next.7} parent=69 // pred_check_branch
                %543 = sbr.rel target = $region96
              $region95: #{t5_block_next.7} parent=69 // pred_region
                _
              $region96: #{t5_block_next.7} parent=69 // pred_fallthru
                _
            $region70: #{t5_block_next.7} parent=65 // pred_fallthru
              _
            // Predicated region
            $region71: #{t5_block_next.7} parent=65 // pred_check
              _
            $region72: #{t5_block_next.7} parent=65 // pred_check_branch
              %393 = sbr.rel target = $region74
            $region73: #{t5_block_next.7} parent=65 // pred_region
              %s395 = ssub.s32 256, 1
              loop: start=0, step=1, limit=1
              $region75: #{t5_block_next.7} parent=73 // loop_pre_header
                _
              $region76: #{t5_block_next.7} parent=73 // loop_header
                %s397 = sphi 0, %s401
                %p398 = scmp.ge.s32.totalorder %s397, 1
                %s402 = sphi %s387, %s387
                %s403 = sphi %s384, %s384
              $region77: #{t5_block_next.7} parent=73 // loop_header_branch
                %400 = sbr.rel (%p398) target = $region81
              $region78: #{t5_block_next.7} parent=73 // loop_body
                %v404 = vld [vmem:[%s402] sm:%s395]
                %405 = vst [vmem:[%s403] sm:%s395] %v404
                %v406 = vld [vmem:[%s402 + $0x10] sm:%s395]
                %407 = vst [vmem:[%s403 + $0x8] sm:%s395] %v406
                %v408 = vld [vmem:[%s402 + $0x20] sm:%s395]
                %409 = vst [vmem:[%s403 + $0x10] sm:%s395] %v408
                %v410 = vld [vmem:[%s402 + $0x30] sm:%s395]
                %411 = vst [vmem:[%s403 + $0x18] sm:%s395] %v410
                %v412 = vld [vmem:[%s402 + $0x40] sm:%s395]
                %413 = vst [vmem:[%s403 + $0x20] sm:%s395] %v412
                %v414 = vld [vmem:[%s402 + $0x50] sm:%s395]
                %415 = vst [vmem:[%s403 + $0x28] sm:%s395] %v414
                %v416 = vld [vmem:[%s402 + $0x60] sm:%s395]
                %417 = vst [vmem:[%s403 + $0x30] sm:%s395] %v416
                %v418 = vld [vmem:[%s402 + $0x70] sm:%s395]
                %419 = vst [vmem:[%s403 + $0x38] sm:%s395] %v418
                %v420 = vld [vmem:[%s402 + $0x80] sm:%s395]
                %421 = vst [vmem:[%s403 + $0x40] sm:%s395] %v420
                %v422 = vld [vmem:[%s402 + $0x90] sm:%s395]
                %423 = vst [vmem:[%s403 + $0x48] sm:%s395] %v422
                %v424 = vld [vmem:[%s402 + $0xa0] sm:%s395]
                %425 = vst [vmem:[%s403 + $0x50] sm:%s395] %v424
                %v426 = vld [vmem:[%s402 + $0xb0] sm:%s395]
                %427 = vst [vmem:[%s403 + $0x58] sm:%s395] %v426
                %v428 = vld [vmem:[%s402 + $0xc0] sm:%s395]
                %429 = vst [vmem:[%s403 + $0x60] sm:%s395] %v428
                %v430 = vld [vmem:[%s402 + $0xd0] sm:%s395]
                %431 = vst [vmem:[%s403 + $0x68] sm:%s395] %v430
                %v432 = vld [vmem:[%s402 + $0xe0] sm:%s395]
                %433 = vst [vmem:[%s403 + $0x70] sm:%s395] %v432
                %v434 = vld [vmem:[%s402 + $0xf0] sm:%s395]
                %435 = vst [vmem:[%s403 + $0x78] sm:%s395] %v434
                %v436 = vld [vmem:[%s402 + $0x100] sm:%s395]
                %437 = vst [vmem:[%s403 + $0x80] sm:%s395] %v436
                %v438 = vld [vmem:[%s402 + $0x110] sm:%s395]
                %439 = vst [vmem:[%s403 + $0x88] sm:%s395] %v438
                %v440 = vld [vmem:[%s402 + $0x120] sm:%s395]
                %441 = vst [vmem:[%s403 + $0x90] sm:%s395] %v440
                %v442 = vld [vmem:[%s402 + $0x130] sm:%s395]
                %443 = vst [vmem:[%s403 + $0x98] sm:%s395] %v442
                %v444 = vld [vmem:[%s402 + $0x140] sm:%s395]
                %445 = vst [vmem:[%s403 + $0xa0] sm:%s395] %v444
                %v446 = vld [vmem:[%s402 + $0x150] sm:%s395]
                %447 = vst [vmem:[%s403 + $0xa8] sm:%s395] %v446
                %v448 = vld [vmem:[%s402 + $0x160] sm:%s395]
                %449 = vst [vmem:[%s403 + $0xb0] sm:%s395] %v448
                %v450 = vld [vmem:[%s402 + $0x170] sm:%s395]
                %451 = vst [vmem:[%s403 + $0xb8] sm:%s395] %v450
                %v452 = vld [vmem:[%s402 + $0x180] sm:%s395]
                %453 = vst [vmem:[%s403 + $0xc0] sm:%s395] %v452
                %v454 = vld [vmem:[%s402 + $0x190] sm:%s395]
                %455 = vst [vmem:[%s403 + $0xc8] sm:%s395] %v454
                %v456 = vld [vmem:[%s402 + $0x1a0] sm:%s395]
                %457 = vst [vmem:[%s403 + $0xd0] sm:%s395] %v456
                %v458 = vld [vmem:[%s402 + $0x1b0] sm:%s395]
                %459 = vst [vmem:[%s403 + $0xd8] sm:%s395] %v458
                %v460 = vld [vmem:[%s402 + $0x1c0] sm:%s395]
                %461 = vst [vmem:[%s403 + $0xe0] sm:%s395] %v460
                %v462 = vld [vmem:[%s402 + $0x1d0] sm:%s395]
                %463 = vst [vmem:[%s403 + $0xe8] sm:%s395] %v462
                %v464 = vld [vmem:[%s402 + $0x1e0] sm:%s395]
                %465 = vst [vmem:[%s403 + $0xf0] sm:%s395] %v464
                %v466 = vld [vmem:[%s402 + $0x1f0] sm:%s395]
                %467 = vst [vmem:[%s403 + $0xf8] sm:%s395] %v466
              $region79: #{t5_block_next.7} parent=73 // loop_footer
                %s401 = sadd.s32 1, %s397
              $region80: #{t5_block_next.7} parent=73 // loop_footer_branch
                %396 = sbr.rel target = $region76
              $region81: #{t5_block_next.7} parent=73 // loop_exit
                _
            $region74: #{t5_block_next.7} parent=65 // pred_fallthru
              _
          $region66: #{t5_block_next.7} parent=61 // pred_fallthru
            _
          %544 = vnop
        $region62: #{t5_block_next.7} parent=15 // pred_fallthru
          _
        // Predicated region
        $region97: #{t5_block_next.7} parent=15 // pred_check
          %p545 = pneg %p124
        $region98: #{t5_block_next.7} parent=15 // pred_check_branch
          %547 = sbr.rel (%p545) target = $region100
        $region99: #{t5_block_next.7} parent=15 // pred_region
          %s548 = smul.u32 32, %s22
          %p549 = scmp.lt.s32.totalorder %s548, 63
          %s550 = scalar_select %p549, %s548, 63
          %s551 = smul.addr %s550, 2
          %s552 = smul.addr %s551, 4
          %s553 = scalar_lea.vmem %s3, %s552
          %s554 = smul.u32 32, %s22
        $region100: #{t5_block_next.7} parent=15 // pred_fallthru
          _
        // Predicated region
        $region101: #{t5_block_next.7} parent=15 // pred_check
          %p555 = pneg %p150
        $region102: #{t5_block_next.7} parent=15 // pred_check_branch
          %557 = sbr.rel (%p555) target = $region104
        $region103: #{t5_block_next.7} parent=15 // pred_region
          %s558 = smul.u32 16, %s21
          %p559 = scmp.lt.s32.totalorder %s558, 31
          %s560 = scalar_select %p559, %s558, 31
          %s561 = smul.addr %s560, 2
          %s562 = smul.addr %s561, 8
          %s563 = scalar_lea.vmem %s4, %s562
          %s564 = smul.u32 16, %s21
        $region104: #{t5_block_next.7} parent=15 // pred_fallthru
          _
      $region16: #{t5_block_next.7} parent=5 // pred_fallthru
        _
      %p565 = scmp.le.s32.totalorder 1, %s14
      %p566 = scmp.lt.s32.totalorder %s14, 5
      %p567 = pnand %p565, %p566
      %p568 = pneg %p567
      // Predicated region
      $region105: #{t5_block_next.7} parent=5 // pred_check
        _
      $region106: #{t5_block_next.7} parent=5 // pred_check_branch
        %570 = sbr.rel (%p567) target = $region108
      $region107: #{t5_block_next.7} parent=5 // pred_region
        %s571 = ssub.s32 %s14, 1
        %s572 = sand.u32 %s65, 1
        %s573 = sand.u32 %s65, 1
        %s574 = smul.addr %s573, 256
        %s575 = scalar_lea.vmem [#allocation2], %s574
        // Predicated region
        $region109: #{t5_block_next.7} parent=107 // pred_check
          %p576 = pneg %p78
        $region110: #{t5_block_next.7} parent=107 // pred_check_branch
          %578 = sbr.rel (%p576) target = $region112
        $region111: #{t5_block_next.7} parent=107 // pred_region
          _
        $region112: #{t5_block_next.7} parent=107 // pred_fallthru
          _
        %s579 = sand.u32 %s91, 1
        %s580 = sand.u32 %s91, 1
        %s581 = smul.addr %s580, 256
        %s582 = scalar_lea.vmem [#allocation3], %s581
        // Predicated region
        $region113: #{t5_block_next.7} parent=107 // pred_check
          %p583 = pneg %p104
        $region114: #{t5_block_next.7} parent=107 // pred_check_branch
          %585 = sbr.rel (%p583) target = $region116
        $region115: #{t5_block_next.7} parent=107 // pred_region
          _
        $region116: #{t5_block_next.7} parent=107 // pred_fallthru
          _
        %s586 = smul.u32 16, %s23
        %p587 = scmp.lt.s32.totalorder %s586, 31
        %s588 = scalar_select %p587, %s586, 31
        %s589 = smul.addr %s588, 2
        %s590 = smul.addr %s589, 4
        %s591 = scalar_lea.vmem %s0, %s590
        %p592 = pneg %p52
        %p593 = pneg %p49
        %s594 = sand.u32 %s65, 1
        %s595 = sand.u32 %s65, 1
        %s596 = smul.addr %s595, 256
        %s597 = scalar_lea.vmem [#allocation2], %s596
        %p598 = pneg %p78
        %p599 = pneg %p75
        %s600 = sand.u32 %s91, 1
        %s601 = sand.u32 %s91, 1
        %s602 = smul.addr %s601, 256
        %s603 = scalar_lea.vmem [#allocation3], %s602
        %p604 = pneg %p104
        %p605 = pneg %p101
        %s606 = smul.u32 32, %s24
        %p607 = scmp.lt.s32.totalorder %s606, 63
        %s608 = scalar_select %p607, %s606, 63
        %s609 = smul.addr %s608, 2
        %s610 = smul.addr %s609, 4
        %s611 = scalar_lea.vmem %s3, %s610
        %p612 = pneg %p130
        %p613 = pneg %p127
        %s614 = smul.u32 16, %s23
        %p615 = scmp.lt.s32.totalorder %s614, 31
        %s616 = scalar_select %p615, %s614, 31
        %s617 = smul.addr %s616, 2
        %s618 = smul.addr %s617, 8
        %s619 = scalar_lea.vmem %s4, %s618
        %p620 = pneg %p156
        %p621 = pneg %p153
        %p622 = pneg %p182
        %p623 = pneg %p179
        %s624 = sand.u32 %s169, 1
        %s625 = scalar_lea.sflag [#allocation5], %s624
        %s626 = sand.u32 %s169, 1
        %s627 = smul.addr %s626, 256
        %s628 = scalar_lea.vmem [#allocation4], %s627
        %s629 = smul.u32 16, %s23
        %p630 = scmp.lt.s32.totalorder %s629, 31
        %s631 = scalar_select %p630, %s629, 31
        %s632 = smul.addr %s631, 2
        %s633 = smul.addr %s632, 4
        %s634 = scalar_lea.vmem %s0, %s633
        %s635 = smul.u32 16, %s23
        %s636 = smul.u32 2, %s24
        %s637 = smul.u32 2, %s24
        %s638 = smul.u32 32, %s24
        %p639 = scmp.lt.s32.totalorder %s638, 63
        %s640 = scalar_select %p639, %s638, 63
        %s641 = smul.addr %s640, 2
        %s642 = smul.addr %s641, 4
        %s643 = scalar_lea.vmem %s3, %s642
        %s644 = smul.u32 32, %s24
        %s645 = smul.u32 16, %s23
        %p646 = scmp.lt.s32.totalorder %s645, 31
        %s647 = scalar_select %p646, %s645, 31
        %s648 = smul.addr %s647, 2
        %s649 = smul.addr %s648, 8
        %s650 = scalar_lea.vmem %s4, %s649
        %s651 = smul.u32 16, %s23
        %s652 = smul.u32 16, %s23
        %p653 = scmp.eq.s32.totalorder %s24, 0
        // Predicated region
        $region117: #{t5_block_next.7} parent=107 // pred_check
          %p654 = pneg %p653
        $region118: #{t5_block_next.7} parent=107 // pred_check_branch
          %656 = sbr.rel (%p654) target = $region120
        $region119: #{t5_block_next.7} parent=107 // pred_region
          %v657 = vld [vmem:[%s650] sm:$0xff]
          %v658 = vld [vmem:[%s650 + $0x8] sm:$0xff]
          %v659 = vld [vmem:[%s650 + $0x10] sm:$0xff]
          %v660 = vld [vmem:[%s650 + $0x18] sm:$0xff]
          %v661 = vld [vmem:[%s650 + $0x20] sm:$0xff]
          %v662 = vld [vmem:[%s650 + $0x28] sm:$0xff]
          %v663 = vld [vmem:[%s650 + $0x30] sm:$0xff]
          %v664 = vld [vmem:[%s650 + $0x38] sm:$0xff]
          %v665 = vld [vmem:[%s650 + $0x40] sm:$0xff]
          %v666 = vld [vmem:[%s650 + $0x48] sm:$0xff]
          %v667 = vld [vmem:[%s650 + $0x50] sm:$0xff]
          %v668 = vld [vmem:[%s650 + $0x58] sm:$0xff]
          %v669 = vld [vmem:[%s650 + $0x60] sm:$0xff]
          %v670 = vld [vmem:[%s650 + $0x68] sm:$0xff]
          %v671 = vld [vmem:[%s650 + $0x70] sm:$0xff]
          %v672 = vld [vmem:[%s650 + $0x78] sm:$0xff]
          %v673 = vld [vmem:[%s650 + $0x80] sm:$0xff]
          %v674 = vld [vmem:[%s650 + $0x88] sm:$0xff]
          %v675 = vld [vmem:[%s650 + $0x90] sm:$0xff]
          %v676 = vld [vmem:[%s650 + $0x98] sm:$0xff]
          %v677 = vld [vmem:[%s650 + $0xa0] sm:$0xff]
          %v678 = vld [vmem:[%s650 + $0xa8] sm:$0xff]
          %v679 = vld [vmem:[%s650 + $0xb0] sm:$0xff]
          %v680 = vld [vmem:[%s650 + $0xb8] sm:$0xff]
          %v681 = vld [vmem:[%s650 + $0xc0] sm:$0xff]
          %v682 = vld [vmem:[%s650 + $0xc8] sm:$0xff]
          %v683 = vld [vmem:[%s650 + $0xd0] sm:$0xff]
          %v684 = vld [vmem:[%s650 + $0xd8] sm:$0xff]
          %v685 = vld [vmem:[%s650 + $0xe0] sm:$0xff]
          %v686 = vld [vmem:[%s650 + $0xe8] sm:$0xff]
          %v687 = vld [vmem:[%s650 + $0xf0] sm:$0xff]
          %v688 = vld [vmem:[%s650 + $0xf8] sm:$0xff]
          %689 = vst [vmem:[%s628] sm:$0xff] %v657
          %690 = vst [vmem:[%s628 + $0x8] sm:$0xff] %v658
          %691 = vst [vmem:[%s628 + $0x10] sm:$0xff] %v659
          %692 = vst [vmem:[%s628 + $0x18] sm:$0xff] %v660
          %693 = vst [vmem:[%s628 + $0x20] sm:$0xff] %v661
          %694 = vst [vmem:[%s628 + $0x28] sm:$0xff] %v662
          %695 = vst [vmem:[%s628 + $0x30] sm:$0xff] %v663
          %696 = vst [vmem:[%s628 + $0x38] sm:$0xff] %v664
          %697 = vst [vmem:[%s628 + $0x40] sm:$0xff] %v665
          %698 = vst [vmem:[%s628 + $0x48] sm:$0xff] %v666
          %699 = vst [vmem:[%s628 + $0x50] sm:$0xff] %v667
          %700 = vst [vmem:[%s628 + $0x58] sm:$0xff] %v668
          %701 = vst [vmem:[%s628 + $0x60] sm:$0xff] %v669
          %702 = vst [vmem:[%s628 + $0x68] sm:$0xff] %v670
          %703 = vst [vmem:[%s628 + $0x70] sm:$0xff] %v671
          %704 = vst [vmem:[%s628 + $0x78] sm:$0xff] %v672
          %705 = vst [vmem:[%s628 + $0x80] sm:$0xff] %v673
          %706 = vst [vmem:[%s628 + $0x88] sm:$0xff] %v674
          %707 = vst [vmem:[%s628 + $0x90] sm:$0xff] %v675
          %708 = vst [vmem:[%s628 + $0x98] sm:$0xff] %v676
          %709 = vst [vmem:[%s628 + $0xa0] sm:$0xff] %v677
          %710 = vst [vmem:[%s628 + $0xa8] sm:$0xff] %v678
          %711 = vst [vmem:[%s628 + $0xb0] sm:$0xff] %v679
          %712 = vst [vmem:[%s628 + $0xb8] sm:$0xff] %v680
          %713 = vst [vmem:[%s628 + $0xc0] sm:$0xff] %v681
          %714 = vst [vmem:[%s628 + $0xc8] sm:$0xff] %v682
          %715 = vst [vmem:[%s628 + $0xd0] sm:$0xff] %v683
          %716 = vst [vmem:[%s628 + $0xd8] sm:$0xff] %v684
          %717 = vst [vmem:[%s628 + $0xe0] sm:$0xff] %v685
          %718 = vst [vmem:[%s628 + $0xe8] sm:$0xff] %v686
          %719 = vst [vmem:[%s628 + $0xf0] sm:$0xff] %v687
          %720 = vst [vmem:[%s628 + $0xf8] sm:$0xff] %v688
        $region120: #{t5_block_next.7} parent=107 // pred_fallthru
          _
        %v721 = vld [vmem:[%s634] sm:$0xff]
        %v722 = vld [vmem:[%s634 + $0x8] sm:$0xff]
        %v723 = vld [vmem:[%s634 + $0x10] sm:$0xff]
        %v724 = vld [vmem:[%s634 + $0x18] sm:$0xff]
        %v725 = vld [vmem:[%s634 + $0x20] sm:$0xff]
        %v726 = vld [vmem:[%s634 + $0x28] sm:$0xff]
        %v727 = vld [vmem:[%s634 + $0x30] sm:$0xff]
        %v728 = vld [vmem:[%s634 + $0x38] sm:$0xff]
        %v729 = vld [vmem:[%s634 + $0x40] sm:$0xff]
        %v730 = vld [vmem:[%s634 + $0x48] sm:$0xff]
        %v731 = vld [vmem:[%s634 + $0x50] sm:$0xff]
        %v732 = vld [vmem:[%s634 + $0x58] sm:$0xff]
        %v733 = vld [vmem:[%s634 + $0x60] sm:$0xff]
        %v734 = vld [vmem:[%s634 + $0x68] sm:$0xff]
        %v735 = vld [vmem:[%s634 + $0x70] sm:$0xff]
        %v736 = vld [vmem:[%s634 + $0x78] sm:$0xff]
        %v737 = vld [vmem:[%s575] sm:$0xff]
        %v738 = vld [vmem:[%s575 + $0x8] sm:$0xff]
        %v739 = vld [vmem:[%s575 + $0x10] sm:$0xff]
        %v740 = vld [vmem:[%s575 + $0x18] sm:$0xff]
        %v741 = vld [vmem:[%s575 + $0x20] sm:$0xff]
        %v742 = vld [vmem:[%s575 + $0x28] sm:$0xff]
        %v743 = vld [vmem:[%s575 + $0x30] sm:$0xff]
        %v744 = vld [vmem:[%s575 + $0x38] sm:$0xff]
        %v745 = vld [vmem:[%s575 + $0x40] sm:$0xff]
        %v746 = vld [vmem:[%s575 + $0x48] sm:$0xff]
        %v747 = vld [vmem:[%s575 + $0x50] sm:$0xff]
        %v748 = vld [vmem:[%s575 + $0x58] sm:$0xff]
        %v749 = vld [vmem:[%s575 + $0x60] sm:$0xff]
        %v750 = vld [vmem:[%s575 + $0x68] sm:$0xff]
        %v751 = vld [vmem:[%s575 + $0x70] sm:$0xff]
        %v752 = vld [vmem:[%s575 + $0x78] sm:$0xff]
        %v753 = vld [vmem:[%s575 + $0x80] sm:$0xff]
        %v754 = vld [vmem:[%s575 + $0x88] sm:$0xff]
        %v755 = vld [vmem:[%s575 + $0x90] sm:$0xff]
        %v756 = vld [vmem:[%s575 + $0x98] sm:$0xff]
        %v757 = vld [vmem:[%s575 + $0xa0] sm:$0xff]
        %v758 = vld [vmem:[%s575 + $0xa8] sm:$0xff]
        %v759 = vld [vmem:[%s575 + $0xb0] sm:$0xff]
        %v760 = vld [vmem:[%s575 + $0xb8] sm:$0xff]
        %v761 = vld [vmem:[%s575 + $0xc0] sm:$0xff]
        %v762 = vld [vmem:[%s575 + $0xc8] sm:$0xff]
        %v763 = vld [vmem:[%s575 + $0xd0] sm:$0xff]
        %v764 = vld [vmem:[%s575 + $0xd8] sm:$0xff]
        %v765 = vld [vmem:[%s575 + $0xe0] sm:$0xff]
        %v766 = vld [vmem:[%s575 + $0xe8] sm:$0xff]
        %v767 = vld [vmem:[%s575 + $0xf0] sm:$0xff]
        %v768 = vld [vmem:[%s575 + $0xf8] sm:$0xff]
        %v785 = vunpack.c.l.b16 %v721
        %v786 = vunpack.c.h.b16 %v721
        %v787 = vunpack.c.l.b16 %v722
        %v788 = vunpack.c.h.b16 %v722
        %v789 = vunpack.c.l.b16 %v723
        %v790 = vunpack.c.h.b16 %v723
        %v791 = vunpack.c.l.b16 %v724
        %v792 = vunpack.c.h.b16 %v724
        %v793 = vunpack.c.l.b16 %v725
        %v794 = vunpack.c.h.b16 %v725
        %v795 = vunpack.c.l.b16 %v726
        %v796 = vunpack.c.h.b16 %v726
        %v797 = vunpack.c.l.b16 %v727
        %v798 = vunpack.c.h.b16 %v727
        %v799 = vunpack.c.l.b16 %v728
        %v800 = vunpack.c.h.b16 %v728
        %v801 = vunpack.c.l.b16 %v729
        %v802 = vunpack.c.h.b16 %v729
        %v803 = vunpack.c.l.b16 %v730
        %v804 = vunpack.c.h.b16 %v730
        %v805 = vunpack.c.l.b16 %v731
        %v806 = vunpack.c.h.b16 %v731
        %v807 = vunpack.c.l.b16 %v732
        %v808 = vunpack.c.h.b16 %v732
        %v809 = vunpack.c.l.b16 %v733
        %v810 = vunpack.c.h.b16 %v733
        %v811 = vunpack.c.l.b16 %v734
        %v812 = vunpack.c.h.b16 %v734
        %v813 = vunpack.c.l.b16 %v735
        %v814 = vunpack.c.h.b16 %v735
        %v815 = vunpack.c.l.b16 %v736
        %v816 = vunpack.c.h.b16 %v736
        %v817 = vpack.c.b16 %v787, %v785
        %v818 = vpack.c.b16 %v788, %v786
        %v819 = vpack.c.b16 %v791, %v789
        %v820 = vpack.c.b16 %v792, %v790
        %v821 = vpack.c.b16 %v795, %v793
        %v822 = vpack.c.b16 %v796, %v794
        %v823 = vpack.c.b16 %v799, %v797
        %v824 = vpack.c.b16 %v800, %v798
        %v825 = vpack.c.b16 %v803, %v801
        %v826 = vpack.c.b16 %v804, %v802
        %v827 = vpack.c.b16 %v807, %v805
        %v828 = vpack.c.b16 %v808, %v806
        %v829 = vpack.c.b16 %v811, %v809
        %v830 = vpack.c.b16 %v812, %v810
        %v831 = vpack.c.b16 %v815, %v813
        %v832 = vpack.c.b16 %v816, %v814
        %v881 = vunpack.c.l.b16 %v737
        %v882 = vunpack.c.h.b16 %v737
        %v883 = vunpack.c.l.b16 %v738
        %v884 = vunpack.c.h.b16 %v738
        %v885 = vunpack.c.l.b16 %v739
        %v886 = vunpack.c.h.b16 %v739
        %v887 = vunpack.c.l.b16 %v740
        %v888 = vunpack.c.h.b16 %v740
        %v889 = vunpack.c.l.b16 %v741
        %v890 = vunpack.c.h.b16 %v741
        %v891 = vunpack.c.l.b16 %v742
        %v892 = vunpack.c.h.b16 %v742
        %v893 = vunpack.c.l.b16 %v743
        %v894 = vunpack.c.h.b16 %v743
        %v895 = vunpack.c.l.b16 %v744
        %v896 = vunpack.c.h.b16 %v744
        %v897 = vunpack.c.l.b16 %v745
        %v898 = vunpack.c.h.b16 %v745
        %v899 = vunpack.c.l.b16 %v746
        %v900 = vunpack.c.h.b16 %v746
        %v901 = vunpack.c.l.b16 %v747
        %v902 = vunpack.c.h.b16 %v747
        %v903 = vunpack.c.l.b16 %v748
        %v904 = vunpack.c.h.b16 %v748
        %v905 = vunpack.c.l.b16 %v749
        %v906 = vunpack.c.h.b16 %v749
        %v907 = vunpack.c.l.b16 %v750
        %v908 = vunpack.c.h.b16 %v750
        %v909 = vunpack.c.l.b16 %v751
        %v910 = vunpack.c.h.b16 %v751
        %v911 = vunpack.c.l.b16 %v752
        %v912 = vunpack.c.h.b16 %v752
        %v913 = vunpack.c.l.b16 %v753
        %v914 = vunpack.c.h.b16 %v753
        %v915 = vunpack.c.l.b16 %v754
        %v916 = vunpack.c.h.b16 %v754
        %v917 = vunpack.c.l.b16 %v755
        %v918 = vunpack.c.h.b16 %v755
        %v919 = vunpack.c.l.b16 %v756
        %v920 = vunpack.c.h.b16 %v756
        %v921 = vunpack.c.l.b16 %v757
        %v922 = vunpack.c.h.b16 %v757
        %v923 = vunpack.c.l.b16 %v758
        %v924 = vunpack.c.h.b16 %v758
        %v925 = vunpack.c.l.b16 %v759
        %v926 = vunpack.c.h.b16 %v759
        %v927 = vunpack.c.l.b16 %v760
        %v928 = vunpack.c.h.b16 %v760
        %v929 = vunpack.c.l.b16 %v761
        %v930 = vunpack.c.h.b16 %v761
        %v931 = vunpack.c.l.b16 %v762
        %v932 = vunpack.c.h.b16 %v762
        %v933 = vunpack.c.l.b16 %v763
        %v934 = vunpack.c.h.b16 %v763
        %v935 = vunpack.c.l.b16 %v764
        %v936 = vunpack.c.h.b16 %v764
        %v937 = vunpack.c.l.b16 %v765
        %v938 = vunpack.c.h.b16 %v765
        %v939 = vunpack.c.l.b16 %v766
        %v940 = vunpack.c.h.b16 %v766
        %v941 = vunpack.c.l.b16 %v767
        %v942 = vunpack.c.h.b16 %v767
        %v943 = vunpack.c.l.b16 %v768
        %v944 = vunpack.c.h.b16 %v768
        %v945 = vpack.c.b16 %v883, %v881
        %v946 = vpack.c.b16 %v884, %v882
        %v947 = vpack.c.b16 %v887, %v885
        %v948 = vpack.c.b16 %v888, %v886
        %v949 = vpack.c.b16 %v891, %v889
        %v950 = vpack.c.b16 %v892, %v890
        %v951 = vpack.c.b16 %v895, %v893
        %v952 = vpack.c.b16 %v896, %v894
        %v953 = vpack.c.b16 %v899, %v897
        %v954 = vpack.c.b16 %v900, %v898
        %v955 = vpack.c.b16 %v903, %v901
        %v956 = vpack.c.b16 %v904, %v902
        %v957 = vpack.c.b16 %v907, %v905
        %v958 = vpack.c.b16 %v908, %v906
        %v959 = vpack.c.b16 %v911, %v909
        %v960 = vpack.c.b16 %v912, %v910
        %v961 = vpack.c.b16 %v915, %v913
        %v962 = vpack.c.b16 %v916, %v914
        %v963 = vpack.c.b16 %v919, %v917
        %v964 = vpack.c.b16 %v920, %v918
        %v965 = vpack.c.b16 %v923, %v921
        %v966 = vpack.c.b16 %v924, %v922
        %v967 = vpack.c.b16 %v927, %v925
        %v968 = vpack.c.b16 %v928, %v926
        %v969 = vpack.c.b16 %v931, %v929
        %v970 = vpack.c.b16 %v932, %v930
        %v971 = vpack.c.b16 %v935, %v933
        %v972 = vpack.c.b16 %v936, %v934
        %v973 = vpack.c.b16 %v939, %v937
        %v974 = vpack.c.b16 %v940, %v938
        %v975 = vpack.c.b16 %v943, %v941
        %v976 = vpack.c.b16 %v944, %v942
        %1009 = vmatprep.subr.bf16.mxu0 %v960
        %1010 = vmatpush1.bf16.msra.mxu0 %v959
        %1011 = vmatprep.subr.bf16.mxu0 %v958
        %1012 = vmatpush1.bf16.msra.mxu0 %v957
        %1013 = vmatprep.subr.bf16.mxu0 %v956
        %1014 = vmatpush1.bf16.msra.mxu0 %v955
        %1015 = vmatprep.subr.bf16.mxu0 %v954
        %1016 = vmatpush1.bf16.msra.mxu0 %v953
        %1017 = vmatprep.subr.bf16.mxu0 %v952
        %1018 = vmatpush1.bf16.msra.mxu0 %v951
        %1019 = vmatprep.subr.bf16.mxu0 %v950
        %1020 = vmatpush1.bf16.msra.mxu0 %v949
        %1021 = vmatprep.subr.bf16.mxu0 %v948
        %1022 = vmatpush1.bf16.msra.mxu0 %v947
        %1023 = vmatprep.subr.bf16.mxu0 %v946
        %1024 = vmatpush1.bf16.msra.mxu0 %v945
        %1025 = vmatprep.subr.bf16.mxu0 %v976
        %1026 = vmatpush2.bf16.msra.mxu0 %v975
        %1027 = vmatprep.subr.bf16.mxu0 %v974
        %1028 = vmatpush2.bf16.msra.mxu0 %v973
        %1029 = vmatprep.subr.bf16.mxu0 %v972
        %1030 = vmatpush2.bf16.msra.mxu0 %v971
        %1031 = vmatprep.subr.bf16.mxu0 %v970
        %1032 = vmatpush2.bf16.msra.mxu0 %v969
        %1033 = vmatprep.subr.bf16.mxu0 %v968
        %1034 = vmatpush2.bf16.msra.mxu0 %v967
        %1035 = vmatprep.subr.bf16.mxu0 %v966
        %1036 = vmatpush2.bf16.msra.mxu0 %v965
        %1037 = vmatprep.subr.bf16.mxu0 %v964
        %1038 = vmatpush2.bf16.msra.mxu0 %v963
        %1039 = vmatprep.subr.bf16.mxu0 %v962
        %1040 = vmatpush2.bf16.msra.mxu0 %v961
        %1041 = vmatprep.mubr.bf16.mxu0 %v818
        %1042 = vmatmul.mubr.bf16.gmra.mxu0 %v817
        %v1043 = vpop.f32.mrf.mxu0
        %v1044 = vadd.f32 0.0, %v1043
        %v1045 = vpop.f32.mrf.mxu0
        %v1046 = vadd.f32 0.0, %v1045
        %v1047 = vpop.f32.mrf.mxu0
        %v1048 = vadd.f32 0.0, %v1047
        %v1049 = vpop.f32.mrf.mxu0
        %v1050 = vadd.f32 0.0, %v1049
        %1051 = vmatprep.mubr.bf16.mxu0 %v820
        %1052 = vmatmul.mubr.bf16.gmra.mxu0 %v819
        %v1053 = vpop.f32.mrf.mxu0
        %v1054 = vadd.f32 0.0, %v1053
        %v1055 = vpop.f32.mrf.mxu0
        %v1056 = vadd.f32 0.0, %v1055
        %v1057 = vpop.f32.mrf.mxu0
        %v1058 = vadd.f32 0.0, %v1057
        %v1059 = vpop.f32.mrf.mxu0
        %v1060 = vadd.f32 0.0, %v1059
        %1061 = vmatprep.mubr.bf16.mxu0 %v822
        %1062 = vmatmul.mubr.bf16.gmra.mxu0 %v821
        %v1063 = vpop.f32.mrf.mxu0
        %v1064 = vadd.f32 0.0, %v1063
        %v1065 = vpop.f32.mrf.mxu0
        %v1066 = vadd.f32 0.0, %v1065
        %v1067 = vpop.f32.mrf.mxu0
        %v1068 = vadd.f32 0.0, %v1067
        %v1069 = vpop.f32.mrf.mxu0
        %v1070 = vadd.f32 0.0, %v1069
        %1071 = vmatprep.mubr.bf16.mxu0 %v824
        %1072 = vmatmul.mubr.bf16.gmra.mxu0 %v823
        %v1073 = vpop.f32.mrf.mxu0
        %v1074 = vadd.f32 0.0, %v1073
        %v1075 = vpop.f32.mrf.mxu0
        %v1076 = vadd.f32 0.0, %v1075
        %v1077 = vpop.f32.mrf.mxu0
        %v1078 = vadd.f32 0.0, %v1077
        %v1079 = vpop.f32.mrf.mxu0
        %v1080 = vadd.f32 0.0, %v1079
        %1081 = vmatprep.mubr.bf16.mxu0 %v826
        %1082 = vmatmul.mubr.bf16.gmra.mxu0 %v825
        %v1083 = vpop.f32.mrf.mxu0
        %v1084 = vadd.f32 0.0, %v1083
        %v1085 = vpop.f32.mrf.mxu0
        %v1086 = vadd.f32 0.0, %v1085
        %v1087 = vpop.f32.mrf.mxu0
        %v1088 = vadd.f32 0.0, %v1087
        %v1089 = vpop.f32.mrf.mxu0
        %v1090 = vadd.f32 0.0, %v1089
        %1091 = vmatprep.mubr.bf16.mxu0 %v828
        %1092 = vmatmul.mubr.bf16.gmra.mxu0 %v827
        %v1093 = vpop.f32.mrf.mxu0
        %v1094 = vadd.f32 0.0, %v1093
        %v1095 = vpop.f32.mrf.mxu0
        %v1096 = vadd.f32 0.0, %v1095
        %v1097 = vpop.f32.mrf.mxu0
        %v1098 = vadd.f32 0.0, %v1097
        %v1099 = vpop.f32.mrf.mxu0
        %v1100 = vadd.f32 0.0, %v1099
        %1101 = vmatprep.mubr.bf16.mxu0 %v830
        %1102 = vmatmul.mubr.bf16.gmra.mxu0 %v829
        %v1103 = vpop.f32.mrf.mxu0
        %v1104 = vadd.f32 0.0, %v1103
        %v1105 = vpop.f32.mrf.mxu0
        %v1106 = vadd.f32 0.0, %v1105
        %v1107 = vpop.f32.mrf.mxu0
        %v1108 = vadd.f32 0.0, %v1107
        %v1109 = vpop.f32.mrf.mxu0
        %v1110 = vadd.f32 0.0, %v1109
        %1111 = vmatprep.mubr.bf16.mxu0 %v832
        %1112 = vmatmul.mubr.bf16.gmra.mxu0 %v831
        %v1113 = vpop.f32.mrf.mxu0
        %v1114 = vadd.f32 0.0, %v1113
        %v1115 = vpop.f32.mrf.mxu0
        %v1116 = vadd.f32 0.0, %v1115
        %v1117 = vpop.f32.mrf.mxu0
        %v1118 = vadd.f32 0.0, %v1117
        %v1119 = vpop.f32.mrf.mxu0
        %v1120 = vadd.f32 0.0, %v1119
        %1121 = vdwg.mxu0
        %v1122 = vld [vmem:[%s582] sm:$0xff]
        %v1123 = vld [vmem:[%s582 + $0x8] sm:$0xff]
        %v1124 = vld [vmem:[%s582 + $0x10] sm:$0xff]
        %v1125 = vld [vmem:[%s582 + $0x18] sm:$0xff]
        %v1126 = vld [vmem:[%s582 + $0x20] sm:$0xff]
        %v1127 = vld [vmem:[%s582 + $0x28] sm:$0xff]
        %v1128 = vld [vmem:[%s582 + $0x30] sm:$0xff]
        %v1129 = vld [vmem:[%s582 + $0x38] sm:$0xff]
        %v1130 = vld [vmem:[%s582 + $0x40] sm:$0xff]
        %v1131 = vld [vmem:[%s582 + $0x48] sm:$0xff]
        %v1132 = vld [vmem:[%s582 + $0x50] sm:$0xff]
        %v1133 = vld [vmem:[%s582 + $0x58] sm:$0xff]
        %v1134 = vld [vmem:[%s582 + $0x60] sm:$0xff]
        %v1135 = vld [vmem:[%s582 + $0x68] sm:$0xff]
        %v1136 = vld [vmem:[%s582 + $0x70] sm:$0xff]
        %v1137 = vld [vmem:[%s582 + $0x78] sm:$0xff]
        %v1138 = vld [vmem:[%s582 + $0x80] sm:$0xff]
        %v1139 = vld [vmem:[%s582 + $0x88] sm:$0xff]
        %v1140 = vld [vmem:[%s582 + $0x90] sm:$0xff]
        %v1141 = vld [vmem:[%s582 + $0x98] sm:$0xff]
        %v1142 = vld [vmem:[%s582 + $0xa0] sm:$0xff]
        %v1143 = vld [vmem:[%s582 + $0xa8] sm:$0xff]
        %v1144 = vld [vmem:[%s582 + $0xb0] sm:$0xff]
        %v1145 = vld [vmem:[%s582 + $0xb8] sm:$0xff]
        %v1146 = vld [vmem:[%s582 + $0xc0] sm:$0xff]
        %v1147 = vld [vmem:[%s582 + $0xc8] sm:$0xff]
        %v1148 = vld [vmem:[%s582 + $0xd0] sm:$0xff]
        %v1149 = vld [vmem:[%s582 + $0xd8] sm:$0xff]
        %v1150 = vld [vmem:[%s582 + $0xe0] sm:$0xff]
        %v1151 = vld [vmem:[%s582 + $0xe8] sm:$0xff]
        %v1152 = vld [vmem:[%s582 + $0xf0] sm:$0xff]
        %v1153 = vld [vmem:[%s582 + $0xf8] sm:$0xff]
        %v1186 = vunpack.c.l.b16 %v1122
        %v1187 = vunpack.c.h.b16 %v1122
        %v1188 = vunpack.c.l.b16 %v1123
        %v1189 = vunpack.c.h.b16 %v1123
        %v1190 = vunpack.c.l.b16 %v1124
        %v1191 = vunpack.c.h.b16 %v1124
        %v1192 = vunpack.c.l.b16 %v1125
        %v1193 = vunpack.c.h.b16 %v1125
        %v1194 = vunpack.c.l.b16 %v1126
        %v1195 = vunpack.c.h.b16 %v1126
        %v1196 = vunpack.c.l.b16 %v1127
        %v1197 = vunpack.c.h.b16 %v1127
        %v1198 = vunpack.c.l.b16 %v1128
        %v1199 = vunpack.c.h.b16 %v1128
        %v1200 = vunpack.c.l.b16 %v1129
        %v1201 = vunpack.c.h.b16 %v1129
        %v1202 = vunpack.c.l.b16 %v1130
        %v1203 = vunpack.c.h.b16 %v1130
        %v1204 = vunpack.c.l.b16 %v1131
        %v1205 = vunpack.c.h.b16 %v1131
        %v1206 = vunpack.c.l.b16 %v1132
        %v1207 = vunpack.c.h.b16 %v1132
        %v1208 = vunpack.c.l.b16 %v1133
        %v1209 = vunpack.c.h.b16 %v1133
        %v1210 = vunpack.c.l.b16 %v1134
        %v1211 = vunpack.c.h.b16 %v1134
        %v1212 = vunpack.c.l.b16 %v1135
        %v1213 = vunpack.c.h.b16 %v1135
        %v1214 = vunpack.c.l.b16 %v1136
        %v1215 = vunpack.c.h.b16 %v1136
        %v1216 = vunpack.c.l.b16 %v1137
        %v1217 = vunpack.c.h.b16 %v1137
        %v1218 = vunpack.c.l.b16 %v1138
        %v1219 = vunpack.c.h.b16 %v1138
        %v1220 = vunpack.c.l.b16 %v1139
        %v1221 = vunpack.c.h.b16 %v1139
        %v1222 = vunpack.c.l.b16 %v1140
        %v1223 = vunpack.c.h.b16 %v1140
        %v1224 = vunpack.c.l.b16 %v1141
        %v1225 = vunpack.c.h.b16 %v1141
        %v1226 = vunpack.c.l.b16 %v1142
        %v1227 = vunpack.c.h.b16 %v1142
        %v1228 = vunpack.c.l.b16 %v1143
        %v1229 = vunpack.c.h.b16 %v1143
        %v1230 = vunpack.c.l.b16 %v1144
        %v1231 = vunpack.c.h.b16 %v1144
        %v1232 = vunpack.c.l.b16 %v1145
        %v1233 = vunpack.c.h.b16 %v1145
        %v1234 = vunpack.c.l.b16 %v1146
        %v1235 = vunpack.c.h.b16 %v1146
        %v1236 = vunpack.c.l.b16 %v1147
        %v1237 = vunpack.c.h.b16 %v1147
        %v1238 = vunpack.c.l.b16 %v1148
        %v1239 = vunpack.c.h.b16 %v1148
        %v1240 = vunpack.c.l.b16 %v1149
        %v1241 = vunpack.c.h.b16 %v1149
        %v1242 = vunpack.c.l.b16 %v1150
        %v1243 = vunpack.c.h.b16 %v1150
        %v1244 = vunpack.c.l.b16 %v1151
        %v1245 = vunpack.c.h.b16 %v1151
        %v1246 = vunpack.c.l.b16 %v1152
        %v1247 = vunpack.c.h.b16 %v1152
        %v1248 = vunpack.c.l.b16 %v1153
        %v1249 = vunpack.c.h.b16 %v1153
        %v1250 = vpack.c.b16 %v1188, %v1186
        %v1251 = vpack.c.b16 %v1189, %v1187
        %v1252 = vpack.c.b16 %v1192, %v1190
        %v1253 = vpack.c.b16 %v1193, %v1191
        %v1254 = vpack.c.b16 %v1196, %v1194
        %v1255 = vpack.c.b16 %v1197, %v1195
        %v1256 = vpack.c.b16 %v1200, %v1198
        %v1257 = vpack.c.b16 %v1201, %v1199
        %v1258 = vpack.c.b16 %v1204, %v1202
        %v1259 = vpack.c.b16 %v1205, %v1203
        %v1260 = vpack.c.b16 %v1208, %v1206
        %v1261 = vpack.c.b16 %v1209, %v1207
        %v1262 = vpack.c.b16 %v1212, %v1210
        %v1263 = vpack.c.b16 %v1213, %v1211
        %v1264 = vpack.c.b16 %v1216, %v1214
        %v1265 = vpack.c.b16 %v1217, %v1215
        %v1266 = vpack.c.b16 %v1220, %v1218
        %v1267 = vpack.c.b16 %v1221, %v1219
        %v1268 = vpack.c.b16 %v1224, %v1222
        %v1269 = vpack.c.b16 %v1225, %v1223
        %v1270 = vpack.c.b16 %v1228, %v1226
        %v1271 = vpack.c.b16 %v1229, %v1227
        %v1272 = vpack.c.b16 %v1232, %v1230
        %v1273 = vpack.c.b16 %v1233, %v1231
        %v1274 = vpack.c.b16 %v1236, %v1234
        %v1275 = vpack.c.b16 %v1237, %v1235
        %v1276 = vpack.c.b16 %v1240, %v1238
        %v1277 = vpack.c.b16 %v1241, %v1239
        %v1278 = vpack.c.b16 %v1244, %v1242
        %v1279 = vpack.c.b16 %v1245, %v1243
        %v1280 = vpack.c.b16 %v1248, %v1246
        %v1281 = vpack.c.b16 %v1249, %v1247
        %1314 = vmatprep.subr.bf16.mxu0 %v1265
        %1315 = vmatpush1.bf16.msra.mxu0 %v1264
        %1316 = vmatprep.subr.bf16.mxu0 %v1263
        %1317 = vmatpush1.bf16.msra.mxu0 %v1262
        %1318 = vmatprep.subr.bf16.mxu0 %v1261
        %1319 = vmatpush1.bf16.msra.mxu0 %v1260
        %1320 = vmatprep.subr.bf16.mxu0 %v1259
        %1321 = vmatpush1.bf16.msra.mxu0 %v1258
        %1322 = vmatprep.subr.bf16.mxu0 %v1257
        %1323 = vmatpush1.bf16.msra.mxu0 %v1256
        %1324 = vmatprep.subr.bf16.mxu0 %v1255
        %1325 = vmatpush1.bf16.msra.mxu0 %v1254
        %1326 = vmatprep.subr.bf16.mxu0 %v1253
        %1327 = vmatpush1.bf16.msra.mxu0 %v1252
        %1328 = vmatprep.subr.bf16.mxu0 %v1251
        %1329 = vmatpush1.bf16.msra.mxu0 %v1250
        %1330 = vmatprep.subr.bf16.mxu0 %v1281
        %1331 = vmatpush2.bf16.msra.mxu0 %v1280
        %1332 = vmatprep.subr.bf16.mxu0 %v1279
        %1333 = vmatpush2.bf16.msra.mxu0 %v1278
        %1334 = vmatprep.subr.bf16.mxu0 %v1277
        %1335 = vmatpush2.bf16.msra.mxu0 %v1276
        %1336 = vmatprep.subr.bf16.mxu0 %v1275
        %1337 = vmatpush2.bf16.msra.mxu0 %v1274
        %1338 = vmatprep.subr.bf16.mxu0 %v1273
        %1339 = vmatpush2.bf16.msra.mxu0 %v1272
        %1340 = vmatprep.subr.bf16.mxu0 %v1271
        %1341 = vmatpush2.bf16.msra.mxu0 %v1270
        %1342 = vmatprep.subr.bf16.mxu0 %v1269
        %1343 = vmatpush2.bf16.msra.mxu0 %v1268
        %1344 = vmatprep.subr.bf16.mxu0 %v1267
        %1345 = vmatpush2.bf16.msra.mxu0 %v1266
        %1346 = vmatprep.mubr.bf16.mxu0 %v818
        %1347 = vmatmul.mubr.bf16.gmra.mxu0 %v817
        %v1348 = vpop.f32.mrf.mxu0
        %v1349 = vadd.f32 0.0, %v1348
        %v1350 = vpop.f32.mrf.mxu0
        %v1351 = vadd.f32 0.0, %v1350
        %v1352 = vpop.f32.mrf.mxu0
        %v1353 = vadd.f32 0.0, %v1352
        %v1354 = vpop.f32.mrf.mxu0
        %v1355 = vadd.f32 0.0, %v1354
        %1356 = vmatprep.mubr.bf16.mxu0 %v820
        %1357 = vmatmul.mubr.bf16.gmra.mxu0 %v819
        %v1358 = vpop.f32.mrf.mxu0
        %v1359 = vadd.f32 0.0, %v1358
        %v1360 = vpop.f32.mrf.mxu0
        %v1361 = vadd.f32 0.0, %v1360
        %v1362 = vpop.f32.mrf.mxu0
        %v1363 = vadd.f32 0.0, %v1362
        %v1364 = vpop.f32.mrf.mxu0
        %v1365 = vadd.f32 0.0, %v1364
        %1366 = vmatprep.mubr.bf16.mxu0 %v822
        %1367 = vmatmul.mubr.bf16.gmra.mxu0 %v821
        %v1368 = vpop.f32.mrf.mxu0
        %v1369 = vadd.f32 0.0, %v1368
        %v1370 = vpop.f32.mrf.mxu0
        %v1371 = vadd.f32 0.0, %v1370
        %v1372 = vpop.f32.mrf.mxu0
        %v1373 = vadd.f32 0.0, %v1372
        %v1374 = vpop.f32.mrf.mxu0
        %v1375 = vadd.f32 0.0, %v1374
        %1376 = vmatprep.mubr.bf16.mxu0 %v824
        %1377 = vmatmul.mubr.bf16.gmra.mxu0 %v823
        %v1378 = vpop.f32.mrf.mxu0
        %v1379 = vadd.f32 0.0, %v1378
        %v1380 = vpop.f32.mrf.mxu0
        %v1381 = vadd.f32 0.0, %v1380
        %v1382 = vpop.f32.mrf.mxu0
        %v1383 = vadd.f32 0.0, %v1382
        %v1384 = vpop.f32.mrf.mxu0
        %v1385 = vadd.f32 0.0, %v1384
        %1386 = vmatprep.mubr.bf16.mxu0 %v826
        %1387 = vmatmul.mubr.bf16.gmra.mxu0 %v825
        %v1388 = vpop.f32.mrf.mxu0
        %v1389 = vadd.f32 0.0, %v1388
        %v1390 = vpop.f32.mrf.mxu0
        %v1391 = vadd.f32 0.0, %v1390
        %v1392 = vpop.f32.mrf.mxu0
        %v1393 = vadd.f32 0.0, %v1392
        %v1394 = vpop.f32.mrf.mxu0
        %v1395 = vadd.f32 0.0, %v1394
        %1396 = vmatprep.mubr.bf16.mxu0 %v828
        %1397 = vmatmul.mubr.bf16.gmra.mxu0 %v827
        %v1398 = vpop.f32.mrf.mxu0
        %v1399 = vadd.f32 0.0, %v1398
        %v1400 = vpop.f32.mrf.mxu0
        %v1401 = vadd.f32 0.0, %v1400
        %v1402 = vpop.f32.mrf.mxu0
        %v1403 = vadd.f32 0.0, %v1402
        %v1404 = vpop.f32.mrf.mxu0
        %v1405 = vadd.f32 0.0, %v1404
        %1406 = vmatprep.mubr.bf16.mxu0 %v830
        %1407 = vmatmul.mubr.bf16.gmra.mxu0 %v829
        %v1408 = vpop.f32.mrf.mxu0
        %v1409 = vadd.f32 0.0, %v1408
        %v1410 = vpop.f32.mrf.mxu0
        %v1411 = vadd.f32 0.0, %v1410
        %v1412 = vpop.f32.mrf.mxu0
        %v1413 = vadd.f32 0.0, %v1412
        %v1414 = vpop.f32.mrf.mxu0
        %v1415 = vadd.f32 0.0, %v1414
        %1416 = vmatprep.mubr.bf16.mxu0 %v832
        %1417 = vmatmul.mubr.bf16.gmra.mxu0 %v831
        %v1418 = vpop.f32.mrf.mxu0
        %v1419 = vadd.f32 0.0, %v1418
        %v1420 = vpop.f32.mrf.mxu0
        %v1421 = vadd.f32 0.0, %v1420
        %v1422 = vpop.f32.mrf.mxu0
        %v1423 = vadd.f32 0.0, %v1422
        %v1424 = vpop.f32.mrf.mxu0
        %v1425 = vadd.f32 0.0, %v1424
        %1426 = vdwg.mxu0
        %v1427 = vmul.f32 %v1044, 0.5
        %v1428 = vmul.f32 %v1046, 0.5
        %v1429 = vmul.f32 %v1048, 0.5
        %v1430 = vmul.f32 %v1050, 0.5
        %v1431 = vmul.f32 %v1054, 0.5
        %v1432 = vmul.f32 %v1056, 0.5
        %v1433 = vmul.f32 %v1058, 0.5
        %v1434 = vmul.f32 %v1060, 0.5
        %v1435 = vmul.f32 %v1064, 0.5
        %v1436 = vmul.f32 %v1066, 0.5
        %v1437 = vmul.f32 %v1068, 0.5
        %v1438 = vmul.f32 %v1070, 0.5
        %v1439 = vmul.f32 %v1074, 0.5
        %v1440 = vmul.f32 %v1076, 0.5
        %v1441 = vmul.f32 %v1078, 0.5
        %v1442 = vmul.f32 %v1080, 0.5
        %v1443 = vmul.f32 %v1084, 0.5
        %v1444 = vmul.f32 %v1086, 0.5
        %v1445 = vmul.f32 %v1088, 0.5
        %v1446 = vmul.f32 %v1090, 0.5
        %v1447 = vmul.f32 %v1094, 0.5
        %v1448 = vmul.f32 %v1096, 0.5
        %v1449 = vmul.f32 %v1098, 0.5
        %v1450 = vmul.f32 %v1100, 0.5
        %v1451 = vmul.f32 %v1104, 0.5
        %v1452 = vmul.f32 %v1106, 0.5
        %v1453 = vmul.f32 %v1108, 0.5
        %v1454 = vmul.f32 %v1110, 0.5
        %v1455 = vmul.f32 %v1114, 0.5
        %v1456 = vmul.f32 %v1116, 0.5
        %v1457 = vmul.f32 %v1118, 0.5
        %v1458 = vmul.f32 %v1120, 0.5
        %v1459 = vmul.f32 %v1044, %v1044
        %v1460 = vmul.f32 %v1046, %v1046
        %v1461 = vmul.f32 %v1048, %v1048
        %v1462 = vmul.f32 %v1050, %v1050
        %v1463 = vmul.f32 %v1054, %v1054
        %v1464 = vmul.f32 %v1056, %v1056
        %v1465 = vmul.f32 %v1058, %v1058
        %v1466 = vmul.f32 %v1060, %v1060
        %v1467 = vmul.f32 %v1064, %v1064
        %v1468 = vmul.f32 %v1066, %v1066
        %v1469 = vmul.f32 %v1068, %v1068
        %v1470 = vmul.f32 %v1070, %v1070
        %v1471 = vmul.f32 %v1074, %v1074
        %v1472 = vmul.f32 %v1076, %v1076
        %v1473 = vmul.f32 %v1078, %v1078
        %v1474 = vmul.f32 %v1080, %v1080
        %v1475 = vmul.f32 %v1084, %v1084
        %v1476 = vmul.f32 %v1086, %v1086
        %v1477 = vmul.f32 %v1088, %v1088
        %v1478 = vmul.f32 %v1090, %v1090
        %v1479 = vmul.f32 %v1094, %v1094
        %v1480 = vmul.f32 %v1096, %v1096
        %v1481 = vmul.f32 %v1098, %v1098
        %v1482 = vmul.f32 %v1100, %v1100
        %v1483 = vmul.f32 %v1104, %v1104
        %v1484 = vmul.f32 %v1106, %v1106
        %v1485 = vmul.f32 %v1108, %v1108
        %v1486 = vmul.f32 %v1110, %v1110
        %v1487 = vmul.f32 %v1114, %v1114
        %v1488 = vmul.f32 %v1116, %v1116
        %v1489 = vmul.f32 %v1118, %v1118
        %v1490 = vmul.f32 %v1120, %v1120
        %v1491 = vmul.f32 %v1459, %v1044
        %v1492 = vmul.f32 %v1460, %v1046
        %v1493 = vmul.f32 %v1461, %v1048
        %v1494 = vmul.f32 %v1462, %v1050
        %v1495 = vmul.f32 %v1463, %v1054
        %v1496 = vmul.f32 %v1464, %v1056
        %v1497 = vmul.f32 %v1465, %v1058
        %v1498 = vmul.f32 %v1466, %v1060
        %v1499 = vmul.f32 %v1467, %v1064
        %v1500 = vmul.f32 %v1468, %v1066
        %v1501 = vmul.f32 %v1469, %v1068
        %v1502 = vmul.f32 %v1470, %v1070
        %v1503 = vmul.f32 %v1471, %v1074
        %v1504 = vmul.f32 %v1472, %v1076
        %v1505 = vmul.f32 %v1473, %v1078
        %v1506 = vmul.f32 %v1474, %v1080
        %v1507 = vmul.f32 %v1475, %v1084
        %v1508 = vmul.f32 %v1476, %v1086
        %v1509 = vmul.f32 %v1477, %v1088
        %v1510 = vmul.f32 %v1478, %v1090
        %v1511 = vmul.f32 %v1479, %v1094
        %v1512 = vmul.f32 %v1480, %v1096
        %v1513 = vmul.f32 %v1481, %v1098
        %v1514 = vmul.f32 %v1482, %v1100
        %v1515 = vmul.f32 %v1483, %v1104
        %v1516 = vmul.f32 %v1484, %v1106
        %v1517 = vmul.f32 %v1485, %v1108
        %v1518 = vmul.f32 %v1486, %v1110
        %v1519 = vmul.f32 %v1487, %v1114
        %v1520 = vmul.f32 %v1488, %v1116
        %v1521 = vmul.f32 %v1489, %v1118
        %v1522 = vmul.f32 %v1490, %v1120
        %v1523 = vmul.f32 %v1491, 0.044715
        %v1524 = vmul.f32 %v1492, 0.044715
        %v1525 = vmul.f32 %v1493, 0.044715
        %v1526 = vmul.f32 %v1494, 0.044715
        %v1527 = vmul.f32 %v1495, 0.044715
        %v1528 = vmul.f32 %v1496, 0.044715
        %v1529 = vmul.f32 %v1497, 0.044715
        %v1530 = vmul.f32 %v1498, 0.044715
        %v1531 = vmul.f32 %v1499, 0.044715
        %v1532 = vmul.f32 %v1500, 0.044715
        %v1533 = vmul.f32 %v1501, 0.044715
        %v1534 = vmul.f32 %v1502, 0.044715
        %v1535 = vmul.f32 %v1503, 0.044715
        %v1536 = vmul.f32 %v1504, 0.044715
        %v1537 = vmul.f32 %v1505, 0.044715
        %v1538 = vmul.f32 %v1506, 0.044715
        %v1539 = vmul.f32 %v1507, 0.044715
        %v1540 = vmul.f32 %v1508, 0.044715
        %v1541 = vmul.f32 %v1509, 0.044715
        %v1542 = vmul.f32 %v1510, 0.044715
        %v1543 = vmul.f32 %v1511, 0.044715
        %v1544 = vmul.f32 %v1512, 0.044715
        %v1545 = vmul.f32 %v1513, 0.044715
        %v1546 = vmul.f32 %v1514, 0.044715
        %v1547 = vmul.f32 %v1515, 0.044715
        %v1548 = vmul.f32 %v1516, 0.044715
        %v1549 = vmul.f32 %v1517, 0.044715
        %v1550 = vmul.f32 %v1518, 0.044715
        %v1551 = vmul.f32 %v1519, 0.044715
        %v1552 = vmul.f32 %v1520, 0.044715
        %v1553 = vmul.f32 %v1521, 0.044715
        %v1554 = vmul.f32 %v1522, 0.044715
        %v1555 = vadd.f32 %v1044, %v1523
        %v1556 = vadd.f32 %v1046, %v1524
        %v1557 = vadd.f32 %v1048, %v1525
        %v1558 = vadd.f32 %v1050, %v1526
        %v1559 = vadd.f32 %v1054, %v1527
        %v1560 = vadd.f32 %v1056, %v1528
        %v1561 = vadd.f32 %v1058, %v1529
        %v1562 = vadd.f32 %v1060, %v1530
        %v1563 = vadd.f32 %v1064, %v1531
        %v1564 = vadd.f32 %v1066, %v1532
        %v1565 = vadd.f32 %v1068, %v1533
        %v1566 = vadd.f32 %v1070, %v1534
        %v1567 = vadd.f32 %v1074, %v1535
        %v1568 = vadd.f32 %v1076, %v1536
        %v1569 = vadd.f32 %v1078, %v1537
        %v1570 = vadd.f32 %v1080, %v1538
        %v1571 = vadd.f32 %v1084, %v1539
        %v1572 = vadd.f32 %v1086, %v1540
        %v1573 = vadd.f32 %v1088, %v1541
        %v1574 = vadd.f32 %v1090, %v1542
        %v1575 = vadd.f32 %v1094, %v1543
        %v1576 = vadd.f32 %v1096, %v1544
        %v1577 = vadd.f32 %v1098, %v1545
        %v1578 = vadd.f32 %v1100, %v1546
        %v1579 = vadd.f32 %v1104, %v1547
        %v1580 = vadd.f32 %v1106, %v1548
        %v1581 = vadd.f32 %v1108, %v1549
        %v1582 = vadd.f32 %v1110, %v1550
        %v1583 = vadd.f32 %v1114, %v1551
        %v1584 = vadd.f32 %v1116, %v1552
        %v1585 = vadd.f32 %v1118, %v1553
        %v1586 = vadd.f32 %v1120, %v1554
        %v1587 = vmul.f32 %v1555, 0.7978846
        %v1588 = vmul.f32 %v1556, 0.7978846
        %v1589 = vmul.f32 %v1557, 0.7978846
        %v1590 = vmul.f32 %v1558, 0.7978846
        %v1591 = vmul.f32 %v1559, 0.7978846
        %v1592 = vmul.f32 %v1560, 0.7978846
        %v1593 = vmul.f32 %v1561, 0.7978846
        %v1594 = vmul.f32 %v1562, 0.7978846
        %v1595 = vmul.f32 %v1563, 0.7978846
        %v1596 = vmul.f32 %v1564, 0.7978846
        %v1597 = vmul.f32 %v1565, 0.7978846
        %v1598 = vmul.f32 %v1566, 0.7978846
        %v1599 = vmul.f32 %v1567, 0.7978846
        %v1600 = vmul.f32 %v1568, 0.7978846
        %v1601 = vmul.f32 %v1569, 0.7978846
        %v1602 = vmul.f32 %v1570, 0.7978846
        %v1603 = vmul.f32 %v1571, 0.7978846
        %v1604 = vmul.f32 %v1572, 0.7978846
        %v1605 = vmul.f32 %v1573, 0.7978846
        %v1606 = vmul.f32 %v1574, 0.7978846
        %v1607 = vmul.f32 %v1575, 0.7978846
        %v1608 = vmul.f32 %v1576, 0.7978846
        %v1609 = vmul.f32 %v1577, 0.7978846
        %v1610 = vmul.f32 %v1578, 0.7978846
        %v1611 = vmul.f32 %v1579, 0.7978846
        %v1612 = vmul.f32 %v1580, 0.7978846
        %v1613 = vmul.f32 %v1581, 0.7978846
        %v1614 = vmul.f32 %v1582, 0.7978846
        %v1615 = vmul.f32 %v1583, 0.7978846
        %v1616 = vmul.f32 %v1584, 0.7978846
        %v1617 = vmul.f32 %v1585, 0.7978846
        %v1618 = vmul.f32 %v1586, 0.7978846
        %v1619 = vtanh.pop %v1587
        %v1620 = vtanh.pop %v1588
        %v1621 = vtanh.pop %v1589
        %v1622 = vtanh.pop %v1590
        %v1623 = vtanh.pop %v1591
        %v1624 = vtanh.pop %v1592
        %v1625 = vtanh.pop %v1593
        %v1626 = vtanh.pop %v1594
        %v1627 = vtanh.pop %v1595
        %v1628 = vtanh.pop %v1596
        %v1629 = vtanh.pop %v1597
        %v1630 = vtanh.pop %v1598
        %v1631 = vtanh.pop %v1599
        %v1632 = vtanh.pop %v1600
        %v1633 = vtanh.pop %v1601
        %v1634 = vtanh.pop %v1602
        %v1635 = vtanh.pop %v1603
        %v1636 = vtanh.pop %v1604
        %v1637 = vtanh.pop %v1605
        %v1638 = vtanh.pop %v1606
        %v1639 = vtanh.pop %v1607
        %v1640 = vtanh.pop %v1608
        %v1641 = vtanh.pop %v1609
        %v1642 = vtanh.pop %v1610
        %v1643 = vtanh.pop %v1611
        %v1644 = vtanh.pop %v1612
        %v1645 = vtanh.pop %v1613
        %v1646 = vtanh.pop %v1614
        %v1647 = vtanh.pop %v1615
        %v1648 = vtanh.pop %v1616
        %v1649 = vtanh.pop %v1617
        %v1650 = vtanh.pop %v1618
        %v1651 = vadd.f32 %v1619, 1.0
        %v1652 = vadd.f32 %v1620, 1.0
        %v1653 = vadd.f32 %v1621, 1.0
        %v1654 = vadd.f32 %v1622, 1.0
        %v1655 = vadd.f32 %v1623, 1.0
        %v1656 = vadd.f32 %v1624, 1.0
        %v1657 = vadd.f32 %v1625, 1.0
        %v1658 = vadd.f32 %v1626, 1.0
        %v1659 = vadd.f32 %v1627, 1.0
        %v1660 = vadd.f32 %v1628, 1.0
        %v1661 = vadd.f32 %v1629, 1.0
        %v1662 = vadd.f32 %v1630, 1.0
        %v1663 = vadd.f32 %v1631, 1.0
        %v1664 = vadd.f32 %v1632, 1.0
        %v1665 = vadd.f32 %v1633, 1.0
        %v1666 = vadd.f32 %v1634, 1.0
        %v1667 = vadd.f32 %v1635, 1.0
        %v1668 = vadd.f32 %v1636, 1.0
        %v1669 = vadd.f32 %v1637, 1.0
        %v1670 = vadd.f32 %v1638, 1.0
        %v1671 = vadd.f32 %v1639, 1.0
        %v1672 = vadd.f32 %v1640, 1.0
        %v1673 = vadd.f32 %v1641, 1.0
        %v1674 = vadd.f32 %v1642, 1.0
        %v1675 = vadd.f32 %v1643, 1.0
        %v1676 = vadd.f32 %v1644, 1.0
        %v1677 = vadd.f32 %v1645, 1.0
        %v1678 = vadd.f32 %v1646, 1.0
        %v1679 = vadd.f32 %v1647, 1.0
        %v1680 = vadd.f32 %v1648, 1.0
        %v1681 = vadd.f32 %v1649, 1.0
        %v1682 = vadd.f32 %v1650, 1.0
        %v1683 = vmul.f32 %v1427, %v1651
        %v1684 = vmul.f32 %v1428, %v1652
        %v1685 = vmul.f32 %v1429, %v1653
        %v1686 = vmul.f32 %v1430, %v1654
        %v1687 = vmul.f32 %v1431, %v1655
        %v1688 = vmul.f32 %v1432, %v1656
        %v1689 = vmul.f32 %v1433, %v1657
        %v1690 = vmul.f32 %v1434, %v1658
        %v1691 = vmul.f32 %v1435, %v1659
        %v1692 = vmul.f32 %v1436, %v1660
        %v1693 = vmul.f32 %v1437, %v1661
        %v1694 = vmul.f32 %v1438, %v1662
        %v1695 = vmul.f32 %v1439, %v1663
        %v1696 = vmul.f32 %v1440, %v1664
        %v1697 = vmul.f32 %v1441, %v1665
        %v1698 = vmul.f32 %v1442, %v1666
        %v1699 = vmul.f32 %v1443, %v1667
        %v1700 = vmul.f32 %v1444, %v1668
        %v1701 = vmul.f32 %v1445, %v1669
        %v1702 = vmul.f32 %v1446, %v1670
        %v1703 = vmul.f32 %v1447, %v1671
        %v1704 = vmul.f32 %v1448, %v1672
        %v1705 = vmul.f32 %v1449, %v1673
        %v1706 = vmul.f32 %v1450, %v1674
        %v1707 = vmul.f32 %v1451, %v1675
        %v1708 = vmul.f32 %v1452, %v1676
        %v1709 = vmul.f32 %v1453, %v1677
        %v1710 = vmul.f32 %v1454, %v1678
        %v1711 = vmul.f32 %v1455, %v1679
        %v1712 = vmul.f32 %v1456, %v1680
        %v1713 = vmul.f32 %v1457, %v1681
        %v1714 = vmul.f32 %v1458, %v1682
        %v1715 = vld [vmem:[%s628] sm:$0xff]
        %v1716 = vld [vmem:[%s628 + $0x8] sm:$0xff]
        %v1717 = vld [vmem:[%s628 + $0x10] sm:$0xff]
        %v1718 = vld [vmem:[%s628 + $0x18] sm:$0xff]
        %v1719 = vld [vmem:[%s628 + $0x20] sm:$0xff]
        %v1720 = vld [vmem:[%s628 + $0x28] sm:$0xff]
        %v1721 = vld [vmem:[%s628 + $0x30] sm:$0xff]
        %v1722 = vld [vmem:[%s628 + $0x38] sm:$0xff]
        %v1723 = vld [vmem:[%s628 + $0x40] sm:$0xff]
        %v1724 = vld [vmem:[%s628 + $0x48] sm:$0xff]
        %v1725 = vld [vmem:[%s628 + $0x50] sm:$0xff]
        %v1726 = vld [vmem:[%s628 + $0x58] sm:$0xff]
        %v1727 = vld [vmem:[%s628 + $0x60] sm:$0xff]
        %v1728 = vld [vmem:[%s628 + $0x68] sm:$0xff]
        %v1729 = vld [vmem:[%s628 + $0x70] sm:$0xff]
        %v1730 = vld [vmem:[%s628 + $0x78] sm:$0xff]
        %v1731 = vld [vmem:[%s628 + $0x80] sm:$0xff]
        %v1732 = vld [vmem:[%s628 + $0x88] sm:$0xff]
        %v1733 = vld [vmem:[%s628 + $0x90] sm:$0xff]
        %v1734 = vld [vmem:[%s628 + $0x98] sm:$0xff]
        %v1735 = vld [vmem:[%s628 + $0xa0] sm:$0xff]
        %v1736 = vld [vmem:[%s628 + $0xa8] sm:$0xff]
        %v1737 = vld [vmem:[%s628 + $0xb0] sm:$0xff]
        %v1738 = vld [vmem:[%s628 + $0xb8] sm:$0xff]
        %v1739 = vld [vmem:[%s628 + $0xc0] sm:$0xff]
        %v1740 = vld [vmem:[%s628 + $0xc8] sm:$0xff]
        %v1741 = vld [vmem:[%s628 + $0xd0] sm:$0xff]
        %v1742 = vld [vmem:[%s628 + $0xd8] sm:$0xff]
        %v1743 = vld [vmem:[%s628 + $0xe0] sm:$0xff]
        %v1744 = vld [vmem:[%s628 + $0xe8] sm:$0xff]
        %v1745 = vld [vmem:[%s628 + $0xf0] sm:$0xff]
        %v1746 = vld [vmem:[%s628 + $0xf8] sm:$0xff]
        %v1747 = vmul.f32 %v1683, %v1349
        %v1748 = vmul.f32 %v1684, %v1351
        %v1749 = vmul.f32 %v1685, %v1353
        %v1750 = vmul.f32 %v1686, %v1355
        %v1751 = vmul.f32 %v1687, %v1359
        %v1752 = vmul.f32 %v1688, %v1361
        %v1753 = vmul.f32 %v1689, %v1363
        %v1754 = vmul.f32 %v1690, %v1365
        %v1755 = vmul.f32 %v1691, %v1369
        %v1756 = vmul.f32 %v1692, %v1371
        %v1757 = vmul.f32 %v1693, %v1373
        %v1758 = vmul.f32 %v1694, %v1375
        %v1759 = vmul.f32 %v1695, %v1379
        %v1760 = vmul.f32 %v1696, %v1381
        %v1761 = vmul.f32 %v1697, %v1383
        %v1762 = vmul.f32 %v1698, %v1385
        %v1763 = vmul.f32 %v1699, %v1389
        %v1764 = vmul.f32 %v1700, %v1391
        %v1765 = vmul.f32 %v1701, %v1393
        %v1766 = vmul.f32 %v1702, %v1395
        %v1767 = vmul.f32 %v1703, %v1399
        %v1768 = vmul.f32 %v1704, %v1401
        %v1769 = vmul.f32 %v1705, %v1403
        %v1770 = vmul.f32 %v1706, %v1405
        %v1771 = vmul.f32 %v1707, %v1409
        %v1772 = vmul.f32 %v1708, %v1411
        %v1773 = vmul.f32 %v1709, %v1413
        %v1774 = vmul.f32 %v1710, %v1415
        %v1775 = vmul.f32 %v1711, %v1419
        %v1776 = vmul.f32 %v1712, %v1421
        %v1777 = vmul.f32 %v1713, %v1423
        %v1778 = vmul.f32 %v1714, %v1425
        %v1779 = vpack.c.bf16 %v1749, %v1747
        %v1780 = vpack.c.bf16 %v1750, %v1748
        %v1781 = vpack.c.bf16 %v1753, %v1751
        %v1782 = vpack.c.bf16 %v1754, %v1752
        %v1783 = vpack.c.bf16 %v1757, %v1755
        %v1784 = vpack.c.bf16 %v1758, %v1756
        %v1785 = vpack.c.bf16 %v1761, %v1759
        %v1786 = vpack.c.bf16 %v1762, %v1760
        %v1787 = vpack.c.bf16 %v1765, %v1763
        %v1788 = vpack.c.bf16 %v1766, %v1764
        %v1789 = vpack.c.bf16 %v1769, %v1767
        %v1790 = vpack.c.bf16 %v1770, %v1768
        %v1791 = vpack.c.bf16 %v1773, %v1771
        %v1792 = vpack.c.bf16 %v1774, %v1772
        %v1793 = vpack.c.bf16 %v1777, %v1775
        %v1794 = vpack.c.bf16 %v1778, %v1776
        %v1795 = vld [vmem:[%s643] sm:$0xff]
        %v1796 = vld [vmem:[%s643 + $0x8] sm:$0xff]
        %v1797 = vld [vmem:[%s643 + $0x10] sm:$0xff]
        %v1798 = vld [vmem:[%s643 + $0x18] sm:$0xff]
        %v1799 = vld [vmem:[%s643 + $0x20] sm:$0xff]
        %v1800 = vld [vmem:[%s643 + $0x28] sm:$0xff]
        %v1801 = vld [vmem:[%s643 + $0x30] sm:$0xff]
        %v1802 = vld [vmem:[%s643 + $0x38] sm:$0xff]
        %v1803 = vld [vmem:[%s643 + $0x40] sm:$0xff]
        %v1804 = vld [vmem:[%s643 + $0x48] sm:$0xff]
        %v1805 = vld [vmem:[%s643 + $0x50] sm:$0xff]
        %v1806 = vld [vmem:[%s643 + $0x58] sm:$0xff]
        %v1807 = vld [vmem:[%s643 + $0x60] sm:$0xff]
        %v1808 = vld [vmem:[%s643 + $0x68] sm:$0xff]
        %v1809 = vld [vmem:[%s643 + $0x70] sm:$0xff]
        %v1810 = vld [vmem:[%s643 + $0x78] sm:$0xff]
        %v1811 = vld [vmem:[%s643 + $0x80] sm:$0xff]
        %v1812 = vld [vmem:[%s643 + $0x88] sm:$0xff]
        %v1813 = vld [vmem:[%s643 + $0x90] sm:$0xff]
        %v1814 = vld [vmem:[%s643 + $0x98] sm:$0xff]
        %v1815 = vld [vmem:[%s643 + $0xa0] sm:$0xff]
        %v1816 = vld [vmem:[%s643 + $0xa8] sm:$0xff]
        %v1817 = vld [vmem:[%s643 + $0xb0] sm:$0xff]
        %v1818 = vld [vmem:[%s643 + $0xb8] sm:$0xff]
        %v1819 = vld [vmem:[%s643 + $0xc0] sm:$0xff]
        %v1820 = vld [vmem:[%s643 + $0xc8] sm:$0xff]
        %v1821 = vld [vmem:[%s643 + $0xd0] sm:$0xff]
        %v1822 = vld [vmem:[%s643 + $0xd8] sm:$0xff]
        %v1823 = vld [vmem:[%s643 + $0xe0] sm:$0xff]
        %v1824 = vld [vmem:[%s643 + $0xe8] sm:$0xff]
        %v1825 = vld [vmem:[%s643 + $0xf0] sm:$0xff]
        %v1826 = vld [vmem:[%s643 + $0xf8] sm:$0xff]
        %v1859 = vunpack.c.l.b16 %v1795
        %v1860 = vunpack.c.h.b16 %v1795
        %v1861 = vunpack.c.l.b16 %v1796
        %v1862 = vunpack.c.h.b16 %v1796
        %v1863 = vunpack.c.l.b16 %v1797
        %v1864 = vunpack.c.h.b16 %v1797
        %v1865 = vunpack.c.l.b16 %v1798
        %v1866 = vunpack.c.h.b16 %v1798
        %v1867 = vunpack.c.l.b16 %v1799
        %v1868 = vunpack.c.h.b16 %v1799
        %v1869 = vunpack.c.l.b16 %v1800
        %v1870 = vunpack.c.h.b16 %v1800
        %v1871 = vunpack.c.l.b16 %v1801
        %v1872 = vunpack.c.h.b16 %v1801
        %v1873 = vunpack.c.l.b16 %v1802
        %v1874 = vunpack.c.h.b16 %v1802
        %v1875 = vunpack.c.l.b16 %v1803
        %v1876 = vunpack.c.h.b16 %v1803
        %v1877 = vunpack.c.l.b16 %v1804
        %v1878 = vunpack.c.h.b16 %v1804
        %v1879 = vunpack.c.l.b16 %v1805
        %v1880 = vunpack.c.h.b16 %v1805
        %v1881 = vunpack.c.l.b16 %v1806
        %v1882 = vunpack.c.h.b16 %v1806
        %v1883 = vunpack.c.l.b16 %v1807
        %v1884 = vunpack.c.h.b16 %v1807
        %v1885 = vunpack.c.l.b16 %v1808
        %v1886 = vunpack.c.h.b16 %v1808
        %v1887 = vunpack.c.l.b16 %v1809
        %v1888 = vunpack.c.h.b16 %v1809
        %v1889 = vunpack.c.l.b16 %v1810
        %v1890 = vunpack.c.h.b16 %v1810
        %v1891 = vunpack.c.l.b16 %v1811
        %v1892 = vunpack.c.h.b16 %v1811
        %v1893 = vunpack.c.l.b16 %v1812
        %v1894 = vunpack.c.h.b16 %v1812
        %v1895 = vunpack.c.l.b16 %v1813
        %v1896 = vunpack.c.h.b16 %v1813
        %v1897 = vunpack.c.l.b16 %v1814
        %v1898 = vunpack.c.h.b16 %v1814
        %v1899 = vunpack.c.l.b16 %v1815
        %v1900 = vunpack.c.h.b16 %v1815
        %v1901 = vunpack.c.l.b16 %v1816
        %v1902 = vunpack.c.h.b16 %v1816
        %v1903 = vunpack.c.l.b16 %v1817
        %v1904 = vunpack.c.h.b16 %v1817
        %v1905 = vunpack.c.l.b16 %v1818
        %v1906 = vunpack.c.h.b16 %v1818
        %v1907 = vunpack.c.l.b16 %v1819
        %v1908 = vunpack.c.h.b16 %v1819
        %v1909 = vunpack.c.l.b16 %v1820
        %v1910 = vunpack.c.h.b16 %v1820
        %v1911 = vunpack.c.l.b16 %v1821
        %v1912 = vunpack.c.h.b16 %v1821
        %v1913 = vunpack.c.l.b16 %v1822
        %v1914 = vunpack.c.h.b16 %v1822
        %v1915 = vunpack.c.l.b16 %v1823
        %v1916 = vunpack.c.h.b16 %v1823
        %v1917 = vunpack.c.l.b16 %v1824
        %v1918 = vunpack.c.h.b16 %v1824
        %v1919 = vunpack.c.l.b16 %v1825
        %v1920 = vunpack.c.h.b16 %v1825
        %v1921 = vunpack.c.l.b16 %v1826
        %v1922 = vunpack.c.h.b16 %v1826
        %v1923 = vpack.c.b16 %v1861, %v1859
        %v1924 = vpack.c.b16 %v1862, %v1860
        %v1925 = vpack.c.b16 %v1865, %v1863
        %v1926 = vpack.c.b16 %v1866, %v1864
        %v1927 = vpack.c.b16 %v1869, %v1867
        %v1928 = vpack.c.b16 %v1870, %v1868
        %v1929 = vpack.c.b16 %v1873, %v1871
        %v1930 = vpack.c.b16 %v1874, %v1872
        %v1931 = vpack.c.b16 %v1877, %v1875
        %v1932 = vpack.c.b16 %v1878, %v1876
        %v1933 = vpack.c.b16 %v1881, %v1879
        %v1934 = vpack.c.b16 %v1882, %v1880
        %v1935 = vpack.c.b16 %v1885, %v1883
        %v1936 = vpack.c.b16 %v1886, %v1884
        %v1937 = vpack.c.b16 %v1889, %v1887
        %v1938 = vpack.c.b16 %v1890, %v1888
        %v1939 = vpack.c.b16 %v1893, %v1891
        %v1940 = vpack.c.b16 %v1894, %v1892
        %v1941 = vpack.c.b16 %v1897, %v1895
        %v1942 = vpack.c.b16 %v1898, %v1896
        %v1943 = vpack.c.b16 %v1901, %v1899
        %v1944 = vpack.c.b16 %v1902, %v1900
        %v1945 = vpack.c.b16 %v1905, %v1903
        %v1946 = vpack.c.b16 %v1906, %v1904
        %v1947 = vpack.c.b16 %v1909, %v1907
        %v1948 = vpack.c.b16 %v1910, %v1908
        %v1949 = vpack.c.b16 %v1913, %v1911
        %v1950 = vpack.c.b16 %v1914, %v1912
        %v1951 = vpack.c.b16 %v1917, %v1915
        %v1952 = vpack.c.b16 %v1918, %v1916
        %v1953 = vpack.c.b16 %v1921, %v1919
        %v1954 = vpack.c.b16 %v1922, %v1920
        %1987 = vmatprep.subr.bf16.mxu0 %v1938
        %1988 = vmatpush1.bf16.msra.mxu0 %v1937
        %1989 = vmatprep.subr.bf16.mxu0 %v1936
        %1990 = vmatpush1.bf16.msra.mxu0 %v1935
        %1991 = vmatprep.subr.bf16.mxu0 %v1934
        %1992 = vmatpush1.bf16.msra.mxu0 %v1933
        %1993 = vmatprep.subr.bf16.mxu0 %v1932
        %1994 = vmatpush1.bf16.msra.mxu0 %v1931
        %1995 = vmatprep.subr.bf16.mxu0 %v1930
        %1996 = vmatpush1.bf16.msra.mxu0 %v1929
        %1997 = vmatprep.subr.bf16.mxu0 %v1928
        %1998 = vmatpush1.bf16.msra.mxu0 %v1927
        %1999 = vmatprep.subr.bf16.mxu0 %v1926
        %2000 = vmatpush1.bf16.msra.mxu0 %v1925
        %2001 = vmatprep.subr.bf16.mxu0 %v1924
        %2002 = vmatpush1.bf16.msra.mxu0 %v1923
        %2003 = vmatprep.subr.bf16.mxu0 %v1954
        %2004 = vmatpush2.bf16.msra.mxu0 %v1953
        %2005 = vmatprep.subr.bf16.mxu0 %v1952
        %2006 = vmatpush2.bf16.msra.mxu0 %v1951
        %2007 = vmatprep.subr.bf16.mxu0 %v1950
        %2008 = vmatpush2.bf16.msra.mxu0 %v1949
        %2009 = vmatprep.subr.bf16.mxu0 %v1948
        %2010 = vmatpush2.bf16.msra.mxu0 %v1947
        %2011 = vmatprep.subr.bf16.mxu0 %v1946
        %2012 = vmatpush2.bf16.msra.mxu0 %v1945
        %2013 = vmatprep.subr.bf16.mxu0 %v1944
        %2014 = vmatpush2.bf16.msra.mxu0 %v1943
        %2015 = vmatprep.subr.bf16.mxu0 %v1942
        %2016 = vmatpush2.bf16.msra.mxu0 %v1941
        %2017 = vmatprep.subr.bf16.mxu0 %v1940
        %2018 = vmatpush2.bf16.msra.mxu0 %v1939
        %2019 = vmatprep.mubr.bf16.mxu0 %v1780
        %2020 = vmatmul.mubr.bf16.gmra.mxu0 %v1779
        %v2021 = vpop.f32.mrf.mxu0
        %v2022 = vadd.f32 0.0, %v2021
        %v2023 = vpop.f32.mrf.mxu0
        %v2024 = vadd.f32 0.0, %v2023
        %v2025 = vpop.f32.mrf.mxu0
        %v2026 = vadd.f32 0.0, %v2025
        %v2027 = vpop.f32.mrf.mxu0
        %v2028 = vadd.f32 0.0, %v2027
        %2029 = vmatprep.mubr.bf16.mxu0 %v1782
        %2030 = vmatmul.mubr.bf16.gmra.mxu0 %v1781
        %v2031 = vpop.f32.mrf.mxu0
        %v2032 = vadd.f32 0.0, %v2031
        %v2033 = vpop.f32.mrf.mxu0
        %v2034 = vadd.f32 0.0, %v2033
        %v2035 = vpop.f32.mrf.mxu0
        %v2036 = vadd.f32 0.0, %v2035
        %v2037 = vpop.f32.mrf.mxu0
        %v2038 = vadd.f32 0.0, %v2037
        %2039 = vmatprep.mubr.bf16.mxu0 %v1784
        %2040 = vmatmul.mubr.bf16.gmra.mxu0 %v1783
        %v2041 = vpop.f32.mrf.mxu0
        %v2042 = vadd.f32 0.0, %v2041
        %v2043 = vpop.f32.mrf.mxu0
        %v2044 = vadd.f32 0.0, %v2043
        %v2045 = vpop.f32.mrf.mxu0
        %v2046 = vadd.f32 0.0, %v2045
        %v2047 = vpop.f32.mrf.mxu0
        %v2048 = vadd.f32 0.0, %v2047
        %2049 = vmatprep.mubr.bf16.mxu0 %v1786
        %2050 = vmatmul.mubr.bf16.gmra.mxu0 %v1785
        %v2051 = vpop.f32.mrf.mxu0
        %v2052 = vadd.f32 0.0, %v2051
        %v2053 = vpop.f32.mrf.mxu0
        %v2054 = vadd.f32 0.0, %v2053
        %v2055 = vpop.f32.mrf.mxu0
        %v2056 = vadd.f32 0.0, %v2055
        %v2057 = vpop.f32.mrf.mxu0
        %v2058 = vadd.f32 0.0, %v2057
        %2059 = vmatprep.mubr.bf16.mxu0 %v1788
        %2060 = vmatmul.mubr.bf16.gmra.mxu0 %v1787
        %v2061 = vpop.f32.mrf.mxu0
        %v2062 = vadd.f32 0.0, %v2061
        %v2063 = vpop.f32.mrf.mxu0
        %v2064 = vadd.f32 0.0, %v2063
        %v2065 = vpop.f32.mrf.mxu0
        %v2066 = vadd.f32 0.0, %v2065
        %v2067 = vpop.f32.mrf.mxu0
        %v2068 = vadd.f32 0.0, %v2067
        %2069 = vmatprep.mubr.bf16.mxu0 %v1790
        %2070 = vmatmul.mubr.bf16.gmra.mxu0 %v1789
        %v2071 = vpop.f32.mrf.mxu0
        %v2072 = vadd.f32 0.0, %v2071
        %v2073 = vpop.f32.mrf.mxu0
        %v2074 = vadd.f32 0.0, %v2073
        %v2075 = vpop.f32.mrf.mxu0
        %v2076 = vadd.f32 0.0, %v2075
        %v2077 = vpop.f32.mrf.mxu0
        %v2078 = vadd.f32 0.0, %v2077
        %2079 = vmatprep.mubr.bf16.mxu0 %v1792
        %2080 = vmatmul.mubr.bf16.gmra.mxu0 %v1791
        %v2081 = vpop.f32.mrf.mxu0
        %v2082 = vadd.f32 0.0, %v2081
        %v2083 = vpop.f32.mrf.mxu0
        %v2084 = vadd.f32 0.0, %v2083
        %v2085 = vpop.f32.mrf.mxu0
        %v2086 = vadd.f32 0.0, %v2085
        %v2087 = vpop.f32.mrf.mxu0
        %v2088 = vadd.f32 0.0, %v2087
        %2089 = vmatprep.mubr.bf16.mxu0 %v1794
        %2090 = vmatmul.mubr.bf16.gmra.mxu0 %v1793
        %v2091 = vpop.f32.mrf.mxu0
        %v2092 = vadd.f32 0.0, %v2091
        %v2093 = vpop.f32.mrf.mxu0
        %v2094 = vadd.f32 0.0, %v2093
        %v2095 = vpop.f32.mrf.mxu0
        %v2096 = vadd.f32 0.0, %v2095
        %v2097 = vpop.f32.mrf.mxu0
        %v2098 = vadd.f32 0.0, %v2097
        %2099 = vdwg.mxu0
        %v2100 = vadd.f32 %v1715, %v2022
        %v2101 = vadd.f32 %v1716, %v2024
        %v2102 = vadd.f32 %v1717, %v2026
        %v2103 = vadd.f32 %v1718, %v2028
        %v2104 = vadd.f32 %v1719, %v2032
        %v2105 = vadd.f32 %v1720, %v2034
        %v2106 = vadd.f32 %v1721, %v2036
        %v2107 = vadd.f32 %v1722, %v2038
        %v2108 = vadd.f32 %v1723, %v2042
        %v2109 = vadd.f32 %v1724, %v2044
        %v2110 = vadd.f32 %v1725, %v2046
        %v2111 = vadd.f32 %v1726, %v2048
        %v2112 = vadd.f32 %v1727, %v2052
        %v2113 = vadd.f32 %v1728, %v2054
        %v2114 = vadd.f32 %v1729, %v2056
        %v2115 = vadd.f32 %v1730, %v2058
        %v2116 = vadd.f32 %v1731, %v2062
        %v2117 = vadd.f32 %v1732, %v2064
        %v2118 = vadd.f32 %v1733, %v2066
        %v2119 = vadd.f32 %v1734, %v2068
        %v2120 = vadd.f32 %v1735, %v2072
        %v2121 = vadd.f32 %v1736, %v2074
        %v2122 = vadd.f32 %v1737, %v2076
        %v2123 = vadd.f32 %v1738, %v2078
        %v2124 = vadd.f32 %v1739, %v2082
        %v2125 = vadd.f32 %v1740, %v2084
        %v2126 = vadd.f32 %v1741, %v2086
        %v2127 = vadd.f32 %v1742, %v2088
        %v2128 = vadd.f32 %v1743, %v2092
        %v2129 = vadd.f32 %v1744, %v2094
        %v2130 = vadd.f32 %v1745, %v2096
        %v2131 = vadd.f32 %v1746, %v2098
        %2132 = vst [vmem:[%s628] sm:$0xff] %v2100
        %2133 = vst [vmem:[%s628 + $0x8] sm:$0xff] %v2101
        %2134 = vst [vmem:[%s628 + $0x10] sm:$0xff] %v2102
        %2135 = vst [vmem:[%s628 + $0x18] sm:$0xff] %v2103
        %2136 = vst [vmem:[%s628 + $0x20] sm:$0xff] %v2104
        %2137 = vst [vmem:[%s628 + $0x28] sm:$0xff] %v2105
        %2138 = vst [vmem:[%s628 + $0x30] sm:$0xff] %v2106
        %2139 = vst [vmem:[%s628 + $0x38] sm:$0xff] %v2107
        %2140 = vst [vmem:[%s628 + $0x40] sm:$0xff] %v2108
        %2141 = vst [vmem:[%s628 + $0x48] sm:$0xff] %v2109
        %2142 = vst [vmem:[%s628 + $0x50] sm:$0xff] %v2110
        %2143 = vst [vmem:[%s628 + $0x58] sm:$0xff] %v2111
        %2144 = vst [vmem:[%s628 + $0x60] sm:$0xff] %v2112
        %2145 = vst [vmem:[%s628 + $0x68] sm:$0xff] %v2113
        %2146 = vst [vmem:[%s628 + $0x70] sm:$0xff] %v2114
        %2147 = vst [vmem:[%s628 + $0x78] sm:$0xff] %v2115
        %2148 = vst [vmem:[%s628 + $0x80] sm:$0xff] %v2116
        %2149 = vst [vmem:[%s628 + $0x88] sm:$0xff] %v2117
        %2150 = vst [vmem:[%s628 + $0x90] sm:$0xff] %v2118
        %2151 = vst [vmem:[%s628 + $0x98] sm:$0xff] %v2119
        %2152 = vst [vmem:[%s628 + $0xa0] sm:$0xff] %v2120
        %2153 = vst [vmem:[%s628 + $0xa8] sm:$0xff] %v2121
        %2154 = vst [vmem:[%s628 + $0xb0] sm:$0xff] %v2122
        %2155 = vst [vmem:[%s628 + $0xb8] sm:$0xff] %v2123
        %2156 = vst [vmem:[%s628 + $0xc0] sm:$0xff] %v2124
        %2157 = vst [vmem:[%s628 + $0xc8] sm:$0xff] %v2125
        %2158 = vst [vmem:[%s628 + $0xd0] sm:$0xff] %v2126
        %2159 = vst [vmem:[%s628 + $0xd8] sm:$0xff] %v2127
        %2160 = vst [vmem:[%s628 + $0xe0] sm:$0xff] %v2128
        %2161 = vst [vmem:[%s628 + $0xe8] sm:$0xff] %v2129
        %2162 = vst [vmem:[%s628 + $0xf0] sm:$0xff] %v2130
        %2163 = vst [vmem:[%s628 + $0xf8] sm:$0xff] %v2131
        %s2164 = sand.u32 %s169, 1
        %s2165 = scalar_lea.sflag [#allocation5], %s2164
        %s2166 = sand.u32 %s169, 1
        %s2167 = smul.addr %s2166, 256
        %s2168 = scalar_lea.vmem [#allocation4], %s2167
        // Predicated region
        $region121: #{t5_block_next.7} parent=107 // pred_check
          %p2169 = pneg %p179
        $region122: #{t5_block_next.7} parent=107 // pred_check_branch
          %2171 = sbr.rel (%p2169) target = $region124
        $region123: #{t5_block_next.7} parent=107 // pred_region
          %s2172 = smul.u32 16, %s23
          %s2174 = ssub.s32 4096, 4096
          %2175 = vsyncadd %s2165, %s2174
          %s2176 = smul.addr %s2172, 2
          %s2177 = smul.addr %s2176, 128
          %s2178 = scalar_lea.hbm %s5, %s2177
          %s2179 = sshll.u32 %s2168, 4
          %s2180 = int_to_ptr.vmem [resolvable:$true] %s2179
          %2185 = dma.vmem_to_hbm [thread:$0]  %s2180, 4096, %s2178, %s2165, 256, 256, 16
        $region124: #{t5_block_next.7} parent=107 // pred_fallthru
          _
      $region108: #{t5_block_next.7} parent=5 // pred_fallthru
        _
      %p2186 = scmp.le.s32.totalorder 2, %s14
      // Predicated region
      $region125: #{t5_block_next.7} parent=5 // pred_check
        %p2187 = pneg %p2186
      $region126: #{t5_block_next.7} parent=5 // pred_check_branch
        %2189 = sbr.rel (%p2187) target = $region128
      $region127: #{t5_block_next.7} parent=5 // pred_region
        %s2190 = ssub.s32 %s14, 2
        // Predicated region
        $region129: #{t5_block_next.7} parent=127 // pred_check
          %p2191 = pneg %p185
        $region130: #{t5_block_next.7} parent=127 // pred_check_branch
          %2193 = sbr.rel (%p2191) target = $region132
        $region131: #{t5_block_next.7} parent=127 // pred_region
          %s2194 = sand.u32 %s170, 1
          %s2195 = scalar_lea.sflag [#allocation5], %s2194
          %s2196 = sand.u32 %s170, 1
          %s2197 = smul.addr %s2196, 256
          %s2198 = scalar_lea.vmem [#allocation4], %s2197
          %2199 = dma.done %s2195, 4096
        $region132: #{t5_block_next.7} parent=127 // pred_fallthru
          _
      $region128: #{t5_block_next.7} parent=5 // pred_fallthru
        _
    $region6: #{t5_block_next.7} parent=1 // loop_footer
      %s18 = sadd.s32 1, %s14
    $region7: #{t5_block_next.7} parent=1 // loop_footer_branch
      %13 = sbr.rel target = $region3
    $region8: #{t5_block_next.7} parent=1 // loop_exit
      _
    %2200 = vsyncpa [#allocation5], 1
    %s2201 = scalar_lea.sflag [#allocation5], 1
    %2202 = vsyncpa %s2201, 1

// kernel: t5_block_next.5
$region0: #{t5_block_next.5}
  #allocation0 [shape = 'u32[]', space=smem, size = 0x4, offset = 0x4, fixed_abs, tag = 'smem constant byte address 0x4 - core index']
  #allocation1 [shape = 'u32[144,128]{1,0:T(1,128)}', space=vmem, size = 0x12000, scoped, tag = 'internal scratch']
  #allocation2 [shape = 'f32[2,128,1]{2,1,0:T(8,128)}', space=vmem, size = 0x20000, scoped, tag = 'scratch operand']
  #allocation3 [shape = 'f32[2,128,1]{2,1,0:T(8,128)}', space=vmem, size = 0x20000, scoped, tag = 'scratch operand']
  #allocation4 [shape = 'f32[2,128,64]{2,1,0:T(8,128)}', space=vmem, size = 0x20000, scoped, tag = 'scratch operand']
  %s0 = inlined_call_operand.vmem [shape: bf16[256,768], index: 0, kind: input, shape index: {}, may-alias: {0,1,2}]
  %s1 = inlined_call_operand.vmem [shape: bf16[256,768], index: 1, kind: input, shape index: {}, may-alias: {0,1,2}]
  %s2 = inlined_call_operand.vmem [shape: bf16[256,768], index: 2, kind: input, shape index: {}, may-alias: {0,1,2}]
  %s3 = inlined_call_operand.vmem [shape: bf16[4,256,256], index: 3, kind: input, shape index: {}]
  %s4 = inlined_call_operand.vmem [shape: f32[1,256], index: 4, kind: input, shape index: {}]
  %s5 = inlined_call_operand.vmem [shape: bf16[256,256], index: 5, kind: output, shape index: {}]
  %s6 = sld [smem:[#allocation0]]
  $region262: #{t5_block_next.5} parent=0
    _
  %s8 = ssub.s32 1, %s6
  %s9 = scalar_select 0, %s8, %s6
  $region1: #{t5_block_next.5} parent=0
    #allocation5 [shape = 'u8[65536]{0}', space=vmem, size = 0x10000, scoped, tag = 'input window, operand 0']
    #allocation6 [shape = 'u8[65536]{0}', space=vmem, size = 0x10000, scoped, tag = 'input window, operand 1']
    #allocation7 [shape = 'u8[65536]{0}', space=vmem, size = 0x10000, scoped, tag = 'input window, operand 2']
    #allocation8 [shape = 'u8[131072]{0}', space=vmem, size = 0x20000, scoped, tag = 'input window, operand 3']
    #allocation9 [shape = 'u8[65536]{0}', space=vmem, size = 0x10000, scoped, tag = 'output window, operand 0']
    loop: start=0, step=1, limit=10
    $region2: #{t5_block_next.5} parent=1 // loop_pre_header
      _
    $region3: #{t5_block_next.5} parent=1 // loop_header
      %s11 = sphi 0, %s15
      %p12 = scmp.ge.s32.totalorder %s11, 10
      %s18 = sphi 0, %s37
      %s19 = sphi 0, %s33
      %s20 = sphi 0, %s29
      %s21 = sphi 0, %s18
      %s22 = sphi 0, %s19
      %s23 = sphi 0, %s20
      %s24 = sphi 0, %s21
      %s25 = sphi 0, %s22
      %s26 = sphi 0, %s23
      %s42 = sphi 0, %s44
      %s45 = sphi 0, %s42
      %s46 = sphi 0, %s45
      %s62 = sphi 0, %s46
      %s72 = sphi 0, %s74
      %s75 = sphi 0, %s72
      %s76 = sphi 0, %s75
      %s92 = sphi 0, %s76
      %s102 = sphi 0, %s104
      %s105 = sphi 0, %s102
      %s106 = sphi 0, %s105
      %s122 = sphi 0, %s106
      %s132 = sphi 0, %s134
      %s135 = sphi 0, %s132
      %s136 = sphi 0, %s135
      %s152 = sphi 0, %s136
      %s158 = sphi 0, %s160
      %s161 = sphi 0, %s158
      %s162 = sphi 0, %s161
      %s178 = sphi 0, %s162
      %s186 = sphi 0, %s188
      %s189 = sphi 0, %s186
      %s190 = sphi 0, %s189
      %s206 = sphi 0, %s190
    $region4: #{t5_block_next.5} parent=1 // loop_header_branch
      %14 = sbr.rel (%p12) target = $region8
    $region5: #{t5_block_next.5} parent=1 // loop_body
      %s16 = ssub.s32 %s11, 1
      %s17 = ssub.s32 %s11, 2
      %s27 = sadd.s32 1, %s20
      %p28 = scmp.ge.s32.totalorder %s27, 2
      %s29 = scalar_select %p28, 0, %s27
      %s30 = sadd.s32 1, %s19
      %s31 = scalar_select %p28, %s30, %s19
      %p32 = scmp.ge.s32.totalorder %s31, 2
      %s33 = scalar_select %p32, 0, %s31
      %s34 = sadd.s32 1, %s18
      %s35 = scalar_select %p32, %s34, %s18
      %p36 = scmp.ge.s32.totalorder %s35, 2
      %s37 = scalar_select %p36, 0, %s35
      %s38 = ssub.s32 %s19, %s33
      %s39 = ssub.s32 %s18, %s37
      %s40 = sor.u32 %s38, %s39
      %p41 = scmp.eq.s32.totalorder %s40, 0
      %s43 = sadd.s32 %s42, 1
      %s44 = scalar_select %p41, %s42, %s43
      %p47 = pneg %p41
      %p48 = scmp.eq.s32.totalorder %s11, 7
      %p49 = por %p47, %p48
      %p50 = scmp.ne.s32.totalorder %s42, %s45
      %p51 = scmp.eq.s32.totalorder %s11, 0
      %p52 = por %p50, %p51
      %p53 = scmp.ne.s32.totalorder %s42, %s45
      %p54 = scmp.eq.s32.totalorder %s16, 7
      %p55 = por %p53, %p54
      %p56 = scmp.ne.s32.totalorder %s45, %s46
      %p57 = scmp.eq.s32.totalorder %s16, 0
      %p58 = por %p56, %p57
      %p59 = scmp.ne.s32.totalorder %s45, %s46
      %p60 = scmp.eq.s32.totalorder %s17, 7
      %p61 = por %p59, %p60
      %p63 = scmp.ne.s32.totalorder %s46, %s62
      %p64 = scmp.eq.s32.totalorder %s17, 0
      %p65 = por %p63, %p64
      %s66 = sadd.s32 %s18, 2
      %s67 = sadd.s32 %s37, 2
      %s68 = ssub.s32 %s20, %s29
      %s69 = ssub.s32 %s66, %s67
      %s70 = sor.u32 %s68, %s69
      %p71 = scmp.eq.s32.totalorder %s70, 0
      %s73 = sadd.s32 %s72, 1
      %s74 = scalar_select %p71, %s72, %s73
      %p77 = pneg %p71
      %p78 = scmp.eq.s32.totalorder %s11, 7
      %p79 = por %p77, %p78
      %p80 = scmp.ne.s32.totalorder %s72, %s75
      %p81 = scmp.eq.s32.totalorder %s11, 0
      %p82 = por %p80, %p81
      %p83 = scmp.ne.s32.totalorder %s72, %s75
      %p84 = scmp.eq.s32.totalorder %s16, 7
      %p85 = por %p83, %p84
      %p86 = scmp.ne.s32.totalorder %s75, %s76
      %p87 = scmp.eq.s32.totalorder %s16, 0
      %p88 = por %p86, %p87
      %p89 = scmp.ne.s32.totalorder %s75, %s76
      %p90 = scmp.eq.s32.totalorder %s17, 7
      %p91 = por %p89, %p90
      %p93 = scmp.ne.s32.totalorder %s76, %s92
      %p94 = scmp.eq.s32.totalorder %s17, 0
      %p95 = por %p93, %p94
      %s96 = sadd.s32 %s18, 4
      %s97 = sadd.s32 %s37, 4
      %s98 = ssub.s32 %s20, %s29
      %s99 = ssub.s32 %s96, %s97
      %s100 = sor.u32 %s98, %s99
      %p101 = scmp.eq.s32.totalorder %s100, 0
      %s103 = sadd.s32 %s102, 1
      %s104 = scalar_select %p101, %s102, %s103
      %p107 = pneg %p101
      %p108 = scmp.eq.s32.totalorder %s11, 7
      %p109 = por %p107, %p108
      %p110 = scmp.ne.s32.totalorder %s102, %s105
      %p111 = scmp.eq.s32.totalorder %s11, 0
      %p112 = por %p110, %p111
      %p113 = scmp.ne.s32.totalorder %s102, %s105
      %p114 = scmp.eq.s32.totalorder %s16, 7
      %p115 = por %p113, %p114
      %p116 = scmp.ne.s32.totalorder %s105, %s106
      %p117 = scmp.eq.s32.totalorder %s16, 0
      %p118 = por %p116, %p117
      %p119 = scmp.ne.s32.totalorder %s105, %s106
      %p120 = scmp.eq.s32.totalorder %s17, 7
      %p121 = por %p119, %p120
      %p123 = scmp.ne.s32.totalorder %s106, %s122
      %p124 = scmp.eq.s32.totalorder %s17, 0
      %p125 = por %p123, %p124
      %s126 = ssub.s32 %s18, %s37
      %s127 = ssub.s32 %s19, %s33
      %s128 = sor.u32 %s126, %s127
      %s129 = ssub.s32 %s20, %s29
      %s130 = sor.u32 %s128, %s129
      %p131 = scmp.eq.s32.totalorder %s130, 0
      %s133 = sadd.s32 %s132, 1
      %s134 = scalar_select %p131, %s132, %s133
      %p137 = pneg %p131
      %p138 = scmp.eq.s32.totalorder %s11, 7
      %p139 = por %p137, %p138
      %p140 = scmp.ne.s32.totalorder %s132, %s135
      %p141 = scmp.eq.s32.totalorder %s11, 0
      %p142 = por %p140, %p141
      %p143 = scmp.ne.s32.totalorder %s132, %s135
      %p144 = scmp.eq.s32.totalorder %s16, 7
      %p145 = por %p143, %p144
      %p146 = scmp.ne.s32.totalorder %s135, %s136
      %p147 = scmp.eq.s32.totalorder %s16, 0
      %p148 = por %p146, %p147
      %p149 = scmp.ne.s32.totalorder %s135, %s136
      %p150 = scmp.eq.s32.totalorder %s17, 7
      %p151 = por %p149, %p150
      %p153 = scmp.ne.s32.totalorder %s136, %s152
      %p154 = scmp.eq.s32.totalorder %s17, 0
      %p155 = por %p153, %p154
      %s156 = ssub.s32 %s20, %s29
      %p157 = scmp.eq.s32.totalorder %s156, 0
      %s159 = sadd.s32 %s158, 1
      %s160 = scalar_select %p157, %s158, %s159
      %p163 = pneg %p157
      %p164 = scmp.eq.s32.totalorder %s11, 7
      %p165 = por %p163, %p164
      %p166 = scmp.ne.s32.totalorder %s158, %s161
      %p167 = scmp.eq.s32.totalorder %s11, 0
      %p168 = por %p166, %p167
      %p169 = scmp.ne.s32.totalorder %s158, %s161
      %p170 = scmp.eq.s32.totalorder %s16, 7
      %p171 = por %p169, %p170
      %p172 = scmp.ne.s32.totalorder %s161, %s162
      %p173 = scmp.eq.s32.totalorder %s16, 0
      %p174 = por %p172, %p173
      %p175 = scmp.ne.s32.totalorder %s161, %s162
      %p176 = scmp.eq.s32.totalorder %s17, 7
      %p177 = por %p175, %p176
      %p179 = scmp.ne.s32.totalorder %s162, %s178
      %p180 = scmp.eq.s32.totalorder %s17, 0
      %p181 = por %p179, %p180
      %s182 = ssub.s32 %s19, %s33
      %s183 = ssub.s32 %s18, %s37
      %s184 = sor.u32 %s182, %s183
      %p185 = scmp.eq.s32.totalorder %s184, 0
      %s187 = sadd.s32 %s186, 1
      %s188 = scalar_select %p185, %s186, %s187
      %p191 = pneg %p185
      %p192 = scmp.eq.s32.totalorder %s11, 7
      %p193 = por %p191, %p192
      %p194 = scmp.ne.s32.totalorder %s186, %s189
      %p195 = scmp.eq.s32.totalorder %s11, 0
      %p196 = por %p194, %p195
      %p197 = scmp.ne.s32.totalorder %s186, %s189
      %p198 = scmp.eq.s32.totalorder %s16, 7
      %p199 = por %p197, %p198
      %p200 = scmp.ne.s32.totalorder %s189, %s190
      %p201 = scmp.eq.s32.totalorder %s16, 0
      %p202 = por %p200, %p201
      %p203 = scmp.ne.s32.totalorder %s189, %s190
      %p204 = scmp.eq.s32.totalorder %s17, 7
      %p205 = por %p203, %p204
      %p207 = scmp.ne.s32.totalorder %s190, %s206
      %p208 = scmp.eq.s32.totalorder %s17, 0
      %p209 = por %p207, %p208
      %p210 = scmp.le.s32.totalorder 1, %s11
      %p211 = scmp.lt.s32.totalorder %s11, 9
      %p212 = pnand %p210, %p211
      %p213 = pneg %p212
      // Predicated region
      $region9: #{t5_block_next.5} parent=5 // pred_check
        _
      $region10: #{t5_block_next.5} parent=5 // pred_check_branch
        %215 = sbr.rel (%p212) target = $region12
      $region11: #{t5_block_next.5} parent=5 // pred_region
        %s216 = ssub.s32 %s11, 1
      $region12: #{t5_block_next.5} parent=5 // pred_fallthru
        _
      %p217 = scmp.lt.s32.totalorder %s11, 8
      // Predicated region
      $region13: #{t5_block_next.5} parent=5 // pred_check
        %p218 = pneg %p217
      $region14: #{t5_block_next.5} parent=5 // pred_check_branch
        %220 = sbr.rel (%p218) target = $region16
      $region15: #{t5_block_next.5} parent=5 // pred_region
        // Predicated region
        $region17: #{t5_block_next.5} parent=15 // pred_check
          %p221 = pneg %p52
        $region18: #{t5_block_next.5} parent=15 // pred_check_branch
          %223 = sbr.rel (%p221) target = $region20
        $region19: #{t5_block_next.5} parent=15 // pred_region
          %s224 = sand.u32 %s42, 1
          %s225 = sand.u32 %s42, 1
          %s226 = smul.addr %s225, 64
          %s227 = scalar_lea.vmem [#allocation5], %s226
          %s228 = smul.u32 16, %s19
          %s229 = smul.addr %s228, 6
          %s230 = sadd.s32 %s18, %s229
          %s231 = smul.addr %s230, 4
          %s232 = scalar_lea.vmem %s0, %s231
          // Predicated region
          $region21: #{t5_block_next.5} parent=19 // pred_check
            _
          $region22: #{t5_block_next.5} parent=19 // pred_check_branch
            %234 = sbr.rel (0) target = $region24
          $region23: #{t5_block_next.5} parent=19 // pred_region
            // Predicated region
            $region25: #{t5_block_next.5} parent=23 // pred_check
              _
            $region26: #{t5_block_next.5} parent=23 // pred_check_branch
              %236 = sbr.rel target = $region28
            $region27: #{t5_block_next.5} parent=23 // pred_region
              // Predicated region
              $region40: #{t5_block_next.5} parent=27 // pred_check
                _
              $region41: #{t5_block_next.5} parent=27 // pred_check_branch
                %282 = sbr.rel (0) target = $region43
              $region42: #{t5_block_next.5} parent=27 // pred_region
                loop: start=0, step=1, limit=1
                $region44: #{t5_block_next.5} parent=42 // loop_pre_header
                  _
                $region45: #{t5_block_next.5} parent=42 // loop_header
                  %s284 = sphi 0, %s288
                  %p285 = scmp.ge.s32.totalorder %s284, 1
                  %s289 = sphi %s232, %s232
                  %s290 = sphi %s227, %s227
                $region46: #{t5_block_next.5} parent=42 // loop_header_branch
                  %287 = sbr.rel (%p285) target = $region50
                $region47: #{t5_block_next.5} parent=42 // loop_body
                  _
                $region48: #{t5_block_next.5} parent=42 // loop_footer
                  %s288 = sadd.s32 1, %s284
                $region49: #{t5_block_next.5} parent=42 // loop_footer_branch
                  %283 = sbr.rel target = $region45
                $region50: #{t5_block_next.5} parent=42 // loop_exit
                  _
                %s292 = ssub.s32 16, 1
                loop: start=0, step=1, limit=1
                $region51: #{t5_block_next.5} parent=42 // loop_pre_header
                  _
                $region52: #{t5_block_next.5} parent=42 // loop_header
                  %s294 = sphi 0, %s298
                  %p295 = scmp.ge.s32.totalorder %s294, 1
                  %s299 = sphi %s232, %s232
                  %s300 = sphi %s227, %s227
                $region53: #{t5_block_next.5} parent=42 // loop_header_branch
                  %297 = sbr.rel (%p295) target = $region57
                $region54: #{t5_block_next.5} parent=42 // loop_body
                  %v301 = vld [vmem:[%s299] sm:%s292]
                  %302 = vst [vmem:[%s300] sm:%s292] %v301
                  %v303 = vld [vmem:[%s299 + $0x18] sm:%s292]
                  %304 = vst [vmem:[%s300 + $0x4] sm:%s292] %v303
                  %v305 = vld [vmem:[%s299 + $0x30] sm:%s292]
                  %306 = vst [vmem:[%s300 + $0x8] sm:%s292] %v305
                  %v307 = vld [vmem:[%s299 + $0x48] sm:%s292]
                  %308 = vst [vmem:[%s300 + $0xc] sm:%s292] %v307
                  %v309 = vld [vmem:[%s299 + $0x60] sm:%s292]
                  %310 = vst [vmem:[%s300 + $0x10] sm:%s292] %v309
                  %v311 = vld [vmem:[%s299 + $0x78] sm:%s292]
                  %312 = vst [vmem:[%s300 + $0x14] sm:%s292] %v311
                  %v313 = vld [vmem:[%s299 + $0x90] sm:%s292]
                  %314 = vst [vmem:[%s300 + $0x18] sm:%s292] %v313
                  %v315 = vld [vmem:[%s299 + $0xa8] sm:%s292]
                  %316 = vst [vmem:[%s300 + $0x1c] sm:%s292] %v315
                  %v317 = vld [vmem:[%s299 + $0xc0] sm:%s292]
                  %318 = vst [vmem:[%s300 + $0x20] sm:%s292] %v317
                  %v319 = vld [vmem:[%s299 + $0xd8] sm:%s292]
                  %320 = vst [vmem:[%s300 + $0x24] sm:%s292] %v319
                  %v321 = vld [vmem:[%s299 + $0xf0] sm:%s292]
                  %322 = vst [vmem:[%s300 + $0x28] sm:%s292] %v321
                  %v323 = vld [vmem:[%s299 + $0x108] sm:%s292]
                  %324 = vst [vmem:[%s300 + $0x2c] sm:%s292] %v323
                  %v325 = vld [vmem:[%s299 + $0x120] sm:%s292]
                  %326 = vst [vmem:[%s300 + $0x30] sm:%s292] %v325
                  %v327 = vld [vmem:[%s299 + $0x138] sm:%s292]
                  %328 = vst [vmem:[%s300 + $0x34] sm:%s292] %v327
                  %v329 = vld [vmem:[%s299 + $0x150] sm:%s292]
                  %330 = vst [vmem:[%s300 + $0x38] sm:%s292] %v329
                  %v331 = vld [vmem:[%s299 + $0x168] sm:%s292]
                  %332 = vst [vmem:[%s300 + $0x3c] sm:%s292] %v331
                $region55: #{t5_block_next.5} parent=42 // loop_footer
                  %s298 = sadd.s32 1, %s294
                $region56: #{t5_block_next.5} parent=42 // loop_footer_branch
                  %293 = sbr.rel target = $region52
                $region57: #{t5_block_next.5} parent=42 // loop_exit
                  _
              $region43: #{t5_block_next.5} parent=27 // pred_fallthru
                _
            $region28: #{t5_block_next.5} parent=23 // pred_fallthru
              _
            // Predicated region
            $region29: #{t5_block_next.5} parent=23 // pred_check
              _
            $region30: #{t5_block_next.5} parent=23 // pred_check_branch
              %238 = sbr.rel (0) target = $region32
            $region31: #{t5_block_next.5} parent=23 // pred_region
              %s240 = ssub.s32 16, 1
              loop: start=0, step=1, limit=1
              $region33: #{t5_block_next.5} parent=31 // loop_pre_header
                _
              $region34: #{t5_block_next.5} parent=31 // loop_header
                %s242 = sphi 0, %s246
                %p243 = scmp.ge.s32.totalorder %s242, 1
                %s247 = sphi %s232, %s232
                %s248 = sphi %s227, %s227
              $region35: #{t5_block_next.5} parent=31 // loop_header_branch
                %245 = sbr.rel (%p243) target = $region39
              $region36: #{t5_block_next.5} parent=31 // loop_body
                %v249 = vld [vmem:[%s247] sm:%s240]
                %250 = vst [vmem:[%s248] sm:%s240] %v249
                %v251 = vld [vmem:[%s247 + $0x18] sm:%s240]
                %252 = vst [vmem:[%s248 + $0x4] sm:%s240] %v251
                %v253 = vld [vmem:[%s247 + $0x30] sm:%s240]
                %254 = vst [vmem:[%s248 + $0x8] sm:%s240] %v253
                %v255 = vld [vmem:[%s247 + $0x48] sm:%s240]
                %256 = vst [vmem:[%s248 + $0xc] sm:%s240] %v255
                %v257 = vld [vmem:[%s247 + $0x60] sm:%s240]
                %258 = vst [vmem:[%s248 + $0x10] sm:%s240] %v257
                %v259 = vld [vmem:[%s247 + $0x78] sm:%s240]
                %260 = vst [vmem:[%s248 + $0x14] sm:%s240] %v259
                %v261 = vld [vmem:[%s247 + $0x90] sm:%s240]
                %262 = vst [vmem:[%s248 + $0x18] sm:%s240] %v261
                %v263 = vld [vmem:[%s247 + $0xa8] sm:%s240]
                %264 = vst [vmem:[%s248 + $0x1c] sm:%s240] %v263
                %v265 = vld [vmem:[%s247 + $0xc0] sm:%s240]
                %266 = vst [vmem:[%s248 + $0x20] sm:%s240] %v265
                %v267 = vld [vmem:[%s247 + $0xd8] sm:%s240]
                %268 = vst [vmem:[%s248 + $0x24] sm:%s240] %v267
                %v269 = vld [vmem:[%s247 + $0xf0] sm:%s240]
                %270 = vst [vmem:[%s248 + $0x28] sm:%s240] %v269
                %v271 = vld [vmem:[%s247 + $0x108] sm:%s240]
                %272 = vst [vmem:[%s248 + $0x2c] sm:%s240] %v271
                %v273 = vld [vmem:[%s247 + $0x120] sm:%s240]
                %274 = vst [vmem:[%s248 + $0x30] sm:%s240] %v273
                %v275 = vld [vmem:[%s247 + $0x138] sm:%s240]
                %276 = vst [vmem:[%s248 + $0x34] sm:%s240] %v275
                %v277 = vld [vmem:[%s247 + $0x150] sm:%s240]
                %278 = vst [vmem:[%s248 + $0x38] sm:%s240] %v277
                %v279 = vld [vmem:[%s247 + $0x168] sm:%s240]
                %280 = vst [vmem:[%s248 + $0x3c] sm:%s240] %v279
              $region37: #{t5_block_next.5} parent=31 // loop_footer
                %s246 = sadd.s32 1, %s242
              $region38: #{t5_block_next.5} parent=31 // loop_footer_branch
                %241 = sbr.rel target = $region34
              $region39: #{t5_block_next.5} parent=31 // loop_exit
                _
            $region32: #{t5_block_next.5} parent=23 // pred_fallthru
              _
          $region24: #{t5_block_next.5} parent=19 // pred_fallthru
            _
          %333 = vnop
        $region20: #{t5_block_next.5} parent=15 // pred_fallthru
          _
        // Predicated region
        $region58: #{t5_block_next.5} parent=15 // pred_check
          %p334 = pneg %p82
        $region59: #{t5_block_next.5} parent=15 // pred_check_branch
          %336 = sbr.rel (%p334) target = $region61
        $region60: #{t5_block_next.5} parent=15 // pred_region
          %s337 = sand.u32 %s72, 1
          %s338 = sand.u32 %s72, 1
          %s339 = smul.addr %s338, 64
          %s340 = scalar_lea.vmem [#allocation6], %s339
          %s341 = sadd.s32 %s18, 2
          %s342 = smul.u32 16, %s20
          %s343 = smul.addr %s342, 6
          %s344 = sadd.s32 %s341, %s343
          %s345 = smul.addr %s344, 4
          %s346 = scalar_lea.vmem %s1, %s345
          // Predicated region
          $region62: #{t5_block_next.5} parent=60 // pred_check
            _
          $region63: #{t5_block_next.5} parent=60 // pred_check_branch
            %348 = sbr.rel (0) target = $region65
          $region64: #{t5_block_next.5} parent=60 // pred_region
            // Predicated region
            $region66: #{t5_block_next.5} parent=64 // pred_check
              _
            $region67: #{t5_block_next.5} parent=64 // pred_check_branch
              %350 = sbr.rel target = $region69
            $region68: #{t5_block_next.5} parent=64 // pred_region
              // Predicated region
              $region81: #{t5_block_next.5} parent=68 // pred_check
                _
              $region82: #{t5_block_next.5} parent=68 // pred_check_branch
                %396 = sbr.rel (0) target = $region84
              $region83: #{t5_block_next.5} parent=68 // pred_region
                loop: start=0, step=1, limit=1
                $region85: #{t5_block_next.5} parent=83 // loop_pre_header
                  _
                $region86: #{t5_block_next.5} parent=83 // loop_header
                  %s398 = sphi 0, %s402
                  %p399 = scmp.ge.s32.totalorder %s398, 1
                  %s403 = sphi %s346, %s346
                  %s404 = sphi %s340, %s340
                $region87: #{t5_block_next.5} parent=83 // loop_header_branch
                  %401 = sbr.rel (%p399) target = $region91
                $region88: #{t5_block_next.5} parent=83 // loop_body
                  _
                $region89: #{t5_block_next.5} parent=83 // loop_footer
                  %s402 = sadd.s32 1, %s398
                $region90: #{t5_block_next.5} parent=83 // loop_footer_branch
                  %397 = sbr.rel target = $region86
                $region91: #{t5_block_next.5} parent=83 // loop_exit
                  _
                %s406 = ssub.s32 16, 1
                loop: start=0, step=1, limit=1
                $region92: #{t5_block_next.5} parent=83 // loop_pre_header
                  _
                $region93: #{t5_block_next.5} parent=83 // loop_header
                  %s408 = sphi 0, %s412
                  %p409 = scmp.ge.s32.totalorder %s408, 1
                  %s413 = sphi %s346, %s346
                  %s414 = sphi %s340, %s340
                $region94: #{t5_block_next.5} parent=83 // loop_header_branch
                  %411 = sbr.rel (%p409) target = $region98
                $region95: #{t5_block_next.5} parent=83 // loop_body
                  %v415 = vld [vmem:[%s413] sm:%s406]
                  %416 = vst [vmem:[%s414] sm:%s406] %v415
                  %v417 = vld [vmem:[%s413 + $0x18] sm:%s406]
                  %418 = vst [vmem:[%s414 + $0x4] sm:%s406] %v417
                  %v419 = vld [vmem:[%s413 + $0x30] sm:%s406]
                  %420 = vst [vmem:[%s414 + $0x8] sm:%s406] %v419
                  %v421 = vld [vmem:[%s413 + $0x48] sm:%s406]
                  %422 = vst [vmem:[%s414 + $0xc] sm:%s406] %v421
                  %v423 = vld [vmem:[%s413 + $0x60] sm:%s406]
                  %424 = vst [vmem:[%s414 + $0x10] sm:%s406] %v423
                  %v425 = vld [vmem:[%s413 + $0x78] sm:%s406]
                  %426 = vst [vmem:[%s414 + $0x14] sm:%s406] %v425
                  %v427 = vld [vmem:[%s413 + $0x90] sm:%s406]
                  %428 = vst [vmem:[%s414 + $0x18] sm:%s406] %v427
                  %v429 = vld [vmem:[%s413 + $0xa8] sm:%s406]
                  %430 = vst [vmem:[%s414 + $0x1c] sm:%s406] %v429
                  %v431 = vld [vmem:[%s413 + $0xc0] sm:%s406]
                  %432 = vst [vmem:[%s414 + $0x20] sm:%s406] %v431
                  %v433 = vld [vmem:[%s413 + $0xd8] sm:%s406]
                  %434 = vst [vmem:[%s414 + $0x24] sm:%s406] %v433
                  %v435 = vld [vmem:[%s413 + $0xf0] sm:%s406]
                  %436 = vst [vmem:[%s414 + $0x28] sm:%s406] %v435
                  %v437 = vld [vmem:[%s413 + $0x108] sm:%s406]
                  %438 = vst [vmem:[%s414 + $0x2c] sm:%s406] %v437
                  %v439 = vld [vmem:[%s413 + $0x120] sm:%s406]
                  %440 = vst [vmem:[%s414 + $0x30] sm:%s406] %v439
                  %v441 = vld [vmem:[%s413 + $0x138] sm:%s406]
                  %442 = vst [vmem:[%s414 + $0x34] sm:%s406] %v441
                  %v443 = vld [vmem:[%s413 + $0x150] sm:%s406]
                  %444 = vst [vmem:[%s414 + $0x38] sm:%s406] %v443
                  %v445 = vld [vmem:[%s413 + $0x168] sm:%s406]
                  %446 = vst [vmem:[%s414 + $0x3c] sm:%s406] %v445
                $region96: #{t5_block_next.5} parent=83 // loop_footer
                  %s412 = sadd.s32 1, %s408
                $region97: #{t5_block_next.5} parent=83 // loop_footer_branch
                  %407 = sbr.rel target = $region93
                $region98: #{t5_block_next.5} parent=83 // loop_exit
                  _
              $region84: #{t5_block_next.5} parent=68 // pred_fallthru
                _
            $region69: #{t5_block_next.5} parent=64 // pred_fallthru
              _
            // Predicated region
            $region70: #{t5_block_next.5} parent=64 // pred_check
              _
            $region71: #{t5_block_next.5} parent=64 // pred_check_branch
              %352 = sbr.rel (0) target = $region73
            $region72: #{t5_block_next.5} parent=64 // pred_region
              %s354 = ssub.s32 16, 1
              loop: start=0, step=1, limit=1
              $region74: #{t5_block_next.5} parent=72 // loop_pre_header
                _
              $region75: #{t5_block_next.5} parent=72 // loop_header
                %s356 = sphi 0, %s360
                %p357 = scmp.ge.s32.totalorder %s356, 1
                %s361 = sphi %s346, %s346
                %s362 = sphi %s340, %s340
              $region76: #{t5_block_next.5} parent=72 // loop_header_branch
                %359 = sbr.rel (%p357) target = $region80
              $region77: #{t5_block_next.5} parent=72 // loop_body
                %v363 = vld [vmem:[%s361] sm:%s354]
                %364 = vst [vmem:[%s362] sm:%s354] %v363
                %v365 = vld [vmem:[%s361 + $0x18] sm:%s354]
                %366 = vst [vmem:[%s362 + $0x4] sm:%s354] %v365
                %v367 = vld [vmem:[%s361 + $0x30] sm:%s354]
                %368 = vst [vmem:[%s362 + $0x8] sm:%s354] %v367
                %v369 = vld [vmem:[%s361 + $0x48] sm:%s354]
                %370 = vst [vmem:[%s362 + $0xc] sm:%s354] %v369
                %v371 = vld [vmem:[%s361 + $0x60] sm:%s354]
                %372 = vst [vmem:[%s362 + $0x10] sm:%s354] %v371
                %v373 = vld [vmem:[%s361 + $0x78] sm:%s354]
                %374 = vst [vmem:[%s362 + $0x14] sm:%s354] %v373
                %v375 = vld [vmem:[%s361 + $0x90] sm:%s354]
                %376 = vst [vmem:[%s362 + $0x18] sm:%s354] %v375
                %v377 = vld [vmem:[%s361 + $0xa8] sm:%s354]
                %378 = vst [vmem:[%s362 + $0x1c] sm:%s354] %v377
                %v379 = vld [vmem:[%s361 + $0xc0] sm:%s354]
                %380 = vst [vmem:[%s362 + $0x20] sm:%s354] %v379
                %v381 = vld [vmem:[%s361 + $0xd8] sm:%s354]
                %382 = vst [vmem:[%s362 + $0x24] sm:%s354] %v381
                %v383 = vld [vmem:[%s361 + $0xf0] sm:%s354]
                %384 = vst [vmem:[%s362 + $0x28] sm:%s354] %v383
                %v385 = vld [vmem:[%s361 + $0x108] sm:%s354]
                %386 = vst [vmem:[%s362 + $0x2c] sm:%s354] %v385
                %v387 = vld [vmem:[%s361 + $0x120] sm:%s354]
                %388 = vst [vmem:[%s362 + $0x30] sm:%s354] %v387
                %v389 = vld [vmem:[%s361 + $0x138] sm:%s354]
                %390 = vst [vmem:[%s362 + $0x34] sm:%s354] %v389
                %v391 = vld [vmem:[%s361 + $0x150] sm:%s354]
                %392 = vst [vmem:[%s362 + $0x38] sm:%s354] %v391
                %v393 = vld [vmem:[%s361 + $0x168] sm:%s354]
                %394 = vst [vmem:[%s362 + $0x3c] sm:%s354] %v393
              $region78: #{t5_block_next.5} parent=72 // loop_footer
                %s360 = sadd.s32 1, %s356
              $region79: #{t5_block_next.5} parent=72 // loop_footer_branch
                %355 = sbr.rel target = $region75
              $region80: #{t5_block_next.5} parent=72 // loop_exit
                _
            $region73: #{t5_block_next.5} parent=64 // pred_fallthru
              _
          $region65: #{t5_block_next.5} parent=60 // pred_fallthru
            _
          %447 = vnop
        $region61: #{t5_block_next.5} parent=15 // pred_fallthru
          _
        // Predicated region
        $region99: #{t5_block_next.5} parent=15 // pred_check
          %p448 = pneg %p112
        $region100: #{t5_block_next.5} parent=15 // pred_check_branch
          %450 = sbr.rel (%p448) target = $region102
        $region101: #{t5_block_next.5} parent=15 // pred_region
          %s451 = sand.u32 %s102, 1
          %s452 = sand.u32 %s102, 1
          %s453 = smul.addr %s452, 64
          %s454 = scalar_lea.vmem [#allocation7], %s453
          %s455 = sadd.s32 %s18, 4
          %s456 = smul.u32 16, %s20
          %s457 = smul.addr %s456, 6
          %s458 = sadd.s32 %s455, %s457
          %s459 = smul.addr %s458, 4
          %s460 = scalar_lea.vmem %s2, %s459
          // Predicated region
          $region103: #{t5_block_next.5} parent=101 // pred_check
            _
          $region104: #{t5_block_next.5} parent=101 // pred_check_branch
            %462 = sbr.rel (0) target = $region106
          $region105: #{t5_block_next.5} parent=101 // pred_region
            // Predicated region
            $region107: #{t5_block_next.5} parent=105 // pred_check
              _
            $region108: #{t5_block_next.5} parent=105 // pred_check_branch
              %464 = sbr.rel target = $region110
            $region109: #{t5_block_next.5} parent=105 // pred_region
              // Predicated region
              $region122: #{t5_block_next.5} parent=109 // pred_check
                _
              $region123: #{t5_block_next.5} parent=109 // pred_check_branch
                %510 = sbr.rel (0) target = $region125
              $region124: #{t5_block_next.5} parent=109 // pred_region
                loop: start=0, step=1, limit=1
                $region126: #{t5_block_next.5} parent=124 // loop_pre_header
                  _
                $region127: #{t5_block_next.5} parent=124 // loop_header
                  %s512 = sphi 0, %s516
                  %p513 = scmp.ge.s32.totalorder %s512, 1
                  %s517 = sphi %s460, %s460
                  %s518 = sphi %s454, %s454
                $region128: #{t5_block_next.5} parent=124 // loop_header_branch
                  %515 = sbr.rel (%p513) target = $region132
                $region129: #{t5_block_next.5} parent=124 // loop_body
                  _
                $region130: #{t5_block_next.5} parent=124 // loop_footer
                  %s516 = sadd.s32 1, %s512
                $region131: #{t5_block_next.5} parent=124 // loop_footer_branch
                  %511 = sbr.rel target = $region127
                $region132: #{t5_block_next.5} parent=124 // loop_exit
                  _
                %s520 = ssub.s32 16, 1
                loop: start=0, step=1, limit=1
                $region133: #{t5_block_next.5} parent=124 // loop_pre_header
                  _
                $region134: #{t5_block_next.5} parent=124 // loop_header
                  %s522 = sphi 0, %s526
                  %p523 = scmp.ge.s32.totalorder %s522, 1
                  %s527 = sphi %s460, %s460
                  %s528 = sphi %s454, %s454
                $region135: #{t5_block_next.5} parent=124 // loop_header_branch
                  %525 = sbr.rel (%p523) target = $region139
                $region136: #{t5_block_next.5} parent=124 // loop_body
                  %v529 = vld [vmem:[%s527] sm:%s520]
                  %530 = vst [vmem:[%s528] sm:%s520] %v529
                  %v531 = vld [vmem:[%s527 + $0x18] sm:%s520]
                  %532 = vst [vmem:[%s528 + $0x4] sm:%s520] %v531
                  %v533 = vld [vmem:[%s527 + $0x30] sm:%s520]
                  %534 = vst [vmem:[%s528 + $0x8] sm:%s520] %v533
                  %v535 = vld [vmem:[%s527 + $0x48] sm:%s520]
                  %536 = vst [vmem:[%s528 + $0xc] sm:%s520] %v535
                  %v537 = vld [vmem:[%s527 + $0x60] sm:%s520]
                  %538 = vst [vmem:[%s528 + $0x10] sm:%s520] %v537
                  %v539 = vld [vmem:[%s527 + $0x78] sm:%s520]
                  %540 = vst [vmem:[%s528 + $0x14] sm:%s520] %v539
                  %v541 = vld [vmem:[%s527 + $0x90] sm:%s520]
                  %542 = vst [vmem:[%s528 + $0x18] sm:%s520] %v541
                  %v543 = vld [vmem:[%s527 + $0xa8] sm:%s520]
                  %544 = vst [vmem:[%s528 + $0x1c] sm:%s520] %v543
                  %v545 = vld [vmem:[%s527 + $0xc0] sm:%s520]
                  %546 = vst [vmem:[%s528 + $0x20] sm:%s520] %v545
                  %v547 = vld [vmem:[%s527 + $0xd8] sm:%s520]
                  %548 = vst [vmem:[%s528 + $0x24] sm:%s520] %v547
                  %v549 = vld [vmem:[%s527 + $0xf0] sm:%s520]
                  %550 = vst [vmem:[%s528 + $0x28] sm:%s520] %v549
                  %v551 = vld [vmem:[%s527 + $0x108] sm:%s520]
                  %552 = vst [vmem:[%s528 + $0x2c] sm:%s520] %v551
                  %v553 = vld [vmem:[%s527 + $0x120] sm:%s520]
                  %554 = vst [vmem:[%s528 + $0x30] sm:%s520] %v553
                  %v555 = vld [vmem:[%s527 + $0x138] sm:%s520]
                  %556 = vst [vmem:[%s528 + $0x34] sm:%s520] %v555
                  %v557 = vld [vmem:[%s527 + $0x150] sm:%s520]
                  %558 = vst [vmem:[%s528 + $0x38] sm:%s520] %v557
                  %v559 = vld [vmem:[%s527 + $0x168] sm:%s520]
                  %560 = vst [vmem:[%s528 + $0x3c] sm:%s520] %v559
                $region137: #{t5_block_next.5} parent=124 // loop_footer
                  %s526 = sadd.s32 1, %s522
                $region138: #{t5_block_next.5} parent=124 // loop_footer_branch
                  %521 = sbr.rel target = $region134
                $region139: #{t5_block_next.5} parent=124 // loop_exit
                  _
              $region125: #{t5_block_next.5} parent=109 // pred_fallthru
                _
            $region110: #{t5_block_next.5} parent=105 // pred_fallthru
              _
            // Predicated region
            $region111: #{t5_block_next.5} parent=105 // pred_check
              _
            $region112: #{t5_block_next.5} parent=105 // pred_check_branch
              %466 = sbr.rel (0) target = $region114
            $region113: #{t5_block_next.5} parent=105 // pred_region
              %s468 = ssub.s32 16, 1
              loop: start=0, step=1, limit=1
              $region115: #{t5_block_next.5} parent=113 // loop_pre_header
                _
              $region116: #{t5_block_next.5} parent=113 // loop_header
                %s470 = sphi 0, %s474
                %p471 = scmp.ge.s32.totalorder %s470, 1
                %s475 = sphi %s460, %s460
                %s476 = sphi %s454, %s454
              $region117: #{t5_block_next.5} parent=113 // loop_header_branch
                %473 = sbr.rel (%p471) target = $region121
              $region118: #{t5_block_next.5} parent=113 // loop_body
                %v477 = vld [vmem:[%s475] sm:%s468]
                %478 = vst [vmem:[%s476] sm:%s468] %v477
                %v479 = vld [vmem:[%s475 + $0x18] sm:%s468]
                %480 = vst [vmem:[%s476 + $0x4] sm:%s468] %v479
                %v481 = vld [vmem:[%s475 + $0x30] sm:%s468]
                %482 = vst [vmem:[%s476 + $0x8] sm:%s468] %v481
                %v483 = vld [vmem:[%s475 + $0x48] sm:%s468]
                %484 = vst [vmem:[%s476 + $0xc] sm:%s468] %v483
                %v485 = vld [vmem:[%s475 + $0x60] sm:%s468]
                %486 = vst [vmem:[%s476 + $0x10] sm:%s468] %v485
                %v487 = vld [vmem:[%s475 + $0x78] sm:%s468]
                %488 = vst [vmem:[%s476 + $0x14] sm:%s468] %v487
                %v489 = vld [vmem:[%s475 + $0x90] sm:%s468]
                %490 = vst [vmem:[%s476 + $0x18] sm:%s468] %v489
                %v491 = vld [vmem:[%s475 + $0xa8] sm:%s468]
                %492 = vst [vmem:[%s476 + $0x1c] sm:%s468] %v491
                %v493 = vld [vmem:[%s475 + $0xc0] sm:%s468]
                %494 = vst [vmem:[%s476 + $0x20] sm:%s468] %v493
                %v495 = vld [vmem:[%s475 + $0xd8] sm:%s468]
                %496 = vst [vmem:[%s476 + $0x24] sm:%s468] %v495
                %v497 = vld [vmem:[%s475 + $0xf0] sm:%s468]
                %498 = vst [vmem:[%s476 + $0x28] sm:%s468] %v497
                %v499 = vld [vmem:[%s475 + $0x108] sm:%s468]
                %500 = vst [vmem:[%s476 + $0x2c] sm:%s468] %v499
                %v501 = vld [vmem:[%s475 + $0x120] sm:%s468]
                %502 = vst [vmem:[%s476 + $0x30] sm:%s468] %v501
                %v503 = vld [vmem:[%s475 + $0x138] sm:%s468]
                %504 = vst [vmem:[%s476 + $0x34] sm:%s468] %v503
                %v505 = vld [vmem:[%s475 + $0x150] sm:%s468]
                %506 = vst [vmem:[%s476 + $0x38] sm:%s468] %v505
                %v507 = vld [vmem:[%s475 + $0x168] sm:%s468]
                %508 = vst [vmem:[%s476 + $0x3c] sm:%s468] %v507
              $region119: #{t5_block_next.5} parent=113 // loop_footer
                %s474 = sadd.s32 1, %s470
              $region120: #{t5_block_next.5} parent=113 // loop_footer_branch
                %469 = sbr.rel target = $region116
              $region121: #{t5_block_next.5} parent=113 // loop_exit
                _
            $region114: #{t5_block_next.5} parent=105 // pred_fallthru
              _
          $region106: #{t5_block_next.5} parent=101 // pred_fallthru
            _
          %561 = vnop
        $region102: #{t5_block_next.5} parent=15 // pred_fallthru
          _
        // Predicated region
        $region140: #{t5_block_next.5} parent=15 // pred_check
          %p562 = pneg %p142
        $region141: #{t5_block_next.5} parent=15 // pred_check_branch
          %564 = sbr.rel (%p562) target = $region143
        $region142: #{t5_block_next.5} parent=15 // pred_region
          %s565 = sand.u32 %s132, 1
          %s566 = sand.u32 %s132, 1
          %s567 = smul.addr %s566, 128
          %s568 = scalar_lea.vmem [#allocation8], %s567
          %s569 = smul.u32 2, %s18
          %s570 = smul.u32 16, %s19
          %s571 = smul.addr %s570, 2
          %s572 = sadd.s32 %s20, %s571
          %s573 = smul.addr %s569, 64
          %s574 = sadd.s32 %s572, %s573
          %s575 = smul.addr %s574, 4
          %s576 = scalar_lea.vmem %s3, %s575
          // Predicated region
          $region144: #{t5_block_next.5} parent=142 // pred_check
            _
          $region145: #{t5_block_next.5} parent=142 // pred_check_branch
            %578 = sbr.rel (0) target = $region147
          $region146: #{t5_block_next.5} parent=142 // pred_region
            // Predicated region
            $region148: #{t5_block_next.5} parent=146 // pred_check
              _
            $region149: #{t5_block_next.5} parent=146 // pred_check_branch
              %580 = sbr.rel target = $region151
            $region150: #{t5_block_next.5} parent=146 // pred_region
              // Predicated region
              $region163: #{t5_block_next.5} parent=150 // pred_check
                _
              $region164: #{t5_block_next.5} parent=150 // pred_check_branch
                %658 = sbr.rel (0) target = $region166
              $region165: #{t5_block_next.5} parent=150 // pred_region
                loop: start=0, step=1, limit=1
                $region167: #{t5_block_next.5} parent=165 // loop_pre_header
                  _
                $region168: #{t5_block_next.5} parent=165 // loop_header
                  %s660 = sphi 0, %s664
                  %p661 = scmp.ge.s32.totalorder %s660, 1
                  %s665 = sphi %s576, %s576
                  %s666 = sphi %s568, %s568
                $region169: #{t5_block_next.5} parent=165 // loop_header_branch
                  %663 = sbr.rel (%p661) target = $region173
                $region170: #{t5_block_next.5} parent=165 // loop_body
                  _
                $region171: #{t5_block_next.5} parent=165 // loop_footer
                  %s664 = sadd.s32 1, %s660
                $region172: #{t5_block_next.5} parent=165 // loop_footer_branch
                  %659 = sbr.rel target = $region168
                $region173: #{t5_block_next.5} parent=165 // loop_exit
                  _
                %s668 = ssub.s32 16, 1
                loop: start=0, step=1, limit=1
                $region174: #{t5_block_next.5} parent=165 // loop_pre_header
                  _
                $region175: #{t5_block_next.5} parent=165 // loop_header
                  %s670 = sphi 0, %s674
                  %p671 = scmp.ge.s32.totalorder %s670, 1
                  %s675 = sphi %s576, %s576
                  %s676 = sphi %s568, %s568
                $region176: #{t5_block_next.5} parent=165 // loop_header_branch
                  %673 = sbr.rel (%p671) target = $region180
                $region177: #{t5_block_next.5} parent=165 // loop_body
                  %v677 = vld [vmem:[%s675] sm:%s668]
                  %678 = vst [vmem:[%s676] sm:%s668] %v677
                  %v679 = vld [vmem:[%s675 + $0x8] sm:%s668]
                  %680 = vst [vmem:[%s676 + $0x4] sm:%s668] %v679
                  %v681 = vld [vmem:[%s675 + $0x10] sm:%s668]
                  %682 = vst [vmem:[%s676 + $0x8] sm:%s668] %v681
                  %v683 = vld [vmem:[%s675 + $0x18] sm:%s668]
                  %684 = vst [vmem:[%s676 + $0xc] sm:%s668] %v683
                  %v685 = vld [vmem:[%s675 + $0x20] sm:%s668]
                  %686 = vst [vmem:[%s676 + $0x10] sm:%s668] %v685
                  %v687 = vld [vmem:[%s675 + $0x28] sm:%s668]
                  %688 = vst [vmem:[%s676 + $0x14] sm:%s668] %v687
                  %v689 = vld [vmem:[%s675 + $0x30] sm:%s668]
                  %690 = vst [vmem:[%s676 + $0x18] sm:%s668] %v689
                  %v691 = vld [vmem:[%s675 + $0x38] sm:%s668]
                  %692 = vst [vmem:[%s676 + $0x1c] sm:%s668] %v691
                  %v693 = vld [vmem:[%s675 + $0x40] sm:%s668]
                  %694 = vst [vmem:[%s676 + $0x20] sm:%s668] %v693
                  %v695 = vld [vmem:[%s675 + $0x48] sm:%s668]
                  %696 = vst [vmem:[%s676 + $0x24] sm:%s668] %v695
                  %v697 = vld [vmem:[%s675 + $0x50] sm:%s668]
                  %698 = vst [vmem:[%s676 + $0x28] sm:%s668] %v697
                  %v699 = vld [vmem:[%s675 + $0x58] sm:%s668]
                  %700 = vst [vmem:[%s676 + $0x2c] sm:%s668] %v699
                  %v701 = vld [vmem:[%s675 + $0x60] sm:%s668]
                  %702 = vst [vmem:[%s676 + $0x30] sm:%s668] %v701
                  %v703 = vld [vmem:[%s675 + $0x68] sm:%s668]
                  %704 = vst [vmem:[%s676 + $0x34] sm:%s668] %v703
                  %v705 = vld [vmem:[%s675 + $0x70] sm:%s668]
                  %706 = vst [vmem:[%s676 + $0x38] sm:%s668] %v705
                  %v707 = vld [vmem:[%s675 + $0x78] sm:%s668]
                  %708 = vst [vmem:[%s676 + $0x3c] sm:%s668] %v707
                  %v709 = vld [vmem:[%s675 + $0x100] sm:%s668]
                  %710 = vst [vmem:[%s676 + $0x40] sm:%s668] %v709
                  %v711 = vld [vmem:[%s675 + $0x108] sm:%s668]
                  %712 = vst [vmem:[%s676 + $0x44] sm:%s668] %v711
                  %v713 = vld [vmem:[%s675 + $0x110] sm:%s668]
                  %714 = vst [vmem:[%s676 + $0x48] sm:%s668] %v713
                  %v715 = vld [vmem:[%s675 + $0x118] sm:%s668]
                  %716 = vst [vmem:[%s676 + $0x4c] sm:%s668] %v715
                  %v717 = vld [vmem:[%s675 + $0x120] sm:%s668]
                  %718 = vst [vmem:[%s676 + $0x50] sm:%s668] %v717
                  %v719 = vld [vmem:[%s675 + $0x128] sm:%s668]
                  %720 = vst [vmem:[%s676 + $0x54] sm:%s668] %v719
                  %v721 = vld [vmem:[%s675 + $0x130] sm:%s668]
                  %722 = vst [vmem:[%s676 + $0x58] sm:%s668] %v721
                  %v723 = vld [vmem:[%s675 + $0x138] sm:%s668]
                  %724 = vst [vmem:[%s676 + $0x5c] sm:%s668] %v723
                  %v725 = vld [vmem:[%s675 + $0x140] sm:%s668]
                  %726 = vst [vmem:[%s676 + $0x60] sm:%s668] %v725
                  %v727 = vld [vmem:[%s675 + $0x148] sm:%s668]
                  %728 = vst [vmem:[%s676 + $0x64] sm:%s668] %v727
                  %v729 = vld [vmem:[%s675 + $0x150] sm:%s668]
                  %730 = vst [vmem:[%s676 + $0x68] sm:%s668] %v729
                  %v731 = vld [vmem:[%s675 + $0x158] sm:%s668]
                  %732 = vst [vmem:[%s676 + $0x6c] sm:%s668] %v731
                  %v733 = vld [vmem:[%s675 + $0x160] sm:%s668]
                  %734 = vst [vmem:[%s676 + $0x70] sm:%s668] %v733
                  %v735 = vld [vmem:[%s675 + $0x168] sm:%s668]
                  %736 = vst [vmem:[%s676 + $0x74] sm:%s668] %v735
                  %v737 = vld [vmem:[%s675 + $0x170] sm:%s668]
                  %738 = vst [vmem:[%s676 + $0x78] sm:%s668] %v737
                  %v739 = vld [vmem:[%s675 + $0x178] sm:%s668]
                  %740 = vst [vmem:[%s676 + $0x7c] sm:%s668] %v739
                $region178: #{t5_block_next.5} parent=165 // loop_footer
                  %s674 = sadd.s32 1, %s670
                $region179: #{t5_block_next.5} parent=165 // loop_footer_branch
                  %669 = sbr.rel target = $region175
                $region180: #{t5_block_next.5} parent=165 // loop_exit
                  _
              $region166: #{t5_block_next.5} parent=150 // pred_fallthru
                _
            $region151: #{t5_block_next.5} parent=146 // pred_fallthru
              _
            // Predicated region
            $region152: #{t5_block_next.5} parent=146 // pred_check
              _
            $region153: #{t5_block_next.5} parent=146 // pred_check_branch
              %582 = sbr.rel (0) target = $region155
            $region154: #{t5_block_next.5} parent=146 // pred_region
              %s584 = ssub.s32 16, 1
              loop: start=0, step=1, limit=1
              $region156: #{t5_block_next.5} parent=154 // loop_pre_header
                _
              $region157: #{t5_block_next.5} parent=154 // loop_header
                %s586 = sphi 0, %s590
                %p587 = scmp.ge.s32.totalorder %s586, 1
                %s591 = sphi %s576, %s576
                %s592 = sphi %s568, %s568
              $region158: #{t5_block_next.5} parent=154 // loop_header_branch
                %589 = sbr.rel (%p587) target = $region162
              $region159: #{t5_block_next.5} parent=154 // loop_body
                %v593 = vld [vmem:[%s591] sm:%s584]
                %594 = vst [vmem:[%s592] sm:%s584] %v593
                %v595 = vld [vmem:[%s591 + $0x8] sm:%s584]
                %596 = vst [vmem:[%s592 + $0x4] sm:%s584] %v595
                %v597 = vld [vmem:[%s591 + $0x10] sm:%s584]
                %598 = vst [vmem:[%s592 + $0x8] sm:%s584] %v597
                %v599 = vld [vmem:[%s591 + $0x18] sm:%s584]
                %600 = vst [vmem:[%s592 + $0xc] sm:%s584] %v599
                %v601 = vld [vmem:[%s591 + $0x20] sm:%s584]
                %602 = vst [vmem:[%s592 + $0x10] sm:%s584] %v601
                %v603 = vld [vmem:[%s591 + $0x28] sm:%s584]
                %604 = vst [vmem:[%s592 + $0x14] sm:%s584] %v603
                %v605 = vld [vmem:[%s591 + $0x30] sm:%s584]
                %606 = vst [vmem:[%s592 + $0x18] sm:%s584] %v605
                %v607 = vld [vmem:[%s591 + $0x38] sm:%s584]
                %608 = vst [vmem:[%s592 + $0x1c] sm:%s584] %v607
                %v609 = vld [vmem:[%s591 + $0x40] sm:%s584]
                %610 = vst [vmem:[%s592 + $0x20] sm:%s584] %v609
                %v611 = vld [vmem:[%s591 + $0x48] sm:%s584]
                %612 = vst [vmem:[%s592 + $0x24] sm:%s584] %v611
                %v613 = vld [vmem:[%s591 + $0x50] sm:%s584]
                %614 = vst [vmem:[%s592 + $0x28] sm:%s584] %v613
                %v615 = vld [vmem:[%s591 + $0x58] sm:%s584]
                %616 = vst [vmem:[%s592 + $0x2c] sm:%s584] %v615
                %v617 = vld [vmem:[%s591 + $0x60] sm:%s584]
                %618 = vst [vmem:[%s592 + $0x30] sm:%s584] %v617
                %v619 = vld [vmem:[%s591 + $0x68] sm:%s584]
                %620 = vst [vmem:[%s592 + $0x34] sm:%s584] %v619
                %v621 = vld [vmem:[%s591 + $0x70] sm:%s584]
                %622 = vst [vmem:[%s592 + $0x38] sm:%s584] %v621
                %v623 = vld [vmem:[%s591 + $0x78] sm:%s584]
                %624 = vst [vmem:[%s592 + $0x3c] sm:%s584] %v623
                %v625 = vld [vmem:[%s591 + $0x100] sm:%s584]
                %626 = vst [vmem:[%s592 + $0x40] sm:%s584] %v625
                %v627 = vld [vmem:[%s591 + $0x108] sm:%s584]
                %628 = vst [vmem:[%s592 + $0x44] sm:%s584] %v627
                %v629 = vld [vmem:[%s591 + $0x110] sm:%s584]
                %630 = vst [vmem:[%s592 + $0x48] sm:%s584] %v629
                %v631 = vld [vmem:[%s591 + $0x118] sm:%s584]
                %632 = vst [vmem:[%s592 + $0x4c] sm:%s584] %v631
                %v633 = vld [vmem:[%s591 + $0x120] sm:%s584]
                %634 = vst [vmem:[%s592 + $0x50] sm:%s584] %v633
                %v635 = vld [vmem:[%s591 + $0x128] sm:%s584]
                %636 = vst [vmem:[%s592 + $0x54] sm:%s584] %v635
                %v637 = vld [vmem:[%s591 + $0x130] sm:%s584]
                %638 = vst [vmem:[%s592 + $0x58] sm:%s584] %v637
                %v639 = vld [vmem:[%s591 + $0x138] sm:%s584]
                %640 = vst [vmem:[%s592 + $0x5c] sm:%s584] %v639
                %v641 = vld [vmem:[%s591 + $0x140] sm:%s584]
                %642 = vst [vmem:[%s592 + $0x60] sm:%s584] %v641
                %v643 = vld [vmem:[%s591 + $0x148] sm:%s584]
                %644 = vst [vmem:[%s592 + $0x64] sm:%s584] %v643
                %v645 = vld [vmem:[%s591 + $0x150] sm:%s584]
                %646 = vst [vmem:[%s592 + $0x68] sm:%s584] %v645
                %v647 = vld [vmem:[%s591 + $0x158] sm:%s584]
                %648 = vst [vmem:[%s592 + $0x6c] sm:%s584] %v647
                %v649 = vld [vmem:[%s591 + $0x160] sm:%s584]
                %650 = vst [vmem:[%s592 + $0x70] sm:%s584] %v649
                %v651 = vld [vmem:[%s591 + $0x168] sm:%s584]
                %652 = vst [vmem:[%s592 + $0x74] sm:%s584] %v651
                %v653 = vld [vmem:[%s591 + $0x170] sm:%s584]
                %654 = vst [vmem:[%s592 + $0x78] sm:%s584] %v653
                %v655 = vld [vmem:[%s591 + $0x178] sm:%s584]
                %656 = vst [vmem:[%s592 + $0x7c] sm:%s584] %v655
              $region160: #{t5_block_next.5} parent=154 // loop_footer
                %s590 = sadd.s32 1, %s586
              $region161: #{t5_block_next.5} parent=154 // loop_footer_branch
                %585 = sbr.rel target = $region157
              $region162: #{t5_block_next.5} parent=154 // loop_exit
                _
            $region155: #{t5_block_next.5} parent=146 // pred_fallthru
              _
          $region147: #{t5_block_next.5} parent=142 // pred_fallthru
            _
          %741 = vnop
        $region143: #{t5_block_next.5} parent=15 // pred_fallthru
          _
        // Predicated region
        $region181: #{t5_block_next.5} parent=15 // pred_check
          %p742 = pneg %p168
        $region182: #{t5_block_next.5} parent=15 // pred_check_branch
          %744 = sbr.rel (%p742) target = $region184
        $region183: #{t5_block_next.5} parent=15 // pred_region
          %p745 = scmp.lt.s32.totalorder %s20, 1
          %s746 = scalar_select %p745, %s20, 1
          %s747 = scalar_lea.vmem %s4, %s746
        $region184: #{t5_block_next.5} parent=15 // pred_fallthru
          _
      $region16: #{t5_block_next.5} parent=5 // pred_fallthru
        _
      %p748 = scmp.le.s32.totalorder 1, %s11
      %p749 = scmp.lt.s32.totalorder %s11, 9
      %p750 = pnand %p748, %p749
      %p751 = pneg %p750
      // Predicated region
      $region185: #{t5_block_next.5} parent=5 // pred_check
        _
      $region186: #{t5_block_next.5} parent=5 // pred_check_branch
        %753 = sbr.rel (%p750) target = $region188
      $region187: #{t5_block_next.5} parent=5 // pred_region
        %s754 = ssub.s32 %s11, 1
        %s755 = sand.u32 %s45, 1
        %s756 = sand.u32 %s45, 1
        %s757 = smul.addr %s756, 64
        %s758 = scalar_lea.vmem [#allocation5], %s757
        // Predicated region
        $region189: #{t5_block_next.5} parent=187 // pred_check
          %p759 = pneg %p58
        $region190: #{t5_block_next.5} parent=187 // pred_check_branch
          %761 = sbr.rel (%p759) target = $region192
        $region191: #{t5_block_next.5} parent=187 // pred_region
          _
        $region192: #{t5_block_next.5} parent=187 // pred_fallthru
          _
        %s762 = sand.u32 %s75, 1
        %s763 = sand.u32 %s75, 1
        %s764 = smul.addr %s763, 64
        %s765 = scalar_lea.vmem [#allocation6], %s764
        // Predicated region
        $region193: #{t5_block_next.5} parent=187 // pred_check
          %p766 = pneg %p88
        $region194: #{t5_block_next.5} parent=187 // pred_check_branch
          %768 = sbr.rel (%p766) target = $region196
        $region195: #{t5_block_next.5} parent=187 // pred_region
          _
        $region196: #{t5_block_next.5} parent=187 // pred_fallthru
          _
        %s769 = sand.u32 %s105, 1
        %s770 = sand.u32 %s105, 1
        %s771 = smul.addr %s770, 64
        %s772 = scalar_lea.vmem [#allocation7], %s771
        // Predicated region
        $region197: #{t5_block_next.5} parent=187 // pred_check
          %p773 = pneg %p118
        $region198: #{t5_block_next.5} parent=187 // pred_check_branch
          %775 = sbr.rel (%p773) target = $region200
        $region199: #{t5_block_next.5} parent=187 // pred_region
          _
        $region200: #{t5_block_next.5} parent=187 // pred_fallthru
          _
        %s776 = sand.u32 %s135, 1
        %s777 = sand.u32 %s135, 1
        %s778 = smul.addr %s777, 128
        %s779 = scalar_lea.vmem [#allocation8], %s778
        // Predicated region
        $region201: #{t5_block_next.5} parent=187 // pred_check
          %p780 = pneg %p148
        $region202: #{t5_block_next.5} parent=187 // pred_check_branch
          %782 = sbr.rel (%p780) target = $region204
        $region203: #{t5_block_next.5} parent=187 // pred_region
          _
        $region204: #{t5_block_next.5} parent=187 // pred_fallthru
          _
        %s783 = sand.u32 %s45, 1
        %s784 = sand.u32 %s45, 1
        %s785 = smul.addr %s784, 64
        %s786 = scalar_lea.vmem [#allocation5], %s785
        %p787 = pneg %p58
        %p788 = pneg %p55
        %s789 = sand.u32 %s75, 1
        %s790 = sand.u32 %s75, 1
        %s791 = smul.addr %s790, 64
        %s792 = scalar_lea.vmem [#allocation6], %s791
        %p793 = pneg %p88
        %p794 = pneg %p85
        %s795 = sand.u32 %s105, 1
        %s796 = sand.u32 %s105, 1
        %s797 = smul.addr %s796, 64
        %s798 = scalar_lea.vmem [#allocation7], %s797
        %p799 = pneg %p118
        %p800 = pneg %p115
        %s801 = sand.u32 %s135, 1
        %s802 = sand.u32 %s135, 1
        %s803 = smul.addr %s802, 128
        %s804 = scalar_lea.vmem [#allocation8], %s803
        %p805 = pneg %p148
        %p806 = pneg %p145
        %p807 = scmp.lt.s32.totalorder %s23, 1
        %s808 = scalar_select %p807, %s23, 1
        %s809 = scalar_lea.vmem %s4, %s808
        %p810 = pneg %p174
        %p811 = pneg %p171
        %p812 = pneg %p202
        %p813 = pneg %p199
        %s814 = sand.u32 %s189, 1
        %s815 = sand.u32 %s189, 1
        %s816 = smul.addr %s815, 64
        %s817 = scalar_lea.vmem [#allocation9], %s816
        %s818 = smul.u32 16, %s22
        %s819 = sadd.s32 %s21, 2
        %s820 = smul.u32 16, %s23
        %s821 = sadd.s32 %s21, 4
        %s822 = smul.u32 16, %s23
        %s823 = smul.u32 2, %s21
        %s824 = smul.u32 16, %s22
        %p825 = scmp.lt.s32.totalorder %s23, 1
        %s826 = scalar_select %p825, %s23, 1
        %s827 = scalar_lea.vmem %s4, %s826
        %s828 = smul.u32 16, %s22
        %p830 = scmp.eq.s32.totalorder %s23, 0
        // Predicated region
        $region205: #{t5_block_next.5} parent=187 // pred_check
          %p831 = pneg %p830
        $region206: #{t5_block_next.5} parent=187 // pred_check_branch
          %833 = sbr.rel (%p831) target = $region208
        $region207: #{t5_block_next.5} parent=187 // pred_region
          %vm834 = vcmask 7168
          %835 = vst.msk [vmem:[#allocation2] sm:$0xff] %vm834, -inf
          %836 = vst.msk [vmem:[#allocation2 + $0x8] sm:$0xff] %vm834, -inf
          %837 = vst.msk [vmem:[#allocation2 + $0x10] sm:$0xff] %vm834, -inf
          %838 = vst.msk [vmem:[#allocation2 + $0x18] sm:$0xff] %vm834, -inf
          %839 = vst.msk [vmem:[#allocation2 + $0x20] sm:$0xff] %vm834, -inf
          %840 = vst.msk [vmem:[#allocation2 + $0x28] sm:$0xff] %vm834, -inf
          %841 = vst.msk [vmem:[#allocation2 + $0x30] sm:$0xff] %vm834, -inf
          %842 = vst.msk [vmem:[#allocation2 + $0x38] sm:$0xff] %vm834, -inf
          %843 = vst.msk [vmem:[#allocation2 + $0x40] sm:$0xff] %vm834, -inf
          %844 = vst.msk [vmem:[#allocation2 + $0x48] sm:$0xff] %vm834, -inf
          %845 = vst.msk [vmem:[#allocation2 + $0x50] sm:$0xff] %vm834, -inf
          %846 = vst.msk [vmem:[#allocation2 + $0x58] sm:$0xff] %vm834, -inf
          %847 = vst.msk [vmem:[#allocation2 + $0x60] sm:$0xff] %vm834, -inf
          %848 = vst.msk [vmem:[#allocation2 + $0x68] sm:$0xff] %vm834, -inf
          %849 = vst.msk [vmem:[#allocation2 + $0x70] sm:$0xff] %vm834, -inf
          %850 = vst.msk [vmem:[#allocation2 + $0x78] sm:$0xff] %vm834, -inf
          %851 = vst.msk [vmem:[#allocation2 + $0x80] sm:$0xff] %vm834, -inf
          %852 = vst.msk [vmem:[#allocation2 + $0x88] sm:$0xff] %vm834, -inf
          %853 = vst.msk [vmem:[#allocation2 + $0x90] sm:$0xff] %vm834, -inf
          %854 = vst.msk [vmem:[#allocation2 + $0x98] sm:$0xff] %vm834, -inf
          %855 = vst.msk [vmem:[#allocation2 + $0xa0] sm:$0xff] %vm834, -inf
          %856 = vst.msk [vmem:[#allocation2 + $0xa8] sm:$0xff] %vm834, -inf
          %857 = vst.msk [vmem:[#allocation2 + $0xb0] sm:$0xff] %vm834, -inf
          %858 = vst.msk [vmem:[#allocation2 + $0xb8] sm:$0xff] %vm834, -inf
          %859 = vst.msk [vmem:[#allocation2 + $0xc0] sm:$0xff] %vm834, -inf
          %860 = vst.msk [vmem:[#allocation2 + $0xc8] sm:$0xff] %vm834, -inf
          %861 = vst.msk [vmem:[#allocation2 + $0xd0] sm:$0xff] %vm834, -inf
          %862 = vst.msk [vmem:[#allocation2 + $0xd8] sm:$0xff] %vm834, -inf
          %863 = vst.msk [vmem:[#allocation2 + $0xe0] sm:$0xff] %vm834, -inf
          %864 = vst.msk [vmem:[#allocation2 + $0xe8] sm:$0xff] %vm834, -inf
          %865 = vst.msk [vmem:[#allocation2 + $0xf0] sm:$0xff] %vm834, -inf
          %866 = vst.msk [vmem:[#allocation2 + $0xf8] sm:$0xff] %vm834, -inf
          %867 = vst.msk [vmem:[#allocation3] sm:$0xff] %vm834, 0.0
          %868 = vst.msk [vmem:[#allocation3 + $0x8] sm:$0xff] %vm834, 0.0
          %869 = vst.msk [vmem:[#allocation3 + $0x10] sm:$0xff] %vm834, 0.0
          %870 = vst.msk [vmem:[#allocation3 + $0x18] sm:$0xff] %vm834, 0.0
          %871 = vst.msk [vmem:[#allocation3 + $0x20] sm:$0xff] %vm834, 0.0
          %872 = vst.msk [vmem:[#allocation3 + $0x28] sm:$0xff] %vm834, 0.0
          %873 = vst.msk [vmem:[#allocation3 + $0x30] sm:$0xff] %vm834, 0.0
          %874 = vst.msk [vmem:[#allocation3 + $0x38] sm:$0xff] %vm834, 0.0
          %875 = vst.msk [vmem:[#allocation3 + $0x40] sm:$0xff] %vm834, 0.0
          %876 = vst.msk [vmem:[#allocation3 + $0x48] sm:$0xff] %vm834, 0.0
          %877 = vst.msk [vmem:[#allocation3 + $0x50] sm:$0xff] %vm834, 0.0
          %878 = vst.msk [vmem:[#allocation3 + $0x58] sm:$0xff] %vm834, 0.0
          %879 = vst.msk [vmem:[#allocation3 + $0x60] sm:$0xff] %vm834, 0.0
          %880 = vst.msk [vmem:[#allocation3 + $0x68] sm:$0xff] %vm834, 0.0
          %881 = vst.msk [vmem:[#allocation3 + $0x70] sm:$0xff] %vm834, 0.0
          %882 = vst.msk [vmem:[#allocation3 + $0x78] sm:$0xff] %vm834, 0.0
          %883 = vst.msk [vmem:[#allocation3 + $0x80] sm:$0xff] %vm834, 0.0
          %884 = vst.msk [vmem:[#allocation3 + $0x88] sm:$0xff] %vm834, 0.0
          %885 = vst.msk [vmem:[#allocation3 + $0x90] sm:$0xff] %vm834, 0.0
          %886 = vst.msk [vmem:[#allocation3 + $0x98] sm:$0xff] %vm834, 0.0
          %887 = vst.msk [vmem:[#allocation3 + $0xa0] sm:$0xff] %vm834, 0.0
          %888 = vst.msk [vmem:[#allocation3 + $0xa8] sm:$0xff] %vm834, 0.0
          %889 = vst.msk [vmem:[#allocation3 + $0xb0] sm:$0xff] %vm834, 0.0
          %890 = vst.msk [vmem:[#allocation3 + $0xb8] sm:$0xff] %vm834, 0.0
          %891 = vst.msk [vmem:[#allocation3 + $0xc0] sm:$0xff] %vm834, 0.0
          %892 = vst.msk [vmem:[#allocation3 + $0xc8] sm:$0xff] %vm834, 0.0
          %893 = vst.msk [vmem:[#allocation3 + $0xd0] sm:$0xff] %vm834, 0.0
          %894 = vst.msk [vmem:[#allocation3 + $0xd8] sm:$0xff] %vm834, 0.0
          %895 = vst.msk [vmem:[#allocation3 + $0xe0] sm:$0xff] %vm834, 0.0
          %896 = vst.msk [vmem:[#allocation3 + $0xe8] sm:$0xff] %vm834, 0.0
          %897 = vst.msk [vmem:[#allocation3 + $0xf0] sm:$0xff] %vm834, 0.0
          %898 = vst.msk [vmem:[#allocation3 + $0xf8] sm:$0xff] %vm834, 0.0
          %vm899 = vcmask 523264
          %900 = vst.msk [vmem:[#allocation4] sm:$0xff] %vm899, 0.0
          %901 = vst.msk [vmem:[#allocation4 + $0x8] sm:$0xff] %vm899, 0.0
          %902 = vst.msk [vmem:[#allocation4 + $0x10] sm:$0xff] %vm899, 0.0
          %903 = vst.msk [vmem:[#allocation4 + $0x18] sm:$0xff] %vm899, 0.0
          %904 = vst.msk [vmem:[#allocation4 + $0x20] sm:$0xff] %vm899, 0.0
          %905 = vst.msk [vmem:[#allocation4 + $0x28] sm:$0xff] %vm899, 0.0
          %906 = vst.msk [vmem:[#allocation4 + $0x30] sm:$0xff] %vm899, 0.0
          %907 = vst.msk [vmem:[#allocation4 + $0x38] sm:$0xff] %vm899, 0.0
          %908 = vst.msk [vmem:[#allocation4 + $0x40] sm:$0xff] %vm899, 0.0
          %909 = vst.msk [vmem:[#allocation4 + $0x48] sm:$0xff] %vm899, 0.0
          %910 = vst.msk [vmem:[#allocation4 + $0x50] sm:$0xff] %vm899, 0.0
          %911 = vst.msk [vmem:[#allocation4 + $0x58] sm:$0xff] %vm899, 0.0
          %912 = vst.msk [vmem:[#allocation4 + $0x60] sm:$0xff] %vm899, 0.0
          %913 = vst.msk [vmem:[#allocation4 + $0x68] sm:$0xff] %vm899, 0.0
          %914 = vst.msk [vmem:[#allocation4 + $0x70] sm:$0xff] %vm899, 0.0
          %915 = vst.msk [vmem:[#allocation4 + $0x78] sm:$0xff] %vm899, 0.0
          %916 = vst.msk [vmem:[#allocation4 + $0x80] sm:$0xff] %vm899, 0.0
          %917 = vst.msk [vmem:[#allocation4 + $0x88] sm:$0xff] %vm899, 0.0
          %918 = vst.msk [vmem:[#allocation4 + $0x90] sm:$0xff] %vm899, 0.0
          %919 = vst.msk [vmem:[#allocation4 + $0x98] sm:$0xff] %vm899, 0.0
          %920 = vst.msk [vmem:[#allocation4 + $0xa0] sm:$0xff] %vm899, 0.0
          %921 = vst.msk [vmem:[#allocation4 + $0xa8] sm:$0xff] %vm899, 0.0
          %922 = vst.msk [vmem:[#allocation4 + $0xb0] sm:$0xff] %vm899, 0.0
          %923 = vst.msk [vmem:[#allocation4 + $0xb8] sm:$0xff] %vm899, 0.0
          %924 = vst.msk [vmem:[#allocation4 + $0xc0] sm:$0xff] %vm899, 0.0
          %925 = vst.msk [vmem:[#allocation4 + $0xc8] sm:$0xff] %vm899, 0.0
          %926 = vst.msk [vmem:[#allocation4 + $0xd0] sm:$0xff] %vm899, 0.0
          %927 = vst.msk [vmem:[#allocation4 + $0xd8] sm:$0xff] %vm899, 0.0
          %928 = vst.msk [vmem:[#allocation4 + $0xe0] sm:$0xff] %vm899, 0.0
          %929 = vst.msk [vmem:[#allocation4 + $0xe8] sm:$0xff] %vm899, 0.0
          %930 = vst.msk [vmem:[#allocation4 + $0xf0] sm:$0xff] %vm899, 0.0
          %931 = vst.msk [vmem:[#allocation4 + $0xf8] sm:$0xff] %vm899, 0.0
        $region208: #{t5_block_next.5} parent=187 // pred_fallthru
          _
        %v932 = vld [vmem:[%s827] sm:$0x1]
        %v933 = vld [vmem:[%s758] sm:$0xf]
        %v934 = vld [vmem:[%s758 + $0x4] sm:$0xf]
        %v935 = vld [vmem:[%s758 + $0x8] sm:$0xf]
        %v936 = vld [vmem:[%s758 + $0xc] sm:$0xf]
        %v937 = vld [vmem:[%s758 + $0x10] sm:$0xf]
        %v938 = vld [vmem:[%s758 + $0x14] sm:$0xf]
        %v939 = vld [vmem:[%s758 + $0x18] sm:$0xf]
        %v940 = vld [vmem:[%s758 + $0x1c] sm:$0xf]
        %v941 = vld [vmem:[%s758 + $0x20] sm:$0xf]
        %v942 = vld [vmem:[%s758 + $0x24] sm:$0xf]
        %v943 = vld [vmem:[%s758 + $0x28] sm:$0xf]
        %v944 = vld [vmem:[%s758 + $0x2c] sm:$0xf]
        %v945 = vld [vmem:[%s758 + $0x30] sm:$0xf]
        %v946 = vld [vmem:[%s758 + $0x34] sm:$0xf]
        %v947 = vld [vmem:[%s758 + $0x38] sm:$0xf]
        %v948 = vld [vmem:[%s758 + $0x3c] sm:$0xf]
        %v949 = vld [vmem:[%s765] sm:$0xf]
        %v950 = vld [vmem:[%s765 + $0x4] sm:$0xf]
        %v951 = vld [vmem:[%s765 + $0x8] sm:$0xf]
        %v952 = vld [vmem:[%s765 + $0xc] sm:$0xf]
        %v953 = vld [vmem:[%s765 + $0x10] sm:$0xf]
        %v954 = vld [vmem:[%s765 + $0x14] sm:$0xf]
        %v955 = vld [vmem:[%s765 + $0x18] sm:$0xf]
        %v956 = vld [vmem:[%s765 + $0x1c] sm:$0xf]
        %v957 = vld [vmem:[%s765 + $0x20] sm:$0xf]
        %v958 = vld [vmem:[%s765 + $0x24] sm:$0xf]
        %v959 = vld [vmem:[%s765 + $0x28] sm:$0xf]
        %v960 = vld [vmem:[%s765 + $0x2c] sm:$0xf]
        %v961 = vld [vmem:[%s765 + $0x30] sm:$0xf]
        %v962 = vld [vmem:[%s765 + $0x34] sm:$0xf]
        %v963 = vld [vmem:[%s765 + $0x38] sm:$0xf]
        %v964 = vld [vmem:[%s765 + $0x3c] sm:$0xf]
        %v965 = vld [vmem:[%s772] sm:$0xf]
        %v966 = vld [vmem:[%s772 + $0x4] sm:$0xf]
        %v967 = vld [vmem:[%s772 + $0x8] sm:$0xf]
        %v968 = vld [vmem:[%s772 + $0xc] sm:$0xf]
        %v969 = vld [vmem:[%s772 + $0x10] sm:$0xf]
        %v970 = vld [vmem:[%s772 + $0x14] sm:$0xf]
        %v971 = vld [vmem:[%s772 + $0x18] sm:$0xf]
        %v972 = vld [vmem:[%s772 + $0x1c] sm:$0xf]
        %v973 = vld [vmem:[%s772 + $0x20] sm:$0xf]
        %v974 = vld [vmem:[%s772 + $0x24] sm:$0xf]
        %v975 = vld [vmem:[%s772 + $0x28] sm:$0xf]
        %v976 = vld [vmem:[%s772 + $0x2c] sm:$0xf]
        %v977 = vld [vmem:[%s772 + $0x30] sm:$0xf]
        %v978 = vld [vmem:[%s772 + $0x34] sm:$0xf]
        %v979 = vld [vmem:[%s772 + $0x38] sm:$0xf]
        %v980 = vld [vmem:[%s772 + $0x3c] sm:$0xf]
        %v981 = vld [vmem:[%s779] sm:$0xf]
        %v982 = vld [vmem:[%s779 + $0x4] sm:$0xf]
        %v983 = vld [vmem:[%s779 + $0x8] sm:$0xf]
        %v984 = vld [vmem:[%s779 + $0xc] sm:$0xf]
        %v985 = vld [vmem:[%s779 + $0x10] sm:$0xf]
        %v986 = vld [vmem:[%s779 + $0x14] sm:$0xf]
        %v987 = vld [vmem:[%s779 + $0x18] sm:$0xf]
        %v988 = vld [vmem:[%s779 + $0x1c] sm:$0xf]
        %v989 = vld [vmem:[%s779 + $0x20] sm:$0xf]
        %v990 = vld [vmem:[%s779 + $0x24] sm:$0xf]
        %v991 = vld [vmem:[%s779 + $0x28] sm:$0xf]
        %v992 = vld [vmem:[%s779 + $0x2c] sm:$0xf]
        %v993 = vld [vmem:[%s779 + $0x30] sm:$0xf]
        %v994 = vld [vmem:[%s779 + $0x34] sm:$0xf]
        %v995 = vld [vmem:[%s779 + $0x38] sm:$0xf]
        %v996 = vld [vmem:[%s779 + $0x3c] sm:$0xf]
        %v997 = vunpack.c.l.bf16 %v981
        %v998 = vunpack.c.l.bf16 %v982
        %v999 = vunpack.c.l.bf16 %v983
        %v1000 = vunpack.c.l.bf16 %v984
        %v1001 = vunpack.c.l.bf16 %v985
        %v1002 = vunpack.c.l.bf16 %v986
        %v1003 = vunpack.c.l.bf16 %v987
        %v1004 = vunpack.c.l.bf16 %v988
        %v1005 = vunpack.c.l.bf16 %v989
        %v1006 = vunpack.c.l.bf16 %v990
        %v1007 = vunpack.c.l.bf16 %v991
        %v1008 = vunpack.c.l.bf16 %v992
        %v1009 = vunpack.c.l.bf16 %v993
        %v1010 = vunpack.c.l.bf16 %v994
        %v1011 = vunpack.c.l.bf16 %v995
        %v1012 = vunpack.c.l.bf16 %v996
        %v1029 = vunpack.c.l.b16 %v933
        %v1030 = vunpack.c.l.b16 %v934
        %v1031 = vunpack.c.l.b16 %v935
        %v1032 = vunpack.c.l.b16 %v936
        %v1033 = vunpack.c.l.b16 %v937
        %v1034 = vunpack.c.l.b16 %v938
        %v1035 = vunpack.c.l.b16 %v939
        %v1036 = vunpack.c.l.b16 %v940
        %v1037 = vunpack.c.l.b16 %v941
        %v1038 = vunpack.c.l.b16 %v942
        %v1039 = vunpack.c.l.b16 %v943
        %v1040 = vunpack.c.l.b16 %v944
        %v1041 = vunpack.c.l.b16 %v945
        %v1042 = vunpack.c.l.b16 %v946
        %v1043 = vunpack.c.l.b16 %v947
        %v1044 = vunpack.c.l.b16 %v948
        %v1045 = vpack.c.b16 %v1030, %v1029
        %v1046 = vpack.c.b16 %v1032, %v1031
        %v1047 = vpack.c.b16 %v1034, %v1033
        %v1048 = vpack.c.b16 %v1036, %v1035
        %v1049 = vpack.c.b16 %v1038, %v1037
        %v1050 = vpack.c.b16 %v1040, %v1039
        %v1051 = vpack.c.b16 %v1042, %v1041
        %v1052 = vpack.c.b16 %v1044, %v1043
        %v1069 = vunpack.c.l.b16 %v949
        %v1070 = vunpack.c.l.b16 %v950
        %v1071 = vunpack.c.l.b16 %v951
        %v1072 = vunpack.c.l.b16 %v952
        %v1073 = vunpack.c.l.b16 %v953
        %v1074 = vunpack.c.l.b16 %v954
        %v1075 = vunpack.c.l.b16 %v955
        %v1076 = vunpack.c.l.b16 %v956
        %v1077 = vunpack.c.l.b16 %v957
        %v1078 = vunpack.c.l.b16 %v958
        %v1079 = vunpack.c.l.b16 %v959
        %v1080 = vunpack.c.l.b16 %v960
        %v1081 = vunpack.c.l.b16 %v961
        %v1082 = vunpack.c.l.b16 %v962
        %v1083 = vunpack.c.l.b16 %v963
        %v1084 = vunpack.c.l.b16 %v964
        %v1085 = vpack.c.b16 %v1070, %v1069
        %v1086 = vpack.c.b16 %v1072, %v1071
        %v1087 = vpack.c.b16 %v1074, %v1073
        %v1088 = vpack.c.b16 %v1076, %v1075
        %v1089 = vpack.c.b16 %v1078, %v1077
        %v1090 = vpack.c.b16 %v1080, %v1079
        %v1091 = vpack.c.b16 %v1082, %v1081
        %v1092 = vpack.c.b16 %v1084, %v1083
        %vm1093 = vcmask 523264
        %v1095 = vsel %vm1093, %v1045, 0
        %v1098 = vsel %vm1093, %v1046, 0
        %v1101 = vsel %vm1093, %v1047, 0
        %v1104 = vsel %vm1093, %v1048, 0
        %v1107 = vsel %vm1093, %v1049, 0
        %v1110 = vsel %vm1093, %v1050, 0
        %v1113 = vsel %vm1093, %v1051, 0
        %v1116 = vsel %vm1093, %v1052, 0
        %v1119 = vsel %vm1093, %v1085, 0
        %v1122 = vsel %vm1093, %v1086, 0
        %v1125 = vsel %vm1093, %v1087, 0
        %v1128 = vsel %vm1093, %v1088, 0
        %v1131 = vsel %vm1093, %v1089, 0
        %v1134 = vsel %vm1093, %v1090, 0
        %v1137 = vsel %vm1093, %v1091, 0
        %v1140 = vsel %vm1093, %v1092, 0
        %1142 = vmatprep.subr.bf16.mxu0 0
        %1143 = vmatpush1.bf16.xpose.msra.mxu0 %v1140
        %1144 = vmatprep.subr.bf16.mxu0 0
        %1145 = vmatpush1.bf16.xpose.msra.mxu0 %v1137
        %1146 = vmatprep.subr.bf16.mxu0 0
        %1147 = vmatpush1.bf16.xpose.msra.mxu0 %v1134
        %1148 = vmatprep.subr.bf16.mxu0 0
        %1149 = vmatpush1.bf16.xpose.msra.mxu0 %v1131
        %1150 = vmatprep.subr.bf16.mxu0 0
        %1151 = vmatpush1.bf16.xpose.msra.mxu0 %v1128
        %1152 = vmatprep.subr.bf16.mxu0 0
        %1153 = vmatpush1.bf16.xpose.msra.mxu0 %v1125
        %1154 = vmatprep.subr.bf16.mxu0 0
        %1155 = vmatpush1.bf16.xpose.msra.mxu0 %v1122
        %1156 = vmatprep.subr.bf16.mxu0 0
        %1157 = vmatpush1.bf16.xpose.msra.mxu0 %v1119
        %1158 = vmatprep.subr.bf16.mxu0 0
        %1159 = vmatpush2.bf16.xpose.msra.mxu0 0
        %1160 = vmatprep.subr.bf16.mxu0 0
        %1161 = vmatpush2.bf16.xpose.msra.mxu0 0
        %1162 = vmatprep.subr.bf16.mxu0 0
        %1163 = vmatpush2.bf16.xpose.msra.mxu0 0
        %1164 = vmatprep.subr.bf16.mxu0 0
        %1165 = vmatpush2.bf16.xpose.msra.mxu0 0
        %1166 = vmatprep.subr.bf16.mxu0 0
        %1167 = vmatpush2.bf16.xpose.msra.mxu0 0
        %1168 = vmatprep.subr.bf16.mxu0 0
        %1169 = vmatpush2.bf16.xpose.msra.mxu0 0
        %1170 = vmatprep.subr.bf16.mxu0 0
        %1171 = vmatpush2.bf16.xpose.msra.mxu0 0
        %1172 = vmatprep.subr.bf16.mxu0 0
        %1173 = vmatpush2.bf16.xpose.msra.mxu0 0
        %1174 = vmatprep.mubr.bf16.mxu0 0
        %1175 = vmatmul.mubr.bf16.gmra.mxu0 %v1095
        %v1176 = vpop.f32.mrf.mxu0
        %v1177 = vadd.f32 %v997, %v1176
        %v1178 = vpop.f32.mrf.mxu0
        %v1179 = vpop.f32.mrf.mxu0
        %v1180 = vadd.f32 %v998, %v1179
        %v1181 = vpop.f32.mrf.mxu0
        %1182 = vmatprep.mubr.bf16.mxu0 0
        %1183 = vmatmul.mubr.bf16.gmra.mxu0 %v1098
        %v1184 = vpop.f32.mrf.mxu0
        %v1185 = vadd.f32 %v999, %v1184
        %v1186 = vpop.f32.mrf.mxu0
        %v1187 = vpop.f32.mrf.mxu0
        %v1188 = vadd.f32 %v1000, %v1187
        %v1189 = vpop.f32.mrf.mxu0
        %1190 = vmatprep.mubr.bf16.mxu0 0
        %1191 = vmatmul.mubr.bf16.gmra.mxu0 %v1101
        %v1192 = vpop.f32.mrf.mxu0
        %v1193 = vadd.f32 %v1001, %v1192
        %v1194 = vpop.f32.mrf.mxu0
        %v1195 = vpop.f32.mrf.mxu0
        %v1196 = vadd.f32 %v1002, %v1195
        %v1197 = vpop.f32.mrf.mxu0
        %1198 = vmatprep.mubr.bf16.mxu0 0
        %1199 = vmatmul.mubr.bf16.gmra.mxu0 %v1104
        %v1200 = vpop.f32.mrf.mxu0
        %v1201 = vadd.f32 %v1003, %v1200
        %v1202 = vpop.f32.mrf.mxu0
        %v1203 = vpop.f32.mrf.mxu0
        %v1204 = vadd.f32 %v1004, %v1203
        %v1205 = vpop.f32.mrf.mxu0
        %1206 = vmatprep.mubr.bf16.mxu0 0
        %1207 = vmatmul.mubr.bf16.gmra.mxu0 %v1107
        %v1208 = vpop.f32.mrf.mxu0
        %v1209 = vadd.f32 %v1005, %v1208
        %v1210 = vpop.f32.mrf.mxu0
        %v1211 = vpop.f32.mrf.mxu0
        %v1212 = vadd.f32 %v1006, %v1211
        %v1213 = vpop.f32.mrf.mxu0
        %1214 = vmatprep.mubr.bf16.mxu0 0
        %1215 = vmatmul.mubr.bf16.gmra.mxu0 %v1110
        %v1216 = vpop.f32.mrf.mxu0
        %v1217 = vadd.f32 %v1007, %v1216
        %v1218 = vpop.f32.mrf.mxu0
        %v1219 = vpop.f32.mrf.mxu0
        %v1220 = vadd.f32 %v1008, %v1219
        %v1221 = vpop.f32.mrf.mxu0
        %1222 = vmatprep.mubr.bf16.mxu0 0
        %1223 = vmatmul.mubr.bf16.gmra.mxu0 %v1113
        %v1224 = vpop.f32.mrf.mxu0
        %v1225 = vadd.f32 %v1009, %v1224
        %v1226 = vpop.f32.mrf.mxu0
        %v1227 = vpop.f32.mrf.mxu0
        %v1228 = vadd.f32 %v1010, %v1227
        %v1229 = vpop.f32.mrf.mxu0
        %1230 = vmatprep.mubr.bf16.mxu0 0
        %1231 = vmatmul.mubr.bf16.gmra.mxu0 %v1116
        %v1232 = vpop.f32.mrf.mxu0
        %v1233 = vadd.f32 %v1011, %v1232
        %v1234 = vpop.f32.mrf.mxu0
        %v1235 = vpop.f32.mrf.mxu0
        %v1236 = vadd.f32 %v1012, %v1235
        %v1237 = vpop.f32.mrf.mxu0
        %1238 = vdwg.mxu0
        %v1240 = vlaneseq
        %v1241 = vshrl.u32 %v1240, 7
        %v1242 = vsub.s32 0, %v1241
        %v1243 = vrot.slane %v932, %v1242
        %v1245 = vadd.f32 %v1177, %v1243
        %v1246 = vadd.f32 %v1180, %v1243
        %v1247 = vadd.f32 %v1185, %v1243
        %v1248 = vadd.f32 %v1188, %v1243
        %v1249 = vadd.f32 %v1193, %v1243
        %v1250 = vadd.f32 %v1196, %v1243
        %v1251 = vadd.f32 %v1201, %v1243
        %v1252 = vadd.f32 %v1204, %v1243
        %v1253 = vadd.f32 %v1209, %v1243
        %v1254 = vadd.f32 %v1212, %v1243
        %v1255 = vadd.f32 %v1217, %v1243
        %v1256 = vadd.f32 %v1220, %v1243
        %v1257 = vadd.f32 %v1225, %v1243
        %v1258 = vadd.f32 %v1228, %v1243
        %v1259 = vadd.f32 %v1233, %v1243
        %v1260 = vadd.f32 %v1236, %v1243
        %v1261 = vld [vmem:[#allocation2] sm:$0xff]
        %v1262 = vld [vmem:[#allocation2 + $0x8] sm:$0xff]
        %v1263 = vld [vmem:[#allocation2 + $0x10] sm:$0xff]
        %v1264 = vld [vmem:[#allocation2 + $0x18] sm:$0xff]
        %v1265 = vld [vmem:[#allocation2 + $0x20] sm:$0xff]
        %v1266 = vld [vmem:[#allocation2 + $0x28] sm:$0xff]
        %v1267 = vld [vmem:[#allocation2 + $0x30] sm:$0xff]
        %v1268 = vld [vmem:[#allocation2 + $0x38] sm:$0xff]
        %v1269 = vld [vmem:[#allocation2 + $0x40] sm:$0xff]
        %v1270 = vld [vmem:[#allocation2 + $0x48] sm:$0xff]
        %v1271 = vld [vmem:[#allocation2 + $0x50] sm:$0xff]
        %v1272 = vld [vmem:[#allocation2 + $0x58] sm:$0xff]
        %v1273 = vld [vmem:[#allocation2 + $0x60] sm:$0xff]
        %v1274 = vld [vmem:[#allocation2 + $0x68] sm:$0xff]
        %v1275 = vld [vmem:[#allocation2 + $0x70] sm:$0xff]
        %v1276 = vld [vmem:[#allocation2 + $0x78] sm:$0xff]
        %1277 = vmax.xlane.f32.xlu0 %v1245
        %v1278 = vpop.xlane.xlu0 %1277
        %1279 = vmax.xlane.f32.xlu0 %v1246
        %v1280 = vpop.xlane.xlu0 %1279
        %1281 = vmax.xlane.f32.xlu0 %v1247
        %v1282 = vpop.xlane.xlu0 %1281
        %1283 = vmax.xlane.f32.xlu0 %v1248
        %v1284 = vpop.xlane.xlu0 %1283
        %1285 = vmax.xlane.f32.xlu0 %v1249
        %v1286 = vpop.xlane.xlu0 %1285
        %1287 = vmax.xlane.f32.xlu0 %v1250
        %v1288 = vpop.xlane.xlu0 %1287
        %1289 = vmax.xlane.f32.xlu0 %v1251
        %v1290 = vpop.xlane.xlu0 %1289
        %1291 = vmax.xlane.f32.xlu0 %v1252
        %v1292 = vpop.xlane.xlu0 %1291
        %1293 = vmax.xlane.f32.xlu0 %v1253
        %v1294 = vpop.xlane.xlu0 %1293
        %1295 = vmax.xlane.f32.xlu0 %v1254
        %v1296 = vpop.xlane.xlu0 %1295
        %1297 = vmax.xlane.f32.xlu0 %v1255
        %v1298 = vpop.xlane.xlu0 %1297
        %1299 = vmax.xlane.f32.xlu0 %v1256
        %v1300 = vpop.xlane.xlu0 %1299
        %1301 = vmax.xlane.f32.xlu0 %v1257
        %v1302 = vpop.xlane.xlu0 %1301
        %1303 = vmax.xlane.f32.xlu0 %v1258
        %v1304 = vpop.xlane.xlu0 %1303
        %1305 = vmax.xlane.f32.xlu0 %v1259
        %v1306 = vpop.xlane.xlu0 %1305
        %1307 = vmax.xlane.f32.xlu0 %v1260
        %v1308 = vpop.xlane.xlu0 %1307
        %v1309 = vmax.f32 %v1261, %v1278
        %v1310 = vmax.f32 %v1262, %v1280
        %v1311 = vmax.f32 %v1263, %v1282
        %v1312 = vmax.f32 %v1264, %v1284
        %v1313 = vmax.f32 %v1265, %v1286
        %v1314 = vmax.f32 %v1266, %v1288
        %v1315 = vmax.f32 %v1267, %v1290
        %v1316 = vmax.f32 %v1268, %v1292
        %v1317 = vmax.f32 %v1269, %v1294
        %v1318 = vmax.f32 %v1270, %v1296
        %v1319 = vmax.f32 %v1271, %v1298
        %v1320 = vmax.f32 %v1272, %v1300
        %v1321 = vmax.f32 %v1273, %v1302
        %v1322 = vmax.f32 %v1274, %v1304
        %v1323 = vmax.f32 %v1275, %v1306
        %v1324 = vmax.f32 %v1276, %v1308
        %v1325 = vsub.f32 %v1261, %v1309
        %v1326 = vsub.f32 %v1262, %v1310
        %v1327 = vsub.f32 %v1263, %v1311
        %v1328 = vsub.f32 %v1264, %v1312
        %v1329 = vsub.f32 %v1265, %v1313
        %v1330 = vsub.f32 %v1266, %v1314
        %v1331 = vsub.f32 %v1267, %v1315
        %v1332 = vsub.f32 %v1268, %v1316
        %v1333 = vsub.f32 %v1269, %v1317
        %v1334 = vsub.f32 %v1270, %v1318
        %v1335 = vsub.f32 %v1271, %v1319
        %v1336 = vsub.f32 %v1272, %v1320
        %v1337 = vsub.f32 %v1273, %v1321
        %v1338 = vsub.f32 %v1274, %v1322
        %v1339 = vsub.f32 %v1275, %v1323
        %v1340 = vsub.f32 %v1276, %v1324
        %v1341 = vmul.f32 %v1325, 1.442695
        %v1342 = vpow.pop %v1341
        %v1343 = vmul.f32 %v1326, 1.442695
        %v1344 = vpow.pop %v1343
        %v1345 = vmul.f32 %v1327, 1.442695
        %v1346 = vpow.pop %v1345
        %v1347 = vmul.f32 %v1328, 1.442695
        %v1348 = vpow.pop %v1347
        %v1349 = vmul.f32 %v1329, 1.442695
        %v1350 = vpow.pop %v1349
        %v1351 = vmul.f32 %v1330, 1.442695
        %v1352 = vpow.pop %v1351
        %v1353 = vmul.f32 %v1331, 1.442695
        %v1354 = vpow.pop %v1353
        %v1355 = vmul.f32 %v1332, 1.442695
        %v1356 = vpow.pop %v1355
        %v1357 = vmul.f32 %v1333, 1.442695
        %v1358 = vpow.pop %v1357
        %v1359 = vmul.f32 %v1334, 1.442695
        %v1360 = vpow.pop %v1359
        %v1361 = vmul.f32 %v1335, 1.442695
        %v1362 = vpow.pop %v1361
        %v1363 = vmul.f32 %v1336, 1.442695
        %v1364 = vpow.pop %v1363
        %v1365 = vmul.f32 %v1337, 1.442695
        %v1366 = vpow.pop %v1365
        %v1367 = vmul.f32 %v1338, 1.442695
        %v1368 = vpow.pop %v1367
        %v1369 = vmul.f32 %v1339, 1.442695
        %v1370 = vpow.pop %v1369
        %v1371 = vmul.f32 %v1340, 1.442695
        %v1372 = vpow.pop %v1371
        %1374 = vset.pattern.permute.xlu0 0
        %1375 = vperm.xlu0 %1374, %v1309
        %v1376 = vpop.permute.xlu0 %1375
        %1379 = vset.pattern.permute.xlu0 0
        %1380 = vperm.xlu0 %1379, %v1310
        %v1381 = vpop.permute.xlu0 %1380
        %1384 = vset.pattern.permute.xlu0 0
        %1385 = vperm.xlu0 %1384, %v1311
        %v1386 = vpop.permute.xlu0 %1385
        %1389 = vset.pattern.permute.xlu0 0
        %1390 = vperm.xlu0 %1389, %v1312
        %v1391 = vpop.permute.xlu0 %1390
        %1394 = vset.pattern.permute.xlu0 0
        %1395 = vperm.xlu0 %1394, %v1313
        %v1396 = vpop.permute.xlu0 %1395
        %1399 = vset.pattern.permute.xlu0 0
        %1400 = vperm.xlu0 %1399, %v1314
        %v1401 = vpop.permute.xlu0 %1400
        %1404 = vset.pattern.permute.xlu0 0
        %1405 = vperm.xlu0 %1404, %v1315
        %v1406 = vpop.permute.xlu0 %1405
        %1409 = vset.pattern.permute.xlu0 0
        %1410 = vperm.xlu0 %1409, %v1316
        %v1411 = vpop.permute.xlu0 %1410
        %1414 = vset.pattern.permute.xlu0 0
        %1415 = vperm.xlu0 %1414, %v1317
        %v1416 = vpop.permute.xlu0 %1415
        %1419 = vset.pattern.permute.xlu0 0
        %1420 = vperm.xlu0 %1419, %v1318
        %v1421 = vpop.permute.xlu0 %1420
        %1424 = vset.pattern.permute.xlu0 0
        %1425 = vperm.xlu0 %1424, %v1319
        %v1426 = vpop.permute.xlu0 %1425
        %1429 = vset.pattern.permute.xlu0 0
        %1430 = vperm.xlu0 %1429, %v1320
        %v1431 = vpop.permute.xlu0 %1430
        %1434 = vset.pattern.permute.xlu0 0
        %1435 = vperm.xlu0 %1434, %v1321
        %v1436 = vpop.permute.xlu0 %1435
        %1439 = vset.pattern.permute.xlu0 0
        %1440 = vperm.xlu0 %1439, %v1322
        %v1441 = vpop.permute.xlu0 %1440
        %1444 = vset.pattern.permute.xlu0 0
        %1445 = vperm.xlu0 %1444, %v1323
        %v1446 = vpop.permute.xlu0 %1445
        %1449 = vset.pattern.permute.xlu0 0
        %1450 = vperm.xlu0 %1449, %v1324
        %v1451 = vpop.permute.xlu0 %1450
        %v1453 = vsub.f32 %v1245, %v1376
        %v1454 = vsub.f32 %v1246, %v1381
        %v1455 = vsub.f32 %v1247, %v1386
        %v1456 = vsub.f32 %v1248, %v1391
        %v1457 = vsub.f32 %v1249, %v1396
        %v1458 = vsub.f32 %v1250, %v1401
        %v1459 = vsub.f32 %v1251, %v1406
        %v1460 = vsub.f32 %v1252, %v1411
        %v1461 = vsub.f32 %v1253, %v1416
        %v1462 = vsub.f32 %v1254, %v1421
        %v1463 = vsub.f32 %v1255, %v1426
        %v1464 = vsub.f32 %v1256, %v1431
        %v1465 = vsub.f32 %v1257, %v1436
        %v1466 = vsub.f32 %v1258, %v1441
        %v1467 = vsub.f32 %v1259, %v1446
        %v1468 = vsub.f32 %v1260, %v1451
        %v1469 = vmul.f32 %v1453, 1.442695
        %v1470 = vpow.pop %v1469
        %v1471 = vmul.f32 %v1454, 1.442695
        %v1472 = vpow.pop %v1471
        %v1473 = vmul.f32 %v1455, 1.442695
        %v1474 = vpow.pop %v1473
        %v1475 = vmul.f32 %v1456, 1.442695
        %v1476 = vpow.pop %v1475
        %v1477 = vmul.f32 %v1457, 1.442695
        %v1478 = vpow.pop %v1477
        %v1479 = vmul.f32 %v1458, 1.442695
        %v1480 = vpow.pop %v1479
        %v1481 = vmul.f32 %v1459, 1.442695
        %v1482 = vpow.pop %v1481
        %v1483 = vmul.f32 %v1460, 1.442695
        %v1484 = vpow.pop %v1483
        %v1485 = vmul.f32 %v1461, 1.442695
        %v1486 = vpow.pop %v1485
        %v1487 = vmul.f32 %v1462, 1.442695
        %v1488 = vpow.pop %v1487
        %v1489 = vmul.f32 %v1463, 1.442695
        %v1490 = vpow.pop %v1489
        %v1491 = vmul.f32 %v1464, 1.442695
        %v1492 = vpow.pop %v1491
        %v1493 = vmul.f32 %v1465, 1.442695
        %v1494 = vpow.pop %v1493
        %v1495 = vmul.f32 %v1466, 1.442695
        %v1496 = vpow.pop %v1495
        %v1497 = vmul.f32 %v1467, 1.442695
        %v1498 = vpow.pop %v1497
        %v1499 = vmul.f32 %v1468, 1.442695
        %v1500 = vpow.pop %v1499
        %v1501 = vld [vmem:[#allocation3] sm:$0xff]
        %v1502 = vld [vmem:[#allocation3 + $0x8] sm:$0xff]
        %v1503 = vld [vmem:[#allocation3 + $0x10] sm:$0xff]
        %v1504 = vld [vmem:[#allocation3 + $0x18] sm:$0xff]
        %v1505 = vld [vmem:[#allocation3 + $0x20] sm:$0xff]
        %v1506 = vld [vmem:[#allocation3 + $0x28] sm:$0xff]
        %v1507 = vld [vmem:[#allocation3 + $0x30] sm:$0xff]
        %v1508 = vld [vmem:[#allocation3 + $0x38] sm:$0xff]
        %v1509 = vld [vmem:[#allocation3 + $0x40] sm:$0xff]
        %v1510 = vld [vmem:[#allocation3 + $0x48] sm:$0xff]
        %v1511 = vld [vmem:[#allocation3 + $0x50] sm:$0xff]
        %v1512 = vld [vmem:[#allocation3 + $0x58] sm:$0xff]
        %v1513 = vld [vmem:[#allocation3 + $0x60] sm:$0xff]
        %v1514 = vld [vmem:[#allocation3 + $0x68] sm:$0xff]
        %v1515 = vld [vmem:[#allocation3 + $0x70] sm:$0xff]
        %v1516 = vld [vmem:[#allocation3 + $0x78] sm:$0xff]
        %v1517 = vmul.f32 %v1342, %v1501
        %v1518 = vmul.f32 %v1344, %v1502
        %v1519 = vmul.f32 %v1346, %v1503
        %v1520 = vmul.f32 %v1348, %v1504
        %v1521 = vmul.f32 %v1350, %v1505
        %v1522 = vmul.f32 %v1352, %v1506
        %v1523 = vmul.f32 %v1354, %v1507
        %v1524 = vmul.f32 %v1356, %v1508
        %v1525 = vmul.f32 %v1358, %v1509
        %v1526 = vmul.f32 %v1360, %v1510
        %v1527 = vmul.f32 %v1362, %v1511
        %v1528 = vmul.f32 %v1364, %v1512
        %v1529 = vmul.f32 %v1366, %v1513
        %v1530 = vmul.f32 %v1368, %v1514
        %v1531 = vmul.f32 %v1370, %v1515
        %v1532 = vmul.f32 %v1372, %v1516
        %1533 = vadd.xlane.f32.xlu0 %v1470
        %v1534 = vpop.xlane.xlu0 %1533
        %1535 = vadd.xlane.f32.xlu0 %v1472
        %v1536 = vpop.xlane.xlu0 %1535
        %1537 = vadd.xlane.f32.xlu0 %v1474
        %v1538 = vpop.xlane.xlu0 %1537
        %1539 = vadd.xlane.f32.xlu0 %v1476
        %v1540 = vpop.xlane.xlu0 %1539
        %1541 = vadd.xlane.f32.xlu0 %v1478
        %v1542 = vpop.xlane.xlu0 %1541
        %1543 = vadd.xlane.f32.xlu0 %v1480
        %v1544 = vpop.xlane.xlu0 %1543
        %1545 = vadd.xlane.f32.xlu0 %v1482
        %v1546 = vpop.xlane.xlu0 %1545
        %1547 = vadd.xlane.f32.xlu0 %v1484
        %v1548 = vpop.xlane.xlu0 %1547
        %1549 = vadd.xlane.f32.xlu0 %v1486
        %v1550 = vpop.xlane.xlu0 %1549
        %1551 = vadd.xlane.f32.xlu0 %v1488
        %v1552 = vpop.xlane.xlu0 %1551
        %1553 = vadd.xlane.f32.xlu0 %v1490
        %v1554 = vpop.xlane.xlu0 %1553
        %1555 = vadd.xlane.f32.xlu0 %v1492
        %v1556 = vpop.xlane.xlu0 %1555
        %1557 = vadd.xlane.f32.xlu0 %v1494
        %v1558 = vpop.xlane.xlu0 %1557
        %1559 = vadd.xlane.f32.xlu0 %v1496
        %v1560 = vpop.xlane.xlu0 %1559
        %1561 = vadd.xlane.f32.xlu0 %v1498
        %v1562 = vpop.xlane.xlu0 %1561
        %1563 = vadd.xlane.f32.xlu0 %v1500
        %v1564 = vpop.xlane.xlu0 %1563
        %v1565 = vadd.f32 %v1517, %v1534
        %v1566 = vadd.f32 %v1518, %v1536
        %v1567 = vadd.f32 %v1519, %v1538
        %v1568 = vadd.f32 %v1520, %v1540
        %v1569 = vadd.f32 %v1521, %v1542
        %v1570 = vadd.f32 %v1522, %v1544
        %v1571 = vadd.f32 %v1523, %v1546
        %v1572 = vadd.f32 %v1524, %v1548
        %v1573 = vadd.f32 %v1525, %v1550
        %v1574 = vadd.f32 %v1526, %v1552
        %v1575 = vadd.f32 %v1527, %v1554
        %v1576 = vadd.f32 %v1528, %v1556
        %v1577 = vadd.f32 %v1529, %v1558
        %v1578 = vadd.f32 %v1530, %v1560
        %v1579 = vadd.f32 %v1531, %v1562
        %v1580 = vadd.f32 %v1532, %v1564
        %vm1581 = vcmask 7168
        %1582 = vst.msk [vmem:[#allocation3] sm:$0xff] %vm1581, %v1565
        %1583 = vst.msk [vmem:[#allocation3 + $0x8] sm:$0xff] %vm1581, %v1566
        %1584 = vst.msk [vmem:[#allocation3 + $0x10] sm:$0xff] %vm1581, %v1567
        %1585 = vst.msk [vmem:[#allocation3 + $0x18] sm:$0xff] %vm1581, %v1568
        %1586 = vst.msk [vmem:[#allocation3 + $0x20] sm:$0xff] %vm1581, %v1569
        %1587 = vst.msk [vmem:[#allocation3 + $0x28] sm:$0xff] %vm1581, %v1570
        %1588 = vst.msk [vmem:[#allocation3 + $0x30] sm:$0xff] %vm1581, %v1571
        %1589 = vst.msk [vmem:[#allocation3 + $0x38] sm:$0xff] %vm1581, %v1572
        %1590 = vst.msk [vmem:[#allocation3 + $0x40] sm:$0xff] %vm1581, %v1573
        %1591 = vst.msk [vmem:[#allocation3 + $0x48] sm:$0xff] %vm1581, %v1574
        %1592 = vst.msk [vmem:[#allocation3 + $0x50] sm:$0xff] %vm1581, %v1575
        %1593 = vst.msk [vmem:[#allocation3 + $0x58] sm:$0xff] %vm1581, %v1576
        %1594 = vst.msk [vmem:[#allocation3 + $0x60] sm:$0xff] %vm1581, %v1577
        %1595 = vst.msk [vmem:[#allocation3 + $0x68] sm:$0xff] %vm1581, %v1578
        %1596 = vst.msk [vmem:[#allocation3 + $0x70] sm:$0xff] %vm1581, %v1579
        %1597 = vst.msk [vmem:[#allocation3 + $0x78] sm:$0xff] %vm1581, %v1580
        %v1598 = vld [vmem:[#allocation4] sm:$0xff]
        %v1599 = vld [vmem:[#allocation4 + $0x8] sm:$0xff]
        %v1600 = vld [vmem:[#allocation4 + $0x10] sm:$0xff]
        %v1601 = vld [vmem:[#allocation4 + $0x18] sm:$0xff]
        %v1602 = vld [vmem:[#allocation4 + $0x20] sm:$0xff]
        %v1603 = vld [vmem:[#allocation4 + $0x28] sm:$0xff]
        %v1604 = vld [vmem:[#allocation4 + $0x30] sm:$0xff]
        %v1605 = vld [vmem:[#allocation4 + $0x38] sm:$0xff]
        %v1606 = vld [vmem:[#allocation4 + $0x40] sm:$0xff]
        %v1607 = vld [vmem:[#allocation4 + $0x48] sm:$0xff]
        %v1608 = vld [vmem:[#allocation4 + $0x50] sm:$0xff]
        %v1609 = vld [vmem:[#allocation4 + $0x58] sm:$0xff]
        %v1610 = vld [vmem:[#allocation4 + $0x60] sm:$0xff]
        %v1611 = vld [vmem:[#allocation4 + $0x68] sm:$0xff]
        %v1612 = vld [vmem:[#allocation4 + $0x70] sm:$0xff]
        %v1613 = vld [vmem:[#allocation4 + $0x78] sm:$0xff]
        %1615 = vset.pattern.permute.xlu0 0
        %1616 = vperm.xlu0 %1615, %v1342
        %v1617 = vpop.permute.xlu0 %1616
        %1620 = vset.pattern.permute.xlu0 0
        %1621 = vperm.xlu0 %1620, %v1344
        %v1622 = vpop.permute.xlu0 %1621
        %1625 = vset.pattern.permute.xlu0 0
        %1626 = vperm.xlu0 %1625, %v1346
        %v1627 = vpop.permute.xlu0 %1626
        %1630 = vset.pattern.permute.xlu0 0
        %1631 = vperm.xlu0 %1630, %v1348
        %v1632 = vpop.permute.xlu0 %1631
        %1635 = vset.pattern.permute.xlu0 0
        %1636 = vperm.xlu0 %1635, %v1350
        %v1637 = vpop.permute.xlu0 %1636
        %1640 = vset.pattern.permute.xlu0 0
        %1641 = vperm.xlu0 %1640, %v1352
        %v1642 = vpop.permute.xlu0 %1641
        %1645 = vset.pattern.permute.xlu0 0
        %1646 = vperm.xlu0 %1645, %v1354
        %v1647 = vpop.permute.xlu0 %1646
        %1650 = vset.pattern.permute.xlu0 0
        %1651 = vperm.xlu0 %1650, %v1356
        %v1652 = vpop.permute.xlu0 %1651
        %1655 = vset.pattern.permute.xlu0 0
        %1656 = vperm.xlu0 %1655, %v1358
        %v1657 = vpop.permute.xlu0 %1656
        %1660 = vset.pattern.permute.xlu0 0
        %1661 = vperm.xlu0 %1660, %v1360
        %v1662 = vpop.permute.xlu0 %1661
        %1665 = vset.pattern.permute.xlu0 0
        %1666 = vperm.xlu0 %1665, %v1362
        %v1667 = vpop.permute.xlu0 %1666
        %1670 = vset.pattern.permute.xlu0 0
        %1671 = vperm.xlu0 %1670, %v1364
        %v1672 = vpop.permute.xlu0 %1671
        %1675 = vset.pattern.permute.xlu0 0
        %1676 = vperm.xlu0 %1675, %v1366
        %v1677 = vpop.permute.xlu0 %1676
        %1680 = vset.pattern.permute.xlu0 0
        %1681 = vperm.xlu0 %1680, %v1368
        %v1682 = vpop.permute.xlu0 %1681
        %1685 = vset.pattern.permute.xlu0 0
        %1686 = vperm.xlu0 %1685, %v1370
        %v1687 = vpop.permute.xlu0 %1686
        %1690 = vset.pattern.permute.xlu0 0
        %1691 = vperm.xlu0 %1690, %v1372
        %v1692 = vpop.permute.xlu0 %1691
        %v1694 = vmul.f32 %v1617, %v1598
        %v1695 = vmul.f32 %v1622, %v1599
        %v1696 = vmul.f32 %v1627, %v1600
        %v1697 = vmul.f32 %v1632, %v1601
        %v1698 = vmul.f32 %v1637, %v1602
        %v1699 = vmul.f32 %v1642, %v1603
        %v1700 = vmul.f32 %v1647, %v1604
        %v1701 = vmul.f32 %v1652, %v1605
        %v1702 = vmul.f32 %v1657, %v1606
        %v1703 = vmul.f32 %v1662, %v1607
        %v1704 = vmul.f32 %v1667, %v1608
        %v1705 = vmul.f32 %v1672, %v1609
        %v1706 = vmul.f32 %v1677, %v1610
        %v1707 = vmul.f32 %v1682, %v1611
        %v1708 = vmul.f32 %v1687, %v1612
        %v1709 = vmul.f32 %v1692, %v1613
        %v1710 = vpack.c.bf16 %v1472, %v1470
        %v1711 = vpack.c.bf16 %v1476, %v1474
        %v1712 = vpack.c.bf16 %v1480, %v1478
        %v1713 = vpack.c.bf16 %v1484, %v1482
        %v1714 = vpack.c.bf16 %v1488, %v1486
        %v1715 = vpack.c.bf16 %v1492, %v1490
        %v1716 = vpack.c.bf16 %v1496, %v1494
        %v1717 = vpack.c.bf16 %v1500, %v1498
        %v1734 = vunpack.c.l.b16 %v965
        %v1735 = vunpack.c.l.b16 %v966
        %v1736 = vunpack.c.l.b16 %v967
        %v1737 = vunpack.c.l.b16 %v968
        %v1738 = vunpack.c.l.b16 %v969
        %v1739 = vunpack.c.l.b16 %v970
        %v1740 = vunpack.c.l.b16 %v971
        %v1741 = vunpack.c.l.b16 %v972
        %v1742 = vunpack.c.l.b16 %v973
        %v1743 = vunpack.c.l.b16 %v974
        %v1744 = vunpack.c.l.b16 %v975
        %v1745 = vunpack.c.l.b16 %v976
        %v1746 = vunpack.c.l.b16 %v977
        %v1747 = vunpack.c.l.b16 %v978
        %v1748 = vunpack.c.l.b16 %v979
        %v1749 = vunpack.c.l.b16 %v980
        %v1750 = vpack.c.b16 %v1735, %v1734
        %v1751 = vpack.c.b16 %v1737, %v1736
        %v1752 = vpack.c.b16 %v1739, %v1738
        %v1753 = vpack.c.b16 %v1741, %v1740
        %v1754 = vpack.c.b16 %v1743, %v1742
        %v1755 = vpack.c.b16 %v1745, %v1744
        %v1756 = vpack.c.b16 %v1747, %v1746
        %v1757 = vpack.c.b16 %v1749, %v1748
        %1766 = vmatprep.subr.bf16.mxu0 0
        %1767 = vmatpush1.bf16.msra.mxu0 %v1757
        %1768 = vmatprep.subr.bf16.mxu0 0
        %1769 = vmatpush1.bf16.msra.mxu0 %v1756
        %1770 = vmatprep.subr.bf16.mxu0 0
        %1771 = vmatpush1.bf16.msra.mxu0 %v1755
        %1772 = vmatprep.subr.bf16.mxu0 0
        %1773 = vmatpush1.bf16.msra.mxu0 %v1754
        %1774 = vmatprep.subr.bf16.mxu0 0
        %1775 = vmatpush1.bf16.msra.mxu0 %v1753
        %1776 = vmatprep.subr.bf16.mxu0 0
        %1777 = vmatpush1.bf16.msra.mxu0 %v1752
        %1778 = vmatprep.subr.bf16.mxu0 0
        %1779 = vmatpush1.bf16.msra.mxu0 %v1751
        %1780 = vmatprep.subr.bf16.mxu0 0
        %1781 = vmatpush1.bf16.msra.mxu0 %v1750
        %1782 = vmatprep.subr.bf16.mxu0 0
        %1783 = vmatpush2.bf16.msra.mxu0 0
        %1784 = vmatprep.subr.bf16.mxu0 0
        %1785 = vmatpush2.bf16.msra.mxu0 0
        %1786 = vmatprep.subr.bf16.mxu0 0
        %1787 = vmatpush2.bf16.msra.mxu0 0
        %1788 = vmatprep.subr.bf16.mxu0 0
        %1789 = vmatpush2.bf16.msra.mxu0 0
        %1790 = vmatprep.subr.bf16.mxu0 0
        %1791 = vmatpush2.bf16.msra.mxu0 0
        %1792 = vmatprep.subr.bf16.mxu0 0
        %1793 = vmatpush2.bf16.msra.mxu0 0
        %1794 = vmatprep.subr.bf16.mxu0 0
        %1795 = vmatpush2.bf16.msra.mxu0 0
        %1796 = vmatprep.subr.bf16.mxu0 0
        %1797 = vmatpush2.bf16.msra.mxu0 0
        %1798 = vmatprep.mubr.bf16.mxu0 0
        %1799 = vmatmul.mubr.bf16.gmra.mxu0 %v1710
        %v1800 = vpop.f32.mrf.mxu0
        %v1801 = vadd.f32 0.0, %v1800
        %v1802 = vpop.f32.mrf.mxu0
        %v1803 = vpop.f32.mrf.mxu0
        %v1804 = vadd.f32 0.0, %v1803
        %v1805 = vpop.f32.mrf.mxu0
        %1806 = vmatprep.mubr.bf16.mxu0 0
        %1807 = vmatmul.mubr.bf16.gmra.mxu0 %v1711
        %v1808 = vpop.f32.mrf.mxu0
        %v1809 = vadd.f32 0.0, %v1808
        %v1810 = vpop.f32.mrf.mxu0
        %v1811 = vpop.f32.mrf.mxu0
        %v1812 = vadd.f32 0.0, %v1811
        %v1813 = vpop.f32.mrf.mxu0
        %1814 = vmatprep.mubr.bf16.mxu0 0
        %1815 = vmatmul.mubr.bf16.gmra.mxu0 %v1712
        %v1816 = vpop.f32.mrf.mxu0
        %v1817 = vadd.f32 0.0, %v1816
        %v1818 = vpop.f32.mrf.mxu0
        %v1819 = vpop.f32.mrf.mxu0
        %v1820 = vadd.f32 0.0, %v1819
        %v1821 = vpop.f32.mrf.mxu0
        %1822 = vmatprep.mubr.bf16.mxu0 0
        %1823 = vmatmul.mubr.bf16.gmra.mxu0 %v1713
        %v1824 = vpop.f32.mrf.mxu0
        %v1825 = vadd.f32 0.0, %v1824
        %v1826 = vpop.f32.mrf.mxu0
        %v1827 = vpop.f32.mrf.mxu0
        %v1828 = vadd.f32 0.0, %v1827
        %v1829 = vpop.f32.mrf.mxu0
        %1830 = vmatprep.mubr.bf16.mxu0 0
        %1831 = vmatmul.mubr.bf16.gmra.mxu0 %v1714
        %v1832 = vpop.f32.mrf.mxu0
        %v1833 = vadd.f32 0.0, %v1832
        %v1834 = vpop.f32.mrf.mxu0
        %v1835 = vpop.f32.mrf.mxu0
        %v1836 = vadd.f32 0.0, %v1835
        %v1837 = vpop.f32.mrf.mxu0
        %1838 = vmatprep.mubr.bf16.mxu0 0
        %1839 = vmatmul.mubr.bf16.gmra.mxu0 %v1715
        %v1840 = vpop.f32.mrf.mxu0
        %v1841 = vadd.f32 0.0, %v1840
        %v1842 = vpop.f32.mrf.mxu0
        %v1843 = vpop.f32.mrf.mxu0
        %v1844 = vadd.f32 0.0, %v1843
        %v1845 = vpop.f32.mrf.mxu0
        %1846 = vmatprep.mubr.bf16.mxu0 0
        %1847 = vmatmul.mubr.bf16.gmra.mxu0 %v1716
        %v1848 = vpop.f32.mrf.mxu0
        %v1849 = vadd.f32 0.0, %v1848
        %v1850 = vpop.f32.mrf.mxu0
        %v1851 = vpop.f32.mrf.mxu0
        %v1852 = vadd.f32 0.0, %v1851
        %v1853 = vpop.f32.mrf.mxu0
        %1854 = vmatprep.mubr.bf16.mxu0 0
        %1855 = vmatmul.mubr.bf16.gmra.mxu0 %v1717
        %v1856 = vpop.f32.mrf.mxu0
        %v1857 = vadd.f32 0.0, %v1856
        %v1858 = vpop.f32.mrf.mxu0
        %v1859 = vpop.f32.mrf.mxu0
        %v1860 = vadd.f32 0.0, %v1859
        %v1861 = vpop.f32.mrf.mxu0
        %1862 = vdwg.mxu0
        %v1863 = vadd.f32 %v1694, %v1801
        %v1864 = vadd.f32 %v1695, %v1804
        %v1865 = vadd.f32 %v1696, %v1809
        %v1866 = vadd.f32 %v1697, %v1812
        %v1867 = vadd.f32 %v1698, %v1817
        %v1868 = vadd.f32 %v1699, %v1820
        %v1869 = vadd.f32 %v1700, %v1825
        %v1870 = vadd.f32 %v1701, %v1828
        %v1871 = vadd.f32 %v1702, %v1833
        %v1872 = vadd.f32 %v1703, %v1836
        %v1873 = vadd.f32 %v1704, %v1841
        %v1874 = vadd.f32 %v1705, %v1844
        %v1875 = vadd.f32 %v1706, %v1849
        %v1876 = vadd.f32 %v1707, %v1852
        %v1877 = vadd.f32 %v1708, %v1857
        %v1878 = vadd.f32 %v1709, %v1860
        %1879 = vst.msk [vmem:[#allocation4] sm:$0xff] %vm1093, %v1863
        %1880 = vst.msk [vmem:[#allocation4 + $0x8] sm:$0xff] %vm1093, %v1864
        %1881 = vst.msk [vmem:[#allocation4 + $0x10] sm:$0xff] %vm1093, %v1865
        %1882 = vst.msk [vmem:[#allocation4 + $0x18] sm:$0xff] %vm1093, %v1866
        %1883 = vst.msk [vmem:[#allocation4 + $0x20] sm:$0xff] %vm1093, %v1867
        %1884 = vst.msk [vmem:[#allocation4 + $0x28] sm:$0xff] %vm1093, %v1868
        %1885 = vst.msk [vmem:[#allocation4 + $0x30] sm:$0xff] %vm1093, %v1869
        %1886 = vst.msk [vmem:[#allocation4 + $0x38] sm:$0xff] %vm1093, %v1870
        %1887 = vst.msk [vmem:[#allocation4 + $0x40] sm:$0xff] %vm1093, %v1871
        %1888 = vst.msk [vmem:[#allocation4 + $0x48] sm:$0xff] %vm1093, %v1872
        %1889 = vst.msk [vmem:[#allocation4 + $0x50] sm:$0xff] %vm1093, %v1873
        %1890 = vst.msk [vmem:[#allocation4 + $0x58] sm:$0xff] %vm1093, %v1874
        %1891 = vst.msk [vmem:[#allocation4 + $0x60] sm:$0xff] %vm1093, %v1875
        %1892 = vst.msk [vmem:[#allocation4 + $0x68] sm:$0xff] %vm1093, %v1876
        %1893 = vst.msk [vmem:[#allocation4 + $0x70] sm:$0xff] %vm1093, %v1877
        %1894 = vst.msk [vmem:[#allocation4 + $0x78] sm:$0xff] %vm1093, %v1878
        %1895 = vst.msk [vmem:[#allocation2] sm:$0xff] %vm1581, %v1309
        %1896 = vst.msk [vmem:[#allocation2 + $0x8] sm:$0xff] %vm1581, %v1310
        %1897 = vst.msk [vmem:[#allocation2 + $0x10] sm:$0xff] %vm1581, %v1311
        %1898 = vst.msk [vmem:[#allocation2 + $0x18] sm:$0xff] %vm1581, %v1312
        %1899 = vst.msk [vmem:[#allocation2 + $0x20] sm:$0xff] %vm1581, %v1313
        %1900 = vst.msk [vmem:[#allocation2 + $0x28] sm:$0xff] %vm1581, %v1314
        %1901 = vst.msk [vmem:[#allocation2 + $0x30] sm:$0xff] %vm1581, %v1315
        %1902 = vst.msk [vmem:[#allocation2 + $0x38] sm:$0xff] %vm1581, %v1316
        %1903 = vst.msk [vmem:[#allocation2 + $0x40] sm:$0xff] %vm1581, %v1317
        %1904 = vst.msk [vmem:[#allocation2 + $0x48] sm:$0xff] %vm1581, %v1318
        %1905 = vst.msk [vmem:[#allocation2 + $0x50] sm:$0xff] %vm1581, %v1319
        %1906 = vst.msk [vmem:[#allocation2 + $0x58] sm:$0xff] %vm1581, %v1320
        %1907 = vst.msk [vmem:[#allocation2 + $0x60] sm:$0xff] %vm1581, %v1321
        %1908 = vst.msk [vmem:[#allocation2 + $0x68] sm:$0xff] %vm1581, %v1322
        %1909 = vst.msk [vmem:[#allocation2 + $0x70] sm:$0xff] %vm1581, %v1323
        %1910 = vst.msk [vmem:[#allocation2 + $0x78] sm:$0xff] %vm1581, %v1324
        %v1911 = vld [vmem:[%s758] sm:$0xf]
        %v1912 = vld [vmem:[%s758 + $0x4] sm:$0xf]
        %v1913 = vld [vmem:[%s758 + $0x8] sm:$0xf]
        %v1914 = vld [vmem:[%s758 + $0xc] sm:$0xf]
        %v1915 = vld [vmem:[%s758 + $0x10] sm:$0xf]
        %v1916 = vld [vmem:[%s758 + $0x14] sm:$0xf]
        %v1917 = vld [vmem:[%s758 + $0x18] sm:$0xf]
        %v1918 = vld [vmem:[%s758 + $0x1c] sm:$0xf]
        %v1919 = vld [vmem:[%s758 + $0x20] sm:$0xf]
        %v1920 = vld [vmem:[%s758 + $0x24] sm:$0xf]
        %v1921 = vld [vmem:[%s758 + $0x28] sm:$0xf]
        %v1922 = vld [vmem:[%s758 + $0x2c] sm:$0xf]
        %v1923 = vld [vmem:[%s758 + $0x30] sm:$0xf]
        %v1924 = vld [vmem:[%s758 + $0x34] sm:$0xf]
        %v1925 = vld [vmem:[%s758 + $0x38] sm:$0xf]
        %v1926 = vld [vmem:[%s758 + $0x3c] sm:$0xf]
        %v1927 = vld [vmem:[%s765] sm:$0xf]
        %v1928 = vld [vmem:[%s765 + $0x4] sm:$0xf]
        %v1929 = vld [vmem:[%s765 + $0x8] sm:$0xf]
        %v1930 = vld [vmem:[%s765 + $0xc] sm:$0xf]
        %v1931 = vld [vmem:[%s765 + $0x10] sm:$0xf]
        %v1932 = vld [vmem:[%s765 + $0x14] sm:$0xf]
        %v1933 = vld [vmem:[%s765 + $0x18] sm:$0xf]
        %v1934 = vld [vmem:[%s765 + $0x1c] sm:$0xf]
        %v1935 = vld [vmem:[%s765 + $0x20] sm:$0xf]
        %v1936 = vld [vmem:[%s765 + $0x24] sm:$0xf]
        %v1937 = vld [vmem:[%s765 + $0x28] sm:$0xf]
        %v1938 = vld [vmem:[%s765 + $0x2c] sm:$0xf]
        %v1939 = vld [vmem:[%s765 + $0x30] sm:$0xf]
        %v1940 = vld [vmem:[%s765 + $0x34] sm:$0xf]
        %v1941 = vld [vmem:[%s765 + $0x38] sm:$0xf]
        %v1942 = vld [vmem:[%s765 + $0x3c] sm:$0xf]
        %v1943 = vld [vmem:[%s772] sm:$0xf]
        %v1944 = vld [vmem:[%s772 + $0x4] sm:$0xf]
        %v1945 = vld [vmem:[%s772 + $0x8] sm:$0xf]
        %v1946 = vld [vmem:[%s772 + $0xc] sm:$0xf]
        %v1947 = vld [vmem:[%s772 + $0x10] sm:$0xf]
        %v1948 = vld [vmem:[%s772 + $0x14] sm:$0xf]
        %v1949 = vld [vmem:[%s772 + $0x18] sm:$0xf]
        %v1950 = vld [vmem:[%s772 + $0x1c] sm:$0xf]
        %v1951 = vld [vmem:[%s772 + $0x20] sm:$0xf]
        %v1952 = vld [vmem:[%s772 + $0x24] sm:$0xf]
        %v1953 = vld [vmem:[%s772 + $0x28] sm:$0xf]
        %v1954 = vld [vmem:[%s772 + $0x2c] sm:$0xf]
        %v1955 = vld [vmem:[%s772 + $0x30] sm:$0xf]
        %v1956 = vld [vmem:[%s772 + $0x34] sm:$0xf]
        %v1957 = vld [vmem:[%s772 + $0x38] sm:$0xf]
        %v1958 = vld [vmem:[%s772 + $0x3c] sm:$0xf]
        %s1959 = scalar_lea.vmem %s779, 64 [#allocation8]
        %v1960 = vld [vmem:[%s1959] sm:$0xf]
        %v1961 = vld [vmem:[%s1959 + $0x4] sm:$0xf]
        %v1962 = vld [vmem:[%s1959 + $0x8] sm:$0xf]
        %v1963 = vld [vmem:[%s1959 + $0xc] sm:$0xf]
        %v1964 = vld [vmem:[%s1959 + $0x10] sm:$0xf]
        %v1965 = vld [vmem:[%s1959 + $0x14] sm:$0xf]
        %v1966 = vld [vmem:[%s1959 + $0x18] sm:$0xf]
        %v1967 = vld [vmem:[%s1959 + $0x1c] sm:$0xf]
        %v1968 = vld [vmem:[%s1959 + $0x20] sm:$0xf]
        %v1969 = vld [vmem:[%s1959 + $0x24] sm:$0xf]
        %v1970 = vld [vmem:[%s1959 + $0x28] sm:$0xf]
        %v1971 = vld [vmem:[%s1959 + $0x2c] sm:$0xf]
        %v1972 = vld [vmem:[%s1959 + $0x30] sm:$0xf]
        %v1973 = vld [vmem:[%s1959 + $0x34] sm:$0xf]
        %v1974 = vld [vmem:[%s1959 + $0x38] sm:$0xf]
        %v1975 = vld [vmem:[%s1959 + $0x3c] sm:$0xf]
        %v1976 = vunpack.c.l.bf16 %v1960
        %v1977 = vunpack.c.l.bf16 %v1961
        %v1978 = vunpack.c.l.bf16 %v1962
        %v1979 = vunpack.c.l.bf16 %v1963
        %v1980 = vunpack.c.l.bf16 %v1964
        %v1981 = vunpack.c.l.bf16 %v1965
        %v1982 = vunpack.c.l.bf16 %v1966
        %v1983 = vunpack.c.l.bf16 %v1967
        %v1984 = vunpack.c.l.bf16 %v1968
        %v1985 = vunpack.c.l.bf16 %v1969
        %v1986 = vunpack.c.l.bf16 %v1970
        %v1987 = vunpack.c.l.bf16 %v1971
        %v1988 = vunpack.c.l.bf16 %v1972
        %v1989 = vunpack.c.l.bf16 %v1973
        %v1990 = vunpack.c.l.bf16 %v1974
        %v1991 = vunpack.c.l.bf16 %v1975
        %v2008 = vunpack.c.l.b16 %v1911
        %v2009 = vunpack.c.l.b16 %v1912
        %v2010 = vunpack.c.l.b16 %v1913
        %v2011 = vunpack.c.l.b16 %v1914
        %v2012 = vunpack.c.l.b16 %v1915
        %v2013 = vunpack.c.l.b16 %v1916
        %v2014 = vunpack.c.l.b16 %v1917
        %v2015 = vunpack.c.l.b16 %v1918
        %v2016 = vunpack.c.l.b16 %v1919
        %v2017 = vunpack.c.l.b16 %v1920
        %v2018 = vunpack.c.l.b16 %v1921
        %v2019 = vunpack.c.l.b16 %v1922
        %v2020 = vunpack.c.l.b16 %v1923
        %v2021 = vunpack.c.l.b16 %v1924
        %v2022 = vunpack.c.l.b16 %v1925
        %v2023 = vunpack.c.l.b16 %v1926
        %v2024 = vpack.c.b16 %v2009, %v2008
        %v2025 = vpack.c.b16 %v2011, %v2010
        %v2026 = vpack.c.b16 %v2013, %v2012
        %v2027 = vpack.c.b16 %v2015, %v2014
        %v2028 = vpack.c.b16 %v2017, %v2016
        %v2029 = vpack.c.b16 %v2019, %v2018
        %v2030 = vpack.c.b16 %v2021, %v2020
        %v2031 = vpack.c.b16 %v2023, %v2022
        %2032 = vrot.lane.b32.xlu0 %v2024, 64
        %v2033 = vpop.permute.xlu0 %2032
        %2034 = vrot.lane.b32.xlu0 %v2025, 64
        %v2035 = vpop.permute.xlu0 %2034
        %2036 = vrot.lane.b32.xlu0 %v2026, 64
        %v2037 = vpop.permute.xlu0 %2036
        %2038 = vrot.lane.b32.xlu0 %v2027, 64
        %v2039 = vpop.permute.xlu0 %2038
        %2040 = vrot.lane.b32.xlu0 %v2028, 64
        %v2041 = vpop.permute.xlu0 %2040
        %2042 = vrot.lane.b32.xlu0 %v2029, 64
        %v2043 = vpop.permute.xlu0 %2042
        %2044 = vrot.lane.b32.xlu0 %v2030, 64
        %v2045 = vpop.permute.xlu0 %2044
        %2046 = vrot.lane.b32.xlu0 %v2031, 64
        %v2047 = vpop.permute.xlu0 %2046
        %v2064 = vunpack.c.l.b16 %v1927
        %v2065 = vunpack.c.l.b16 %v1928
        %v2066 = vunpack.c.l.b16 %v1929
        %v2067 = vunpack.c.l.b16 %v1930
        %v2068 = vunpack.c.l.b16 %v1931
        %v2069 = vunpack.c.l.b16 %v1932
        %v2070 = vunpack.c.l.b16 %v1933
        %v2071 = vunpack.c.l.b16 %v1934
        %v2072 = vunpack.c.l.b16 %v1935
        %v2073 = vunpack.c.l.b16 %v1936
        %v2074 = vunpack.c.l.b16 %v1937
        %v2075 = vunpack.c.l.b16 %v1938
        %v2076 = vunpack.c.l.b16 %v1939
        %v2077 = vunpack.c.l.b16 %v1940
        %v2078 = vunpack.c.l.b16 %v1941
        %v2079 = vunpack.c.l.b16 %v1942
        %v2080 = vpack.c.b16 %v2065, %v2064
        %v2081 = vpack.c.b16 %v2067, %v2066
        %v2082 = vpack.c.b16 %v2069, %v2068
        %v2083 = vpack.c.b16 %v2071, %v2070
        %v2084 = vpack.c.b16 %v2073, %v2072
        %v2085 = vpack.c.b16 %v2075, %v2074
        %v2086 = vpack.c.b16 %v2077, %v2076
        %v2087 = vpack.c.b16 %v2079, %v2078
        %2088 = vrot.lane.b32.xlu0 %v2080, 64
        %v2089 = vpop.permute.xlu0 %2088
        %2090 = vrot.lane.b32.xlu0 %v2081, 64
        %v2091 = vpop.permute.xlu0 %2090
        %2092 = vrot.lane.b32.xlu0 %v2082, 64
        %v2093 = vpop.permute.xlu0 %2092
        %2094 = vrot.lane.b32.xlu0 %v2083, 64
        %v2095 = vpop.permute.xlu0 %2094
        %2096 = vrot.lane.b32.xlu0 %v2084, 64
        %v2097 = vpop.permute.xlu0 %2096
        %2098 = vrot.lane.b32.xlu0 %v2085, 64
        %v2099 = vpop.permute.xlu0 %2098
        %2100 = vrot.lane.b32.xlu0 %v2086, 64
        %v2101 = vpop.permute.xlu0 %2100
        %2102 = vrot.lane.b32.xlu0 %v2087, 64
        %v2103 = vpop.permute.xlu0 %2102
        %v2105 = vsel %vm1093, %v2033, 0
        %v2108 = vsel %vm1093, %v2035, 0
        %v2111 = vsel %vm1093, %v2037, 0
        %v2114 = vsel %vm1093, %v2039, 0
        %v2117 = vsel %vm1093, %v2041, 0
        %v2120 = vsel %vm1093, %v2043, 0
        %v2123 = vsel %vm1093, %v2045, 0
        %v2126 = vsel %vm1093, %v2047, 0
        %v2129 = vsel %vm1093, %v2089, 0
        %v2132 = vsel %vm1093, %v2091, 0
        %v2135 = vsel %vm1093, %v2093, 0
        %v2138 = vsel %vm1093, %v2095, 0
        %v2141 = vsel %vm1093, %v2097, 0
        %v2144 = vsel %vm1093, %v2099, 0
        %v2147 = vsel %vm1093, %v2101, 0
        %v2150 = vsel %vm1093, %v2103, 0
        %2152 = vmatprep.subr.bf16.mxu0 0
        %2153 = vmatpush1.bf16.xpose.msra.mxu0 %v2150
        %2154 = vmatprep.subr.bf16.mxu0 0
        %2155 = vmatpush1.bf16.xpose.msra.mxu0 %v2147
        %2156 = vmatprep.subr.bf16.mxu0 0
        %2157 = vmatpush1.bf16.xpose.msra.mxu0 %v2144
        %2158 = vmatprep.subr.bf16.mxu0 0
        %2159 = vmatpush1.bf16.xpose.msra.mxu0 %v2141
        %2160 = vmatprep.subr.bf16.mxu0 0
        %2161 = vmatpush1.bf16.xpose.msra.mxu0 %v2138
        %2162 = vmatprep.subr.bf16.mxu0 0
        %2163 = vmatpush1.bf16.xpose.msra.mxu0 %v2135
        %2164 = vmatprep.subr.bf16.mxu0 0
        %2165 = vmatpush1.bf16.xpose.msra.mxu0 %v2132
        %2166 = vmatprep.subr.bf16.mxu0 0
        %2167 = vmatpush1.bf16.xpose.msra.mxu0 %v2129
        %2168 = vmatprep.subr.bf16.mxu0 0
        %2169 = vmatpush2.bf16.xpose.msra.mxu0 0
        %2170 = vmatprep.subr.bf16.mxu0 0
        %2171 = vmatpush2.bf16.xpose.msra.mxu0 0
        %2172 = vmatprep.subr.bf16.mxu0 0
        %2173 = vmatpush2.bf16.xpose.msra.mxu0 0
        %2174 = vmatprep.subr.bf16.mxu0 0
        %2175 = vmatpush2.bf16.xpose.msra.mxu0 0
        %2176 = vmatprep.subr.bf16.mxu0 0
        %2177 = vmatpush2.bf16.xpose.msra.mxu0 0
        %2178 = vmatprep.subr.bf16.mxu0 0
        %2179 = vmatpush2.bf16.xpose.msra.mxu0 0
        %2180 = vmatprep.subr.bf16.mxu0 0
        %2181 = vmatpush2.bf16.xpose.msra.mxu0 0
        %2182 = vmatprep.subr.bf16.mxu0 0
        %2183 = vmatpush2.bf16.xpose.msra.mxu0 0
        %2184 = vmatprep.mubr.bf16.mxu0 0
        %2185 = vmatmul.mubr.bf16.gmra.mxu0 %v2105
        %v2186 = vpop.f32.mrf.mxu0
        %v2187 = vadd.f32 %v1976, %v2186
        %v2188 = vpop.f32.mrf.mxu0
        %v2189 = vpop.f32.mrf.mxu0
        %v2190 = vadd.f32 %v1977, %v2189
        %v2191 = vpop.f32.mrf.mxu0
        %2192 = vmatprep.mubr.bf16.mxu0 0
        %2193 = vmatmul.mubr.bf16.gmra.mxu0 %v2108
        %v2194 = vpop.f32.mrf.mxu0
        %v2195 = vadd.f32 %v1978, %v2194
        %v2196 = vpop.f32.mrf.mxu0
        %v2197 = vpop.f32.mrf.mxu0
        %v2198 = vadd.f32 %v1979, %v2197
        %v2199 = vpop.f32.mrf.mxu0
        %2200 = vmatprep.mubr.bf16.mxu0 0
        %2201 = vmatmul.mubr.bf16.gmra.mxu0 %v2111
        %v2202 = vpop.f32.mrf.mxu0
        %v2203 = vadd.f32 %v1980, %v2202
        %v2204 = vpop.f32.mrf.mxu0
        %v2205 = vpop.f32.mrf.mxu0
        %v2206 = vadd.f32 %v1981, %v2205
        %v2207 = vpop.f32.mrf.mxu0
        %2208 = vmatprep.mubr.bf16.mxu0 0
        %2209 = vmatmul.mubr.bf16.gmra.mxu0 %v2114
        %v2210 = vpop.f32.mrf.mxu0
        %v2211 = vadd.f32 %v1982, %v2210
        %v2212 = vpop.f32.mrf.mxu0
        %v2213 = vpop.f32.mrf.mxu0
        %v2214 = vadd.f32 %v1983, %v2213
        %v2215 = vpop.f32.mrf.mxu0
        %2216 = vmatprep.mubr.bf16.mxu0 0
        %2217 = vmatmul.mubr.bf16.gmra.mxu0 %v2117
        %v2218 = vpop.f32.mrf.mxu0
        %v2219 = vadd.f32 %v1984, %v2218
        %v2220 = vpop.f32.mrf.mxu0
        %v2221 = vpop.f32.mrf.mxu0
        %v2222 = vadd.f32 %v1985, %v2221
        %v2223 = vpop.f32.mrf.mxu0
        %2224 = vmatprep.mubr.bf16.mxu0 0
        %2225 = vmatmul.mubr.bf16.gmra.mxu0 %v2120
        %v2226 = vpop.f32.mrf.mxu0
        %v2227 = vadd.f32 %v1986, %v2226
        %v2228 = vpop.f32.mrf.mxu0
        %v2229 = vpop.f32.mrf.mxu0
        %v2230 = vadd.f32 %v1987, %v2229
        %v2231 = vpop.f32.mrf.mxu0
        %2232 = vmatprep.mubr.bf16.mxu0 0
        %2233 = vmatmul.mubr.bf16.gmra.mxu0 %v2123
        %v2234 = vpop.f32.mrf.mxu0
        %v2235 = vadd.f32 %v1988, %v2234
        %v2236 = vpop.f32.mrf.mxu0
        %v2237 = vpop.f32.mrf.mxu0
        %v2238 = vadd.f32 %v1989, %v2237
        %v2239 = vpop.f32.mrf.mxu0
        %2240 = vmatprep.mubr.bf16.mxu0 0
        %2241 = vmatmul.mubr.bf16.gmra.mxu0 %v2126
        %v2242 = vpop.f32.mrf.mxu0
        %v2243 = vadd.f32 %v1990, %v2242
        %v2244 = vpop.f32.mrf.mxu0
        %v2245 = vpop.f32.mrf.mxu0
        %v2246 = vadd.f32 %v1991, %v2245
        %v2247 = vpop.f32.mrf.mxu0
        %2248 = vdwg.mxu0
        %v2249 = vadd.f32 %v2187, %v1243
        %v2250 = vadd.f32 %v2190, %v1243
        %v2251 = vadd.f32 %v2195, %v1243
        %v2252 = vadd.f32 %v2198, %v1243
        %v2253 = vadd.f32 %v2203, %v1243
        %v2254 = vadd.f32 %v2206, %v1243
        %v2255 = vadd.f32 %v2211, %v1243
        %v2256 = vadd.f32 %v2214, %v1243
        %v2257 = vadd.f32 %v2219, %v1243
        %v2258 = vadd.f32 %v2222, %v1243
        %v2259 = vadd.f32 %v2227, %v1243
        %v2260 = vadd.f32 %v2230, %v1243
        %v2261 = vadd.f32 %v2235, %v1243
        %v2262 = vadd.f32 %v2238, %v1243
        %v2263 = vadd.f32 %v2243, %v1243
        %v2264 = vadd.f32 %v2246, %v1243
        %s2265 = scalar_lea.vmem [#allocation2], 128
        %v2266 = vld [vmem:[%s2265] sm:$0xff]
        %v2267 = vld [vmem:[%s2265 + $0x8] sm:$0xff]
        %v2268 = vld [vmem:[%s2265 + $0x10] sm:$0xff]
        %v2269 = vld [vmem:[%s2265 + $0x18] sm:$0xff]
        %v2270 = vld [vmem:[%s2265 + $0x20] sm:$0xff]
        %v2271 = vld [vmem:[%s2265 + $0x28] sm:$0xff]
        %v2272 = vld [vmem:[%s2265 + $0x30] sm:$0xff]
        %v2273 = vld [vmem:[%s2265 + $0x38] sm:$0xff]
        %v2274 = vld [vmem:[%s2265 + $0x40] sm:$0xff]
        %v2275 = vld [vmem:[%s2265 + $0x48] sm:$0xff]
        %v2276 = vld [vmem:[%s2265 + $0x50] sm:$0xff]
        %v2277 = vld [vmem:[%s2265 + $0x58] sm:$0xff]
        %v2278 = vld [vmem:[%s2265 + $0x60] sm:$0xff]
        %v2279 = vld [vmem:[%s2265 + $0x68] sm:$0xff]
        %v2280 = vld [vmem:[%s2265 + $0x70] sm:$0xff]
        %v2281 = vld [vmem:[%s2265 + $0x78] sm:$0xff]
        %2282 = vmax.xlane.f32.xlu0 %v2249
        %v2283 = vpop.xlane.xlu0 %2282
        %2284 = vmax.xlane.f32.xlu0 %v2250
        %v2285 = vpop.xlane.xlu0 %2284
        %2286 = vmax.xlane.f32.xlu0 %v2251
        %v2287 = vpop.xlane.xlu0 %2286
        %2288 = vmax.xlane.f32.xlu0 %v2252
        %v2289 = vpop.xlane.xlu0 %2288
        %2290 = vmax.xlane.f32.xlu0 %v2253
        %v2291 = vpop.xlane.xlu0 %2290
        %2292 = vmax.xlane.f32.xlu0 %v2254
        %v2293 = vpop.xlane.xlu0 %2292
        %2294 = vmax.xlane.f32.xlu0 %v2255
        %v2295 = vpop.xlane.xlu0 %2294
        %2296 = vmax.xlane.f32.xlu0 %v2256
        %v2297 = vpop.xlane.xlu0 %2296
        %2298 = vmax.xlane.f32.xlu0 %v2257
        %v2299 = vpop.xlane.xlu0 %2298
        %2300 = vmax.xlane.f32.xlu0 %v2258
        %v2301 = vpop.xlane.xlu0 %2300
        %2302 = vmax.xlane.f32.xlu0 %v2259
        %v2303 = vpop.xlane.xlu0 %2302
        %2304 = vmax.xlane.f32.xlu0 %v2260
        %v2305 = vpop.xlane.xlu0 %2304
        %2306 = vmax.xlane.f32.xlu0 %v2261
        %v2307 = vpop.xlane.xlu0 %2306
        %2308 = vmax.xlane.f32.xlu0 %v2262
        %v2309 = vpop.xlane.xlu0 %2308
        %2310 = vmax.xlane.f32.xlu0 %v2263
        %v2311 = vpop.xlane.xlu0 %2310
        %2312 = vmax.xlane.f32.xlu0 %v2264
        %v2313 = vpop.xlane.xlu0 %2312
        %v2314 = vmax.f32 %v2266, %v2283
        %v2315 = vmax.f32 %v2267, %v2285
        %v2316 = vmax.f32 %v2268, %v2287
        %v2317 = vmax.f32 %v2269, %v2289
        %v2318 = vmax.f32 %v2270, %v2291
        %v2319 = vmax.f32 %v2271, %v2293
        %v2320 = vmax.f32 %v2272, %v2295
        %v2321 = vmax.f32 %v2273, %v2297
        %v2322 = vmax.f32 %v2274, %v2299
        %v2323 = vmax.f32 %v2275, %v2301
        %v2324 = vmax.f32 %v2276, %v2303
        %v2325 = vmax.f32 %v2277, %v2305
        %v2326 = vmax.f32 %v2278, %v2307
        %v2327 = vmax.f32 %v2279, %v2309
        %v2328 = vmax.f32 %v2280, %v2311
        %v2329 = vmax.f32 %v2281, %v2313
        %v2330 = vsub.f32 %v2266, %v2314
        %v2331 = vsub.f32 %v2267, %v2315
        %v2332 = vsub.f32 %v2268, %v2316
        %v2333 = vsub.f32 %v2269, %v2317
        %v2334 = vsub.f32 %v2270, %v2318
        %v2335 = vsub.f32 %v2271, %v2319
        %v2336 = vsub.f32 %v2272, %v2320
        %v2337 = vsub.f32 %v2273, %v2321
        %v2338 = vsub.f32 %v2274, %v2322
        %v2339 = vsub.f32 %v2275, %v2323
        %v2340 = vsub.f32 %v2276, %v2324
        %v2341 = vsub.f32 %v2277, %v2325
        %v2342 = vsub.f32 %v2278, %v2326
        %v2343 = vsub.f32 %v2279, %v2327
        %v2344 = vsub.f32 %v2280, %v2328
        %v2345 = vsub.f32 %v2281, %v2329
        %v2346 = vmul.f32 %v2330, 1.442695
        %v2347 = vpow.pop %v2346
        %v2348 = vmul.f32 %v2331, 1.442695
        %v2349 = vpow.pop %v2348
        %v2350 = vmul.f32 %v2332, 1.442695
        %v2351 = vpow.pop %v2350
        %v2352 = vmul.f32 %v2333, 1.442695
        %v2353 = vpow.pop %v2352
        %v2354 = vmul.f32 %v2334, 1.442695
        %v2355 = vpow.pop %v2354
        %v2356 = vmul.f32 %v2335, 1.442695
        %v2357 = vpow.pop %v2356
        %v2358 = vmul.f32 %v2336, 1.442695
        %v2359 = vpow.pop %v2358
        %v2360 = vmul.f32 %v2337, 1.442695
        %v2361 = vpow.pop %v2360
        %v2362 = vmul.f32 %v2338, 1.442695
        %v2363 = vpow.pop %v2362
        %v2364 = vmul.f32 %v2339, 1.442695
        %v2365 = vpow.pop %v2364
        %v2366 = vmul.f32 %v2340, 1.442695
        %v2367 = vpow.pop %v2366
        %v2368 = vmul.f32 %v2341, 1.442695
        %v2369 = vpow.pop %v2368
        %v2370 = vmul.f32 %v2342, 1.442695
        %v2371 = vpow.pop %v2370
        %v2372 = vmul.f32 %v2343, 1.442695
        %v2373 = vpow.pop %v2372
        %v2374 = vmul.f32 %v2344, 1.442695
        %v2375 = vpow.pop %v2374
        %v2376 = vmul.f32 %v2345, 1.442695
        %v2377 = vpow.pop %v2376
        %2379 = vset.pattern.permute.xlu0 0
        %2380 = vperm.xlu0 %2379, %v2314
        %v2381 = vpop.permute.xlu0 %2380
        %2384 = vset.pattern.permute.xlu0 0
        %2385 = vperm.xlu0 %2384, %v2315
        %v2386 = vpop.permute.xlu0 %2385
        %2389 = vset.pattern.permute.xlu0 0
        %2390 = vperm.xlu0 %2389, %v2316
        %v2391 = vpop.permute.xlu0 %2390
        %2394 = vset.pattern.permute.xlu0 0
        %2395 = vperm.xlu0 %2394, %v2317
        %v2396 = vpop.permute.xlu0 %2395
        %2399 = vset.pattern.permute.xlu0 0
        %2400 = vperm.xlu0 %2399, %v2318
        %v2401 = vpop.permute.xlu0 %2400
        %2404 = vset.pattern.permute.xlu0 0
        %2405 = vperm.xlu0 %2404, %v2319
        %v2406 = vpop.permute.xlu0 %2405
        %2409 = vset.pattern.permute.xlu0 0
        %2410 = vperm.xlu0 %2409, %v2320
        %v2411 = vpop.permute.xlu0 %2410
        %2414 = vset.pattern.permute.xlu0 0
        %2415 = vperm.xlu0 %2414, %v2321
        %v2416 = vpop.permute.xlu0 %2415
        %2419 = vset.pattern.permute.xlu0 0
        %2420 = vperm.xlu0 %2419, %v2322
        %v2421 = vpop.permute.xlu0 %2420
        %2424 = vset.pattern.permute.xlu0 0
        %2425 = vperm.xlu0 %2424, %v2323
        %v2426 = vpop.permute.xlu0 %2425
        %2429 = vset.pattern.permute.xlu0 0
        %2430 = vperm.xlu0 %2429, %v2324
        %v2431 = vpop.permute.xlu0 %2430
        %2434 = vset.pattern.permute.xlu0 0
        %2435 = vperm.xlu0 %2434, %v2325
        %v2436 = vpop.permute.xlu0 %2435
        %2439 = vset.pattern.permute.xlu0 0
        %2440 = vperm.xlu0 %2439, %v2326
        %v2441 = vpop.permute.xlu0 %2440
        %2444 = vset.pattern.permute.xlu0 0
        %2445 = vperm.xlu0 %2444, %v2327
        %v2446 = vpop.permute.xlu0 %2445
        %2449 = vset.pattern.permute.xlu0 0
        %2450 = vperm.xlu0 %2449, %v2328
        %v2451 = vpop.permute.xlu0 %2450
        %2454 = vset.pattern.permute.xlu0 0
        %2455 = vperm.xlu0 %2454, %v2329
        %v2456 = vpop.permute.xlu0 %2455
        %v2458 = vsub.f32 %v2249, %v2381
        %v2459 = vsub.f32 %v2250, %v2386
        %v2460 = vsub.f32 %v2251, %v2391
        %v2461 = vsub.f32 %v2252, %v2396
        %v2462 = vsub.f32 %v2253, %v2401
        %v2463 = vsub.f32 %v2254, %v2406
        %v2464 = vsub.f32 %v2255, %v2411
        %v2465 = vsub.f32 %v2256, %v2416
        %v2466 = vsub.f32 %v2257, %v2421
        %v2467 = vsub.f32 %v2258, %v2426
        %v2468 = vsub.f32 %v2259, %v2431
        %v2469 = vsub.f32 %v2260, %v2436
        %v2470 = vsub.f32 %v2261, %v2441
        %v2471 = vsub.f32 %v2262, %v2446
        %v2472 = vsub.f32 %v2263, %v2451
        %v2473 = vsub.f32 %v2264, %v2456
        %v2474 = vmul.f32 %v2458, 1.442695
        %v2475 = vpow.pop %v2474
        %v2476 = vmul.f32 %v2459, 1.442695
        %v2477 = vpow.pop %v2476
        %v2478 = vmul.f32 %v2460, 1.442695
        %v2479 = vpow.pop %v2478
        %v2480 = vmul.f32 %v2461, 1.442695
        %v2481 = vpow.pop %v2480
        %v2482 = vmul.f32 %v2462, 1.442695
        %v2483 = vpow.pop %v2482
        %v2484 = vmul.f32 %v2463, 1.442695
        %v2485 = vpow.pop %v2484
        %v2486 = vmul.f32 %v2464, 1.442695
        %v2487 = vpow.pop %v2486
        %v2488 = vmul.f32 %v2465, 1.442695
        %v2489 = vpow.pop %v2488
        %v2490 = vmul.f32 %v2466, 1.442695
        %v2491 = vpow.pop %v2490
        %v2492 = vmul.f32 %v2467, 1.442695
        %v2493 = vpow.pop %v2492
        %v2494 = vmul.f32 %v2468, 1.442695
        %v2495 = vpow.pop %v2494
        %v2496 = vmul.f32 %v2469, 1.442695
        %v2497 = vpow.pop %v2496
        %v2498 = vmul.f32 %v2470, 1.442695
        %v2499 = vpow.pop %v2498
        %v2500 = vmul.f32 %v2471, 1.442695
        %v2501 = vpow.pop %v2500
        %v2502 = vmul.f32 %v2472, 1.442695
        %v2503 = vpow.pop %v2502
        %v2504 = vmul.f32 %v2473, 1.442695
        %v2505 = vpow.pop %v2504
        %s2506 = scalar_lea.vmem [#allocation3], 128
        %v2507 = vld [vmem:[%s2506] sm:$0xff]
        %v2508 = vld [vmem:[%s2506 + $0x8] sm:$0xff]
        %v2509 = vld [vmem:[%s2506 + $0x10] sm:$0xff]
        %v2510 = vld [vmem:[%s2506 + $0x18] sm:$0xff]
        %v2511 = vld [vmem:[%s2506 + $0x20] sm:$0xff]
        %v2512 = vld [vmem:[%s2506 + $0x28] sm:$0xff]
        %v2513 = vld [vmem:[%s2506 + $0x30] sm:$0xff]
        %v2514 = vld [vmem:[%s2506 + $0x38] sm:$0xff]
        %v2515 = vld [vmem:[%s2506 + $0x40] sm:$0xff]
        %v2516 = vld [vmem:[%s2506 + $0x48] sm:$0xff]
        %v2517 = vld [vmem:[%s2506 + $0x50] sm:$0xff]
        %v2518 = vld [vmem:[%s2506 + $0x58] sm:$0xff]
        %v2519 = vld [vmem:[%s2506 + $0x60] sm:$0xff]
        %v2520 = vld [vmem:[%s2506 + $0x68] sm:$0xff]
        %v2521 = vld [vmem:[%s2506 + $0x70] sm:$0xff]
        %v2522 = vld [vmem:[%s2506 + $0x78] sm:$0xff]
        %v2523 = vmul.f32 %v2347, %v2507
        %v2524 = vmul.f32 %v2349, %v2508
        %v2525 = vmul.f32 %v2351, %v2509
        %v2526 = vmul.f32 %v2353, %v2510
        %v2527 = vmul.f32 %v2355, %v2511
        %v2528 = vmul.f32 %v2357, %v2512
        %v2529 = vmul.f32 %v2359, %v2513
        %v2530 = vmul.f32 %v2361, %v2514
        %v2531 = vmul.f32 %v2363, %v2515
        %v2532 = vmul.f32 %v2365, %v2516
        %v2533 = vmul.f32 %v2367, %v2517
        %v2534 = vmul.f32 %v2369, %v2518
        %v2535 = vmul.f32 %v2371, %v2519
        %v2536 = vmul.f32 %v2373, %v2520
        %v2537 = vmul.f32 %v2375, %v2521
        %v2538 = vmul.f32 %v2377, %v2522
        %2539 = vadd.xlane.f32.xlu0 %v2475
        %v2540 = vpop.xlane.xlu0 %2539
        %2541 = vadd.xlane.f32.xlu0 %v2477
        %v2542 = vpop.xlane.xlu0 %2541
        %2543 = vadd.xlane.f32.xlu0 %v2479
        %v2544 = vpop.xlane.xlu0 %2543
        %2545 = vadd.xlane.f32.xlu0 %v2481
        %v2546 = vpop.xlane.xlu0 %2545
        %2547 = vadd.xlane.f32.xlu0 %v2483
        %v2548 = vpop.xlane.xlu0 %2547
        %2549 = vadd.xlane.f32.xlu0 %v2485
        %v2550 = vpop.xlane.xlu0 %2549
        %2551 = vadd.xlane.f32.xlu0 %v2487
        %v2552 = vpop.xlane.xlu0 %2551
        %2553 = vadd.xlane.f32.xlu0 %v2489
        %v2554 = vpop.xlane.xlu0 %2553
        %2555 = vadd.xlane.f32.xlu0 %v2491
        %v2556 = vpop.xlane.xlu0 %2555
        %2557 = vadd.xlane.f32.xlu0 %v2493
        %v2558 = vpop.xlane.xlu0 %2557
        %2559 = vadd.xlane.f32.xlu0 %v2495
        %v2560 = vpop.xlane.xlu0 %2559
        %2561 = vadd.xlane.f32.xlu0 %v2497
        %v2562 = vpop.xlane.xlu0 %2561
        %2563 = vadd.xlane.f32.xlu0 %v2499
        %v2564 = vpop.xlane.xlu0 %2563
        %2565 = vadd.xlane.f32.xlu0 %v2501
        %v2566 = vpop.xlane.xlu0 %2565
        %2567 = vadd.xlane.f32.xlu0 %v2503
        %v2568 = vpop.xlane.xlu0 %2567
        %2569 = vadd.xlane.f32.xlu0 %v2505
        %v2570 = vpop.xlane.xlu0 %2569
        %v2571 = vadd.f32 %v2523, %v2540
        %v2572 = vadd.f32 %v2524, %v2542
        %v2573 = vadd.f32 %v2525, %v2544
        %v2574 = vadd.f32 %v2526, %v2546
        %v2575 = vadd.f32 %v2527, %v2548
        %v2576 = vadd.f32 %v2528, %v2550
        %v2577 = vadd.f32 %v2529, %v2552
        %v2578 = vadd.f32 %v2530, %v2554
        %v2579 = vadd.f32 %v2531, %v2556
        %v2580 = vadd.f32 %v2532, %v2558
        %v2581 = vadd.f32 %v2533, %v2560
        %v2582 = vadd.f32 %v2534, %v2562
        %v2583 = vadd.f32 %v2535, %v2564
        %v2584 = vadd.f32 %v2536, %v2566
        %v2585 = vadd.f32 %v2537, %v2568
        %v2586 = vadd.f32 %v2538, %v2570
        %2587 = vst.msk [vmem:[%s2506] sm:$0xff] %vm1581, %v2571
        %2588 = vst.msk [vmem:[%s2506 + $0x8] sm:$0xff] %vm1581, %v2572
        %2589 = vst.msk [vmem:[%s2506 + $0x10] sm:$0xff] %vm1581, %v2573
        %2590 = vst.msk [vmem:[%s2506 + $0x18] sm:$0xff] %vm1581, %v2574
        %2591 = vst.msk [vmem:[%s2506 + $0x20] sm:$0xff] %vm1581, %v2575
        %2592 = vst.msk [vmem:[%s2506 + $0x28] sm:$0xff] %vm1581, %v2576
        %2593 = vst.msk [vmem:[%s2506 + $0x30] sm:$0xff] %vm1581, %v2577
        %2594 = vst.msk [vmem:[%s2506 + $0x38] sm:$0xff] %vm1581, %v2578
        %2595 = vst.msk [vmem:[%s2506 + $0x40] sm:$0xff] %vm1581, %v2579
        %2596 = vst.msk [vmem:[%s2506 + $0x48] sm:$0xff] %vm1581, %v2580
        %2597 = vst.msk [vmem:[%s2506 + $0x50] sm:$0xff] %vm1581, %v2581
        %2598 = vst.msk [vmem:[%s2506 + $0x58] sm:$0xff] %vm1581, %v2582
        %2599 = vst.msk [vmem:[%s2506 + $0x60] sm:$0xff] %vm1581, %v2583
        %2600 = vst.msk [vmem:[%s2506 + $0x68] sm:$0xff] %vm1581, %v2584
        %2601 = vst.msk [vmem:[%s2506 + $0x70] sm:$0xff] %vm1581, %v2585
        %2602 = vst.msk [vmem:[%s2506 + $0x78] sm:$0xff] %vm1581, %v2586
        %s2603 = scalar_lea.vmem [#allocation4], 128
        %v2604 = vld [vmem:[%s2603] sm:$0xff]
        %v2605 = vld [vmem:[%s2603 + $0x8] sm:$0xff]
        %v2606 = vld [vmem:[%s2603 + $0x10] sm:$0xff]
        %v2607 = vld [vmem:[%s2603 + $0x18] sm:$0xff]
        %v2608 = vld [vmem:[%s2603 + $0x20] sm:$0xff]
        %v2609 = vld [vmem:[%s2603 + $0x28] sm:$0xff]
        %v2610 = vld [vmem:[%s2603 + $0x30] sm:$0xff]
        %v2611 = vld [vmem:[%s2603 + $0x38] sm:$0xff]
        %v2612 = vld [vmem:[%s2603 + $0x40] sm:$0xff]
        %v2613 = vld [vmem:[%s2603 + $0x48] sm:$0xff]
        %v2614 = vld [vmem:[%s2603 + $0x50] sm:$0xff]
        %v2615 = vld [vmem:[%s2603 + $0x58] sm:$0xff]
        %v2616 = vld [vmem:[%s2603 + $0x60] sm:$0xff]
        %v2617 = vld [vmem:[%s2603 + $0x68] sm:$0xff]
        %v2618 = vld [vmem:[%s2603 + $0x70] sm:$0xff]
        %v2619 = vld [vmem:[%s2603 + $0x78] sm:$0xff]
        %2621 = vset.pattern.permute.xlu0 0
        %2622 = vperm.xlu0 %2621, %v2347
        %v2623 = vpop.permute.xlu0 %2622
        %2626 = vset.pattern.permute.xlu0 0
        %2627 = vperm.xlu0 %2626, %v2349
        %v2628 = vpop.permute.xlu0 %2627
        %2631 = vset.pattern.permute.xlu0 0
        %2632 = vperm.xlu0 %2631, %v2351
        %v2633 = vpop.permute.xlu0 %2632
        %2636 = vset.pattern.permute.xlu0 0
        %2637 = vperm.xlu0 %2636, %v2353
        %v2638 = vpop.permute.xlu0 %2637
        %2641 = vset.pattern.permute.xlu0 0
        %2642 = vperm.xlu0 %2641, %v2355
        %v2643 = vpop.permute.xlu0 %2642
        %2646 = vset.pattern.permute.xlu0 0
        %2647 = vperm.xlu0 %2646, %v2357
        %v2648 = vpop.permute.xlu0 %2647
        %2651 = vset.pattern.permute.xlu0 0
        %2652 = vperm.xlu0 %2651, %v2359
        %v2653 = vpop.permute.xlu0 %2652
        %2656 = vset.pattern.permute.xlu0 0
        %2657 = vperm.xlu0 %2656, %v2361
        %v2658 = vpop.permute.xlu0 %2657
        %2661 = vset.pattern.permute.xlu0 0
        %2662 = vperm.xlu0 %2661, %v2363
        %v2663 = vpop.permute.xlu0 %2662
        %2666 = vset.pattern.permute.xlu0 0
        %2667 = vperm.xlu0 %2666, %v2365
        %v2668 = vpop.permute.xlu0 %2667
        %2671 = vset.pattern.permute.xlu0 0
        %2672 = vperm.xlu0 %2671, %v2367
        %v2673 = vpop.permute.xlu0 %2672
        %2676 = vset.pattern.permute.xlu0 0
        %2677 = vperm.xlu0 %2676, %v2369
        %v2678 = vpop.permute.xlu0 %2677
        %2681 = vset.pattern.permute.xlu0 0
        %2682 = vperm.xlu0 %2681, %v2371
        %v2683 = vpop.permute.xlu0 %2682
        %2686 = vset.pattern.permute.xlu0 0
        %2687 = vperm.xlu0 %2686, %v2373
        %v2688 = vpop.permute.xlu0 %2687
        %2691 = vset.pattern.permute.xlu0 0
        %2692 = vperm.xlu0 %2691, %v2375
        %v2693 = vpop.permute.xlu0 %2692
        %2696 = vset.pattern.permute.xlu0 0
        %2697 = vperm.xlu0 %2696, %v2377
        %v2698 = vpop.permute.xlu0 %2697
        %v2700 = vmul.f32 %v2623, %v2604
        %v2701 = vmul.f32 %v2628, %v2605
        %v2702 = vmul.f32 %v2633, %v2606
        %v2703 = vmul.f32 %v2638, %v2607
        %v2704 = vmul.f32 %v2643, %v2608
        %v2705 = vmul.f32 %v2648, %v2609
        %v2706 = vmul.f32 %v2653, %v2610
        %v2707 = vmul.f32 %v2658, %v2611
        %v2708 = vmul.f32 %v2663, %v2612
        %v2709 = vmul.f32 %v2668, %v2613
        %v2710 = vmul.f32 %v2673, %v2614
        %v2711 = vmul.f32 %v2678, %v2615
        %v2712 = vmul.f32 %v2683, %v2616
        %v2713 = vmul.f32 %v2688, %v2617
        %v2714 = vmul.f32 %v2693, %v2618
        %v2715 = vmul.f32 %v2698, %v2619
        %v2716 = vpack.c.bf16 %v2477, %v2475
        %v2717 = vpack.c.bf16 %v2481, %v2479
        %v2718 = vpack.c.bf16 %v2485, %v2483
        %v2719 = vpack.c.bf16 %v2489, %v2487
        %v2720 = vpack.c.bf16 %v2493, %v2491
        %v2721 = vpack.c.bf16 %v2497, %v2495
        %v2722 = vpack.c.bf16 %v2501, %v2499
        %v2723 = vpack.c.bf16 %v2505, %v2503
        %v2740 = vunpack.c.l.b16 %v1943
        %v2741 = vunpack.c.l.b16 %v1944
        %v2742 = vunpack.c.l.b16 %v1945
        %v2743 = vunpack.c.l.b16 %v1946
        %v2744 = vunpack.c.l.b16 %v1947
        %v2745 = vunpack.c.l.b16 %v1948
        %v2746 = vunpack.c.l.b16 %v1949
        %v2747 = vunpack.c.l.b16 %v1950
        %v2748 = vunpack.c.l.b16 %v1951
        %v2749 = vunpack.c.l.b16 %v1952
        %v2750 = vunpack.c.l.b16 %v1953
        %v2751 = vunpack.c.l.b16 %v1954
        %v2752 = vunpack.c.l.b16 %v1955
        %v2753 = vunpack.c.l.b16 %v1956
        %v2754 = vunpack.c.l.b16 %v1957
        %v2755 = vunpack.c.l.b16 %v1958
        %v2756 = vpack.c.b16 %v2741, %v2740
        %v2757 = vpack.c.b16 %v2743, %v2742
        %v2758 = vpack.c.b16 %v2745, %v2744
        %v2759 = vpack.c.b16 %v2747, %v2746
        %v2760 = vpack.c.b16 %v2749, %v2748
        %v2761 = vpack.c.b16 %v2751, %v2750
        %v2762 = vpack.c.b16 %v2753, %v2752
        %v2763 = vpack.c.b16 %v2755, %v2754
        %2764 = vrot.lane.b32.xlu0 %v2756, 64
        %v2765 = vpop.permute.xlu0 %2764
        %2766 = vrot.lane.b32.xlu0 %v2757, 64
        %v2767 = vpop.permute.xlu0 %2766
        %2768 = vrot.lane.b32.xlu0 %v2758, 64
        %v2769 = vpop.permute.xlu0 %2768
        %2770 = vrot.lane.b32.xlu0 %v2759, 64
        %v2771 = vpop.permute.xlu0 %2770
        %2772 = vrot.lane.b32.xlu0 %v2760, 64
        %v2773 = vpop.permute.xlu0 %2772
        %2774 = vrot.lane.b32.xlu0 %v2761, 64
        %v2775 = vpop.permute.xlu0 %2774
        %2776 = vrot.lane.b32.xlu0 %v2762, 64
        %v2777 = vpop.permute.xlu0 %2776
        %2778 = vrot.lane.b32.xlu0 %v2763, 64
        %v2779 = vpop.permute.xlu0 %2778
        %2788 = vmatprep.subr.bf16.mxu0 0
        %2789 = vmatpush1.bf16.msra.mxu0 %v2779
        %2790 = vmatprep.subr.bf16.mxu0 0
        %2791 = vmatpush1.bf16.msra.mxu0 %v2777
        %2792 = vmatprep.subr.bf16.mxu0 0
        %2793 = vmatpush1.bf16.msra.mxu0 %v2775
        %2794 = vmatprep.subr.bf16.mxu0 0
        %2795 = vmatpush1.bf16.msra.mxu0 %v2773
        %2796 = vmatprep.subr.bf16.mxu0 0
        %2797 = vmatpush1.bf16.msra.mxu0 %v2771
        %2798 = vmatprep.subr.bf16.mxu0 0
        %2799 = vmatpush1.bf16.msra.mxu0 %v2769
        %2800 = vmatprep.subr.bf16.mxu0 0
        %2801 = vmatpush1.bf16.msra.mxu0 %v2767
        %2802 = vmatprep.subr.bf16.mxu0 0
        %2803 = vmatpush1.bf16.msra.mxu0 %v2765
        %2804 = vmatprep.subr.bf16.mxu0 0
        %2805 = vmatpush2.bf16.msra.mxu0 0
        %2806 = vmatprep.subr.bf16.mxu0 0
        %2807 = vmatpush2.bf16.msra.mxu0 0
        %2808 = vmatprep.subr.bf16.mxu0 0
        %2809 = vmatpush2.bf16.msra.mxu0 0
        %2810 = vmatprep.subr.bf16.mxu0 0
        %2811 = vmatpush2.bf16.msra.mxu0 0
        %2812 = vmatprep.subr.bf16.mxu0 0
        %2813 = vmatpush2.bf16.msra.mxu0 0
        %2814 = vmatprep.subr.bf16.mxu0 0
        %2815 = vmatpush2.bf16.msra.mxu0 0
        %2816 = vmatprep.subr.bf16.mxu0 0
        %2817 = vmatpush2.bf16.msra.mxu0 0
        %2818 = vmatprep.subr.bf16.mxu0 0
        %2819 = vmatpush2.bf16.msra.mxu0 0
        %2820 = vmatprep.mubr.bf16.mxu0 0
        %2821 = vmatmul.mubr.bf16.gmra.mxu0 %v2716
        %v2822 = vpop.f32.mrf.mxu0
        %v2823 = vadd.f32 0.0, %v2822
        %v2824 = vpop.f32.mrf.mxu0
        %v2825 = vpop.f32.mrf.mxu0
        %v2826 = vadd.f32 0.0, %v2825
        %v2827 = vpop.f32.mrf.mxu0
        %2828 = vmatprep.mubr.bf16.mxu0 0
        %2829 = vmatmul.mubr.bf16.gmra.mxu0 %v2717
        %v2830 = vpop.f32.mrf.mxu0
        %v2831 = vadd.f32 0.0, %v2830
        %v2832 = vpop.f32.mrf.mxu0
        %v2833 = vpop.f32.mrf.mxu0
        %v2834 = vadd.f32 0.0, %v2833
        %v2835 = vpop.f32.mrf.mxu0
        %2836 = vmatprep.mubr.bf16.mxu0 0
        %2837 = vmatmul.mubr.bf16.gmra.mxu0 %v2718
        %v2838 = vpop.f32.mrf.mxu0
        %v2839 = vadd.f32 0.0, %v2838
        %v2840 = vpop.f32.mrf.mxu0
        %v2841 = vpop.f32.mrf.mxu0
        %v2842 = vadd.f32 0.0, %v2841
        %v2843 = vpop.f32.mrf.mxu0
        %2844 = vmatprep.mubr.bf16.mxu0 0
        %2845 = vmatmul.mubr.bf16.gmra.mxu0 %v2719
        %v2846 = vpop.f32.mrf.mxu0
        %v2847 = vadd.f32 0.0, %v2846
        %v2848 = vpop.f32.mrf.mxu0
        %v2849 = vpop.f32.mrf.mxu0
        %v2850 = vadd.f32 0.0, %v2849
        %v2851 = vpop.f32.mrf.mxu0
        %2852 = vmatprep.mubr.bf16.mxu0 0
        %2853 = vmatmul.mubr.bf16.gmra.mxu0 %v2720
        %v2854 = vpop.f32.mrf.mxu0
        %v2855 = vadd.f32 0.0, %v2854
        %v2856 = vpop.f32.mrf.mxu0
        %v2857 = vpop.f32.mrf.mxu0
        %v2858 = vadd.f32 0.0, %v2857
        %v2859 = vpop.f32.mrf.mxu0
        %2860 = vmatprep.mubr.bf16.mxu0 0
        %2861 = vmatmul.mubr.bf16.gmra.mxu0 %v2721
        %v2862 = vpop.f32.mrf.mxu0
        %v2863 = vadd.f32 0.0, %v2862
        %v2864 = vpop.f32.mrf.mxu0
        %v2865 = vpop.f32.mrf.mxu0
        %v2866 = vadd.f32 0.0, %v2865
        %v2867 = vpop.f32.mrf.mxu0
        %2868 = vmatprep.mubr.bf16.mxu0 0
        %2869 = vmatmul.mubr.bf16.gmra.mxu0 %v2722
        %v2870 = vpop.f32.mrf.mxu0
        %v2871 = vadd.f32 0.0, %v2870
        %v2872 = vpop.f32.mrf.mxu0
        %v2873 = vpop.f32.mrf.mxu0
        %v2874 = vadd.f32 0.0, %v2873
        %v2875 = vpop.f32.mrf.mxu0
        %2876 = vmatprep.mubr.bf16.mxu0 0
        %2877 = vmatmul.mubr.bf16.gmra.mxu0 %v2723
        %v2878 = vpop.f32.mrf.mxu0
        %v2879 = vadd.f32 0.0, %v2878
        %v2880 = vpop.f32.mrf.mxu0
        %v2881 = vpop.f32.mrf.mxu0
        %v2882 = vadd.f32 0.0, %v2881
        %v2883 = vpop.f32.mrf.mxu0
        %2884 = vdwg.mxu0
        %v2885 = vadd.f32 %v2700, %v2823
        %v2886 = vadd.f32 %v2701, %v2826
        %v2887 = vadd.f32 %v2702, %v2831
        %v2888 = vadd.f32 %v2703, %v2834
        %v2889 = vadd.f32 %v2704, %v2839
        %v2890 = vadd.f32 %v2705, %v2842
        %v2891 = vadd.f32 %v2706, %v2847
        %v2892 = vadd.f32 %v2707, %v2850
        %v2893 = vadd.f32 %v2708, %v2855
        %v2894 = vadd.f32 %v2709, %v2858
        %v2895 = vadd.f32 %v2710, %v2863
        %v2896 = vadd.f32 %v2711, %v2866
        %v2897 = vadd.f32 %v2712, %v2871
        %v2898 = vadd.f32 %v2713, %v2874
        %v2899 = vadd.f32 %v2714, %v2879
        %v2900 = vadd.f32 %v2715, %v2882
        %2901 = vst.msk [vmem:[%s2603] sm:$0xff] %vm1093, %v2885
        %2902 = vst.msk [vmem:[%s2603 + $0x8] sm:$0xff] %vm1093, %v2886
        %2903 = vst.msk [vmem:[%s2603 + $0x10] sm:$0xff] %vm1093, %v2887
        %2904 = vst.msk [vmem:[%s2603 + $0x18] sm:$0xff] %vm1093, %v2888
        %2905 = vst.msk [vmem:[%s2603 + $0x20] sm:$0xff] %vm1093, %v2889
        %2906 = vst.msk [vmem:[%s2603 + $0x28] sm:$0xff] %vm1093, %v2890
        %2907 = vst.msk [vmem:[%s2603 + $0x30] sm:$0xff] %vm1093, %v2891
        %2908 = vst.msk [vmem:[%s2603 + $0x38] sm:$0xff] %vm1093, %v2892
        %2909 = vst.msk [vmem:[%s2603 + $0x40] sm:$0xff] %vm1093, %v2893
        %2910 = vst.msk [vmem:[%s2603 + $0x48] sm:$0xff] %vm1093, %v2894
        %2911 = vst.msk [vmem:[%s2603 + $0x50] sm:$0xff] %vm1093, %v2895
        %2912 = vst.msk [vmem:[%s2603 + $0x58] sm:$0xff] %vm1093, %v2896
        %2913 = vst.msk [vmem:[%s2603 + $0x60] sm:$0xff] %vm1093, %v2897
        %2914 = vst.msk [vmem:[%s2603 + $0x68] sm:$0xff] %vm1093, %v2898
        %2915 = vst.msk [vmem:[%s2603 + $0x70] sm:$0xff] %vm1093, %v2899
        %2916 = vst.msk [vmem:[%s2603 + $0x78] sm:$0xff] %vm1093, %v2900
        %2917 = vst.msk [vmem:[%s2265] sm:$0xff] %vm1581, %v2314
        %2918 = vst.msk [vmem:[%s2265 + $0x8] sm:$0xff] %vm1581, %v2315
        %2919 = vst.msk [vmem:[%s2265 + $0x10] sm:$0xff] %vm1581, %v2316
        %2920 = vst.msk [vmem:[%s2265 + $0x18] sm:$0xff] %vm1581, %v2317
        %2921 = vst.msk [vmem:[%s2265 + $0x20] sm:$0xff] %vm1581, %v2318
        %2922 = vst.msk [vmem:[%s2265 + $0x28] sm:$0xff] %vm1581, %v2319
        %2923 = vst.msk [vmem:[%s2265 + $0x30] sm:$0xff] %vm1581, %v2320
        %2924 = vst.msk [vmem:[%s2265 + $0x38] sm:$0xff] %vm1581, %v2321
        %2925 = vst.msk [vmem:[%s2265 + $0x40] sm:$0xff] %vm1581, %v2322
        %2926 = vst.msk [vmem:[%s2265 + $0x48] sm:$0xff] %vm1581, %v2323
        %2927 = vst.msk [vmem:[%s2265 + $0x50] sm:$0xff] %vm1581, %v2324
        %2928 = vst.msk [vmem:[%s2265 + $0x58] sm:$0xff] %vm1581, %v2325
        %2929 = vst.msk [vmem:[%s2265 + $0x60] sm:$0xff] %vm1581, %v2326
        %2930 = vst.msk [vmem:[%s2265 + $0x68] sm:$0xff] %vm1581, %v2327
        %2931 = vst.msk [vmem:[%s2265 + $0x70] sm:$0xff] %vm1581, %v2328
        %2932 = vst.msk [vmem:[%s2265 + $0x78] sm:$0xff] %vm1581, %v2329
        %p2933 = scmp.eq.s32.totalorder %s23, 1
        // Predicated region
        $region209: #{t5_block_next.5} parent=187 // pred_check
          %p2934 = pneg %p2933
        $region210: #{t5_block_next.5} parent=187 // pred_check_branch
          %2936 = sbr.rel (%p2934) target = $region212
        $region211: #{t5_block_next.5} parent=187 // pred_region
          %v2937 = vld [vmem:[#allocation3] sm:$0xff]
          %v2938 = vld [vmem:[#allocation3 + $0x8] sm:$0xff]
          %v2939 = vld [vmem:[#allocation3 + $0x10] sm:$0xff]
          %v2940 = vld [vmem:[#allocation3 + $0x18] sm:$0xff]
          %v2941 = vld [vmem:[#allocation3 + $0x20] sm:$0xff]
          %v2942 = vld [vmem:[#allocation3 + $0x28] sm:$0xff]
          %v2943 = vld [vmem:[#allocation3 + $0x30] sm:$0xff]
          %v2944 = vld [vmem:[#allocation3 + $0x38] sm:$0xff]
          %v2945 = vld [vmem:[#allocation3 + $0x40] sm:$0xff]
          %v2946 = vld [vmem:[#allocation3 + $0x48] sm:$0xff]
          %v2947 = vld [vmem:[#allocation3 + $0x50] sm:$0xff]
          %v2948 = vld [vmem:[#allocation3 + $0x58] sm:$0xff]
          %v2949 = vld [vmem:[#allocation3 + $0x60] sm:$0xff]
          %v2950 = vld [vmem:[#allocation3 + $0x68] sm:$0xff]
          %v2951 = vld [vmem:[#allocation3 + $0x70] sm:$0xff]
          %v2952 = vld [vmem:[#allocation3 + $0x78] sm:$0xff]
          %v2953 = vrcp.pop %v2937
          %v2954 = vrcp.pop %v2938
          %v2955 = vrcp.pop %v2939
          %v2956 = vrcp.pop %v2940
          %v2957 = vrcp.pop %v2941
          %v2958 = vrcp.pop %v2942
          %v2959 = vrcp.pop %v2943
          %v2960 = vrcp.pop %v2944
          %v2961 = vrcp.pop %v2945
          %v2962 = vrcp.pop %v2946
          %v2963 = vrcp.pop %v2947
          %v2964 = vrcp.pop %v2948
          %v2965 = vrcp.pop %v2949
          %v2966 = vrcp.pop %v2950
          %v2967 = vrcp.pop %v2951
          %v2968 = vrcp.pop %v2952
          %v2969 = vld [vmem:[#allocation4] sm:$0xff]
          %v2970 = vld [vmem:[#allocation4 + $0x8] sm:$0xff]
          %v2971 = vld [vmem:[#allocation4 + $0x10] sm:$0xff]
          %v2972 = vld [vmem:[#allocation4 + $0x18] sm:$0xff]
          %v2973 = vld [vmem:[#allocation4 + $0x20] sm:$0xff]
          %v2974 = vld [vmem:[#allocation4 + $0x28] sm:$0xff]
          %v2975 = vld [vmem:[#allocation4 + $0x30] sm:$0xff]
          %v2976 = vld [vmem:[#allocation4 + $0x38] sm:$0xff]
          %v2977 = vld [vmem:[#allocation4 + $0x40] sm:$0xff]
          %v2978 = vld [vmem:[#allocation4 + $0x48] sm:$0xff]
          %v2979 = vld [vmem:[#allocation4 + $0x50] sm:$0xff]
          %v2980 = vld [vmem:[#allocation4 + $0x58] sm:$0xff]
          %v2981 = vld [vmem:[#allocation4 + $0x60] sm:$0xff]
          %v2982 = vld [vmem:[#allocation4 + $0x68] sm:$0xff]
          %v2983 = vld [vmem:[#allocation4 + $0x70] sm:$0xff]
          %v2984 = vld [vmem:[#allocation4 + $0x78] sm:$0xff]
          %2986 = vset.pattern.permute.xlu0 0
          %2987 = vperm.xlu0 %2986, %v2953
          %v2988 = vpop.permute.xlu0 %2987
          %2991 = vset.pattern.permute.xlu0 0
          %2992 = vperm.xlu0 %2991, %v2954
          %v2993 = vpop.permute.xlu0 %2992
          %2996 = vset.pattern.permute.xlu0 0
          %2997 = vperm.xlu0 %2996, %v2955
          %v2998 = vpop.permute.xlu0 %2997
          %3001 = vset.pattern.permute.xlu0 0
          %3002 = vperm.xlu0 %3001, %v2956
          %v3003 = vpop.permute.xlu0 %3002
          %3006 = vset.pattern.permute.xlu0 0
          %3007 = vperm.xlu0 %3006, %v2957
          %v3008 = vpop.permute.xlu0 %3007
          %3011 = vset.pattern.permute.xlu0 0
          %3012 = vperm.xlu0 %3011, %v2958
          %v3013 = vpop.permute.xlu0 %3012
          %3016 = vset.pattern.permute.xlu0 0
          %3017 = vperm.xlu0 %3016, %v2959
          %v3018 = vpop.permute.xlu0 %3017
          %3021 = vset.pattern.permute.xlu0 0
          %3022 = vperm.xlu0 %3021, %v2960
          %v3023 = vpop.permute.xlu0 %3022
          %3026 = vset.pattern.permute.xlu0 0
          %3027 = vperm.xlu0 %3026, %v2961
          %v3028 = vpop.permute.xlu0 %3027
          %3031 = vset.pattern.permute.xlu0 0
          %3032 = vperm.xlu0 %3031, %v2962
          %v3033 = vpop.permute.xlu0 %3032
          %3036 = vset.pattern.permute.xlu0 0
          %3037 = vperm.xlu0 %3036, %v2963
          %v3038 = vpop.permute.xlu0 %3037
          %3041 = vset.pattern.permute.xlu0 0
          %3042 = vperm.xlu0 %3041, %v2964
          %v3043 = vpop.permute.xlu0 %3042
          %3046 = vset.pattern.permute.xlu0 0
          %3047 = vperm.xlu0 %3046, %v2965
          %v3048 = vpop.permute.xlu0 %3047
          %3051 = vset.pattern.permute.xlu0 0
          %3052 = vperm.xlu0 %3051, %v2966
          %v3053 = vpop.permute.xlu0 %3052
          %3056 = vset.pattern.permute.xlu0 0
          %3057 = vperm.xlu0 %3056, %v2967
          %v3058 = vpop.permute.xlu0 %3057
          %3061 = vset.pattern.permute.xlu0 0
          %3062 = vperm.xlu0 %3061, %v2968
          %v3063 = vpop.permute.xlu0 %3062
          %v3065 = vmul.f32 %v2969, %v2988
          %v3066 = vmul.f32 %v2970, %v2993
          %v3067 = vmul.f32 %v2971, %v2998
          %v3068 = vmul.f32 %v2972, %v3003
          %v3069 = vmul.f32 %v2973, %v3008
          %v3070 = vmul.f32 %v2974, %v3013
          %v3071 = vmul.f32 %v2975, %v3018
          %v3072 = vmul.f32 %v2976, %v3023
          %v3073 = vmul.f32 %v2977, %v3028
          %v3074 = vmul.f32 %v2978, %v3033
          %v3075 = vmul.f32 %v2979, %v3038
          %v3076 = vmul.f32 %v2980, %v3043
          %v3077 = vmul.f32 %v2981, %v3048
          %v3078 = vmul.f32 %v2982, %v3053
          %v3079 = vmul.f32 %v2983, %v3058
          %v3080 = vmul.f32 %v2984, %v3063
          %v3081 = vpack.c.bf16 %v3066, %v3065
          %v3082 = vpack.c.bf16 %v3068, %v3067
          %v3083 = vpack.c.bf16 %v3070, %v3069
          %v3084 = vpack.c.bf16 %v3072, %v3071
          %v3085 = vpack.c.bf16 %v3074, %v3073
          %v3086 = vpack.c.bf16 %v3076, %v3075
          %v3087 = vpack.c.bf16 %v3078, %v3077
          %v3088 = vpack.c.bf16 %v3080, %v3079
          %v3089 = vld [vmem:[%s2506] sm:$0xff]
          %v3090 = vld [vmem:[%s2506 + $0x8] sm:$0xff]
          %v3091 = vld [vmem:[%s2506 + $0x10] sm:$0xff]
          %v3092 = vld [vmem:[%s2506 + $0x18] sm:$0xff]
          %v3093 = vld [vmem:[%s2506 + $0x20] sm:$0xff]
          %v3094 = vld [vmem:[%s2506 + $0x28] sm:$0xff]
          %v3095 = vld [vmem:[%s2506 + $0x30] sm:$0xff]
          %v3096 = vld [vmem:[%s2506 + $0x38] sm:$0xff]
          %v3097 = vld [vmem:[%s2506 + $0x40] sm:$0xff]
          %v3098 = vld [vmem:[%s2506 + $0x48] sm:$0xff]
          %v3099 = vld [vmem:[%s2506 + $0x50] sm:$0xff]
          %v3100 = vld [vmem:[%s2506 + $0x58] sm:$0xff]
          %v3101 = vld [vmem:[%s2506 + $0x60] sm:$0xff]
          %v3102 = vld [vmem:[%s2506 + $0x68] sm:$0xff]
          %v3103 = vld [vmem:[%s2506 + $0x70] sm:$0xff]
          %v3104 = vld [vmem:[%s2506 + $0x78] sm:$0xff]
          %v3105 = vrcp.pop %v3089
          %v3106 = vrcp.pop %v3090
          %v3107 = vrcp.pop %v3091
          %v3108 = vrcp.pop %v3092
          %v3109 = vrcp.pop %v3093
          %v3110 = vrcp.pop %v3094
          %v3111 = vrcp.pop %v3095
          %v3112 = vrcp.pop %v3096
          %v3113 = vrcp.pop %v3097
          %v3114 = vrcp.pop %v3098
          %v3115 = vrcp.pop %v3099
          %v3116 = vrcp.pop %v3100
          %v3117 = vrcp.pop %v3101
          %v3118 = vrcp.pop %v3102
          %v3119 = vrcp.pop %v3103
          %v3120 = vrcp.pop %v3104
          %v3121 = vld [vmem:[%s2603] sm:$0xff]
          %v3122 = vld [vmem:[%s2603 + $0x8] sm:$0xff]
          %v3123 = vld [vmem:[%s2603 + $0x10] sm:$0xff]
          %v3124 = vld [vmem:[%s2603 + $0x18] sm:$0xff]
          %v3125 = vld [vmem:[%s2603 + $0x20] sm:$0xff]
          %v3126 = vld [vmem:[%s2603 + $0x28] sm:$0xff]
          %v3127 = vld [vmem:[%s2603 + $0x30] sm:$0xff]
          %v3128 = vld [vmem:[%s2603 + $0x38] sm:$0xff]
          %v3129 = vld [vmem:[%s2603 + $0x40] sm:$0xff]
          %v3130 = vld [vmem:[%s2603 + $0x48] sm:$0xff]
          %v3131 = vld [vmem:[%s2603 + $0x50] sm:$0xff]
          %v3132 = vld [vmem:[%s2603 + $0x58] sm:$0xff]
          %v3133 = vld [vmem:[%s2603 + $0x60] sm:$0xff]
          %v3134 = vld [vmem:[%s2603 + $0x68] sm:$0xff]
          %v3135 = vld [vmem:[%s2603 + $0x70] sm:$0xff]
          %v3136 = vld [vmem:[%s2603 + $0x78] sm:$0xff]
          %3138 = vset.pattern.permute.xlu0 0
          %3139 = vperm.xlu0 %3138, %v3105
          %v3140 = vpop.permute.xlu0 %3139
          %3143 = vset.pattern.permute.xlu0 0
          %3144 = vperm.xlu0 %3143, %v3106
          %v3145 = vpop.permute.xlu0 %3144
          %3148 = vset.pattern.permute.xlu0 0
          %3149 = vperm.xlu0 %3148, %v3107
          %v3150 = vpop.permute.xlu0 %3149
          %3153 = vset.pattern.permute.xlu0 0
          %3154 = vperm.xlu0 %3153, %v3108
          %v3155 = vpop.permute.xlu0 %3154
          %3158 = vset.pattern.permute.xlu0 0
          %3159 = vperm.xlu0 %3158, %v3109
          %v3160 = vpop.permute.xlu0 %3159
          %3163 = vset.pattern.permute.xlu0 0
          %3164 = vperm.xlu0 %3163, %v3110
          %v3165 = vpop.permute.xlu0 %3164
          %3168 = vset.pattern.permute.xlu0 0
          %3169 = vperm.xlu0 %3168, %v3111
          %v3170 = vpop.permute.xlu0 %3169
          %3173 = vset.pattern.permute.xlu0 0
          %3174 = vperm.xlu0 %3173, %v3112
          %v3175 = vpop.permute.xlu0 %3174
          %3178 = vset.pattern.permute.xlu0 0
          %3179 = vperm.xlu0 %3178, %v3113
          %v3180 = vpop.permute.xlu0 %3179
          %3183 = vset.pattern.permute.xlu0 0
          %3184 = vperm.xlu0 %3183, %v3114
          %v3185 = vpop.permute.xlu0 %3184
          %3188 = vset.pattern.permute.xlu0 0
          %3189 = vperm.xlu0 %3188, %v3115
          %v3190 = vpop.permute.xlu0 %3189
          %3193 = vset.pattern.permute.xlu0 0
          %3194 = vperm.xlu0 %3193, %v3116
          %v3195 = vpop.permute.xlu0 %3194
          %3198 = vset.pattern.permute.xlu0 0
          %3199 = vperm.xlu0 %3198, %v3117
          %v3200 = vpop.permute.xlu0 %3199
          %3203 = vset.pattern.permute.xlu0 0
          %3204 = vperm.xlu0 %3203, %v3118
          %v3205 = vpop.permute.xlu0 %3204
          %3208 = vset.pattern.permute.xlu0 0
          %3209 = vperm.xlu0 %3208, %v3119
          %v3210 = vpop.permute.xlu0 %3209
          %3213 = vset.pattern.permute.xlu0 0
          %3214 = vperm.xlu0 %3213, %v3120
          %v3215 = vpop.permute.xlu0 %3214
          %v3217 = vmul.f32 %v3121, %v3140
          %v3218 = vmul.f32 %v3122, %v3145
          %v3219 = vmul.f32 %v3123, %v3150
          %v3220 = vmul.f32 %v3124, %v3155
          %v3221 = vmul.f32 %v3125, %v3160
          %v3222 = vmul.f32 %v3126, %v3165
          %v3223 = vmul.f32 %v3127, %v3170
          %v3224 = vmul.f32 %v3128, %v3175
          %v3225 = vmul.f32 %v3129, %v3180
          %v3226 = vmul.f32 %v3130, %v3185
          %v3227 = vmul.f32 %v3131, %v3190
          %v3228 = vmul.f32 %v3132, %v3195
          %v3229 = vmul.f32 %v3133, %v3200
          %v3230 = vmul.f32 %v3134, %v3205
          %v3231 = vmul.f32 %v3135, %v3210
          %v3232 = vmul.f32 %v3136, %v3215
          %v3233 = vpack.c.bf16 %v3218, %v3217
          %v3234 = vpack.c.bf16 %v3220, %v3219
          %v3235 = vpack.c.bf16 %v3222, %v3221
          %v3236 = vpack.c.bf16 %v3224, %v3223
          %v3237 = vpack.c.bf16 %v3226, %v3225
          %v3238 = vpack.c.bf16 %v3228, %v3227
          %v3239 = vpack.c.bf16 %v3230, %v3229
          %v3240 = vpack.c.bf16 %v3232, %v3231
          %3249 = vrot.lane.b32.xlu0 %v3233, 64
          %v3250 = vpop.permute.xlu0 %3249
          %3251 = vrot.lane.b32.xlu0 %v3234, 64
          %v3252 = vpop.permute.xlu0 %3251
          %3253 = vrot.lane.b32.xlu0 %v3235, 64
          %v3254 = vpop.permute.xlu0 %3253
          %3255 = vrot.lane.b32.xlu0 %v3236, 64
          %v3256 = vpop.permute.xlu0 %3255
          %3257 = vrot.lane.b32.xlu0 %v3237, 64
          %v3258 = vpop.permute.xlu0 %3257
          %3259 = vrot.lane.b32.xlu0 %v3238, 64
          %v3260 = vpop.permute.xlu0 %3259
          %3261 = vrot.lane.b32.xlu0 %v3239, 64
          %v3262 = vpop.permute.xlu0 %3261
          %3263 = vrot.lane.b32.xlu0 %v3240, 64
          %v3264 = vpop.permute.xlu0 %3263
          %v3267 = vsel %vm1093, %v3081, %v3250
          %v3270 = vsel %vm1093, %v3082, %v3252
          %v3273 = vsel %vm1093, %v3083, %v3254
          %v3276 = vsel %vm1093, %v3084, %v3256
          %v3279 = vsel %vm1093, %v3085, %v3258
          %v3282 = vsel %vm1093, %v3086, %v3260
          %v3285 = vsel %vm1093, %v3087, %v3262
          %v3288 = vsel %vm1093, %v3088, %v3264
          %v3297 = vunpack.c.l.b16 %v3267
          %v3298 = vunpack.c.h.b16 %v3267
          %v3299 = vunpack.c.l.b16 %v3270
          %v3300 = vunpack.c.h.b16 %v3270
          %v3301 = vunpack.c.l.b16 %v3273
          %v3302 = vunpack.c.h.b16 %v3273
          %v3303 = vunpack.c.l.b16 %v3276
          %v3304 = vunpack.c.h.b16 %v3276
          %v3305 = vunpack.c.l.b16 %v3279
          %v3306 = vunpack.c.h.b16 %v3279
          %v3307 = vunpack.c.l.b16 %v3282
          %v3308 = vunpack.c.h.b16 %v3282
          %v3309 = vunpack.c.l.b16 %v3285
          %v3310 = vunpack.c.h.b16 %v3285
          %v3311 = vunpack.c.l.b16 %v3288
          %v3312 = vunpack.c.h.b16 %v3288
          %v3313 = vpack.c.b16 %v3297, %v3297
          %v3314 = vpack.c.b16 %v3298, %v3298
          %v3315 = vpack.c.b16 %v3299, %v3299
          %v3316 = vpack.c.b16 %v3300, %v3300
          %v3317 = vpack.c.b16 %v3301, %v3301
          %v3318 = vpack.c.b16 %v3302, %v3302
          %v3319 = vpack.c.b16 %v3303, %v3303
          %v3320 = vpack.c.b16 %v3304, %v3304
          %v3321 = vpack.c.b16 %v3305, %v3305
          %v3322 = vpack.c.b16 %v3306, %v3306
          %v3323 = vpack.c.b16 %v3307, %v3307
          %v3324 = vpack.c.b16 %v3308, %v3308
          %v3325 = vpack.c.b16 %v3309, %v3309
          %v3326 = vpack.c.b16 %v3310, %v3310
          %v3327 = vpack.c.b16 %v3311, %v3311
          %v3328 = vpack.c.b16 %v3312, %v3312
          %3345 = vst [vmem:[%s817] sm:$0xf] %v3313
          %3346 = vst [vmem:[%s817 + $0x4] sm:$0xf] %v3314
          %3347 = vst [vmem:[%s817 + $0x8] sm:$0xf] %v3315
          %3348 = vst [vmem:[%s817 + $0xc] sm:$0xf] %v3316
          %3349 = vst [vmem:[%s817 + $0x10] sm:$0xf] %v3317
          %3350 = vst [vmem:[%s817 + $0x14] sm:$0xf] %v3318
          %3351 = vst [vmem:[%s817 + $0x18] sm:$0xf] %v3319
          %3352 = vst [vmem:[%s817 + $0x1c] sm:$0xf] %v3320
          %3353 = vst [vmem:[%s817 + $0x20] sm:$0xf] %v3321
          %3354 = vst [vmem:[%s817 + $0x24] sm:$0xf] %v3322
          %3355 = vst [vmem:[%s817 + $0x28] sm:$0xf] %v3323
          %3356 = vst [vmem:[%s817 + $0x2c] sm:$0xf] %v3324
          %3357 = vst [vmem:[%s817 + $0x30] sm:$0xf] %v3325
          %3358 = vst [vmem:[%s817 + $0x34] sm:$0xf] %v3326
          %3359 = vst [vmem:[%s817 + $0x38] sm:$0xf] %v3327
          %3360 = vst [vmem:[%s817 + $0x3c] sm:$0xf] %v3328
        $region212: #{t5_block_next.5} parent=187 // pred_fallthru
          _
        %s3361 = sand.u32 %s189, 1
        %s3362 = sand.u32 %s189, 1
        %s3363 = smul.addr %s3362, 64
        %s3364 = scalar_lea.vmem [#allocation9], %s3363
        // Predicated region
        $region213: #{t5_block_next.5} parent=187 // pred_check
          %p3365 = pneg %p199
        $region214: #{t5_block_next.5} parent=187 // pred_check_branch
          %3367 = sbr.rel (%p3365) target = $region216
        $region215: #{t5_block_next.5} parent=187 // pred_region
          %s3368 = smul.u32 16, %s22
          %s3369 = smul.addr %s3368, 2
          %s3370 = sadd.s32 %s21, %s3369
          %s3371 = smul.addr %s3370, 4
          %s3372 = scalar_lea.vmem %s5, %s3371
          // Predicated region
          $region217: #{t5_block_next.5} parent=215 // pred_check
            _
          $region218: #{t5_block_next.5} parent=215 // pred_check_branch
            %3374 = sbr.rel (0) target = $region220
          $region219: #{t5_block_next.5} parent=215 // pred_region
            // Predicated region
            $region221: #{t5_block_next.5} parent=219 // pred_check
              _
            $region222: #{t5_block_next.5} parent=219 // pred_check_branch
              %3376 = sbr.rel target = $region224
            $region223: #{t5_block_next.5} parent=219 // pred_region
              // Predicated region
              $region236: #{t5_block_next.5} parent=223 // pred_check
                _
              $region237: #{t5_block_next.5} parent=223 // pred_check_branch
                %3422 = sbr.rel (0) target = $region239
              $region238: #{t5_block_next.5} parent=223 // pred_region
                loop: start=0, step=1, limit=1
                $region240: #{t5_block_next.5} parent=238 // loop_pre_header
                  _
                $region241: #{t5_block_next.5} parent=238 // loop_header
                  %s3424 = sphi 0, %s3428
                  %p3425 = scmp.ge.s32.totalorder %s3424, 1
                  %s3429 = sphi %s3364, %s3364
                  %s3430 = sphi %s3372, %s3372
                $region242: #{t5_block_next.5} parent=238 // loop_header_branch
                  %3427 = sbr.rel (%p3425) target = $region246
                $region243: #{t5_block_next.5} parent=238 // loop_body
                  _
                $region244: #{t5_block_next.5} parent=238 // loop_footer
                  %s3428 = sadd.s32 1, %s3424
                $region245: #{t5_block_next.5} parent=238 // loop_footer_branch
                  %3423 = sbr.rel target = $region241
                $region246: #{t5_block_next.5} parent=238 // loop_exit
                  _
                %s3432 = ssub.s32 16, 1
                loop: start=0, step=1, limit=1
                $region247: #{t5_block_next.5} parent=238 // loop_pre_header
                  _
                $region248: #{t5_block_next.5} parent=238 // loop_header
                  %s3434 = sphi 0, %s3438
                  %p3435 = scmp.ge.s32.totalorder %s3434, 1
                  %s3439 = sphi %s3364, %s3364
                  %s3440 = sphi %s3372, %s3372
                $region249: #{t5_block_next.5} parent=238 // loop_header_branch
                  %3437 = sbr.rel (%p3435) target = $region253
                $region250: #{t5_block_next.5} parent=238 // loop_body
                  %v3441 = vld [vmem:[%s3439] sm:%s3432]
                  %3442 = vst [vmem:[%s3440] sm:%s3432] %v3441
                  %v3443 = vld [vmem:[%s3439 + $0x4] sm:%s3432]
                  %3444 = vst [vmem:[%s3440 + $0x8] sm:%s3432] %v3443
                  %v3445 = vld [vmem:[%s3439 + $0x8] sm:%s3432]
                  %3446 = vst [vmem:[%s3440 + $0x10] sm:%s3432] %v3445
                  %v3447 = vld [vmem:[%s3439 + $0xc] sm:%s3432]
                  %3448 = vst [vmem:[%s3440 + $0x18] sm:%s3432] %v3447
                  %v3449 = vld [vmem:[%s3439 + $0x10] sm:%s3432]
                  %3450 = vst [vmem:[%s3440 + $0x20] sm:%s3432] %v3449
                  %v3451 = vld [vmem:[%s3439 + $0x14] sm:%s3432]
                  %3452 = vst [vmem:[%s3440 + $0x28] sm:%s3432] %v3451
                  %v3453 = vld [vmem:[%s3439 + $0x18] sm:%s3432]
                  %3454 = vst [vmem:[%s3440 + $0x30] sm:%s3432] %v3453
                  %v3455 = vld [vmem:[%s3439 + $0x1c] sm:%s3432]
                  %3456 = vst [vmem:[%s3440 + $0x38] sm:%s3432] %v3455
                  %v3457 = vld [vmem:[%s3439 + $0x20] sm:%s3432]
                  %3458 = vst [vmem:[%s3440 + $0x40] sm:%s3432] %v3457
                  %v3459 = vld [vmem:[%s3439 + $0x24] sm:%s3432]
                  %3460 = vst [vmem:[%s3440 + $0x48] sm:%s3432] %v3459
                  %v3461 = vld [vmem:[%s3439 + $0x28] sm:%s3432]
                  %3462 = vst [vmem:[%s3440 + $0x50] sm:%s3432] %v3461
                  %v3463 = vld [vmem:[%s3439 + $0x2c] sm:%s3432]
                  %3464 = vst [vmem:[%s3440 + $0x58] sm:%s3432] %v3463
                  %v3465 = vld [vmem:[%s3439 + $0x30] sm:%s3432]
                  %3466 = vst [vmem:[%s3440 + $0x60] sm:%s3432] %v3465
                  %v3467 = vld [vmem:[%s3439 + $0x34] sm:%s3432]
                  %3468 = vst [vmem:[%s3440 + $0x68] sm:%s3432] %v3467
                  %v3469 = vld [vmem:[%s3439 + $0x38] sm:%s3432]
                  %3470 = vst [vmem:[%s3440 + $0x70] sm:%s3432] %v3469
                  %v3471 = vld [vmem:[%s3439 + $0x3c] sm:%s3432]
                  %3472 = vst [vmem:[%s3440 + $0x78] sm:%s3432] %v3471
                $region251: #{t5_block_next.5} parent=238 // loop_footer
                  %s3438 = sadd.s32 1, %s3434
                $region252: #{t5_block_next.5} parent=238 // loop_footer_branch
                  %3433 = sbr.rel target = $region248
                $region253: #{t5_block_next.5} parent=238 // loop_exit
                  _
              $region239: #{t5_block_next.5} parent=223 // pred_fallthru
                _
            $region224: #{t5_block_next.5} parent=219 // pred_fallthru
              _
            // Predicated region
            $region225: #{t5_block_next.5} parent=219 // pred_check
              _
            $region226: #{t5_block_next.5} parent=219 // pred_check_branch
              %3378 = sbr.rel (0) target = $region228
            $region227: #{t5_block_next.5} parent=219 // pred_region
              %s3380 = ssub.s32 16, 1
              loop: start=0, step=1, limit=1
              $region229: #{t5_block_next.5} parent=227 // loop_pre_header
                _
              $region230: #{t5_block_next.5} parent=227 // loop_header
                %s3382 = sphi 0, %s3386
                %p3383 = scmp.ge.s32.totalorder %s3382, 1
                %s3387 = sphi %s3364, %s3364
                %s3388 = sphi %s3372, %s3372
              $region231: #{t5_block_next.5} parent=227 // loop_header_branch
                %3385 = sbr.rel (%p3383) target = $region235
              $region232: #{t5_block_next.5} parent=227 // loop_body
                %v3389 = vld [vmem:[%s3387] sm:%s3380]
                %3390 = vst [vmem:[%s3388] sm:%s3380] %v3389
                %v3391 = vld [vmem:[%s3387 + $0x4] sm:%s3380]
                %3392 = vst [vmem:[%s3388 + $0x8] sm:%s3380] %v3391
                %v3393 = vld [vmem:[%s3387 + $0x8] sm:%s3380]
                %3394 = vst [vmem:[%s3388 + $0x10] sm:%s3380] %v3393
                %v3395 = vld [vmem:[%s3387 + $0xc] sm:%s3380]
                %3396 = vst [vmem:[%s3388 + $0x18] sm:%s3380] %v3395
                %v3397 = vld [vmem:[%s3387 + $0x10] sm:%s3380]
                %3398 = vst [vmem:[%s3388 + $0x20] sm:%s3380] %v3397
                %v3399 = vld [vmem:[%s3387 + $0x14] sm:%s3380]
                %3400 = vst [vmem:[%s3388 + $0x28] sm:%s3380] %v3399
                %v3401 = vld [vmem:[%s3387 + $0x18] sm:%s3380]
                %3402 = vst [vmem:[%s3388 + $0x30] sm:%s3380] %v3401
                %v3403 = vld [vmem:[%s3387 + $0x1c] sm:%s3380]
                %3404 = vst [vmem:[%s3388 + $0x38] sm:%s3380] %v3403
                %v3405 = vld [vmem:[%s3387 + $0x20] sm:%s3380]
                %3406 = vst [vmem:[%s3388 + $0x40] sm:%s3380] %v3405
                %v3407 = vld [vmem:[%s3387 + $0x24] sm:%s3380]
                %3408 = vst [vmem:[%s3388 + $0x48] sm:%s3380] %v3407
                %v3409 = vld [vmem:[%s3387 + $0x28] sm:%s3380]
                %3410 = vst [vmem:[%s3388 + $0x50] sm:%s3380] %v3409
                %v3411 = vld [vmem:[%s3387 + $0x2c] sm:%s3380]
                %3412 = vst [vmem:[%s3388 + $0x58] sm:%s3380] %v3411
                %v3413 = vld [vmem:[%s3387 + $0x30] sm:%s3380]
                %3414 = vst [vmem:[%s3388 + $0x60] sm:%s3380] %v3413
                %v3415 = vld [vmem:[%s3387 + $0x34] sm:%s3380]
                %3416 = vst [vmem:[%s3388 + $0x68] sm:%s3380] %v3415
                %v3417 = vld [vmem:[%s3387 + $0x38] sm:%s3380]
                %3418 = vst [vmem:[%s3388 + $0x70] sm:%s3380] %v3417
                %v3419 = vld [vmem:[%s3387 + $0x3c] sm:%s3380]
                %3420 = vst [vmem:[%s3388 + $0x78] sm:%s3380] %v3419
              $region233: #{t5_block_next.5} parent=227 // loop_footer
                %s3386 = sadd.s32 1, %s3382
              $region234: #{t5_block_next.5} parent=227 // loop_footer_branch
                %3381 = sbr.rel target = $region230
              $region235: #{t5_block_next.5} parent=227 // loop_exit
                _
            $region228: #{t5_block_next.5} parent=219 // pred_fallthru
              _
          $region220: #{t5_block_next.5} parent=215 // pred_fallthru
            _
          %3473 = vnop
        $region216: #{t5_block_next.5} parent=187 // pred_fallthru
          _
      $region188: #{t5_block_next.5} parent=5 // pred_fallthru
        _
      %p3474 = scmp.le.s32.totalorder 2, %s11
      // Predicated region
      $region254: #{t5_block_next.5} parent=5 // pred_check
        %p3475 = pneg %p3474
      $region255: #{t5_block_next.5} parent=5 // pred_check_branch
        %3477 = sbr.rel (%p3475) target = $region257
      $region256: #{t5_block_next.5} parent=5 // pred_region
        %s3478 = ssub.s32 %s11, 2
        // Predicated region
        $region258: #{t5_block_next.5} parent=256 // pred_check
          %p3479 = pneg %p205
        $region259: #{t5_block_next.5} parent=256 // pred_check_branch
          %3481 = sbr.rel (%p3479) target = $region261
        $region260: #{t5_block_next.5} parent=256 // pred_region
          %s3482 = sand.u32 %s190, 1
          %s3483 = sand.u32 %s190, 1
          %s3484 = smul.addr %s3483, 64
          %s3485 = scalar_lea.vmem [#allocation9], %s3484
        $region261: #{t5_block_next.5} parent=256 // pred_fallthru
          _
      $region257: #{t5_block_next.5} parent=5 // pred_fallthru
        _
    $region6: #{t5_block_next.5} parent=1 // loop_footer
      %s15 = sadd.s32 1, %s11
    $region7: #{t5_block_next.5} parent=1 // loop_footer_branch
      %10 = sbr.rel target = $region3
    $region8: #{t5_block_next.5} parent=1 // loop_exit
      _

</llo_original>
